<compile_context>
chip_gen: v7x
topology: tpu7x:2x2x1
jax: 0.10.0
libtpu: 0.0.40
codegen_flags: <defaults>
</compile_context>

<pallas_src>
import jax
import jax.numpy as jnp
from jax import lax
from jax.experimental import pallas as pl
from jax.experimental.pallas import tpu as pltpu

HIGH = lax.Precision.HIGHEST   # only used by the pure-JAX reference

HO = WO = 31
HW = HO * WO                   # 961 real pooled positions per channel
HWP = 1024                     # lane-padded spatial size (multiple of 128)
NPH = 16                       # 4x4 max-pool phases
PHW = NPH * HWP                # 16384 patch lane width (phase-major)
C = 32
F = HW * C                     # 30752 real features
FP = C * HWP                   # 32768 padded features (kernel-A flatten order)
H_FC = 128
TK = 8192                      # K tile of the big FC matmul
SUB = 2048                     # in-kernel int8->bf16 widening chunk
KSTEPS = (FP // 2) // TK       # k steps per K-half (halves -> 2 TCs on v7x)


# ---------------------------------------------------------------------------
# Kernel A: Conv2d(1,32,3) + ReLU + MaxPool2d(4)  (+ per-batch BN partials)
#   patches: (B, 9, 16*1024) bf16 -- taps on sublanes, phase-major lanes
#   pooled : (B, C, 1024) bf16    -- NCHW flatten order, lanes 961.. zeroed
#   stats  : (B, C, 2) f32        -- per-batch per-channel [sum, sum-of-sq]
# ---------------------------------------------------------------------------
def _conv_pool_kernel(p_ref, w_ref, b_ref, pooled_ref, stats_ref, acc_ref):
    w = w_ref[...]                                              # (C, 9) bf16

    # 16 pool phases (i,j) of the 4x4 window; conv-as-matmul on the MXU
    # (single-pass bf16), running max kept in a VMEM scratch.
    acc_ref[...] = jnp.dot(w, p_ref[0, :, 0:HWP],
                           preferred_element_type=jnp.float32)  # (C, 1024)
    for ph in range(1, NPH):
        z = jnp.dot(w, p_ref[0, :, ph * HWP:(ph + 1) * HWP],
                    preferred_element_type=jnp.float32)
        acc_ref[...] = jnp.maximum(acc_ref[...], z)

    # bias + ReLU once (phase invariant / ReLU-max commute); zero the padded
    # lanes so both the flattened features and the BN stats see exact zeros.
    lane = lax.broadcasted_iota(jnp.int32, (C, HWP), 1)
    m = jnp.maximum(acc_ref[...] + b_ref[...], 0.0)             # (C, 1024) f32
    m = jnp.where(lane < HW, m, 0.0)

    pooled_ref[0] = m.astype(jnp.bfloat16)
    stats_ref[0, :, 0:1] = jnp.sum(m, axis=1, keepdims=True)
    stats_ref[0, :, 1:2] = jnp.sum(m * m, axis=1, keepdims=True)


# ---------------------------------------------------------------------------
# Kernel B: fc_common as a K-split int8-weight matmul
#   z : (B, FP) bf16 (BN already folded in), wq : (FP, 128) int8
#   out: (2, B, 128) f32 partial sums (one per K-half / TensorCore)
# ---------------------------------------------------------------------------
def _fc_kernel(z_ref, wq_ref, part_ref, acc_ref):
    k = pl.program_id(1)

    @pl.when(k == 0)
    def _():
        acc_ref[...] = jnp.zeros_like(acc_ref)

    # Widen the int8 weights to bf16 in modest chunks (bounded VMEM, hides
    # under the weight DMA); the int8->f32->bf16 hop keeps lowering simple,
    # and int8 values are exactly representable in bf16.
    for s in range(TK // SUB):
        wb = (wq_ref[s * SUB:(s + 1) * SUB, :]
              .astype(jnp.float32).astype(jnp.bfloat16))        # (SUB, 128)
        acc_ref[...] += jnp.dot(z_ref[:, s * SUB:(s + 1) * SUB], wb,
                                preferred_element_type=jnp.float32)

    @pl.when(k == pl.num_programs(1) - 1)
    def _():
        part_ref[0] = acc_ref[...]


# ---------------------------------------------------------------------------
# One-time parameter preparation (kept OUT of the per-call jit path).
# ---------------------------------------------------------------------------
def prepare_params(params):
    # fc_common weight: (128, 30752) -> (30752, 128), pad each channel's 961
    # rows to 1024 (matching kernel A's lane-padded flatten), then symmetric
    # int8 quantisation with one f32 scale per output column.
    w1 = params["fc_w"].T.reshape(C, HW, H_FC)
    w1 = jnp.pad(w1, ((0, 0), (0, HWP - HW), (0, 0))).reshape(FP, H_FC)
    s = jnp.maximum(jnp.max(jnp.abs(w1), axis=0) / 127.0, 1e-20)         # (128,)
    wq = jnp.clip(jnp.round(w1 / s[None, :]), -127.0, 127.0).astype(jnp.int8)

    wh = jnp.concatenate([params["actor_w"], params["critic_w"]], axis=0).T  # (128, 2)
    bh = jnp.concatenate([params["actor_b"], params["critic_b"]]).reshape(1, 2)
    return {
        "conv_w": params["conv_w"].reshape(C, 9).astype(jnp.bfloat16),    # (32, 9)
        "conv_b": params["conv_b"].reshape(C, 1),                         # (32, 1)
        "bn_gamma": params["bn_gamma"],
        "bn_beta": params["bn_beta"],
        "fc_wq": wq,                                                      # (FP, 128) int8
        "fc_scale": s.reshape(1, H_FC),                                   # (1, 128) f32
        "fc_b": params["fc_b"].reshape(1, H_FC),
        "wh": wh, "bh": bh,
    }


# ---------------------------------------------------------------------------
# Forward wrapper (glue: bf16 im2col, BN-stat finish/fold, dequant + heads)
# ---------------------------------------------------------------------------
def actor_critic_tag_forward(x, prep):
    B = x.shape[0]

    # ---- glue: pool-phase-aware im2col, bf16, HW padded to 1024 lanes ----
    xs = x[:, 0].astype(jnp.bfloat16)                            # (B, 128, 128)
    cols = [xs[:, ky:ky + 124, kx:kx + 124]
            for ky in range(3) for kx in range(3)]
    p9 = jnp.stack(cols, axis=1)                                 # (B, 9, 124, 124)
    p9 = (p9.reshape(B, 9, HO, 4, WO, 4)
            .transpose(0, 1, 3, 5, 2, 4)                         # (b, tap, i, j, ho, wo)
            .reshape(B, 9, NPH, HW))
    patches = jnp.pad(p9, ((0, 0), (0, 0), (0, 0), (0, HWP - HW))
                      ).reshape(B, 9, PHW)                       # (B, 9, 16384) bf16

    pooled, stats = pl.pallas_call(
        _conv_pool_kernel,
        out_shape=(jax.ShapeDtypeStruct((B, C, HWP), jnp.bfloat16),
                   jax.ShapeDtypeStruct((B, C, 2), jnp.float32)),
        grid_spec=pltpu.PrefetchScalarGridSpec(
            num_scalar_prefetch=0,
            grid=(B,),
            in_specs=[pl.BlockSpec((1, 9, PHW), lambda b: (b, 0, 0)),
                      pl.BlockSpec((C, 9), lambda b: (0, 0)),
                      pl.BlockSpec((C, 1), lambda b: (0, 0))],
            out_specs=[pl.BlockSpec((1, C, HWP), lambda b: (b, 0, 0)),
                       pl.BlockSpec((1, C, 2), lambda b: (b, 0, 0))],
            scratch_shapes=[pltpu.VMEM((C, HWP), jnp.float32)]),
        compiler_params=pltpu.CompilerParams(
            dimension_semantics=("parallel",)),
    )(patches, prep["conv_w"], prep["conv_b"])

    # ---- glue: finish training-mode BN stats, fold into a channel affine ----
    tot = jnp.sum(stats, axis=0)                                 # (C, 2)
    n = B * HW
    mean = tot[:, 0] / n
    var = tot[:, 1] / n - mean * mean                            # biased variance
    scale_c = prep["bn_gamma"] * lax.rsqrt(var + 1e-5)
    shift_c = prep["bn_beta"] - mean * scale_c
    z = (pooled.astype(jnp.float32) * scale_c[None, :, None]
         + shift_c[None, :, None]).astype(jnp.bfloat16).reshape(B, FP)

    # ---- kernel B: fc_common as 2 (TensorCore) x KSTEPS int8-weight matmul ----
    parts = pl.pallas_call(
        _fc_kernel,
        out_shape=jax.ShapeDtypeStruct((2, B, H_FC), jnp.float32),
        grid_spec=pltpu.PrefetchScalarGridSpec(
            num_scalar_prefetch=0,
            grid=(2, KSTEPS),
            in_specs=[pl.BlockSpec((B, TK), lambda j, k: (0, j * KSTEPS + k)),
                      pl.BlockSpec((TK, H_FC), lambda j, k: (j * KSTEPS + k, 0))],
            out_specs=pl.BlockSpec((1, B, H_FC), lambda j, k: (j, 0, 0)),
            scratch_shapes=[pltpu.VMEM((B, H_FC), jnp.float32)]),
        compiler_params=pltpu.CompilerParams(
            dimension_semantics=("parallel", "arbitrary")),
    )(z, prep["fc_wq"])

    # ---- glue: tiny epilogue (dequant scale + bias + ReLU + heads) ----
    o = parts[0] + parts[1]                                      # (B, 128)
    h = jnp.maximum(o * prep["fc_scale"] + prep["fc_b"], 0.0)
    av = jnp.dot(h, prep["wh"]) + prep["bh"]                     # (B, 2)
    action = jax.nn.sigmoid(av[:, 0:1]) * 365.0
    value = av[:, 1:2]
    return action, value


# ---------------------------------------------------------------------------
# Pure-JAX reference (mirrors the PyTorch forward) for a sanity check
# ---------------------------------------------------------------------------
def reference_forward(x, params):
    conv = lax.conv_general_dilated(
        x, params["conv_w"], (1, 1), "VALID",
        dimension_numbers=("NCHW", "OIHW", "NCHW"), precision=HIGH)
    conv = conv + params["conv_b"].reshape(1, C, 1, 1)
    r = jnp.maximum(conv, 0.0)
    mp = lax.reduce_window(r, -jnp.inf, lax.max,
                           (1, 1, 4, 4), (1, 1, 4, 4), "VALID")    # (B, 32, 31, 31)
    mean = jnp.mean(mp, axis=(0, 2, 3), keepdims=True)
    var = jnp.mean((mp - mean) ** 2, axis=(0, 2, 3), keepdims=True)
    bn = (mp - mean) / jnp.sqrt(var + 1e-5)
    bn = bn * params["bn_gamma"].reshape(1, C, 1, 1) + params["bn_beta"].reshape(1, C, 1, 1)
    flat = bn.reshape(x.shape[0], -1)                               # NCHW flatten
    h = jnp.maximum(jnp.dot(flat, params["fc_w"].T, precision=HIGH) + params["fc_b"], 0.0)
    a = jax.nn.sigmoid(jnp.dot(h, params["actor_w"].T, precision=HIGH) + params["actor_b"]) * 365.0
    v = jnp.dot(h, params["critic_w"].T, precision=HIGH) + params["critic_b"]
    return a, v


if __name__ == "__main__":
    key = jax.random.PRNGKey(0)
    ks = jax.random.split(key, 10)
    B = 2
    x = jax.random.normal(ks[0], (B, 1, 128, 128), jnp.float32)

    params = {
        "conv_w":  0.2 * jax.random.normal(ks[1], (32, 1, 3, 3), jnp.float32),
        "conv_b":  0.1 * jax.random.normal(ks[2], (32,), jnp.float32),
        "bn_gamma": 1.0 + 0.1 * jax.random.normal(ks[3], (32,), jnp.float32),
        "bn_beta":  0.1 * jax.random.normal(ks[4], (32,), jnp.float32),
        "fc_w":    (1.0 / 175.0) * jax.random.normal(ks[5], (128, 30752), jnp.float32),
        "fc_b":     0.1 * jax.random.normal(ks[6], (128,), jnp.float32),
        "actor_w": (1.0 / 11.3) * jax.random.normal(ks[7], (1, 128), jnp.float32),
        "actor_b":  jnp.zeros((1,), jnp.float32),
        "critic_w": (1.0 / 11.3) * jax.random.normal(ks[8], (1, 128), jnp.float32),
        "critic_b": jnp.zeros((1,), jnp.float32),
    }

    # one-time weight prep (transpose / pad / int8 quantisation) outside the jit
    prep = prepare_params(params)
    jax.block_until_ready(prep)

    forward = jax.jit(actor_critic_tag_forward)
    action, value = forward(x, prep)
    jax.block_until_ready((action, value))

    assert action.shape == (B, 1) and value.shape == (B, 1)
    assert bool(jnp.all(jnp.isfinite(action))) and bool(jnp.all(jnp.isfinite(value)))

    a_ref, v_ref = reference_forward(x, params)
    assert jnp.allclose(action, a_ref, atol=0.5, rtol=5e-2), \
        f"action mismatch: max |diff| = {float(jnp.max(jnp.abs(action - a_ref)))}"
    assert jnp.allclose(value, v_ref, atol=5e-2, rtol=5e-2), \
        f"value mismatch: max |diff| = {float(jnp.max(jnp.abs(value - v_ref)))}"

    print("KERNEL_OK")
</pallas_src>

<mosaic_0001>
module attributes {stable_mosaic.version = 11 : i64} {
  func.func @_conv_pool_kernel(%arg0: i32, %arg1: memref<1x9x16384xbf16, #tpu.memory_space<vmem>>, %arg2: memref<32x9xbf16, #tpu.memory_space<vmem>>, %arg3: memref<32x1xf32, #tpu.memory_space<vmem>>, %arg4: memref<1x32x1024xbf16, #tpu.memory_space<vmem>>, %arg5: memref<1x32x2xf32, #tpu.memory_space<vmem>>, %arg6: memref<32x1024xf32, #tpu.memory_space<vmem>>) attributes {dimension_semantics = [#tpu.dimension_semantics<parallel>], iteration_bounds = array<i64: 2>, scalar_prefetch = 0 : i64, scratch_operands = 1 : i64, tpu.core_type = #tpu.core_type<tc>, window_params = [{transform_indices = @transform_0, window_bounds = array<i64: 1, 9, 16384>}, {pipeline_mode = #tpu.pipeline_mode<synchronous>, transform_indices = @transform_1, window_bounds = array<i64: 32, 9>}, {pipeline_mode = #tpu.pipeline_mode<synchronous>, transform_indices = @transform_2, window_bounds = array<i64: 32, 1>}, {transform_indices = @transform_3, window_bounds = array<i64: 1, 32, 1024>}, {transform_indices = @transform_4, window_bounds = array<i64: 1, 32, 2>}]} {
    %c0 = arith.constant 0 : index
    %c0_0 = arith.constant 0 : index
    %0 = vector.load %arg2[%c0, %c0_0] : memref<32x9xbf16, #tpu.memory_space<vmem>>, vector<32x9xbf16>
    %c0_1 = arith.constant 0 : index
    %c0_2 = arith.constant 0 : index
    %c0_3 = arith.constant 0 : index
    %1 = vector.load %arg1[%c0_1, %c0_2, %c0_3] : memref<1x9x16384xbf16, #tpu.memory_space<vmem>>, vector<1x9x1024xbf16>
    %2 = vector.shape_cast %1 : vector<1x9x1024xbf16> to vector<9x1024xbf16>
    %cst = arith.constant dense<0.000000e+00> : vector<32x1024xf32>
    %3 = tpu.matmul %0, %2, %cst {dimension_numbers = #tpu.dot_dimension_numbers<[1], [0], [0], [1], [0, 0, 1, 1], [], []>} : vector<32x9xbf16>, vector<9x1024xbf16>, vector<32x1024xf32> -> vector<32x1024xf32>
    %c0_4 = arith.constant 0 : index
    %c0_5 = arith.constant 0 : index
    %4 = vector.load %arg6[%c0_4, %c0_5] : memref<32x1024xf32, #tpu.memory_space<vmem>>, vector<32x1024xf32>
    tpu.vector_store %arg6[%c0_4, %c0_5], %3 {strides = array<i32>} : memref<32x1024xf32, #tpu.memory_space<vmem>>, vector<32x1024xf32>,
    %c0_6 = arith.constant 0 : index
    %c0_7 = arith.constant 0 : index
    %c1024 = arith.constant 1024 : index
    %5 = vector.load %arg1[%c0_6, %c0_7, %c1024] : memref<1x9x16384xbf16, #tpu.memory_space<vmem>>, vector<1x9x1024xbf16>
    %6 = vector.shape_cast %5 : vector<1x9x1024xbf16> to vector<9x1024xbf16>
    %cst_8 = arith.constant dense<0.000000e+00> : vector<32x1024xf32>
    %7 = tpu.matmul %0, %6, %cst_8 {dimension_numbers = #tpu.dot_dimension_numbers<[1], [0], [0], [1], [0, 0, 1, 1], [], []>} : vector<32x9xbf16>, vector<9x1024xbf16>, vector<32x1024xf32> -> vector<32x1024xf32>
    %c0_9 = arith.constant 0 : index
    %c0_10 = arith.constant 0 : index
    %8 = vector.load %arg6[%c0_9, %c0_10] : memref<32x1024xf32, #tpu.memory_space<vmem>>, vector<32x1024xf32>
    %9 = arith.maximumf %8, %7 : vector<32x1024xf32>
    %c0_11 = arith.constant 0 : index
    %c0_12 = arith.constant 0 : index
    %10 = vector.load %arg6[%c0_11, %c0_12] : memref<32x1024xf32, #tpu.memory_space<vmem>>, vector<32x1024xf32>
    tpu.vector_store %arg6[%c0_11, %c0_12], %9 {strides = array<i32>} : memref<32x1024xf32, #tpu.memory_space<vmem>>, vector<32x1024xf32>,
    %c0_13 = arith.constant 0 : index
    %c0_14 = arith.constant 0 : index
    %c2048 = arith.constant 2048 : index
    %11 = vector.load %arg1[%c0_13, %c0_14, %c2048] : memref<1x9x16384xbf16, #tpu.memory_space<vmem>>, vector<1x9x1024xbf16>
    %12 = vector.shape_cast %11 : vector<1x9x1024xbf16> to vector<9x1024xbf16>
    %cst_15 = arith.constant dense<0.000000e+00> : vector<32x1024xf32>
    %13 = tpu.matmul %0, %12, %cst_15 {dimension_numbers = #tpu.dot_dimension_numbers<[1], [0], [0], [1], [0, 0, 1, 1], [], []>} : vector<32x9xbf16>, vector<9x1024xbf16>, vector<32x1024xf32> -> vector<32x1024xf32>
    %c0_16 = arith.constant 0 : index
    %c0_17 = arith.constant 0 : index
    %14 = vector.load %arg6[%c0_16, %c0_17] : memref<32x1024xf32, #tpu.memory_space<vmem>>, vector<32x1024xf32>
    %15 = arith.maximumf %14, %13 : vector<32x1024xf32>
    %c0_18 = arith.constant 0 : index
    %c0_19 = arith.constant 0 : index
    %16 = vector.load %arg6[%c0_18, %c0_19] : memref<32x1024xf32, #tpu.memory_space<vmem>>, vector<32x1024xf32>
    tpu.vector_store %arg6[%c0_18, %c0_19], %15 {strides = array<i32>} : memref<32x1024xf32, #tpu.memory_space<vmem>>, vector<32x1024xf32>,
    %c0_20 = arith.constant 0 : index
    %c0_21 = arith.constant 0 : index
    %c3072 = arith.constant 3072 : index
    %17 = vector.load %arg1[%c0_20, %c0_21, %c3072] : memref<1x9x16384xbf16, #tpu.memory_space<vmem>>, vector<1x9x1024xbf16>
    %18 = vector.shape_cast %17 : vector<1x9x1024xbf16> to vector<9x1024xbf16>
    %cst_22 = arith.constant dense<0.000000e+00> : vector<32x1024xf32>
    %19 = tpu.matmul %0, %18, %cst_22 {dimension_numbers = #tpu.dot_dimension_numbers<[1], [0], [0], [1], [0, 0, 1, 1], [], []>} : vector<32x9xbf16>, vector<9x1024xbf16>, vector<32x1024xf32> -> vector<32x1024xf32>
    %c0_23 = arith.constant 0 : index
    %c0_24 = arith.constant 0 : index
    %20 = vector.load %arg6[%c0_23, %c0_24] : memref<32x1024xf32, #tpu.memory_space<vmem>>, vector<32x1024xf32>
    %21 = arith.maximumf %20, %19 : vector<32x1024xf32>
    %c0_25 = arith.constant 0 : index
    %c0_26 = arith.constant 0 : index
    %22 = vector.load %arg6[%c0_25, %c0_26] : memref<32x1024xf32, #tpu.memory_space<vmem>>, vector<32x1024xf32>
    tpu.vector_store %arg6[%c0_25, %c0_26], %21 {strides = array<i32>} : memref<32x1024xf32, #tpu.memory_space<vmem>>, vector<32x1024xf32>,
    %c0_27 = arith.constant 0 : index
    %c0_28 = arith.constant 0 : index
    %c4096 = arith.constant 4096 : index
    %23 = vector.load %arg1[%c0_27, %c0_28, %c4096] : memref<1x9x16384xbf16, #tpu.memory_space<vmem>>, vector<1x9x1024xbf16>
    %24 = vector.shape_cast %23 : vector<1x9x1024xbf16> to vector<9x1024xbf16>
    %cst_29 = arith.constant dense<0.000000e+00> : vector<32x1024xf32>
    %25 = tpu.matmul %0, %24, %cst_29 {dimension_numbers = #tpu.dot_dimension_numbers<[1], [0], [0], [1], [0, 0, 1, 1], [], []>} : vector<32x9xbf16>, vector<9x1024xbf16>, vector<32x1024xf32> -> vector<32x1024xf32>
    %c0_30 = arith.constant 0 : index
    %c0_31 = arith.constant 0 : index
    %26 = vector.load %arg6[%c0_30, %c0_31] : memref<32x1024xf32, #tpu.memory_space<vmem>>, vector<32x1024xf32>
    %27 = arith.maximumf %26, %25 : vector<32x1024xf32>
    %c0_32 = arith.constant 0 : index
    %c0_33 = arith.constant 0 : index
    %28 = vector.load %arg6[%c0_32, %c0_33] : memref<32x1024xf32, #tpu.memory_space<vmem>>, vector<32x1024xf32>
    tpu.vector_store %arg6[%c0_32, %c0_33], %27 {strides = array<i32>} : memref<32x1024xf32, #tpu.memory_space<vmem>>, vector<32x1024xf32>,
    %c0_34 = arith.constant 0 : index
    %c0_35 = arith.constant 0 : index
    %c5120 = arith.constant 5120 : index
    %29 = vector.load %arg1[%c0_34, %c0_35, %c5120] : memref<1x9x16384xbf16, #tpu.memory_space<vmem>>, vector<1x9x1024xbf16>
    %30 = vector.shape_cast %29 : vector<1x9x1024xbf16> to vector<9x1024xbf16>
    %cst_36 = arith.constant dense<0.000000e+00> : vector<32x1024xf32>
    %31 = tpu.matmul %0, %30, %cst_36 {dimension_numbers = #tpu.dot_dimension_numbers<[1], [0], [0], [1], [0, 0, 1, 1], [], []>} : vector<32x9xbf16>, vector<9x1024xbf16>, vector<32x1024xf32> -> vector<32x1024xf32>
    %c0_37 = arith.constant 0 : index
    %c0_38 = arith.constant 0 : index
    %32 = vector.load %arg6[%c0_37, %c0_38] : memref<32x1024xf32, #tpu.memory_space<vmem>>, vector<32x1024xf32>
    %33 = arith.maximumf %32, %31 : vector<32x1024xf32>
    %c0_39 = arith.constant 0 : index
    %c0_40 = arith.constant 0 : index
    %34 = vector.load %arg6[%c0_39, %c0_40] : memref<32x1024xf32, #tpu.memory_space<vmem>>, vector<32x1024xf32>
    tpu.vector_store %arg6[%c0_39, %c0_40], %33 {strides = array<i32>} : memref<32x1024xf32, #tpu.memory_space<vmem>>, vector<32x1024xf32>,
    %c0_41 = arith.constant 0 : index
    %c0_42 = arith.constant 0 : index
    %c6144 = arith.constant 6144 : index
    %35 = vector.load %arg1[%c0_41, %c0_42, %c6144] : memref<1x9x16384xbf16, #tpu.memory_space<vmem>>, vector<1x9x1024xbf16>
    %36 = vector.shape_cast %35 : vector<1x9x1024xbf16> to vector<9x1024xbf16>
    %cst_43 = arith.constant dense<0.000000e+00> : vector<32x1024xf32>
    %37 = tpu.matmul %0, %36, %cst_43 {dimension_numbers = #tpu.dot_dimension_numbers<[1], [0], [0], [1], [0, 0, 1, 1], [], []>} : vector<32x9xbf16>, vector<9x1024xbf16>, vector<32x1024xf32> -> vector<32x1024xf32>
    %c0_44 = arith.constant 0 : index
    %c0_45 = arith.constant 0 : index
    %38 = vector.load %arg6[%c0_44, %c0_45] : memref<32x1024xf32, #tpu.memory_space<vmem>>, vector<32x1024xf32>
    %39 = arith.maximumf %38, %37 : vector<32x1024xf32>
    %c0_46 = arith.constant 0 : index
    %c0_47 = arith.constant 0 : index
    %40 = vector.load %arg6[%c0_46, %c0_47] : memref<32x1024xf32, #tpu.memory_space<vmem>>, vector<32x1024xf32>
    tpu.vector_store %arg6[%c0_46, %c0_47], %39 {strides = array<i32>} : memref<32x1024xf32, #tpu.memory_space<vmem>>, vector<32x1024xf32>,
    %c0_48 = arith.constant 0 : index
    %c0_49 = arith.constant 0 : index
    %c7168 = arith.constant 7168 : index
    %41 = vector.load %arg1[%c0_48, %c0_49, %c7168] : memref<1x9x16384xbf16, #tpu.memory_space<vmem>>, vector<1x9x1024xbf16>
    %42 = vector.shape_cast %41 : vector<1x9x1024xbf16> to vector<9x1024xbf16>
    %cst_50 = arith.constant dense<0.000000e+00> : vector<32x1024xf32>
    %43 = tpu.matmul %0, %42, %cst_50 {dimension_numbers = #tpu.dot_dimension_numbers<[1], [0], [0], [1], [0, 0, 1, 1], [], []>} : vector<32x9xbf16>, vector<9x1024xbf16>, vector<32x1024xf32> -> vector<32x1024xf32>
    %c0_51 = arith.constant 0 : index
    %c0_52 = arith.constant 0 : index
    %44 = vector.load %arg6[%c0_51, %c0_52] : memref<32x1024xf32, #tpu.memory_space<vmem>>, vector<32x1024xf32>
    %45 = arith.maximumf %44, %43 : vector<32x1024xf32>
    %c0_53 = arith.constant 0 : index
    %c0_54 = arith.constant 0 : index
    %46 = vector.load %arg6[%c0_53, %c0_54] : memref<32x1024xf32, #tpu.memory_space<vmem>>, vector<32x1024xf32>
    tpu.vector_store %arg6[%c0_53, %c0_54], %45 {strides = array<i32>} : memref<32x1024xf32, #tpu.memory_space<vmem>>, vector<32x1024xf32>,
    %c0_55 = arith.constant 0 : index
    %c0_56 = arith.constant 0 : index
    %c8192 = arith.constant 8192 : index
    %47 = vector.load %arg1[%c0_55, %c0_56, %c8192] : memref<1x9x16384xbf16, #tpu.memory_space<vmem>>, vector<1x9x1024xbf16>
    %48 = vector.shape_cast %47 : vector<1x9x1024xbf16> to vector<9x1024xbf16>
    %cst_57 = arith.constant dense<0.000000e+00> : vector<32x1024xf32>
    %49 = tpu.matmul %0, %48, %cst_57 {dimension_numbers = #tpu.dot_dimension_numbers<[1], [0], [0], [1], [0, 0, 1, 1], [], []>} : vector<32x9xbf16>, vector<9x1024xbf16>, vector<32x1024xf32> -> vector<32x1024xf32>
    %c0_58 = arith.constant 0 : index
    %c0_59 = arith.constant 0 : index
    %50 = vector.load %arg6[%c0_58, %c0_59] : memref<32x1024xf32, #tpu.memory_space<vmem>>, vector<32x1024xf32>
    %51 = arith.maximumf %50, %49 : vector<32x1024xf32>
    %c0_60 = arith.constant 0 : index
    %c0_61 = arith.constant 0 : index
    %52 = vector.load %arg6[%c0_60, %c0_61] : memref<32x1024xf32, #tpu.memory_space<vmem>>, vector<32x1024xf32>
    tpu.vector_store %arg6[%c0_60, %c0_61], %51 {strides = array<i32>} : memref<32x1024xf32, #tpu.memory_space<vmem>>, vector<32x1024xf32>,
    %c0_62 = arith.constant 0 : index
    %c0_63 = arith.constant 0 : index
    %c9216 = arith.constant 9216 : index
    %53 = vector.load %arg1[%c0_62, %c0_63, %c9216] : memref<1x9x16384xbf16, #tpu.memory_space<vmem>>, vector<1x9x1024xbf16>
    %54 = vector.shape_cast %53 : vector<1x9x1024xbf16> to vector<9x1024xbf16>
    %cst_64 = arith.constant dense<0.000000e+00> : vector<32x1024xf32>
    %55 = tpu.matmul %0, %54, %cst_64 {dimension_numbers = #tpu.dot_dimension_numbers<[1], [0], [0], [1], [0, 0, 1, 1], [], []>} : vector<32x9xbf16>, vector<9x1024xbf16>, vector<32x1024xf32> -> vector<32x1024xf32>
    %c0_65 = arith.constant 0 : index
    %c0_66 = arith.constant 0 : index
    %56 = vector.load %arg6[%c0_65, %c0_66] : memref<32x1024xf32, #tpu.memory_space<vmem>>, vector<32x1024xf32>
    %57 = arith.maximumf %56, %55 : vector<32x1024xf32>
    %c0_67 = arith.constant 0 : index
    %c0_68 = arith.constant 0 : index
    %58 = vector.load %arg6[%c0_67, %c0_68] : memref<32x1024xf32, #tpu.memory_space<vmem>>, vector<32x1024xf32>
    tpu.vector_store %arg6[%c0_67, %c0_68], %57 {strides = array<i32>} : memref<32x1024xf32, #tpu.memory_space<vmem>>, vector<32x1024xf32>,
    %c0_69 = arith.constant 0 : index
    %c0_70 = arith.constant 0 : index
    %c10240 = arith.constant 10240 : index
    %59 = vector.load %arg1[%c0_69, %c0_70, %c10240] : memref<1x9x16384xbf16, #tpu.memory_space<vmem>>, vector<1x9x1024xbf16>
    %60 = vector.shape_cast %59 : vector<1x9x1024xbf16> to vector<9x1024xbf16>
    %cst_71 = arith.constant dense<0.000000e+00> : vector<32x1024xf32>
    %61 = tpu.matmul %0, %60, %cst_71 {dimension_numbers = #tpu.dot_dimension_numbers<[1], [0], [0], [1], [0, 0, 1, 1], [], []>} : vector<32x9xbf16>, vector<9x1024xbf16>, vector<32x1024xf32> -> vector<32x1024xf32>
    %c0_72 = arith.constant 0 : index
    %c0_73 = arith.constant 0 : index
    %62 = vector.load %arg6[%c0_72, %c0_73] : memref<32x1024xf32, #tpu.memory_space<vmem>>, vector<32x1024xf32>
    %63 = arith.maximumf %62, %61 : vector<32x1024xf32>
    %c0_74 = arith.constant 0 : index
    %c0_75 = arith.constant 0 : index
    %64 = vector.load %arg6[%c0_74, %c0_75] : memref<32x1024xf32, #tpu.memory_space<vmem>>, vector<32x1024xf32>
    tpu.vector_store %arg6[%c0_74, %c0_75], %63 {strides = array<i32>} : memref<32x1024xf32, #tpu.memory_space<vmem>>, vector<32x1024xf32>,
    %c0_76 = arith.constant 0 : index
    %c0_77 = arith.constant 0 : index
    %c11264 = arith.constant 11264 : index
    %65 = vector.load %arg1[%c0_76, %c0_77, %c11264] : memref<1x9x16384xbf16, #tpu.memory_space<vmem>>, vector<1x9x1024xbf16>
    %66 = vector.shape_cast %65 : vector<1x9x1024xbf16> to vector<9x1024xbf16>
    %cst_78 = arith.constant dense<0.000000e+00> : vector<32x1024xf32>
    %67 = tpu.matmul %0, %66, %cst_78 {dimension_numbers = #tpu.dot_dimension_numbers<[1], [0], [0], [1], [0, 0, 1, 1], [], []>} : vector<32x9xbf16>, vector<9x1024xbf16>, vector<32x1024xf32> -> vector<32x1024xf32>
    %c0_79 = arith.constant 0 : index
    %c0_80 = arith.constant 0 : index
    %68 = vector.load %arg6[%c0_79, %c0_80] : memref<32x1024xf32, #tpu.memory_space<vmem>>, vector<32x1024xf32>
    %69 = arith.maximumf %68, %67 : vector<32x1024xf32>
    %c0_81 = arith.constant 0 : index
    %c0_82 = arith.constant 0 : index
    %70 = vector.load %arg6[%c0_81, %c0_82] : memref<32x1024xf32, #tpu.memory_space<vmem>>, vector<32x1024xf32>
    tpu.vector_store %arg6[%c0_81, %c0_82], %69 {strides = array<i32>} : memref<32x1024xf32, #tpu.memory_space<vmem>>, vector<32x1024xf32>,
    %c0_83 = arith.constant 0 : index
    %c0_84 = arith.constant 0 : index
    %c12288 = arith.constant 12288 : index
    %71 = vector.load %arg1[%c0_83, %c0_84, %c12288] : memref<1x9x16384xbf16, #tpu.memory_space<vmem>>, vector<1x9x1024xbf16>
    %72 = vector.shape_cast %71 : vector<1x9x1024xbf16> to vector<9x1024xbf16>
    %cst_85 = arith.constant dense<0.000000e+00> : vector<32x1024xf32>
    %73 = tpu.matmul %0, %72, %cst_85 {dimension_numbers = #tpu.dot_dimension_numbers<[1], [0], [0], [1], [0, 0, 1, 1], [], []>} : vector<32x9xbf16>, vector<9x1024xbf16>, vector<32x1024xf32> -> vector<32x1024xf32>
    %c0_86 = arith.constant 0 : index
    %c0_87 = arith.constant 0 : index
    %74 = vector.load %arg6[%c0_86, %c0_87] : memref<32x1024xf32, #tpu.memory_space<vmem>>, vector<32x1024xf32>
    %75 = arith.maximumf %74, %73 : vector<32x1024xf32>
    %c0_88 = arith.constant 0 : index
    %c0_89 = arith.constant 0 : index
    %76 = vector.load %arg6[%c0_88, %c0_89] : memref<32x1024xf32, #tpu.memory_space<vmem>>, vector<32x1024xf32>
    tpu.vector_store %arg6[%c0_88, %c0_89], %75 {strides = array<i32>} : memref<32x1024xf32, #tpu.memory_space<vmem>>, vector<32x1024xf32>,
    %c0_90 = arith.constant 0 : index
    %c0_91 = arith.constant 0 : index
    %c13312 = arith.constant 13312 : index
    %77 = vector.load %arg1[%c0_90, %c0_91, %c13312] : memref<1x9x16384xbf16, #tpu.memory_space<vmem>>, vector<1x9x1024xbf16>
    %78 = vector.shape_cast %77 : vector<1x9x1024xbf16> to vector<9x1024xbf16>
    %cst_92 = arith.constant dense<0.000000e+00> : vector<32x1024xf32>
    %79 = tpu.matmul %0, %78, %cst_92 {dimension_numbers = #tpu.dot_dimension_numbers<[1], [0], [0], [1], [0, 0, 1, 1], [], []>} : vector<32x9xbf16>, vector<9x1024xbf16>, vector<32x1024xf32> -> vector<32x1024xf32>
    %c0_93 = arith.constant 0 : index
    %c0_94 = arith.constant 0 : index
    %80 = vector.load %arg6[%c0_93, %c0_94] : memref<32x1024xf32, #tpu.memory_space<vmem>>, vector<32x1024xf32>
    %81 = arith.maximumf %80, %79 : vector<32x1024xf32>
    %c0_95 = arith.constant 0 : index
    %c0_96 = arith.constant 0 : index
    %82 = vector.load %arg6[%c0_95, %c0_96] : memref<32x1024xf32, #tpu.memory_space<vmem>>, vector<32x1024xf32>
    tpu.vector_store %arg6[%c0_95, %c0_96], %81 {strides = array<i32>} : memref<32x1024xf32, #tpu.memory_space<vmem>>, vector<32x1024xf32>,
    %c0_97 = arith.constant 0 : index
    %c0_98 = arith.constant 0 : index
    %c14336 = arith.constant 14336 : index
    %83 = vector.load %arg1[%c0_97, %c0_98, %c14336] : memref<1x9x16384xbf16, #tpu.memory_space<vmem>>, vector<1x9x1024xbf16>
    %84 = vector.shape_cast %83 : vector<1x9x1024xbf16> to vector<9x1024xbf16>
    %cst_99 = arith.constant dense<0.000000e+00> : vector<32x1024xf32>
    %85 = tpu.matmul %0, %84, %cst_99 {dimension_numbers = #tpu.dot_dimension_numbers<[1], [0], [0], [1], [0, 0, 1, 1], [], []>} : vector<32x9xbf16>, vector<9x1024xbf16>, vector<32x1024xf32> -> vector<32x1024xf32>
    %c0_100 = arith.constant 0 : index
    %c0_101 = arith.constant 0 : index
    %86 = vector.load %arg6[%c0_100, %c0_101] : memref<32x1024xf32, #tpu.memory_space<vmem>>, vector<32x1024xf32>
    %87 = arith.maximumf %86, %85 : vector<32x1024xf32>
    %c0_102 = arith.constant 0 : index
    %c0_103 = arith.constant 0 : index
    %88 = vector.load %arg6[%c0_102, %c0_103] : memref<32x1024xf32, #tpu.memory_space<vmem>>, vector<32x1024xf32>
    tpu.vector_store %arg6[%c0_102, %c0_103], %87 {strides = array<i32>} : memref<32x1024xf32, #tpu.memory_space<vmem>>, vector<32x1024xf32>,
    %c0_104 = arith.constant 0 : index
    %c0_105 = arith.constant 0 : index
    %c15360 = arith.constant 15360 : index
    %89 = vector.load %arg1[%c0_104, %c0_105, %c15360] : memref<1x9x16384xbf16, #tpu.memory_space<vmem>>, vector<1x9x1024xbf16>
    %90 = vector.shape_cast %89 : vector<1x9x1024xbf16> to vector<9x1024xbf16>
    %cst_106 = arith.constant dense<0.000000e+00> : vector<32x1024xf32>
    %91 = tpu.matmul %0, %90, %cst_106 {dimension_numbers = #tpu.dot_dimension_numbers<[1], [0], [0], [1], [0, 0, 1, 1], [], []>} : vector<32x9xbf16>, vector<9x1024xbf16>, vector<32x1024xf32> -> vector<32x1024xf32>
    %c0_107 = arith.constant 0 : index
    %c0_108 = arith.constant 0 : index
    %92 = vector.load %arg6[%c0_107, %c0_108] : memref<32x1024xf32, #tpu.memory_space<vmem>>, vector<32x1024xf32>
    %93 = arith.maximumf %92, %91 : vector<32x1024xf32>
    %c0_109 = arith.constant 0 : index
    %c0_110 = arith.constant 0 : index
    %94 = vector.load %arg6[%c0_109, %c0_110] : memref<32x1024xf32, #tpu.memory_space<vmem>>, vector<32x1024xf32>
    tpu.vector_store %arg6[%c0_109, %c0_110], %93 {strides = array<i32>} : memref<32x1024xf32, #tpu.memory_space<vmem>>, vector<32x1024xf32>,
    %95 = tpu.iota {dimensions = array<i32: 1>} : vector<32x1024xi32>
    %c0_111 = arith.constant 0 : index
    %c0_112 = arith.constant 0 : index
    %96 = vector.load %arg6[%c0_111, %c0_112] : memref<32x1024xf32, #tpu.memory_space<vmem>>, vector<32x1024xf32>
    %c0_113 = arith.constant 0 : index
    %c0_114 = arith.constant 0 : index
    %97 = vector.load %arg3[%c0_113, %c0_114] : memref<32x1xf32, #tpu.memory_space<vmem>>, vector<32x1xf32>
    %98 = vector.broadcast %97 : vector<32x1xf32> to vector<32x1024xf32>
    %99 = arith.addf %96, %98 : vector<32x1024xf32>
    %cst_115 = arith.constant 0.000000e+00 : f32
    %100 = vector.broadcast %cst_115 : f32 to vector<32x1024xf32>
    %101 = arith.maximumf %99, %100 : vector<32x1024xf32>
    %c961_i32 = arith.constant 961 : i32
    %102 = vector.broadcast %c961_i32 : i32 to vector<32x1024xi32>
    %103 = arith.cmpi slt, %95, %102 : vector<32x1024xi32>
    %cst_116 = arith.constant 0.000000e+00 : f32
    %104 = vector.broadcast %cst_116 : f32 to vector<32x1024xf32>
    %105 = arith.select %103, %101, %104 : vector<32x1024xi1>, vector<32x1024xf32>
    %106 = arith.truncf %105 : vector<32x1024xf32> to vector<32x1024xbf16>
    %c0_117 = arith.constant 0 : index
    %c0_118 = arith.constant 0 : index
    %c0_119 = arith.constant 0 : index
    %107 = vector.load %arg4[%c0_117, %c0_118, %c0_119] : memref<1x32x1024xbf16, #tpu.memory_space<vmem>>, vector<1x32x1024xbf16>
    %108 = vector.shape_cast %107 : vector<1x32x1024xbf16> to vector<32x1024xbf16>
    %109 = vector.shape_cast %106 : vector<32x1024xbf16> to vector<1x32x1024xbf16>
    tpu.vector_store %arg4[%c0_117, %c0_118, %c0_119], %109 {strides = array<i32>} : memref<1x32x1024xbf16, #tpu.memory_space<vmem>>, vector<1x32x1024xbf16>,
    %cst_120 = arith.constant dense<0.000000e+00> : vector<32xf32>
    %110 = vector.multi_reduction <add>, %105, %cst_120 [1] : vector<32x1024xf32> to vector<32xf32>
    %111 = vector.shape_cast %110 : vector<32xf32> to vector<32x1xf32>
    %c0_121 = arith.constant 0 : index
    %c0_122 = arith.constant 0 : index
    %c0_123 = arith.constant 0 : index
    %112 = vector.load %arg5[%c0_121, %c0_122, %c0_123] : memref<1x32x2xf32, #tpu.memory_space<vmem>>, vector<1x32x1xf32>
    %113 = vector.shape_cast %112 : vector<1x32x1xf32> to vector<32x1xf32>
    %114 = vector.shape_cast %111 : vector<32x1xf32> to vector<1x32x1xf32>
    tpu.vector_store %arg5[%c0_121, %c0_122, %c0_123], %114 {strides = array<i32>} : memref<1x32x2xf32, #tpu.memory_space<vmem>>, vector<1x32x1xf32>,
    %115 = arith.mulf %105, %105 : vector<32x1024xf32>
    %cst_124 = arith.constant dense<0.000000e+00> : vector<32xf32>
    %116 = vector.multi_reduction <add>, %115, %cst_124 [1] : vector<32x1024xf32> to vector<32xf32>
    %117 = vector.shape_cast %116 : vector<32xf32> to vector<32x1xf32>
    %c0_125 = arith.constant 0 : index
    %c0_126 = arith.constant 0 : index
    %c1 = arith.constant 1 : index
    %118 = vector.load %arg5[%c0_125, %c0_126, %c1] : memref<1x32x2xf32, #tpu.memory_space<vmem>>, vector<1x32x1xf32>
    %119 = vector.shape_cast %118 : vector<1x32x1xf32> to vector<32x1xf32>
    %120 = vector.shape_cast %117 : vector<32x1xf32> to vector<1x32x1xf32>
    tpu.vector_store %arg5[%c0_125, %c0_126, %c1], %120 {strides = array<i32>} : memref<1x32x2xf32, #tpu.memory_space<vmem>>, vector<1x32x1xf32>,
    return
  }
  func.func @transform_0(%arg0: i32) -> (i32, i32, i32) {
    %c0_i32 = arith.constant 0 : i32
    %c0_i32_0 = arith.constant 0 : i32
    %c0_i32_1 = arith.constant 0 : i32
    return %arg0, %c0_i32, %c0_i32_0 : i32, i32, i32
  }
  func.func @transform_1(%arg0: i32) -> (i32, i32) {
    %c0_i32 = arith.constant 0 : i32
    %c0_i32_0 = arith.constant 0 : i32
    %c0_i32_1 = arith.constant 0 : i32
    return %c0_i32, %c0_i32_0 : i32, i32
  }
  func.func @transform_2(%arg0: i32) -> (i32, i32) {
    %c0_i32 = arith.constant 0 : i32
    %c0_i32_0 = arith.constant 0 : i32
    %c0_i32_1 = arith.constant 0 : i32
    return %c0_i32, %c0_i32_0 : i32, i32
  }
  func.func @transform_3(%arg0: i32) -> (i32, i32, i32) {
    %c0_i32 = arith.constant 0 : i32
    %c0_i32_0 = arith.constant 0 : i32
    %c0_i32_1 = arith.constant 0 : i32
    return %arg0, %c0_i32, %c0_i32_0 : i32, i32, i32
  }
  func.func @transform_4(%arg0: i32) -> (i32, i32, i32) {
    %c0_i32 = arith.constant 0 : i32
    %c0_i32_0 = arith.constant 0 : i32
    %c0_i32_1 = arith.constant 0 : i32
    return %arg0, %c0_i32, %c0_i32_0 : i32, i32, i32
  }
}

module attributes {stable_mosaic.version = 11 : i64} {
  func.func @_fc_kernel(%arg0: i32, %arg1: i32, %arg2: memref<2x8192xbf16, #tpu.memory_space<vmem>>, %arg3: memref<8192x128xi8, #tpu.memory_space<vmem>>, %arg4: memref<1x2x128xf32, #tpu.memory_space<vmem>>, %arg5: memref<2x128xf32, #tpu.memory_space<vmem>>) attributes {dimension_semantics = [#tpu.dimension_semantics<parallel>, #tpu.dimension_semantics<arbitrary>], iteration_bounds = array<i64: 2, 2>, scalar_prefetch = 0 : i64, scratch_operands = 1 : i64, tpu.core_type = #tpu.core_type<tc>, window_params = [{transform_indices = @transform_0, window_bounds = array<i64: 2, 8192>}, {transform_indices = @transform_1, window_bounds = array<i64: 8192, 128>}, {transform_indices = @transform_2, window_bounds = array<i64: 1, 2, 128>}]} {
    %c0_i32 = arith.constant 0 : i32
    %0 = arith.cmpi eq, %arg1, %c0_i32 : i32
    %1 = arith.extui %0 : i1 to i32
    %c0_i32_0 = arith.constant 0 : i32
    %2 = arith.cmpi ne, %1, %c0_i32_0 : i32
    scf.if %2 {
      %cst_33 = arith.constant 0.000000e+00 : f32
      %38 = vector.broadcast %cst_33 : f32 to vector<2x128xf32>
      %c0_34 = arith.constant 0 : index
      %c0_35 = arith.constant 0 : index
      %39 = vector.load %arg5[%c0_34, %c0_35] : memref<2x128xf32, #tpu.memory_space<vmem>>, vector<2x128xf32>
      tpu.vector_store %arg5[%c0_34, %c0_35], %38 {strides = array<i32>} : memref<2x128xf32, #tpu.memory_space<vmem>>, vector<2x128xf32>,
    } else {
    }
    %c0 = arith.constant 0 : index
    %c0_1 = arith.constant 0 : index
    %3 = vector.load %arg3[%c0, %c0_1] : memref<8192x128xi8, #tpu.memory_space<vmem>>, vector<2048x128xi8>
    %4 = arith.sitofp %3 : vector<2048x128xi8> to vector<2048x128xf32>
    %5 = arith.truncf %4 : vector<2048x128xf32> to vector<2048x128xbf16>
    %c0_2 = arith.constant 0 : index
    %c0_3 = arith.constant 0 : index
    %6 = vector.load %arg5[%c0_2, %c0_3] : memref<2x128xf32, #tpu.memory_space<vmem>>, vector<2x128xf32>
    %c0_4 = arith.constant 0 : index
    %c0_5 = arith.constant 0 : index
    %7 = vector.load %arg2[%c0_4, %c0_5] : memref<2x8192xbf16, #tpu.memory_space<vmem>>, vector<2x2048xbf16>
    %cst = arith.constant dense<0.000000e+00> : vector<2x128xf32>
    %8 = tpu.matmul %7, %5, %cst {dimension_numbers = #tpu.dot_dimension_numbers<[1], [0], [0], [1], [0, 0, 1, 1], [], []>} : vector<2x2048xbf16>, vector<2048x128xbf16>, vector<2x128xf32> -> vector<2x128xf32>
    %9 = arith.addf %6, %8 : vector<2x128xf32>
    %c0_6 = arith.constant 0 : index
    %c0_7 = arith.constant 0 : index
    %10 = vector.load %arg5[%c0_6, %c0_7] : memref<2x128xf32, #tpu.memory_space<vmem>>, vector<2x128xf32>
    tpu.vector_store %arg5[%c0_6, %c0_7], %9 {strides = array<i32>} : memref<2x128xf32, #tpu.memory_space<vmem>>, vector<2x128xf32>,
    %c2048 = arith.constant 2048 : index
    %c0_8 = arith.constant 0 : index
    %11 = vector.load %arg3[%c2048, %c0_8] : memref<8192x128xi8, #tpu.memory_space<vmem>>, vector<2048x128xi8>
    %12 = arith.sitofp %11 : vector<2048x128xi8> to vector<2048x128xf32>
    %13 = arith.truncf %12 : vector<2048x128xf32> to vector<2048x128xbf16>
    %c0_9 = arith.constant 0 : index
    %c0_10 = arith.constant 0 : index
    %14 = vector.load %arg5[%c0_9, %c0_10] : memref<2x128xf32, #tpu.memory_space<vmem>>, vector<2x128xf32>
    %c0_11 = arith.constant 0 : index
    %c2048_12 = arith.constant 2048 : index
    %15 = vector.load %arg2[%c0_11, %c2048_12] : memref<2x8192xbf16, #tpu.memory_space<vmem>>, vector<2x2048xbf16>
    %cst_13 = arith.constant dense<0.000000e+00> : vector<2x128xf32>
    %16 = tpu.matmul %15, %13, %cst_13 {dimension_numbers = #tpu.dot_dimension_numbers<[1], [0], [0], [1], [0, 0, 1, 1], [], []>} : vector<2x2048xbf16>, vector<2048x128xbf16>, vector<2x128xf32> -> vector<2x128xf32>
    %17 = arith.addf %14, %16 : vector<2x128xf32>
    %c0_14 = arith.constant 0 : index
    %c0_15 = arith.constant 0 : index
    %18 = vector.load %arg5[%c0_14, %c0_15] : memref<2x128xf32, #tpu.memory_space<vmem>>, vector<2x128xf32>
    tpu.vector_store %arg5[%c0_14, %c0_15], %17 {strides = array<i32>} : memref<2x128xf32, #tpu.memory_space<vmem>>, vector<2x128xf32>,
    %c4096 = arith.constant 4096 : index
    %c0_16 = arith.constant 0 : index
    %19 = vector.load %arg3[%c4096, %c0_16] : memref<8192x128xi8, #tpu.memory_space<vmem>>, vector<2048x128xi8>
    %20 = arith.sitofp %19 : vector<2048x128xi8> to vector<2048x128xf32>
    %21 = arith.truncf %20 : vector<2048x128xf32> to vector<2048x128xbf16>
    %c0_17 = arith.constant 0 : index
    %c0_18 = arith.constant 0 : index
    %22 = vector.load %arg5[%c0_17, %c0_18] : memref<2x128xf32, #tpu.memory_space<vmem>>, vector<2x128xf32>
    %c0_19 = arith.constant 0 : index
    %c4096_20 = arith.constant 4096 : index
    %23 = vector.load %arg2[%c0_19, %c4096_20] : memref<2x8192xbf16, #tpu.memory_space<vmem>>, vector<2x2048xbf16>
    %cst_21 = arith.constant dense<0.000000e+00> : vector<2x128xf32>
    %24 = tpu.matmul %23, %21, %cst_21 {dimension_numbers = #tpu.dot_dimension_numbers<[1], [0], [0], [1], [0, 0, 1, 1], [], []>} : vector<2x2048xbf16>, vector<2048x128xbf16>, vector<2x128xf32> -> vector<2x128xf32>
    %25 = arith.addf %22, %24 : vector<2x128xf32>
    %c0_22 = arith.constant 0 : index
    %c0_23 = arith.constant 0 : index
    %26 = vector.load %arg5[%c0_22, %c0_23] : memref<2x128xf32, #tpu.memory_space<vmem>>, vector<2x128xf32>
    tpu.vector_store %arg5[%c0_22, %c0_23], %25 {strides = array<i32>} : memref<2x128xf32, #tpu.memory_space<vmem>>, vector<2x128xf32>,
    %c6144 = arith.constant 6144 : index
    %c0_24 = arith.constant 0 : index
    %27 = vector.load %arg3[%c6144, %c0_24] : memref<8192x128xi8, #tpu.memory_space<vmem>>, vector<2048x128xi8>
    %28 = arith.sitofp %27 : vector<2048x128xi8> to vector<2048x128xf32>
    %29 = arith.truncf %28 : vector<2048x128xf32> to vector<2048x128xbf16>
    %c0_25 = arith.constant 0 : index
    %c0_26 = arith.constant 0 : index
    %30 = vector.load %arg5[%c0_25, %c0_26] : memref<2x128xf32, #tpu.memory_space<vmem>>, vector<2x128xf32>
    %c0_27 = arith.constant 0 : index
    %c6144_28 = arith.constant 6144 : index
    %31 = vector.load %arg2[%c0_27, %c6144_28] : memref<2x8192xbf16, #tpu.memory_space<vmem>>, vector<2x2048xbf16>
    %cst_29 = arith.constant dense<0.000000e+00> : vector<2x128xf32>
    %32 = tpu.matmul %31, %29, %cst_29 {dimension_numbers = #tpu.dot_dimension_numbers<[1], [0], [0], [1], [0, 0, 1, 1], [], []>} : vector<2x2048xbf16>, vector<2048x128xbf16>, vector<2x128xf32> -> vector<2x128xf32>
    %33 = arith.addf %30, %32 : vector<2x128xf32>
    %c0_30 = arith.constant 0 : index
    %c0_31 = arith.constant 0 : index
    %34 = vector.load %arg5[%c0_30, %c0_31] : memref<2x128xf32, #tpu.memory_space<vmem>>, vector<2x128xf32>
    tpu.vector_store %arg5[%c0_30, %c0_31], %33 {strides = array<i32>} : memref<2x128xf32, #tpu.memory_space<vmem>>, vector<2x128xf32>,
    %c1_i32 = arith.constant 1 : i32
    %35 = arith.cmpi eq, %arg1, %c1_i32 : i32
    %36 = arith.extui %35 : i1 to i32
    %c0_i32_32 = arith.constant 0 : i32
    %37 = arith.cmpi ne, %36, %c0_i32_32 : i32
    scf.if %37 {
      %c0_33 = arith.constant 0 : index
      %c0_34 = arith.constant 0 : index
      %38 = vector.load %arg5[%c0_33, %c0_34] : memref<2x128xf32, #tpu.memory_space<vmem>>, vector<2x128xf32>
      %c0_35 = arith.constant 0 : index
      %c0_36 = arith.constant 0 : index
      %c0_37 = arith.constant 0 : index
      %39 = vector.load %arg4[%c0_35, %c0_36, %c0_37] : memref<1x2x128xf32, #tpu.memory_space<vmem>>, vector<1x2x128xf32>
      %40 = vector.shape_cast %39 : vector<1x2x128xf32> to vector<2x128xf32>
      %41 = vector.shape_cast %38 : vector<2x128xf32> to vector<1x2x128xf32>
      tpu.vector_store %arg4[%c0_35, %c0_36, %c0_37], %41 {strides = array<i32>} : memref<1x2x128xf32, #tpu.memory_space<vmem>>, vector<1x2x128xf32>,
    } else {
    }
    return
  }
  func.func @transform_0(%arg0: i32, %arg1: i32) -> (i32, i32) {
    %c2_i32 = arith.constant 2 : i32
    %0 = arith.muli %arg0, %c2_i32 : i32
    %1 = arith.addi %0, %arg1 : i32
    %c0_i32 = arith.constant 0 : i32
    %c0_i32_0 = arith.constant 0 : i32
    return %c0_i32, %1 : i32, i32
  }
  func.func @transform_1(%arg0: i32, %arg1: i32) -> (i32, i32) {
    %c2_i32 = arith.constant 2 : i32
    %0 = arith.muli %arg0, %c2_i32 : i32
    %1 = arith.addi %0, %arg1 : i32
    %c0_i32 = arith.constant 0 : i32
    %c0_i32_0 = arith.constant 0 : i32
    return %1, %c0_i32 : i32, i32
  }
  func.func @transform_2(%arg0: i32, %arg1: i32) -> (i32, i32, i32) {
    %c0_i32 = arith.constant 0 : i32
    %c0_i32_0 = arith.constant 0 : i32
    %c0_i32_1 = arith.constant 0 : i32
    return %arg0, %c0_i32, %c0_i32_0 : i32, i32, i32
  }
}

</mosaic_0001>

<llo_original>
// kernel: actor_critic_tag_forward.2
$region0: #{actor_critic_tag_forward.2}
  #allocation0 [shape = 'u32[]', space=smem, size = 0x4, offset = 0x4, fixed_abs, tag = 'smem constant byte address 0x4 - core index']
  #allocation1 [shape = 'u32[144,128]{1,0:T(1,128)}', space=vmem, size = 0x12000, scoped, tag = 'internal scratch']
  #allocation2 [shape = 'f32[32,1024]{1,0:T(8,128)}', space=vmem, size = 0x20000, scoped, tag = 'scratch operand']
  %s0 = inlined_call_operand.vmem [shape: bf16[2,9,16384], index: 0, kind: input, shape index: {}]
  %s1 = inlined_call_operand.vmem [shape: bf16[32,9], index: 1, kind: input, shape index: {}]
  %s2 = inlined_call_operand.vmem [shape: f32[32,1], index: 2, kind: input, shape index: {}]
  %s3 = inlined_call_operand.vmem [shape: bf16[2,32,1024], index: 3, kind: output, shape index: {0}]
  %s4 = inlined_call_operand.vmem [shape: f32[2,32,2], index: 4, kind: output, shape index: {1}]
  %5 = xla_tuple %s3, %s4
  %s6 = sld [smem:[#allocation0]]
  $region53: #{actor_critic_tag_forward.2} parent=0
    _
  %s8 = ssub.s32 1, %s6
  %s9 = scalar_select 0, %s8, %s6
  loop: start=0, step=1, limit=4
  $region2: #{actor_critic_tag_forward.2} parent=0 // loop_pre_header
    _
  $region3: #{actor_critic_tag_forward.2} parent=0 // loop_header
    %s11 = sphi 0, %s15
    %p12 = scmp.ge.s32.totalorder %s11, 4
    %s21 = sphi 0, %s23
    %s24 = sphi 0, %s21
    %s25 = sphi 0, %s24
    %s41 = sphi 0, %s25
    %s45 = sphi 0, %s45
    %s47 = sphi 0, %s45
    %s48 = sphi 0, %s47
    %s62 = sphi 0, %s48
    %s66 = sphi 0, %s66
    %s68 = sphi 0, %s66
    %s69 = sphi 0, %s68
    %s83 = sphi 0, %s69
    %s89 = sphi 0, %s91
    %s92 = sphi 0, %s89
    %s93 = sphi 0, %s92
    %s109 = sphi 0, %s93
    %s115 = sphi 0, %s117
    %s118 = sphi 0, %s115
    %s119 = sphi 0, %s118
    %s135 = sphi 0, %s119
  $region4: #{actor_critic_tag_forward.2} parent=0 // loop_header_branch
    %14 = sbr.rel (%p12) target = $region8
  $region5: #{actor_critic_tag_forward.2} parent=0 // loop_body
    %s16 = ssub.s32 %s11, 1
    %s17 = ssub.s32 %s11, 2
    %s18 = sadd.s32 %s11, 1
    %s19 = ssub.s32 %s11, %s18
    %p20 = scmp.eq.s32.totalorder %s19, 0
    %s22 = sadd.s32 %s21, 1
    %s23 = scalar_select %p20, %s21, %s22
    %p26 = pneg %p20
    %p27 = scmp.eq.s32.totalorder %s11, 1
    %p28 = por %p26, %p27
    %p29 = scmp.ne.s32.totalorder %s21, %s24
    %p30 = scmp.eq.s32.totalorder %s11, 0
    %p31 = por %p29, %p30
    %p32 = scmp.ne.s32.totalorder %s21, %s24
    %p33 = scmp.eq.s32.totalorder %s16, 1
    %p34 = por %p32, %p33
    %p35 = scmp.ne.s32.totalorder %s24, %s25
    %p36 = scmp.eq.s32.totalorder %s16, 0
    %p37 = por %p35, %p36
    %p38 = scmp.ne.s32.totalorder %s24, %s25
    %p39 = scmp.eq.s32.totalorder %s17, 1
    %p40 = por %p38, %p39
    %p42 = scmp.ne.s32.totalorder %s25, %s41
    %p43 = scmp.eq.s32.totalorder %s17, 0
    %p44 = por %p42, %p43
    %s46 = sadd.s32 %s45, 1
    %p49 = scmp.eq.s32.totalorder %s11, 1
    %p50 = scmp.ne.s32.totalorder %s45, %s47
    %p51 = scmp.eq.s32.totalorder %s11, 0
    %p52 = por %p50, %p51
    %p53 = scmp.ne.s32.totalorder %s45, %s47
    %p54 = scmp.eq.s32.totalorder %s16, 1
    %p55 = por %p53, %p54
    %p56 = scmp.ne.s32.totalorder %s47, %s48
    %p57 = scmp.eq.s32.totalorder %s16, 0
    %p58 = por %p56, %p57
    %p59 = scmp.ne.s32.totalorder %s47, %s48
    %p60 = scmp.eq.s32.totalorder %s17, 1
    %p61 = por %p59, %p60
    %p63 = scmp.ne.s32.totalorder %s48, %s62
    %p64 = scmp.eq.s32.totalorder %s17, 0
    %p65 = por %p63, %p64
    %s67 = sadd.s32 %s66, 1
    %p70 = scmp.eq.s32.totalorder %s11, 1
    %p71 = scmp.ne.s32.totalorder %s66, %s68
    %p72 = scmp.eq.s32.totalorder %s11, 0
    %p73 = por %p71, %p72
    %p74 = scmp.ne.s32.totalorder %s66, %s68
    %p75 = scmp.eq.s32.totalorder %s16, 1
    %p76 = por %p74, %p75
    %p77 = scmp.ne.s32.totalorder %s68, %s69
    %p78 = scmp.eq.s32.totalorder %s16, 0
    %p79 = por %p77, %p78
    %p80 = scmp.ne.s32.totalorder %s68, %s69
    %p81 = scmp.eq.s32.totalorder %s17, 1
    %p82 = por %p80, %p81
    %p84 = scmp.ne.s32.totalorder %s69, %s83
    %p85 = scmp.eq.s32.totalorder %s17, 0
    %p86 = por %p84, %p85
    %s87 = ssub.s32 %s11, %s18
    %p88 = scmp.eq.s32.totalorder %s87, 0
    %s90 = sadd.s32 %s89, 1
    %s91 = scalar_select %p88, %s89, %s90
    %p94 = pneg %p88
    %p95 = scmp.eq.s32.totalorder %s11, 1
    %p96 = por %p94, %p95
    %p97 = scmp.ne.s32.totalorder %s89, %s92
    %p98 = scmp.eq.s32.totalorder %s11, 0
    %p99 = por %p97, %p98
    %p100 = scmp.ne.s32.totalorder %s89, %s92
    %p101 = scmp.eq.s32.totalorder %s16, 1
    %p102 = por %p100, %p101
    %p103 = scmp.ne.s32.totalorder %s92, %s93
    %p104 = scmp.eq.s32.totalorder %s16, 0
    %p105 = por %p103, %p104
    %p106 = scmp.ne.s32.totalorder %s92, %s93
    %p107 = scmp.eq.s32.totalorder %s17, 1
    %p108 = por %p106, %p107
    %p110 = scmp.ne.s32.totalorder %s93, %s109
    %p111 = scmp.eq.s32.totalorder %s17, 0
    %p112 = por %p110, %p111
    %s113 = ssub.s32 %s11, %s18
    %p114 = scmp.eq.s32.totalorder %s113, 0
    %s116 = sadd.s32 %s115, 1
    %s117 = scalar_select %p114, %s115, %s116
    %p120 = pneg %p114
    %p121 = scmp.eq.s32.totalorder %s11, 1
    %p122 = por %p120, %p121
    %p123 = scmp.ne.s32.totalorder %s115, %s118
    %p124 = scmp.eq.s32.totalorder %s11, 0
    %p125 = por %p123, %p124
    %p126 = scmp.ne.s32.totalorder %s115, %s118
    %p127 = scmp.eq.s32.totalorder %s16, 1
    %p128 = por %p126, %p127
    %p129 = scmp.ne.s32.totalorder %s118, %s119
    %p130 = scmp.eq.s32.totalorder %s16, 0
    %p131 = por %p129, %p130
    %p132 = scmp.ne.s32.totalorder %s118, %s119
    %p133 = scmp.eq.s32.totalorder %s17, 1
    %p134 = por %p132, %p133
    %p136 = scmp.ne.s32.totalorder %s119, %s135
    %p137 = scmp.eq.s32.totalorder %s17, 0
    %p138 = por %p136, %p137
    %p139 = scmp.le.s32.totalorder 1, %s11
    %p140 = scmp.lt.s32.totalorder %s11, 3
    %p141 = pnand %p139, %p140
    %p142 = pneg %p141
    // Predicated region
    $region9: #{actor_critic_tag_forward.2} parent=5 // pred_check
      _
    $region10: #{actor_critic_tag_forward.2} parent=5 // pred_check_branch
      %144 = sbr.rel (%p141) target = $region12
    $region11: #{actor_critic_tag_forward.2} parent=5 // pred_region
      %s145 = ssub.s32 %s11, 1
      // Predicated region
      $region13: #{actor_critic_tag_forward.2} parent=11 // pred_check
        %p146 = pneg %p58
      $region14: #{actor_critic_tag_forward.2} parent=11 // pred_check_branch
        %148 = sbr.rel (%p146) target = $region16
      $region15: #{actor_critic_tag_forward.2} parent=11 // pred_region
        _
      $region16: #{actor_critic_tag_forward.2} parent=11 // pred_fallthru
        _
      // Predicated region
      $region17: #{actor_critic_tag_forward.2} parent=11 // pred_check
        %p149 = pneg %p79
      $region18: #{actor_critic_tag_forward.2} parent=11 // pred_check_branch
        %151 = sbr.rel (%p149) target = $region20
      $region19: #{actor_critic_tag_forward.2} parent=11 // pred_region
        _
      $region20: #{actor_critic_tag_forward.2} parent=11 // pred_fallthru
        _
    $region12: #{actor_critic_tag_forward.2} parent=5 // pred_fallthru
      _
    %p152 = scmp.lt.s32.totalorder %s11, 2
    // Predicated region
    $region21: #{actor_critic_tag_forward.2} parent=5 // pred_check
      %p153 = pneg %p152
    $region22: #{actor_critic_tag_forward.2} parent=5 // pred_check_branch
      %155 = sbr.rel (%p153) target = $region24
    $region23: #{actor_critic_tag_forward.2} parent=5 // pred_region
      // Predicated region
      $region25: #{actor_critic_tag_forward.2} parent=23 // pred_check
        %p156 = pneg %p31
      $region26: #{actor_critic_tag_forward.2} parent=23 // pred_check_branch
        %158 = sbr.rel (%p156) target = $region28
      $region27: #{actor_critic_tag_forward.2} parent=23 // pred_region
        %p159 = scmp.lt.s32.totalorder %s11, 1
        %s160 = scalar_select %p159, %s11, 1
        %s161 = smul.addr %s160, 256
        %s162 = smul.addr %s161, 4
        %s163 = scalar_lea.vmem %s0, %s162
      $region28: #{actor_critic_tag_forward.2} parent=23 // pred_fallthru
        _
    $region24: #{actor_critic_tag_forward.2} parent=5 // pred_fallthru
      _
    %p164 = scmp.le.s32.totalorder 1, %s11
    %p165 = scmp.lt.s32.totalorder %s11, 3
    %p166 = pnand %p164, %p165
    %p167 = pneg %p166
    // Predicated region
    $region29: #{actor_critic_tag_forward.2} parent=5 // pred_check
      _
    $region30: #{actor_critic_tag_forward.2} parent=5 // pred_check_branch
      %169 = sbr.rel (%p166) target = $region32
    $region31: #{actor_critic_tag_forward.2} parent=5 // pred_region
      %s170 = ssub.s32 %s11, 1
      %p171 = scmp.lt.s32.totalorder %s16, 1
      %s172 = scalar_select %p171, %s16, 1
      %s173 = smul.addr %s172, 256
      %s174 = smul.addr %s173, 4
      %s175 = scalar_lea.vmem %s0, %s174
      %p176 = pneg %p37
      %p177 = pneg %p34
      %p178 = pneg %p58
      %p179 = pneg %p55
      %p180 = pneg %p79
      %p181 = pneg %p76
      %p182 = pneg %p105
      %p183 = pneg %p102
      %p184 = scmp.lt.s32.totalorder %s16, 1
      %s185 = scalar_select %p184, %s16, 1
      %s186 = smul.addr %s185, 32
      %s187 = smul.addr %s186, 4
      %s188 = scalar_lea.vmem %s3, %s187
      %p189 = pneg %p131
      %p190 = pneg %p128
      %p191 = scmp.lt.s32.totalorder %s16, 1
      %s192 = scalar_select %p191, %s16, 1
      %s193 = smul.addr %s192, 4
      %s194 = smul.addr %s193, 8
      %s195 = scalar_lea.vmem %s4, %s194
      %p196 = scmp.lt.s32.totalorder %s16, 1
      %s197 = scalar_select %p196, %s16, 1
      %s198 = smul.addr %s197, 256
      %s199 = smul.addr %s198, 4
      %s200 = scalar_lea.vmem %s0, %s199
      %p201 = scmp.lt.s32.totalorder %s16, 1
      %s202 = scalar_select %p201, %s16, 1
      %s203 = smul.addr %s202, 32
      %s204 = smul.addr %s203, 4
      %s205 = scalar_lea.vmem %s3, %s204
      %p206 = scmp.lt.s32.totalorder %s16, 1
      %s207 = scalar_select %p206, %s16, 1
      %s208 = smul.addr %s207, 4
      %s209 = smul.addr %s208, 8
      %s210 = scalar_lea.vmem %s4, %s209
      %v212 = vld [vmem:[%s1] sm:$0xf]
      %v213 = vld [vmem:[%s1 + $0x4] sm:$0xf]
      %v214 = vld [vmem:[%s1 + $0x8] sm:$0xf]
      %v215 = vld [vmem:[%s1 + $0xc] sm:$0xf]
      %v216 = vld [vmem:[%s200] sm:$0xff]
      %v217 = vld [vmem:[%s200 + $0x8] sm:$0xff]
      %v218 = vld [vmem:[%s200 + $0x10] sm:$0xff]
      %v219 = vld [vmem:[%s200 + $0x18] sm:$0xff]
      %v220 = vld [vmem:[%s200 + $0x200] sm:$0x11]
      %v221 = vld [vmem:[%s200 + $0x208] sm:$0x11]
      %v222 = vld [vmem:[%s200 + $0x210] sm:$0x11]
      %v223 = vld [vmem:[%s200 + $0x218] sm:$0x11]
      %v228 = vunpack.c.l.b16 %v212
      %v229 = vunpack.c.l.b16 %v213
      %v230 = vunpack.c.l.b16 %v214
      %v231 = vunpack.c.l.b16 %v215
      %v232 = vpack.c.b16 %v229, %v228
      %v233 = vpack.c.b16 %v231, %v230
      %v242 = vunpack.c.l.b16 %v216
      %v243 = vunpack.c.h.b16 %v216
      %v244 = vunpack.c.l.b16 %v217
      %v245 = vunpack.c.h.b16 %v217
      %v246 = vunpack.c.l.b16 %v218
      %v247 = vunpack.c.h.b16 %v218
      %v248 = vunpack.c.l.b16 %v219
      %v249 = vunpack.c.h.b16 %v219
      %v250 = vunpack.c.l.b16 %v220
      %v251 = vunpack.c.h.b16 %v220
      %v252 = vunpack.c.l.b16 %v221
      %v253 = vunpack.c.h.b16 %v221
      %v254 = vunpack.c.l.b16 %v222
      %v255 = vunpack.c.h.b16 %v222
      %v256 = vunpack.c.l.b16 %v223
      %v257 = vunpack.c.h.b16 %v223
      %v258 = vpack.c.b16 %v250, %v242
      %v259 = vpack.c.b16 %v251, %v243
      %v260 = vpack.c.b16 %v252, %v244
      %v261 = vpack.c.b16 %v253, %v245
      %v262 = vpack.c.b16 %v254, %v246
      %v263 = vpack.c.b16 %v255, %v247
      %v264 = vpack.c.b16 %v256, %v248
      %v265 = vpack.c.b16 %v257, %v249
      %vm266 = vcmask 72704
      %v268 = vsel %vm266, %v232, 0
      %v271 = vsel %vm266, %v233, 0
      %vm273 = vcmask 1043456
      %vm274 = vcmask 1044480
      %v275 = vsel %vm273, 4294967295, 65535
      %v276 = vsel %vm274, %v275, 0
      %v278 = vand.u32 %v258, %v276
      %v281 = vand.u32 %v259, %v276
      %v284 = vand.u32 %v260, %v276
      %v287 = vand.u32 %v261, %v276
      %v290 = vand.u32 %v262, %v276
      %v293 = vand.u32 %v263, %v276
      %v296 = vand.u32 %v264, %v276
      %v299 = vand.u32 %v265, %v276
      %301 = vmatprep.subr.bf16.mxu0 %v281
      %302 = vmatpush1.bf16.msra.mxu0 %v278
      %303 = vmatprep.subr.bf16.mxu0 0
      %304 = vmatpush1.bf16.msra.mxu0 0
      %305 = vmatprep.subr.bf16.mxu0 0
      %306 = vmatpush1.bf16.msra.mxu0 0
      %307 = vmatprep.subr.bf16.mxu0 0
      %308 = vmatpush1.bf16.msra.mxu0 0
      %309 = vmatprep.subr.bf16.mxu0 0
      %310 = vmatpush1.bf16.msra.mxu0 0
      %311 = vmatprep.subr.bf16.mxu0 0
      %312 = vmatpush1.bf16.msra.mxu0 0
      %313 = vmatprep.subr.bf16.mxu0 0
      %314 = vmatpush1.bf16.msra.mxu0 0
      %315 = vmatprep.subr.bf16.mxu0 0
      %316 = vmatpush1.bf16.msra.mxu0 0
      %317 = vmatprep.subr.bf16.mxu0 0
      %318 = vmatpush1.bf16.msra.mxu0 0
      %319 = vmatprep.subr.bf16.mxu0 0
      %320 = vmatpush1.bf16.msra.mxu0 0
      %321 = vmatprep.subr.bf16.mxu0 0
      %322 = vmatpush1.bf16.msra.mxu0 0
      %323 = vmatprep.subr.bf16.mxu0 0
      %324 = vmatpush1.bf16.msra.mxu0 0
      %325 = vmatprep.subr.bf16.mxu0 0
      %326 = vmatpush1.bf16.msra.mxu0 0
      %327 = vmatprep.subr.bf16.mxu0 0
      %328 = vmatpush1.bf16.msra.mxu0 0
      %329 = vmatprep.subr.bf16.mxu0 0
      %330 = vmatpush1.bf16.msra.mxu0 0
      %331 = vmatprep.subr.bf16.mxu0 0
      %332 = vmatpush1.bf16.msra.mxu0 0
      %333 = vmatprep.mubr.bf16.mxu0 0
      %334 = vmatmul.mubr.bf16.gmra.mrb[0].mxu0 %v268
      %v335 = vpop.f32.mrb[0].mxu0
      %v336 = vadd.f32 0.0, %v335
      %v337 = vpop.f32.mrb[0].mxu0
      %v338 = vadd.f32 0.0, %v337
      %v339 = vpop.f32.mrb[0].mxu0
      %v340 = vadd.f32 0.0, %v339
      %v341 = vpop.f32.mrb[0].mxu0
      %v342 = vadd.f32 0.0, %v341
      %343 = vmatprep.mubr.bf16.mxu0 0
      %344 = vmatmul.mubr.bf16.gmra.mrb[0].mxu0 %v271
      %v345 = vpop.f32.mrb[0].mxu0
      %v346 = vadd.f32 0.0, %v345
      %v347 = vpop.f32.mrb[0].mxu0
      %v348 = vadd.f32 0.0, %v347
      %v349 = vpop.f32.mrb[0].mxu0
      %v350 = vadd.f32 0.0, %v349
      %v351 = vpop.f32.mrb[0].mxu0
      %v352 = vadd.f32 0.0, %v351
      %353 = vdwg.mxu0
      %354 = vmatprep.subr.bf16.mxu0 %v287
      %355 = vmatpush1.bf16.msra.mxu0 %v284
      %356 = vmatprep.subr.bf16.mxu0 0
      %357 = vmatpush1.bf16.msra.mxu0 0
      %358 = vmatprep.subr.bf16.mxu0 0
      %359 = vmatpush1.bf16.msra.mxu0 0
      %360 = vmatprep.subr.bf16.mxu0 0
      %361 = vmatpush1.bf16.msra.mxu0 0
      %362 = vmatprep.subr.bf16.mxu0 0
      %363 = vmatpush1.bf16.msra.mxu0 0
      %364 = vmatprep.subr.bf16.mxu0 0
      %365 = vmatpush1.bf16.msra.mxu0 0
      %366 = vmatprep.subr.bf16.mxu0 0
      %367 = vmatpush1.bf16.msra.mxu0 0
      %368 = vmatprep.subr.bf16.mxu0 0
      %369 = vmatpush1.bf16.msra.mxu0 0
      %370 = vmatprep.subr.bf16.mxu0 0
      %371 = vmatpush1.bf16.msra.mxu0 0
      %372 = vmatprep.subr.bf16.mxu0 0
      %373 = vmatpush1.bf16.msra.mxu0 0
      %374 = vmatprep.subr.bf16.mxu0 0
      %375 = vmatpush1.bf16.msra.mxu0 0
      %376 = vmatprep.subr.bf16.mxu0 0
      %377 = vmatpush1.bf16.msra.mxu0 0
      %378 = vmatprep.subr.bf16.mxu0 0
      %379 = vmatpush1.bf16.msra.mxu0 0
      %380 = vmatprep.subr.bf16.mxu0 0
      %381 = vmatpush1.bf16.msra.mxu0 0
      %382 = vmatprep.subr.bf16.mxu0 0
      %383 = vmatpush1.bf16.msra.mxu0 0
      %384 = vmatprep.subr.bf16.mxu0 0
      %385 = vmatpush1.bf16.msra.mxu0 0
      %386 = vmatprep.mubr.bf16.mxu0 0
      %387 = vmatmul.mubr.bf16.gmra.mrb[0].mxu0 %v268
      %v388 = vpop.f32.mrb[0].mxu0
      %v389 = vadd.f32 0.0, %v388
      %v390 = vpop.f32.mrb[0].mxu0
      %v391 = vadd.f32 0.0, %v390
      %v392 = vpop.f32.mrb[0].mxu0
      %v393 = vadd.f32 0.0, %v392
      %v394 = vpop.f32.mrb[0].mxu0
      %v395 = vadd.f32 0.0, %v394
      %396 = vmatprep.mubr.bf16.mxu0 0
      %397 = vmatmul.mubr.bf16.gmra.mrb[0].mxu0 %v271
      %v398 = vpop.f32.mrb[0].mxu0
      %v399 = vadd.f32 0.0, %v398
      %v400 = vpop.f32.mrb[0].mxu0
      %v401 = vadd.f32 0.0, %v400
      %v402 = vpop.f32.mrb[0].mxu0
      %v403 = vadd.f32 0.0, %v402
      %v404 = vpop.f32.mrb[0].mxu0
      %v405 = vadd.f32 0.0, %v404
      %406 = vdwg.mxu0
      %407 = vmatprep.subr.bf16.mxu0 %v293
      %408 = vmatpush1.bf16.msra.mxu0 %v290
      %409 = vmatprep.subr.bf16.mxu0 0
      %410 = vmatpush1.bf16.msra.mxu0 0
      %411 = vmatprep.subr.bf16.mxu0 0
      %412 = vmatpush1.bf16.msra.mxu0 0
      %413 = vmatprep.subr.bf16.mxu0 0
      %414 = vmatpush1.bf16.msra.mxu0 0
      %415 = vmatprep.subr.bf16.mxu0 0
      %416 = vmatpush1.bf16.msra.mxu0 0
      %417 = vmatprep.subr.bf16.mxu0 0
      %418 = vmatpush1.bf16.msra.mxu0 0
      %419 = vmatprep.subr.bf16.mxu0 0
      %420 = vmatpush1.bf16.msra.mxu0 0
      %421 = vmatprep.subr.bf16.mxu0 0
      %422 = vmatpush1.bf16.msra.mxu0 0
      %423 = vmatprep.subr.bf16.mxu0 0
      %424 = vmatpush1.bf16.msra.mxu0 0
      %425 = vmatprep.subr.bf16.mxu0 0
      %426 = vmatpush1.bf16.msra.mxu0 0
      %427 = vmatprep.subr.bf16.mxu0 0
      %428 = vmatpush1.bf16.msra.mxu0 0
      %429 = vmatprep.subr.bf16.mxu0 0
      %430 = vmatpush1.bf16.msra.mxu0 0
      %431 = vmatprep.subr.bf16.mxu0 0
      %432 = vmatpush1.bf16.msra.mxu0 0
      %433 = vmatprep.subr.bf16.mxu0 0
      %434 = vmatpush1.bf16.msra.mxu0 0
      %435 = vmatprep.subr.bf16.mxu0 0
      %436 = vmatpush1.bf16.msra.mxu0 0
      %437 = vmatprep.subr.bf16.mxu0 0
      %438 = vmatpush1.bf16.msra.mxu0 0
      %439 = vmatprep.mubr.bf16.mxu0 0
      %440 = vmatmul.mubr.bf16.gmra.mrb[0].mxu0 %v268
      %v441 = vpop.f32.mrb[0].mxu0
      %v442 = vadd.f32 0.0, %v441
      %v443 = vpop.f32.mrb[0].mxu0
      %v444 = vadd.f32 0.0, %v443
      %v445 = vpop.f32.mrb[0].mxu0
      %v446 = vadd.f32 0.0, %v445
      %v447 = vpop.f32.mrb[0].mxu0
      %v448 = vadd.f32 0.0, %v447
      %449 = vmatprep.mubr.bf16.mxu0 0
      %450 = vmatmul.mubr.bf16.gmra.mrb[0].mxu0 %v271
      %v451 = vpop.f32.mrb[0].mxu0
      %v452 = vadd.f32 0.0, %v451
      %v453 = vpop.f32.mrb[0].mxu0
      %v454 = vadd.f32 0.0, %v453
      %v455 = vpop.f32.mrb[0].mxu0
      %v456 = vadd.f32 0.0, %v455
      %v457 = vpop.f32.mrb[0].mxu0
      %v458 = vadd.f32 0.0, %v457
      %459 = vdwg.mxu0
      %460 = vmatprep.subr.bf16.mxu0 %v299
      %461 = vmatpush1.bf16.msra.mxu0 %v296
      %462 = vmatprep.subr.bf16.mxu0 0
      %463 = vmatpush1.bf16.msra.mxu0 0
      %464 = vmatprep.subr.bf16.mxu0 0
      %465 = vmatpush1.bf16.msra.mxu0 0
      %466 = vmatprep.subr.bf16.mxu0 0
      %467 = vmatpush1.bf16.msra.mxu0 0
      %468 = vmatprep.subr.bf16.mxu0 0
      %469 = vmatpush1.bf16.msra.mxu0 0
      %470 = vmatprep.subr.bf16.mxu0 0
      %471 = vmatpush1.bf16.msra.mxu0 0
      %472 = vmatprep.subr.bf16.mxu0 0
      %473 = vmatpush1.bf16.msra.mxu0 0
      %474 = vmatprep.subr.bf16.mxu0 0
      %475 = vmatpush1.bf16.msra.mxu0 0
      %476 = vmatprep.subr.bf16.mxu0 0
      %477 = vmatpush1.bf16.msra.mxu0 0
      %478 = vmatprep.subr.bf16.mxu0 0
      %479 = vmatpush1.bf16.msra.mxu0 0
      %480 = vmatprep.subr.bf16.mxu0 0
      %481 = vmatpush1.bf16.msra.mxu0 0
      %482 = vmatprep.subr.bf16.mxu0 0
      %483 = vmatpush1.bf16.msra.mxu0 0
      %484 = vmatprep.subr.bf16.mxu0 0
      %485 = vmatpush1.bf16.msra.mxu0 0
      %486 = vmatprep.subr.bf16.mxu0 0
      %487 = vmatpush1.bf16.msra.mxu0 0
      %488 = vmatprep.subr.bf16.mxu0 0
      %489 = vmatpush1.bf16.msra.mxu0 0
      %490 = vmatprep.subr.bf16.mxu0 0
      %491 = vmatpush1.bf16.msra.mxu0 0
      %492 = vmatprep.mubr.bf16.mxu0 0
      %493 = vmatmul.mubr.bf16.gmra.mrb[0].mxu0 %v268
      %v494 = vpop.f32.mrb[0].mxu0
      %v495 = vadd.f32 0.0, %v494
      %v496 = vpop.f32.mrb[0].mxu0
      %v497 = vadd.f32 0.0, %v496
      %v498 = vpop.f32.mrb[0].mxu0
      %v499 = vadd.f32 0.0, %v498
      %v500 = vpop.f32.mrb[0].mxu0
      %v501 = vadd.f32 0.0, %v500
      %502 = vmatprep.mubr.bf16.mxu0 0
      %503 = vmatmul.mubr.bf16.gmra.mrb[0].mxu0 %v271
      %v504 = vpop.f32.mrb[0].mxu0
      %v505 = vadd.f32 0.0, %v504
      %v506 = vpop.f32.mrb[0].mxu0
      %v507 = vadd.f32 0.0, %v506
      %v508 = vpop.f32.mrb[0].mxu0
      %v509 = vadd.f32 0.0, %v508
      %v510 = vpop.f32.mrb[0].mxu0
      %v511 = vadd.f32 0.0, %v510
      %512 = vdwg.mxu0
      %513 = vst [vmem:[#allocation2] sm:$0xff] %v336
      %514 = vst [vmem:[#allocation2 + $0x8] sm:$0xff] %v338
      %515 = vst [vmem:[#allocation2 + $0x10] sm:$0xff] %v389
      %516 = vst [vmem:[#allocation2 + $0x18] sm:$0xff] %v391
      %517 = vst [vmem:[#allocation2 + $0x20] sm:$0xff] %v442
      %518 = vst [vmem:[#allocation2 + $0x28] sm:$0xff] %v444
      %519 = vst [vmem:[#allocation2 + $0x30] sm:$0xff] %v495
      %520 = vst [vmem:[#allocation2 + $0x38] sm:$0xff] %v497
      %521 = vst [vmem:[#allocation2 + $0x40] sm:$0xff] %v340
      %522 = vst [vmem:[#allocation2 + $0x48] sm:$0xff] %v342
      %523 = vst [vmem:[#allocation2 + $0x50] sm:$0xff] %v393
      %524 = vst [vmem:[#allocation2 + $0x58] sm:$0xff] %v395
      %525 = vst [vmem:[#allocation2 + $0x60] sm:$0xff] %v446
      %526 = vst [vmem:[#allocation2 + $0x68] sm:$0xff] %v448
      %527 = vst [vmem:[#allocation2 + $0x70] sm:$0xff] %v499
      %528 = vst [vmem:[#allocation2 + $0x78] sm:$0xff] %v501
      %529 = vst [vmem:[#allocation2 + $0x80] sm:$0xff] %v346
      %530 = vst [vmem:[#allocation2 + $0x88] sm:$0xff] %v348
      %531 = vst [vmem:[#allocation2 + $0x90] sm:$0xff] %v399
      %532 = vst [vmem:[#allocation2 + $0x98] sm:$0xff] %v401
      %533 = vst [vmem:[#allocation2 + $0xa0] sm:$0xff] %v452
      %534 = vst [vmem:[#allocation2 + $0xa8] sm:$0xff] %v454
      %535 = vst [vmem:[#allocation2 + $0xb0] sm:$0xff] %v505
      %536 = vst [vmem:[#allocation2 + $0xb8] sm:$0xff] %v507
      %537 = vst [vmem:[#allocation2 + $0xc0] sm:$0xff] %v350
      %538 = vst [vmem:[#allocation2 + $0xc8] sm:$0xff] %v352
      %539 = vst [vmem:[#allocation2 + $0xd0] sm:$0xff] %v403
      %540 = vst [vmem:[#allocation2 + $0xd8] sm:$0xff] %v405
      %541 = vst [vmem:[#allocation2 + $0xe0] sm:$0xff] %v456
      %542 = vst [vmem:[#allocation2 + $0xe8] sm:$0xff] %v458
      %543 = vst [vmem:[#allocation2 + $0xf0] sm:$0xff] %v509
      %544 = vst [vmem:[#allocation2 + $0xf8] sm:$0xff] %v511
      %v545 = vld [vmem:[%s200 + $0x20] sm:$0xff]
      %v546 = vld [vmem:[%s200 + $0x28] sm:$0xff]
      %v547 = vld [vmem:[%s200 + $0x30] sm:$0xff]
      %v548 = vld [vmem:[%s200 + $0x38] sm:$0xff]
      %v549 = vld [vmem:[%s200 + $0x220] sm:$0x11]
      %v550 = vld [vmem:[%s200 + $0x228] sm:$0x11]
      %v551 = vld [vmem:[%s200 + $0x230] sm:$0x11]
      %v552 = vld [vmem:[%s200 + $0x238] sm:$0x11]
      %v561 = vunpack.c.l.b16 %v545
      %v562 = vunpack.c.h.b16 %v545
      %v563 = vunpack.c.l.b16 %v546
      %v564 = vunpack.c.h.b16 %v546
      %v565 = vunpack.c.l.b16 %v547
      %v566 = vunpack.c.h.b16 %v547
      %v567 = vunpack.c.l.b16 %v548
      %v568 = vunpack.c.h.b16 %v548
      %v569 = vunpack.c.l.b16 %v549
      %v570 = vunpack.c.h.b16 %v549
      %v571 = vunpack.c.l.b16 %v550
      %v572 = vunpack.c.h.b16 %v550
      %v573 = vunpack.c.l.b16 %v551
      %v574 = vunpack.c.h.b16 %v551
      %v575 = vunpack.c.l.b16 %v552
      %v576 = vunpack.c.h.b16 %v552
      %v577 = vpack.c.b16 %v569, %v561
      %v578 = vpack.c.b16 %v570, %v562
      %v579 = vpack.c.b16 %v571, %v563
      %v580 = vpack.c.b16 %v572, %v564
      %v581 = vpack.c.b16 %v573, %v565
      %v582 = vpack.c.b16 %v574, %v566
      %v583 = vpack.c.b16 %v575, %v567
      %v584 = vpack.c.b16 %v576, %v568
      %v586 = vand.u32 %v577, %v276
      %v589 = vand.u32 %v578, %v276
      %v592 = vand.u32 %v579, %v276
      %v595 = vand.u32 %v580, %v276
      %v598 = vand.u32 %v581, %v276
      %v601 = vand.u32 %v582, %v276
      %v604 = vand.u32 %v583, %v276
      %v607 = vand.u32 %v584, %v276
      %609 = vmatprep.subr.bf16.mxu0 %v589
      %610 = vmatpush1.bf16.msra.mxu0 %v586
      %611 = vmatprep.subr.bf16.mxu0 0
      %612 = vmatpush1.bf16.msra.mxu0 0
      %613 = vmatprep.subr.bf16.mxu0 0
      %614 = vmatpush1.bf16.msra.mxu0 0
      %615 = vmatprep.subr.bf16.mxu0 0
      %616 = vmatpush1.bf16.msra.mxu0 0
      %617 = vmatprep.subr.bf16.mxu0 0
      %618 = vmatpush1.bf16.msra.mxu0 0
      %619 = vmatprep.subr.bf16.mxu0 0
      %620 = vmatpush1.bf16.msra.mxu0 0
      %621 = vmatprep.subr.bf16.mxu0 0
      %622 = vmatpush1.bf16.msra.mxu0 0
      %623 = vmatprep.subr.bf16.mxu0 0
      %624 = vmatpush1.bf16.msra.mxu0 0
      %625 = vmatprep.subr.bf16.mxu0 0
      %626 = vmatpush1.bf16.msra.mxu0 0
      %627 = vmatprep.subr.bf16.mxu0 0
      %628 = vmatpush1.bf16.msra.mxu0 0
      %629 = vmatprep.subr.bf16.mxu0 0
      %630 = vmatpush1.bf16.msra.mxu0 0
      %631 = vmatprep.subr.bf16.mxu0 0
      %632 = vmatpush1.bf16.msra.mxu0 0
      %633 = vmatprep.subr.bf16.mxu0 0
      %634 = vmatpush1.bf16.msra.mxu0 0
      %635 = vmatprep.subr.bf16.mxu0 0
      %636 = vmatpush1.bf16.msra.mxu0 0
      %637 = vmatprep.subr.bf16.mxu0 0
      %638 = vmatpush1.bf16.msra.mxu0 0
      %639 = vmatprep.subr.bf16.mxu0 0
      %640 = vmatpush1.bf16.msra.mxu0 0
      %641 = vmatprep.mubr.bf16.mxu0 0
      %642 = vmatmul.mubr.bf16.gmra.mrb[0].mxu0 %v268
      %v643 = vpop.f32.mrb[0].mxu0
      %v644 = vadd.f32 0.0, %v643
      %v645 = vpop.f32.mrb[0].mxu0
      %v646 = vadd.f32 0.0, %v645
      %v647 = vpop.f32.mrb[0].mxu0
      %v648 = vadd.f32 0.0, %v647
      %v649 = vpop.f32.mrb[0].mxu0
      %v650 = vadd.f32 0.0, %v649
      %651 = vmatprep.mubr.bf16.mxu0 0
      %652 = vmatmul.mubr.bf16.gmra.mrb[0].mxu0 %v271
      %v653 = vpop.f32.mrb[0].mxu0
      %v654 = vadd.f32 0.0, %v653
      %v655 = vpop.f32.mrb[0].mxu0
      %v656 = vadd.f32 0.0, %v655
      %v657 = vpop.f32.mrb[0].mxu0
      %v658 = vadd.f32 0.0, %v657
      %v659 = vpop.f32.mrb[0].mxu0
      %v660 = vadd.f32 0.0, %v659
      %661 = vdwg.mxu0
      %662 = vmatprep.subr.bf16.mxu0 %v595
      %663 = vmatpush1.bf16.msra.mxu0 %v592
      %664 = vmatprep.subr.bf16.mxu0 0
      %665 = vmatpush1.bf16.msra.mxu0 0
      %666 = vmatprep.subr.bf16.mxu0 0
      %667 = vmatpush1.bf16.msra.mxu0 0
      %668 = vmatprep.subr.bf16.mxu0 0
      %669 = vmatpush1.bf16.msra.mxu0 0
      %670 = vmatprep.subr.bf16.mxu0 0
      %671 = vmatpush1.bf16.msra.mxu0 0
      %672 = vmatprep.subr.bf16.mxu0 0
      %673 = vmatpush1.bf16.msra.mxu0 0
      %674 = vmatprep.subr.bf16.mxu0 0
      %675 = vmatpush1.bf16.msra.mxu0 0
      %676 = vmatprep.subr.bf16.mxu0 0
      %677 = vmatpush1.bf16.msra.mxu0 0
      %678 = vmatprep.subr.bf16.mxu0 0
      %679 = vmatpush1.bf16.msra.mxu0 0
      %680 = vmatprep.subr.bf16.mxu0 0
      %681 = vmatpush1.bf16.msra.mxu0 0
      %682 = vmatprep.subr.bf16.mxu0 0
      %683 = vmatpush1.bf16.msra.mxu0 0
      %684 = vmatprep.subr.bf16.mxu0 0
      %685 = vmatpush1.bf16.msra.mxu0 0
      %686 = vmatprep.subr.bf16.mxu0 0
      %687 = vmatpush1.bf16.msra.mxu0 0
      %688 = vmatprep.subr.bf16.mxu0 0
      %689 = vmatpush1.bf16.msra.mxu0 0
      %690 = vmatprep.subr.bf16.mxu0 0
      %691 = vmatpush1.bf16.msra.mxu0 0
      %692 = vmatprep.subr.bf16.mxu0 0
      %693 = vmatpush1.bf16.msra.mxu0 0
      %694 = vmatprep.mubr.bf16.mxu0 0
      %695 = vmatmul.mubr.bf16.gmra.mrb[0].mxu0 %v268
      %v696 = vpop.f32.mrb[0].mxu0
      %v697 = vadd.f32 0.0, %v696
      %v698 = vpop.f32.mrb[0].mxu0
      %v699 = vadd.f32 0.0, %v698
      %v700 = vpop.f32.mrb[0].mxu0
      %v701 = vadd.f32 0.0, %v700
      %v702 = vpop.f32.mrb[0].mxu0
      %v703 = vadd.f32 0.0, %v702
      %704 = vmatprep.mubr.bf16.mxu0 0
      %705 = vmatmul.mubr.bf16.gmra.mrb[0].mxu0 %v271
      %v706 = vpop.f32.mrb[0].mxu0
      %v707 = vadd.f32 0.0, %v706
      %v708 = vpop.f32.mrb[0].mxu0
      %v709 = vadd.f32 0.0, %v708
      %v710 = vpop.f32.mrb[0].mxu0
      %v711 = vadd.f32 0.0, %v710
      %v712 = vpop.f32.mrb[0].mxu0
      %v713 = vadd.f32 0.0, %v712
      %714 = vdwg.mxu0
      %715 = vmatprep.subr.bf16.mxu0 %v601
      %716 = vmatpush1.bf16.msra.mxu0 %v598
      %717 = vmatprep.subr.bf16.mxu0 0
      %718 = vmatpush1.bf16.msra.mxu0 0
      %719 = vmatprep.subr.bf16.mxu0 0
      %720 = vmatpush1.bf16.msra.mxu0 0
      %721 = vmatprep.subr.bf16.mxu0 0
      %722 = vmatpush1.bf16.msra.mxu0 0
      %723 = vmatprep.subr.bf16.mxu0 0
      %724 = vmatpush1.bf16.msra.mxu0 0
      %725 = vmatprep.subr.bf16.mxu0 0
      %726 = vmatpush1.bf16.msra.mxu0 0
      %727 = vmatprep.subr.bf16.mxu0 0
      %728 = vmatpush1.bf16.msra.mxu0 0
      %729 = vmatprep.subr.bf16.mxu0 0
      %730 = vmatpush1.bf16.msra.mxu0 0
      %731 = vmatprep.subr.bf16.mxu0 0
      %732 = vmatpush1.bf16.msra.mxu0 0
      %733 = vmatprep.subr.bf16.mxu0 0
      %734 = vmatpush1.bf16.msra.mxu0 0
      %735 = vmatprep.subr.bf16.mxu0 0
      %736 = vmatpush1.bf16.msra.mxu0 0
      %737 = vmatprep.subr.bf16.mxu0 0
      %738 = vmatpush1.bf16.msra.mxu0 0
      %739 = vmatprep.subr.bf16.mxu0 0
      %740 = vmatpush1.bf16.msra.mxu0 0
      %741 = vmatprep.subr.bf16.mxu0 0
      %742 = vmatpush1.bf16.msra.mxu0 0
      %743 = vmatprep.subr.bf16.mxu0 0
      %744 = vmatpush1.bf16.msra.mxu0 0
      %745 = vmatprep.subr.bf16.mxu0 0
      %746 = vmatpush1.bf16.msra.mxu0 0
      %747 = vmatprep.mubr.bf16.mxu0 0
      %748 = vmatmul.mubr.bf16.gmra.mrb[0].mxu0 %v268
      %v749 = vpop.f32.mrb[0].mxu0
      %v750 = vadd.f32 0.0, %v749
      %v751 = vpop.f32.mrb[0].mxu0
      %v752 = vadd.f32 0.0, %v751
      %v753 = vpop.f32.mrb[0].mxu0
      %v754 = vadd.f32 0.0, %v753
      %v755 = vpop.f32.mrb[0].mxu0
      %v756 = vadd.f32 0.0, %v755
      %757 = vmatprep.mubr.bf16.mxu0 0
      %758 = vmatmul.mubr.bf16.gmra.mrb[0].mxu0 %v271
      %v759 = vpop.f32.mrb[0].mxu0
      %v760 = vadd.f32 0.0, %v759
      %v761 = vpop.f32.mrb[0].mxu0
      %v762 = vadd.f32 0.0, %v761
      %v763 = vpop.f32.mrb[0].mxu0
      %v764 = vadd.f32 0.0, %v763
      %v765 = vpop.f32.mrb[0].mxu0
      %v766 = vadd.f32 0.0, %v765
      %767 = vdwg.mxu0
      %768 = vmatprep.subr.bf16.mxu0 %v607
      %769 = vmatpush1.bf16.msra.mxu0 %v604
      %770 = vmatprep.subr.bf16.mxu0 0
      %771 = vmatpush1.bf16.msra.mxu0 0
      %772 = vmatprep.subr.bf16.mxu0 0
      %773 = vmatpush1.bf16.msra.mxu0 0
      %774 = vmatprep.subr.bf16.mxu0 0
      %775 = vmatpush1.bf16.msra.mxu0 0
      %776 = vmatprep.subr.bf16.mxu0 0
      %777 = vmatpush1.bf16.msra.mxu0 0
      %778 = vmatprep.subr.bf16.mxu0 0
      %779 = vmatpush1.bf16.msra.mxu0 0
      %780 = vmatprep.subr.bf16.mxu0 0
      %781 = vmatpush1.bf16.msra.mxu0 0
      %782 = vmatprep.subr.bf16.mxu0 0
      %783 = vmatpush1.bf16.msra.mxu0 0
      %784 = vmatprep.subr.bf16.mxu0 0
      %785 = vmatpush1.bf16.msra.mxu0 0
      %786 = vmatprep.subr.bf16.mxu0 0
      %787 = vmatpush1.bf16.msra.mxu0 0
      %788 = vmatprep.subr.bf16.mxu0 0
      %789 = vmatpush1.bf16.msra.mxu0 0
      %790 = vmatprep.subr.bf16.mxu0 0
      %791 = vmatpush1.bf16.msra.mxu0 0
      %792 = vmatprep.subr.bf16.mxu0 0
      %793 = vmatpush1.bf16.msra.mxu0 0
      %794 = vmatprep.subr.bf16.mxu0 0
      %795 = vmatpush1.bf16.msra.mxu0 0
      %796 = vmatprep.subr.bf16.mxu0 0
      %797 = vmatpush1.bf16.msra.mxu0 0
      %798 = vmatprep.subr.bf16.mxu0 0
      %799 = vmatpush1.bf16.msra.mxu0 0
      %800 = vmatprep.mubr.bf16.mxu0 0
      %801 = vmatmul.mubr.bf16.gmra.mrb[0].mxu0 %v268
      %v802 = vpop.f32.mrb[0].mxu0
      %v803 = vadd.f32 0.0, %v802
      %v804 = vpop.f32.mrb[0].mxu0
      %v805 = vadd.f32 0.0, %v804
      %v806 = vpop.f32.mrb[0].mxu0
      %v807 = vadd.f32 0.0, %v806
      %v808 = vpop.f32.mrb[0].mxu0
      %v809 = vadd.f32 0.0, %v808
      %810 = vmatprep.mubr.bf16.mxu0 0
      %811 = vmatmul.mubr.bf16.gmra.mrb[0].mxu0 %v271
      %v812 = vpop.f32.mrb[0].mxu0
      %v813 = vadd.f32 0.0, %v812
      %v814 = vpop.f32.mrb[0].mxu0
      %v815 = vadd.f32 0.0, %v814
      %v816 = vpop.f32.mrb[0].mxu0
      %v817 = vadd.f32 0.0, %v816
      %v818 = vpop.f32.mrb[0].mxu0
      %v819 = vadd.f32 0.0, %v818
      %820 = vdwg.mxu0
      %v821 = vld [vmem:[#allocation2] sm:$0xff]
      %v822 = vld [vmem:[#allocation2 + $0x8] sm:$0xff]
      %v823 = vld [vmem:[#allocation2 + $0x10] sm:$0xff]
      %v824 = vld [vmem:[#allocation2 + $0x18] sm:$0xff]
      %v825 = vld [vmem:[#allocation2 + $0x20] sm:$0xff]
      %v826 = vld [vmem:[#allocation2 + $0x28] sm:$0xff]
      %v827 = vld [vmem:[#allocation2 + $0x30] sm:$0xff]
      %v828 = vld [vmem:[#allocation2 + $0x38] sm:$0xff]
      %v829 = vld [vmem:[#allocation2 + $0x40] sm:$0xff]
      %v830 = vld [vmem:[#allocation2 + $0x48] sm:$0xff]
      %v831 = vld [vmem:[#allocation2 + $0x50] sm:$0xff]
      %v832 = vld [vmem:[#allocation2 + $0x58] sm:$0xff]
      %v833 = vld [vmem:[#allocation2 + $0x60] sm:$0xff]
      %v834 = vld [vmem:[#allocation2 + $0x68] sm:$0xff]
      %v835 = vld [vmem:[#allocation2 + $0x70] sm:$0xff]
      %v836 = vld [vmem:[#allocation2 + $0x78] sm:$0xff]
      %v837 = vld [vmem:[#allocation2 + $0x80] sm:$0xff]
      %v838 = vld [vmem:[#allocation2 + $0x88] sm:$0xff]
      %v839 = vld [vmem:[#allocation2 + $0x90] sm:$0xff]
      %v840 = vld [vmem:[#allocation2 + $0x98] sm:$0xff]
      %v841 = vld [vmem:[#allocation2 + $0xa0] sm:$0xff]
      %v842 = vld [vmem:[#allocation2 + $0xa8] sm:$0xff]
      %v843 = vld [vmem:[#allocation2 + $0xb0] sm:$0xff]
      %v844 = vld [vmem:[#allocation2 + $0xb8] sm:$0xff]
      %v845 = vld [vmem:[#allocation2 + $0xc0] sm:$0xff]
      %v846 = vld [vmem:[#allocation2 + $0xc8] sm:$0xff]
      %v847 = vld [vmem:[#allocation2 + $0xd0] sm:$0xff]
      %v848 = vld [vmem:[#allocation2 + $0xd8] sm:$0xff]
      %v849 = vld [vmem:[#allocation2 + $0xe0] sm:$0xff]
      %v850 = vld [vmem:[#allocation2 + $0xe8] sm:$0xff]
      %v851 = vld [vmem:[#allocation2 + $0xf0] sm:$0xff]
      %v852 = vld [vmem:[#allocation2 + $0xf8] sm:$0xff]
      %v853 = vmax.f32 %v821, %v644
      %v854 = vmax.f32 %v822, %v646
      %v855 = vmax.f32 %v823, %v697
      %v856 = vmax.f32 %v824, %v699
      %v857 = vmax.f32 %v825, %v750
      %v858 = vmax.f32 %v826, %v752
      %v859 = vmax.f32 %v827, %v803
      %v860 = vmax.f32 %v828, %v805
      %v861 = vmax.f32 %v829, %v648
      %v862 = vmax.f32 %v830, %v650
      %v863 = vmax.f32 %v831, %v701
      %v864 = vmax.f32 %v832, %v703
      %v865 = vmax.f32 %v833, %v754
      %v866 = vmax.f32 %v834, %v756
      %v867 = vmax.f32 %v835, %v807
      %v868 = vmax.f32 %v836, %v809
      %v869 = vmax.f32 %v837, %v654
      %v870 = vmax.f32 %v838, %v656
      %v871 = vmax.f32 %v839, %v707
      %v872 = vmax.f32 %v840, %v709
      %v873 = vmax.f32 %v841, %v760
      %v874 = vmax.f32 %v842, %v762
      %v875 = vmax.f32 %v843, %v813
      %v876 = vmax.f32 %v844, %v815
      %v877 = vmax.f32 %v845, %v658
      %v878 = vmax.f32 %v846, %v660
      %v879 = vmax.f32 %v847, %v711
      %v880 = vmax.f32 %v848, %v713
      %v881 = vmax.f32 %v849, %v764
      %v882 = vmax.f32 %v850, %v766
      %v883 = vmax.f32 %v851, %v817
      %v884 = vmax.f32 %v852, %v819
      %885 = vst [vmem:[#allocation2] sm:$0xff] %v853
      %886 = vst [vmem:[#allocation2 + $0x8] sm:$0xff] %v854
      %887 = vst [vmem:[#allocation2 + $0x10] sm:$0xff] %v855
      %888 = vst [vmem:[#allocation2 + $0x18] sm:$0xff] %v856
      %889 = vst [vmem:[#allocation2 + $0x20] sm:$0xff] %v857
      %890 = vst [vmem:[#allocation2 + $0x28] sm:$0xff] %v858
      %891 = vst [vmem:[#allocation2 + $0x30] sm:$0xff] %v859
      %892 = vst [vmem:[#allocation2 + $0x38] sm:$0xff] %v860
      %893 = vst [vmem:[#allocation2 + $0x40] sm:$0xff] %v861
      %894 = vst [vmem:[#allocation2 + $0x48] sm:$0xff] %v862
      %895 = vst [vmem:[#allocation2 + $0x50] sm:$0xff] %v863
      %896 = vst [vmem:[#allocation2 + $0x58] sm:$0xff] %v864
      %897 = vst [vmem:[#allocation2 + $0x60] sm:$0xff] %v865
      %898 = vst [vmem:[#allocation2 + $0x68] sm:$0xff] %v866
      %899 = vst [vmem:[#allocation2 + $0x70] sm:$0xff] %v867
      %900 = vst [vmem:[#allocation2 + $0x78] sm:$0xff] %v868
      %901 = vst [vmem:[#allocation2 + $0x80] sm:$0xff] %v869
      %902 = vst [vmem:[#allocation2 + $0x88] sm:$0xff] %v870
      %903 = vst [vmem:[#allocation2 + $0x90] sm:$0xff] %v871
      %904 = vst [vmem:[#allocation2 + $0x98] sm:$0xff] %v872
      %905 = vst [vmem:[#allocation2 + $0xa0] sm:$0xff] %v873
      %906 = vst [vmem:[#allocation2 + $0xa8] sm:$0xff] %v874
      %907 = vst [vmem:[#allocation2 + $0xb0] sm:$0xff] %v875
      %908 = vst [vmem:[#allocation2 + $0xb8] sm:$0xff] %v876
      %909 = vst [vmem:[#allocation2 + $0xc0] sm:$0xff] %v877
      %910 = vst [vmem:[#allocation2 + $0xc8] sm:$0xff] %v878
      %911 = vst [vmem:[#allocation2 + $0xd0] sm:$0xff] %v879
      %912 = vst [vmem:[#allocation2 + $0xd8] sm:$0xff] %v880
      %913 = vst [vmem:[#allocation2 + $0xe0] sm:$0xff] %v881
      %914 = vst [vmem:[#allocation2 + $0xe8] sm:$0xff] %v882
      %915 = vst [vmem:[#allocation2 + $0xf0] sm:$0xff] %v883
      %916 = vst [vmem:[#allocation2 + $0xf8] sm:$0xff] %v884
      %v917 = vld [vmem:[%s200 + $0x40] sm:$0xff]
      %v918 = vld [vmem:[%s200 + $0x48] sm:$0xff]
      %v919 = vld [vmem:[%s200 + $0x50] sm:$0xff]
      %v920 = vld [vmem:[%s200 + $0x58] sm:$0xff]
      %v921 = vld [vmem:[%s200 + $0x240] sm:$0x11]
      %v922 = vld [vmem:[%s200 + $0x248] sm:$0x11]
      %v923 = vld [vmem:[%s200 + $0x250] sm:$0x11]
      %v924 = vld [vmem:[%s200 + $0x258] sm:$0x11]
      %v933 = vunpack.c.l.b16 %v917
      %v934 = vunpack.c.h.b16 %v917
      %v935 = vunpack.c.l.b16 %v918
      %v936 = vunpack.c.h.b16 %v918
      %v937 = vunpack.c.l.b16 %v919
      %v938 = vunpack.c.h.b16 %v919
      %v939 = vunpack.c.l.b16 %v920
      %v940 = vunpack.c.h.b16 %v920
      %v941 = vunpack.c.l.b16 %v921
      %v942 = vunpack.c.h.b16 %v921
      %v943 = vunpack.c.l.b16 %v922
      %v944 = vunpack.c.h.b16 %v922
      %v945 = vunpack.c.l.b16 %v923
      %v946 = vunpack.c.h.b16 %v923
      %v947 = vunpack.c.l.b16 %v924
      %v948 = vunpack.c.h.b16 %v924
      %v949 = vpack.c.b16 %v941, %v933
      %v950 = vpack.c.b16 %v942, %v934
      %v951 = vpack.c.b16 %v943, %v935
      %v952 = vpack.c.b16 %v944, %v936
      %v953 = vpack.c.b16 %v945, %v937
      %v954 = vpack.c.b16 %v946, %v938
      %v955 = vpack.c.b16 %v947, %v939
      %v956 = vpack.c.b16 %v948, %v940
      %v958 = vand.u32 %v949, %v276
      %v961 = vand.u32 %v950, %v276
      %v964 = vand.u32 %v951, %v276
      %v967 = vand.u32 %v952, %v276
      %v970 = vand.u32 %v953, %v276
      %v973 = vand.u32 %v954, %v276
      %v976 = vand.u32 %v955, %v276
      %v979 = vand.u32 %v956, %v276
      %981 = vmatprep.subr.bf16.mxu0 %v961
      %982 = vmatpush1.bf16.msra.mxu0 %v958
      %983 = vmatprep.subr.bf16.mxu0 0
      %984 = vmatpush1.bf16.msra.mxu0 0
      %985 = vmatprep.subr.bf16.mxu0 0
      %986 = vmatpush1.bf16.msra.mxu0 0
      %987 = vmatprep.subr.bf16.mxu0 0
      %988 = vmatpush1.bf16.msra.mxu0 0
      %989 = vmatprep.subr.bf16.mxu0 0
      %990 = vmatpush1.bf16.msra.mxu0 0
      %991 = vmatprep.subr.bf16.mxu0 0
      %992 = vmatpush1.bf16.msra.mxu0 0
      %993 = vmatprep.subr.bf16.mxu0 0
      %994 = vmatpush1.bf16.msra.mxu0 0
      %995 = vmatprep.subr.bf16.mxu0 0
      %996 = vmatpush1.bf16.msra.mxu0 0
      %997 = vmatprep.subr.bf16.mxu0 0
      %998 = vmatpush1.bf16.msra.mxu0 0
      %999 = vmatprep.subr.bf16.mxu0 0
      %1000 = vmatpush1.bf16.msra.mxu0 0
      %1001 = vmatprep.subr.bf16.mxu0 0
      %1002 = vmatpush1.bf16.msra.mxu0 0
      %1003 = vmatprep.subr.bf16.mxu0 0
      %1004 = vmatpush1.bf16.msra.mxu0 0
      %1005 = vmatprep.subr.bf16.mxu0 0
      %1006 = vmatpush1.bf16.msra.mxu0 0
      %1007 = vmatprep.subr.bf16.mxu0 0
      %1008 = vmatpush1.bf16.msra.mxu0 0
      %1009 = vmatprep.subr.bf16.mxu0 0
      %1010 = vmatpush1.bf16.msra.mxu0 0
      %1011 = vmatprep.subr.bf16.mxu0 0
      %1012 = vmatpush1.bf16.msra.mxu0 0
      %1013 = vmatprep.mubr.bf16.mxu0 0
      %1014 = vmatmul.mubr.bf16.gmra.mrb[0].mxu0 %v268
      %v1015 = vpop.f32.mrb[0].mxu0
      %v1016 = vadd.f32 0.0, %v1015
      %v1017 = vpop.f32.mrb[0].mxu0
      %v1018 = vadd.f32 0.0, %v1017
      %v1019 = vpop.f32.mrb[0].mxu0
      %v1020 = vadd.f32 0.0, %v1019
      %v1021 = vpop.f32.mrb[0].mxu0
      %v1022 = vadd.f32 0.0, %v1021
      %1023 = vmatprep.mubr.bf16.mxu0 0
      %1024 = vmatmul.mubr.bf16.gmra.mrb[0].mxu0 %v271
      %v1025 = vpop.f32.mrb[0].mxu0
      %v1026 = vadd.f32 0.0, %v1025
      %v1027 = vpop.f32.mrb[0].mxu0
      %v1028 = vadd.f32 0.0, %v1027
      %v1029 = vpop.f32.mrb[0].mxu0
      %v1030 = vadd.f32 0.0, %v1029
      %v1031 = vpop.f32.mrb[0].mxu0
      %v1032 = vadd.f32 0.0, %v1031
      %1033 = vdwg.mxu0
      %1034 = vmatprep.subr.bf16.mxu0 %v967
      %1035 = vmatpush1.bf16.msra.mxu0 %v964
      %1036 = vmatprep.subr.bf16.mxu0 0
      %1037 = vmatpush1.bf16.msra.mxu0 0
      %1038 = vmatprep.subr.bf16.mxu0 0
      %1039 = vmatpush1.bf16.msra.mxu0 0
      %1040 = vmatprep.subr.bf16.mxu0 0
      %1041 = vmatpush1.bf16.msra.mxu0 0
      %1042 = vmatprep.subr.bf16.mxu0 0
      %1043 = vmatpush1.bf16.msra.mxu0 0
      %1044 = vmatprep.subr.bf16.mxu0 0
      %1045 = vmatpush1.bf16.msra.mxu0 0
      %1046 = vmatprep.subr.bf16.mxu0 0
      %1047 = vmatpush1.bf16.msra.mxu0 0
      %1048 = vmatprep.subr.bf16.mxu0 0
      %1049 = vmatpush1.bf16.msra.mxu0 0
      %1050 = vmatprep.subr.bf16.mxu0 0
      %1051 = vmatpush1.bf16.msra.mxu0 0
      %1052 = vmatprep.subr.bf16.mxu0 0
      %1053 = vmatpush1.bf16.msra.mxu0 0
      %1054 = vmatprep.subr.bf16.mxu0 0
      %1055 = vmatpush1.bf16.msra.mxu0 0
      %1056 = vmatprep.subr.bf16.mxu0 0
      %1057 = vmatpush1.bf16.msra.mxu0 0
      %1058 = vmatprep.subr.bf16.mxu0 0
      %1059 = vmatpush1.bf16.msra.mxu0 0
      %1060 = vmatprep.subr.bf16.mxu0 0
      %1061 = vmatpush1.bf16.msra.mxu0 0
      %1062 = vmatprep.subr.bf16.mxu0 0
      %1063 = vmatpush1.bf16.msra.mxu0 0
      %1064 = vmatprep.subr.bf16.mxu0 0
      %1065 = vmatpush1.bf16.msra.mxu0 0
      %1066 = vmatprep.mubr.bf16.mxu0 0
      %1067 = vmatmul.mubr.bf16.gmra.mrb[0].mxu0 %v268
      %v1068 = vpop.f32.mrb[0].mxu0
      %v1069 = vadd.f32 0.0, %v1068
      %v1070 = vpop.f32.mrb[0].mxu0
      %v1071 = vadd.f32 0.0, %v1070
      %v1072 = vpop.f32.mrb[0].mxu0
      %v1073 = vadd.f32 0.0, %v1072
      %v1074 = vpop.f32.mrb[0].mxu0
      %v1075 = vadd.f32 0.0, %v1074
      %1076 = vmatprep.mubr.bf16.mxu0 0
      %1077 = vmatmul.mubr.bf16.gmra.mrb[0].mxu0 %v271
      %v1078 = vpop.f32.mrb[0].mxu0
      %v1079 = vadd.f32 0.0, %v1078
      %v1080 = vpop.f32.mrb[0].mxu0
      %v1081 = vadd.f32 0.0, %v1080
      %v1082 = vpop.f32.mrb[0].mxu0
      %v1083 = vadd.f32 0.0, %v1082
      %v1084 = vpop.f32.mrb[0].mxu0
      %v1085 = vadd.f32 0.0, %v1084
      %1086 = vdwg.mxu0
      %1087 = vmatprep.subr.bf16.mxu0 %v973
      %1088 = vmatpush1.bf16.msra.mxu0 %v970
      %1089 = vmatprep.subr.bf16.mxu0 0
      %1090 = vmatpush1.bf16.msra.mxu0 0
      %1091 = vmatprep.subr.bf16.mxu0 0
      %1092 = vmatpush1.bf16.msra.mxu0 0
      %1093 = vmatprep.subr.bf16.mxu0 0
      %1094 = vmatpush1.bf16.msra.mxu0 0
      %1095 = vmatprep.subr.bf16.mxu0 0
      %1096 = vmatpush1.bf16.msra.mxu0 0
      %1097 = vmatprep.subr.bf16.mxu0 0
      %1098 = vmatpush1.bf16.msra.mxu0 0
      %1099 = vmatprep.subr.bf16.mxu0 0
      %1100 = vmatpush1.bf16.msra.mxu0 0
      %1101 = vmatprep.subr.bf16.mxu0 0
      %1102 = vmatpush1.bf16.msra.mxu0 0
      %1103 = vmatprep.subr.bf16.mxu0 0
      %1104 = vmatpush1.bf16.msra.mxu0 0
      %1105 = vmatprep.subr.bf16.mxu0 0
      %1106 = vmatpush1.bf16.msra.mxu0 0
      %1107 = vmatprep.subr.bf16.mxu0 0
      %1108 = vmatpush1.bf16.msra.mxu0 0
      %1109 = vmatprep.subr.bf16.mxu0 0
      %1110 = vmatpush1.bf16.msra.mxu0 0
      %1111 = vmatprep.subr.bf16.mxu0 0
      %1112 = vmatpush1.bf16.msra.mxu0 0
      %1113 = vmatprep.subr.bf16.mxu0 0
      %1114 = vmatpush1.bf16.msra.mxu0 0
      %1115 = vmatprep.subr.bf16.mxu0 0
      %1116 = vmatpush1.bf16.msra.mxu0 0
      %1117 = vmatprep.subr.bf16.mxu0 0
      %1118 = vmatpush1.bf16.msra.mxu0 0
      %1119 = vmatprep.mubr.bf16.mxu0 0
      %1120 = vmatmul.mubr.bf16.gmra.mrb[0].mxu0 %v268
      %v1121 = vpop.f32.mrb[0].mxu0
      %v1122 = vadd.f32 0.0, %v1121
      %v1123 = vpop.f32.mrb[0].mxu0
      %v1124 = vadd.f32 0.0, %v1123
      %v1125 = vpop.f32.mrb[0].mxu0
      %v1126 = vadd.f32 0.0, %v1125
      %v1127 = vpop.f32.mrb[0].mxu0
      %v1128 = vadd.f32 0.0, %v1127
      %1129 = vmatprep.mubr.bf16.mxu0 0
      %1130 = vmatmul.mubr.bf16.gmra.mrb[0].mxu0 %v271
      %v1131 = vpop.f32.mrb[0].mxu0
      %v1132 = vadd.f32 0.0, %v1131
      %v1133 = vpop.f32.mrb[0].mxu0
      %v1134 = vadd.f32 0.0, %v1133
      %v1135 = vpop.f32.mrb[0].mxu0
      %v1136 = vadd.f32 0.0, %v1135
      %v1137 = vpop.f32.mrb[0].mxu0
      %v1138 = vadd.f32 0.0, %v1137
      %1139 = vdwg.mxu0
      %1140 = vmatprep.subr.bf16.mxu0 %v979
      %1141 = vmatpush1.bf16.msra.mxu0 %v976
      %1142 = vmatprep.subr.bf16.mxu0 0
      %1143 = vmatpush1.bf16.msra.mxu0 0
      %1144 = vmatprep.subr.bf16.mxu0 0
      %1145 = vmatpush1.bf16.msra.mxu0 0
      %1146 = vmatprep.subr.bf16.mxu0 0
      %1147 = vmatpush1.bf16.msra.mxu0 0
      %1148 = vmatprep.subr.bf16.mxu0 0
      %1149 = vmatpush1.bf16.msra.mxu0 0
      %1150 = vmatprep.subr.bf16.mxu0 0
      %1151 = vmatpush1.bf16.msra.mxu0 0
      %1152 = vmatprep.subr.bf16.mxu0 0
      %1153 = vmatpush1.bf16.msra.mxu0 0
      %1154 = vmatprep.subr.bf16.mxu0 0
      %1155 = vmatpush1.bf16.msra.mxu0 0
      %1156 = vmatprep.subr.bf16.mxu0 0
      %1157 = vmatpush1.bf16.msra.mxu0 0
      %1158 = vmatprep.subr.bf16.mxu0 0
      %1159 = vmatpush1.bf16.msra.mxu0 0
      %1160 = vmatprep.subr.bf16.mxu0 0
      %1161 = vmatpush1.bf16.msra.mxu0 0
      %1162 = vmatprep.subr.bf16.mxu0 0
      %1163 = vmatpush1.bf16.msra.mxu0 0
      %1164 = vmatprep.subr.bf16.mxu0 0
      %1165 = vmatpush1.bf16.msra.mxu0 0
      %1166 = vmatprep.subr.bf16.mxu0 0
      %1167 = vmatpush1.bf16.msra.mxu0 0
      %1168 = vmatprep.subr.bf16.mxu0 0
      %1169 = vmatpush1.bf16.msra.mxu0 0
      %1170 = vmatprep.subr.bf16.mxu0 0
      %1171 = vmatpush1.bf16.msra.mxu0 0
      %1172 = vmatprep.mubr.bf16.mxu0 0
      %1173 = vmatmul.mubr.bf16.gmra.mrb[0].mxu0 %v268
      %v1174 = vpop.f32.mrb[0].mxu0
      %v1175 = vadd.f32 0.0, %v1174
      %v1176 = vpop.f32.mrb[0].mxu0
      %v1177 = vadd.f32 0.0, %v1176
      %v1178 = vpop.f32.mrb[0].mxu0
      %v1179 = vadd.f32 0.0, %v1178
      %v1180 = vpop.f32.mrb[0].mxu0
      %v1181 = vadd.f32 0.0, %v1180
      %1182 = vmatprep.mubr.bf16.mxu0 0
      %1183 = vmatmul.mubr.bf16.gmra.mrb[0].mxu0 %v271
      %v1184 = vpop.f32.mrb[0].mxu0
      %v1185 = vadd.f32 0.0, %v1184
      %v1186 = vpop.f32.mrb[0].mxu0
      %v1187 = vadd.f32 0.0, %v1186
      %v1188 = vpop.f32.mrb[0].mxu0
      %v1189 = vadd.f32 0.0, %v1188
      %v1190 = vpop.f32.mrb[0].mxu0
      %v1191 = vadd.f32 0.0, %v1190
      %1192 = vdwg.mxu0
      %v1193 = vld [vmem:[#allocation2] sm:$0xff]
      %v1194 = vld [vmem:[#allocation2 + $0x8] sm:$0xff]
      %v1195 = vld [vmem:[#allocation2 + $0x10] sm:$0xff]
      %v1196 = vld [vmem:[#allocation2 + $0x18] sm:$0xff]
      %v1197 = vld [vmem:[#allocation2 + $0x20] sm:$0xff]
      %v1198 = vld [vmem:[#allocation2 + $0x28] sm:$0xff]
      %v1199 = vld [vmem:[#allocation2 + $0x30] sm:$0xff]
      %v1200 = vld [vmem:[#allocation2 + $0x38] sm:$0xff]
      %v1201 = vld [vmem:[#allocation2 + $0x40] sm:$0xff]
      %v1202 = vld [vmem:[#allocation2 + $0x48] sm:$0xff]
      %v1203 = vld [vmem:[#allocation2 + $0x50] sm:$0xff]
      %v1204 = vld [vmem:[#allocation2 + $0x58] sm:$0xff]
      %v1205 = vld [vmem:[#allocation2 + $0x60] sm:$0xff]
      %v1206 = vld [vmem:[#allocation2 + $0x68] sm:$0xff]
      %v1207 = vld [vmem:[#allocation2 + $0x70] sm:$0xff]
      %v1208 = vld [vmem:[#allocation2 + $0x78] sm:$0xff]
      %v1209 = vld [vmem:[#allocation2 + $0x80] sm:$0xff]
      %v1210 = vld [vmem:[#allocation2 + $0x88] sm:$0xff]
      %v1211 = vld [vmem:[#allocation2 + $0x90] sm:$0xff]
      %v1212 = vld [vmem:[#allocation2 + $0x98] sm:$0xff]
      %v1213 = vld [vmem:[#allocation2 + $0xa0] sm:$0xff]
      %v1214 = vld [vmem:[#allocation2 + $0xa8] sm:$0xff]
      %v1215 = vld [vmem:[#allocation2 + $0xb0] sm:$0xff]
      %v1216 = vld [vmem:[#allocation2 + $0xb8] sm:$0xff]
      %v1217 = vld [vmem:[#allocation2 + $0xc0] sm:$0xff]
      %v1218 = vld [vmem:[#allocation2 + $0xc8] sm:$0xff]
      %v1219 = vld [vmem:[#allocation2 + $0xd0] sm:$0xff]
      %v1220 = vld [vmem:[#allocation2 + $0xd8] sm:$0xff]
      %v1221 = vld [vmem:[#allocation2 + $0xe0] sm:$0xff]
      %v1222 = vld [vmem:[#allocation2 + $0xe8] sm:$0xff]
      %v1223 = vld [vmem:[#allocation2 + $0xf0] sm:$0xff]
      %v1224 = vld [vmem:[#allocation2 + $0xf8] sm:$0xff]
      %v1225 = vmax.f32 %v1193, %v1016
      %v1226 = vmax.f32 %v1194, %v1018
      %v1227 = vmax.f32 %v1195, %v1069
      %v1228 = vmax.f32 %v1196, %v1071
      %v1229 = vmax.f32 %v1197, %v1122
      %v1230 = vmax.f32 %v1198, %v1124
      %v1231 = vmax.f32 %v1199, %v1175
      %v1232 = vmax.f32 %v1200, %v1177
      %v1233 = vmax.f32 %v1201, %v1020
      %v1234 = vmax.f32 %v1202, %v1022
      %v1235 = vmax.f32 %v1203, %v1073
      %v1236 = vmax.f32 %v1204, %v1075
      %v1237 = vmax.f32 %v1205, %v1126
      %v1238 = vmax.f32 %v1206, %v1128
      %v1239 = vmax.f32 %v1207, %v1179
      %v1240 = vmax.f32 %v1208, %v1181
      %v1241 = vmax.f32 %v1209, %v1026
      %v1242 = vmax.f32 %v1210, %v1028
      %v1243 = vmax.f32 %v1211, %v1079
      %v1244 = vmax.f32 %v1212, %v1081
      %v1245 = vmax.f32 %v1213, %v1132
      %v1246 = vmax.f32 %v1214, %v1134
      %v1247 = vmax.f32 %v1215, %v1185
      %v1248 = vmax.f32 %v1216, %v1187
      %v1249 = vmax.f32 %v1217, %v1030
      %v1250 = vmax.f32 %v1218, %v1032
      %v1251 = vmax.f32 %v1219, %v1083
      %v1252 = vmax.f32 %v1220, %v1085
      %v1253 = vmax.f32 %v1221, %v1136
      %v1254 = vmax.f32 %v1222, %v1138
      %v1255 = vmax.f32 %v1223, %v1189
      %v1256 = vmax.f32 %v1224, %v1191
      %1257 = vst [vmem:[#allocation2] sm:$0xff] %v1225
      %1258 = vst [vmem:[#allocation2 + $0x8] sm:$0xff] %v1226
      %1259 = vst [vmem:[#allocation2 + $0x10] sm:$0xff] %v1227
      %1260 = vst [vmem:[#allocation2 + $0x18] sm:$0xff] %v1228
      %1261 = vst [vmem:[#allocation2 + $0x20] sm:$0xff] %v1229
      %1262 = vst [vmem:[#allocation2 + $0x28] sm:$0xff] %v1230
      %1263 = vst [vmem:[#allocation2 + $0x30] sm:$0xff] %v1231
      %1264 = vst [vmem:[#allocation2 + $0x38] sm:$0xff] %v1232
      %1265 = vst [vmem:[#allocation2 + $0x40] sm:$0xff] %v1233
      %1266 = vst [vmem:[#allocation2 + $0x48] sm:$0xff] %v1234
      %1267 = vst [vmem:[#allocation2 + $0x50] sm:$0xff] %v1235
      %1268 = vst [vmem:[#allocation2 + $0x58] sm:$0xff] %v1236
      %1269 = vst [vmem:[#allocation2 + $0x60] sm:$0xff] %v1237
      %1270 = vst [vmem:[#allocation2 + $0x68] sm:$0xff] %v1238
      %1271 = vst [vmem:[#allocation2 + $0x70] sm:$0xff] %v1239
      %1272 = vst [vmem:[#allocation2 + $0x78] sm:$0xff] %v1240
      %1273 = vst [vmem:[#allocation2 + $0x80] sm:$0xff] %v1241
      %1274 = vst [vmem:[#allocation2 + $0x88] sm:$0xff] %v1242
      %1275 = vst [vmem:[#allocation2 + $0x90] sm:$0xff] %v1243
      %1276 = vst [vmem:[#allocation2 + $0x98] sm:$0xff] %v1244
      %1277 = vst [vmem:[#allocation2 + $0xa0] sm:$0xff] %v1245
      %1278 = vst [vmem:[#allocation2 + $0xa8] sm:$0xff] %v1246
      %1279 = vst [vmem:[#allocation2 + $0xb0] sm:$0xff] %v1247
      %1280 = vst [vmem:[#allocation2 + $0xb8] sm:$0xff] %v1248
      %1281 = vst [vmem:[#allocation2 + $0xc0] sm:$0xff] %v1249
      %1282 = vst [vmem:[#allocation2 + $0xc8] sm:$0xff] %v1250
      %1283 = vst [vmem:[#allocation2 + $0xd0] sm:$0xff] %v1251
      %1284 = vst [vmem:[#allocation2 + $0xd8] sm:$0xff] %v1252
      %1285 = vst [vmem:[#allocation2 + $0xe0] sm:$0xff] %v1253
      %1286 = vst [vmem:[#allocation2 + $0xe8] sm:$0xff] %v1254
      %1287 = vst [vmem:[#allocation2 + $0xf0] sm:$0xff] %v1255
      %1288 = vst [vmem:[#allocation2 + $0xf8] sm:$0xff] %v1256
      %v1289 = vld [vmem:[%s200 + $0x60] sm:$0xff]
      %v1290 = vld [vmem:[%s200 + $0x68] sm:$0xff]
      %v1291 = vld [vmem:[%s200 + $0x70] sm:$0xff]
      %v1292 = vld [vmem:[%s200 + $0x78] sm:$0xff]
      %v1293 = vld [vmem:[%s200 + $0x260] sm:$0x11]
      %v1294 = vld [vmem:[%s200 + $0x268] sm:$0x11]
      %v1295 = vld [vmem:[%s200 + $0x270] sm:$0x11]
      %v1296 = vld [vmem:[%s200 + $0x278] sm:$0x11]
      %v1305 = vunpack.c.l.b16 %v1289
      %v1306 = vunpack.c.h.b16 %v1289
      %v1307 = vunpack.c.l.b16 %v1290
      %v1308 = vunpack.c.h.b16 %v1290
      %v1309 = vunpack.c.l.b16 %v1291
      %v1310 = vunpack.c.h.b16 %v1291
      %v1311 = vunpack.c.l.b16 %v1292
      %v1312 = vunpack.c.h.b16 %v1292
      %v1313 = vunpack.c.l.b16 %v1293
      %v1314 = vunpack.c.h.b16 %v1293
      %v1315 = vunpack.c.l.b16 %v1294
      %v1316 = vunpack.c.h.b16 %v1294
      %v1317 = vunpack.c.l.b16 %v1295
      %v1318 = vunpack.c.h.b16 %v1295
      %v1319 = vunpack.c.l.b16 %v1296
      %v1320 = vunpack.c.h.b16 %v1296
      %v1321 = vpack.c.b16 %v1313, %v1305
      %v1322 = vpack.c.b16 %v1314, %v1306
      %v1323 = vpack.c.b16 %v1315, %v1307
      %v1324 = vpack.c.b16 %v1316, %v1308
      %v1325 = vpack.c.b16 %v1317, %v1309
      %v1326 = vpack.c.b16 %v1318, %v1310
      %v1327 = vpack.c.b16 %v1319, %v1311
      %v1328 = vpack.c.b16 %v1320, %v1312
      %v1330 = vand.u32 %v1321, %v276
      %v1333 = vand.u32 %v1322, %v276
      %v1336 = vand.u32 %v1323, %v276
      %v1339 = vand.u32 %v1324, %v276
      %v1342 = vand.u32 %v1325, %v276
      %v1345 = vand.u32 %v1326, %v276
      %v1348 = vand.u32 %v1327, %v276
      %v1351 = vand.u32 %v1328, %v276
      %1353 = vmatprep.subr.bf16.mxu0 %v1333
      %1354 = vmatpush1.bf16.msra.mxu0 %v1330
      %1355 = vmatprep.subr.bf16.mxu0 0
      %1356 = vmatpush1.bf16.msra.mxu0 0
      %1357 = vmatprep.subr.bf16.mxu0 0
      %1358 = vmatpush1.bf16.msra.mxu0 0
      %1359 = vmatprep.subr.bf16.mxu0 0
      %1360 = vmatpush1.bf16.msra.mxu0 0
      %1361 = vmatprep.subr.bf16.mxu0 0
      %1362 = vmatpush1.bf16.msra.mxu0 0
      %1363 = vmatprep.subr.bf16.mxu0 0
      %1364 = vmatpush1.bf16.msra.mxu0 0
      %1365 = vmatprep.subr.bf16.mxu0 0
      %1366 = vmatpush1.bf16.msra.mxu0 0
      %1367 = vmatprep.subr.bf16.mxu0 0
      %1368 = vmatpush1.bf16.msra.mxu0 0
      %1369 = vmatprep.subr.bf16.mxu0 0
      %1370 = vmatpush1.bf16.msra.mxu0 0
      %1371 = vmatprep.subr.bf16.mxu0 0
      %1372 = vmatpush1.bf16.msra.mxu0 0
      %1373 = vmatprep.subr.bf16.mxu0 0
      %1374 = vmatpush1.bf16.msra.mxu0 0
      %1375 = vmatprep.subr.bf16.mxu0 0
      %1376 = vmatpush1.bf16.msra.mxu0 0
      %1377 = vmatprep.subr.bf16.mxu0 0
      %1378 = vmatpush1.bf16.msra.mxu0 0
      %1379 = vmatprep.subr.bf16.mxu0 0
      %1380 = vmatpush1.bf16.msra.mxu0 0
      %1381 = vmatprep.subr.bf16.mxu0 0
      %1382 = vmatpush1.bf16.msra.mxu0 0
      %1383 = vmatprep.subr.bf16.mxu0 0
      %1384 = vmatpush1.bf16.msra.mxu0 0
      %1385 = vmatprep.mubr.bf16.mxu0 0
      %1386 = vmatmul.mubr.bf16.gmra.mrb[0].mxu0 %v268
      %v1387 = vpop.f32.mrb[0].mxu0
      %v1388 = vadd.f32 0.0, %v1387
      %v1389 = vpop.f32.mrb[0].mxu0
      %v1390 = vadd.f32 0.0, %v1389
      %v1391 = vpop.f32.mrb[0].mxu0
      %v1392 = vadd.f32 0.0, %v1391
      %v1393 = vpop.f32.mrb[0].mxu0
      %v1394 = vadd.f32 0.0, %v1393
      %1395 = vmatprep.mubr.bf16.mxu0 0
      %1396 = vmatmul.mubr.bf16.gmra.mrb[0].mxu0 %v271
      %v1397 = vpop.f32.mrb[0].mxu0
      %v1398 = vadd.f32 0.0, %v1397
      %v1399 = vpop.f32.mrb[0].mxu0
      %v1400 = vadd.f32 0.0, %v1399
      %v1401 = vpop.f32.mrb[0].mxu0
      %v1402 = vadd.f32 0.0, %v1401
      %v1403 = vpop.f32.mrb[0].mxu0
      %v1404 = vadd.f32 0.0, %v1403
      %1405 = vdwg.mxu0
      %1406 = vmatprep.subr.bf16.mxu0 %v1339
      %1407 = vmatpush1.bf16.msra.mxu0 %v1336
      %1408 = vmatprep.subr.bf16.mxu0 0
      %1409 = vmatpush1.bf16.msra.mxu0 0
      %1410 = vmatprep.subr.bf16.mxu0 0
      %1411 = vmatpush1.bf16.msra.mxu0 0
      %1412 = vmatprep.subr.bf16.mxu0 0
      %1413 = vmatpush1.bf16.msra.mxu0 0
      %1414 = vmatprep.subr.bf16.mxu0 0
      %1415 = vmatpush1.bf16.msra.mxu0 0
      %1416 = vmatprep.subr.bf16.mxu0 0
      %1417 = vmatpush1.bf16.msra.mxu0 0
      %1418 = vmatprep.subr.bf16.mxu0 0
      %1419 = vmatpush1.bf16.msra.mxu0 0
      %1420 = vmatprep.subr.bf16.mxu0 0
      %1421 = vmatpush1.bf16.msra.mxu0 0
      %1422 = vmatprep.subr.bf16.mxu0 0
      %1423 = vmatpush1.bf16.msra.mxu0 0
      %1424 = vmatprep.subr.bf16.mxu0 0
      %1425 = vmatpush1.bf16.msra.mxu0 0
      %1426 = vmatprep.subr.bf16.mxu0 0
      %1427 = vmatpush1.bf16.msra.mxu0 0
      %1428 = vmatprep.subr.bf16.mxu0 0
      %1429 = vmatpush1.bf16.msra.mxu0 0
      %1430 = vmatprep.subr.bf16.mxu0 0
      %1431 = vmatpush1.bf16.msra.mxu0 0
      %1432 = vmatprep.subr.bf16.mxu0 0
      %1433 = vmatpush1.bf16.msra.mxu0 0
      %1434 = vmatprep.subr.bf16.mxu0 0
      %1435 = vmatpush1.bf16.msra.mxu0 0
      %1436 = vmatprep.subr.bf16.mxu0 0
      %1437 = vmatpush1.bf16.msra.mxu0 0
      %1438 = vmatprep.mubr.bf16.mxu0 0
      %1439 = vmatmul.mubr.bf16.gmra.mrb[0].mxu0 %v268
      %v1440 = vpop.f32.mrb[0].mxu0
      %v1441 = vadd.f32 0.0, %v1440
      %v1442 = vpop.f32.mrb[0].mxu0
      %v1443 = vadd.f32 0.0, %v1442
      %v1444 = vpop.f32.mrb[0].mxu0
      %v1445 = vadd.f32 0.0, %v1444
      %v1446 = vpop.f32.mrb[0].mxu0
      %v1447 = vadd.f32 0.0, %v1446
      %1448 = vmatprep.mubr.bf16.mxu0 0
      %1449 = vmatmul.mubr.bf16.gmra.mrb[0].mxu0 %v271
      %v1450 = vpop.f32.mrb[0].mxu0
      %v1451 = vadd.f32 0.0, %v1450
      %v1452 = vpop.f32.mrb[0].mxu0
      %v1453 = vadd.f32 0.0, %v1452
      %v1454 = vpop.f32.mrb[0].mxu0
      %v1455 = vadd.f32 0.0, %v1454
      %v1456 = vpop.f32.mrb[0].mxu0
      %v1457 = vadd.f32 0.0, %v1456
      %1458 = vdwg.mxu0
      %1459 = vmatprep.subr.bf16.mxu0 %v1345
      %1460 = vmatpush1.bf16.msra.mxu0 %v1342
      %1461 = vmatprep.subr.bf16.mxu0 0
      %1462 = vmatpush1.bf16.msra.mxu0 0
      %1463 = vmatprep.subr.bf16.mxu0 0
      %1464 = vmatpush1.bf16.msra.mxu0 0
      %1465 = vmatprep.subr.bf16.mxu0 0
      %1466 = vmatpush1.bf16.msra.mxu0 0
      %1467 = vmatprep.subr.bf16.mxu0 0
      %1468 = vmatpush1.bf16.msra.mxu0 0
      %1469 = vmatprep.subr.bf16.mxu0 0
      %1470 = vmatpush1.bf16.msra.mxu0 0
      %1471 = vmatprep.subr.bf16.mxu0 0
      %1472 = vmatpush1.bf16.msra.mxu0 0
      %1473 = vmatprep.subr.bf16.mxu0 0
      %1474 = vmatpush1.bf16.msra.mxu0 0
      %1475 = vmatprep.subr.bf16.mxu0 0
      %1476 = vmatpush1.bf16.msra.mxu0 0
      %1477 = vmatprep.subr.bf16.mxu0 0
      %1478 = vmatpush1.bf16.msra.mxu0 0
      %1479 = vmatprep.subr.bf16.mxu0 0
      %1480 = vmatpush1.bf16.msra.mxu0 0
      %1481 = vmatprep.subr.bf16.mxu0 0
      %1482 = vmatpush1.bf16.msra.mxu0 0
      %1483 = vmatprep.subr.bf16.mxu0 0
      %1484 = vmatpush1.bf16.msra.mxu0 0
      %1485 = vmatprep.subr.bf16.mxu0 0
      %1486 = vmatpush1.bf16.msra.mxu0 0
      %1487 = vmatprep.subr.bf16.mxu0 0
      %1488 = vmatpush1.bf16.msra.mxu0 0
      %1489 = vmatprep.subr.bf16.mxu0 0
      %1490 = vmatpush1.bf16.msra.mxu0 0
      %1491 = vmatprep.mubr.bf16.mxu0 0
      %1492 = vmatmul.mubr.bf16.gmra.mrb[0].mxu0 %v268
      %v1493 = vpop.f32.mrb[0].mxu0
      %v1494 = vadd.f32 0.0, %v1493
      %v1495 = vpop.f32.mrb[0].mxu0
      %v1496 = vadd.f32 0.0, %v1495
      %v1497 = vpop.f32.mrb[0].mxu0
      %v1498 = vadd.f32 0.0, %v1497
      %v1499 = vpop.f32.mrb[0].mxu0
      %v1500 = vadd.f32 0.0, %v1499
      %1501 = vmatprep.mubr.bf16.mxu0 0
      %1502 = vmatmul.mubr.bf16.gmra.mrb[0].mxu0 %v271
      %v1503 = vpop.f32.mrb[0].mxu0
      %v1504 = vadd.f32 0.0, %v1503
      %v1505 = vpop.f32.mrb[0].mxu0
      %v1506 = vadd.f32 0.0, %v1505
      %v1507 = vpop.f32.mrb[0].mxu0
      %v1508 = vadd.f32 0.0, %v1507
      %v1509 = vpop.f32.mrb[0].mxu0
      %v1510 = vadd.f32 0.0, %v1509
      %1511 = vdwg.mxu0
      %1512 = vmatprep.subr.bf16.mxu0 %v1351
      %1513 = vmatpush1.bf16.msra.mxu0 %v1348
      %1514 = vmatprep.subr.bf16.mxu0 0
      %1515 = vmatpush1.bf16.msra.mxu0 0
      %1516 = vmatprep.subr.bf16.mxu0 0
      %1517 = vmatpush1.bf16.msra.mxu0 0
      %1518 = vmatprep.subr.bf16.mxu0 0
      %1519 = vmatpush1.bf16.msra.mxu0 0
      %1520 = vmatprep.subr.bf16.mxu0 0
      %1521 = vmatpush1.bf16.msra.mxu0 0
      %1522 = vmatprep.subr.bf16.mxu0 0
      %1523 = vmatpush1.bf16.msra.mxu0 0
      %1524 = vmatprep.subr.bf16.mxu0 0
      %1525 = vmatpush1.bf16.msra.mxu0 0
      %1526 = vmatprep.subr.bf16.mxu0 0
      %1527 = vmatpush1.bf16.msra.mxu0 0
      %1528 = vmatprep.subr.bf16.mxu0 0
      %1529 = vmatpush1.bf16.msra.mxu0 0
      %1530 = vmatprep.subr.bf16.mxu0 0
      %1531 = vmatpush1.bf16.msra.mxu0 0
      %1532 = vmatprep.subr.bf16.mxu0 0
      %1533 = vmatpush1.bf16.msra.mxu0 0
      %1534 = vmatprep.subr.bf16.mxu0 0
      %1535 = vmatpush1.bf16.msra.mxu0 0
      %1536 = vmatprep.subr.bf16.mxu0 0
      %1537 = vmatpush1.bf16.msra.mxu0 0
      %1538 = vmatprep.subr.bf16.mxu0 0
      %1539 = vmatpush1.bf16.msra.mxu0 0
      %1540 = vmatprep.subr.bf16.mxu0 0
      %1541 = vmatpush1.bf16.msra.mxu0 0
      %1542 = vmatprep.subr.bf16.mxu0 0
      %1543 = vmatpush1.bf16.msra.mxu0 0
      %1544 = vmatprep.mubr.bf16.mxu0 0
      %1545 = vmatmul.mubr.bf16.gmra.mrb[0].mxu0 %v268
      %v1546 = vpop.f32.mrb[0].mxu0
      %v1547 = vadd.f32 0.0, %v1546
      %v1548 = vpop.f32.mrb[0].mxu0
      %v1549 = vadd.f32 0.0, %v1548
      %v1550 = vpop.f32.mrb[0].mxu0
      %v1551 = vadd.f32 0.0, %v1550
      %v1552 = vpop.f32.mrb[0].mxu0
      %v1553 = vadd.f32 0.0, %v1552
      %1554 = vmatprep.mubr.bf16.mxu0 0
      %1555 = vmatmul.mubr.bf16.gmra.mrb[0].mxu0 %v271
      %v1556 = vpop.f32.mrb[0].mxu0
      %v1557 = vadd.f32 0.0, %v1556
      %v1558 = vpop.f32.mrb[0].mxu0
      %v1559 = vadd.f32 0.0, %v1558
      %v1560 = vpop.f32.mrb[0].mxu0
      %v1561 = vadd.f32 0.0, %v1560
      %v1562 = vpop.f32.mrb[0].mxu0
      %v1563 = vadd.f32 0.0, %v1562
      %1564 = vdwg.mxu0
      %v1565 = vld [vmem:[#allocation2] sm:$0xff]
      %v1566 = vld [vmem:[#allocation2 + $0x8] sm:$0xff]
      %v1567 = vld [vmem:[#allocation2 + $0x10] sm:$0xff]
      %v1568 = vld [vmem:[#allocation2 + $0x18] sm:$0xff]
      %v1569 = vld [vmem:[#allocation2 + $0x20] sm:$0xff]
      %v1570 = vld [vmem:[#allocation2 + $0x28] sm:$0xff]
      %v1571 = vld [vmem:[#allocation2 + $0x30] sm:$0xff]
      %v1572 = vld [vmem:[#allocation2 + $0x38] sm:$0xff]
      %v1573 = vld [vmem:[#allocation2 + $0x40] sm:$0xff]
      %v1574 = vld [vmem:[#allocation2 + $0x48] sm:$0xff]
      %v1575 = vld [vmem:[#allocation2 + $0x50] sm:$0xff]
      %v1576 = vld [vmem:[#allocation2 + $0x58] sm:$0xff]
      %v1577 = vld [vmem:[#allocation2 + $0x60] sm:$0xff]
      %v1578 = vld [vmem:[#allocation2 + $0x68] sm:$0xff]
      %v1579 = vld [vmem:[#allocation2 + $0x70] sm:$0xff]
      %v1580 = vld [vmem:[#allocation2 + $0x78] sm:$0xff]
      %v1581 = vld [vmem:[#allocation2 + $0x80] sm:$0xff]
      %v1582 = vld [vmem:[#allocation2 + $0x88] sm:$0xff]
      %v1583 = vld [vmem:[#allocation2 + $0x90] sm:$0xff]
      %v1584 = vld [vmem:[#allocation2 + $0x98] sm:$0xff]
      %v1585 = vld [vmem:[#allocation2 + $0xa0] sm:$0xff]
      %v1586 = vld [vmem:[#allocation2 + $0xa8] sm:$0xff]
      %v1587 = vld [vmem:[#allocation2 + $0xb0] sm:$0xff]
      %v1588 = vld [vmem:[#allocation2 + $0xb8] sm:$0xff]
      %v1589 = vld [vmem:[#allocation2 + $0xc0] sm:$0xff]
      %v1590 = vld [vmem:[#allocation2 + $0xc8] sm:$0xff]
      %v1591 = vld [vmem:[#allocation2 + $0xd0] sm:$0xff]
      %v1592 = vld [vmem:[#allocation2 + $0xd8] sm:$0xff]
      %v1593 = vld [vmem:[#allocation2 + $0xe0] sm:$0xff]
      %v1594 = vld [vmem:[#allocation2 + $0xe8] sm:$0xff]
      %v1595 = vld [vmem:[#allocation2 + $0xf0] sm:$0xff]
      %v1596 = vld [vmem:[#allocation2 + $0xf8] sm:$0xff]
      %v1597 = vmax.f32 %v1565, %v1388
      %v1598 = vmax.f32 %v1566, %v1390
      %v1599 = vmax.f32 %v1567, %v1441
      %v1600 = vmax.f32 %v1568, %v1443
      %v1601 = vmax.f32 %v1569, %v1494
      %v1602 = vmax.f32 %v1570, %v1496
      %v1603 = vmax.f32 %v1571, %v1547
      %v1604 = vmax.f32 %v1572, %v1549
      %v1605 = vmax.f32 %v1573, %v1392
      %v1606 = vmax.f32 %v1574, %v1394
      %v1607 = vmax.f32 %v1575, %v1445
      %v1608 = vmax.f32 %v1576, %v1447
      %v1609 = vmax.f32 %v1577, %v1498
      %v1610 = vmax.f32 %v1578, %v1500
      %v1611 = vmax.f32 %v1579, %v1551
      %v1612 = vmax.f32 %v1580, %v1553
      %v1613 = vmax.f32 %v1581, %v1398
      %v1614 = vmax.f32 %v1582, %v1400
      %v1615 = vmax.f32 %v1583, %v1451
      %v1616 = vmax.f32 %v1584, %v1453
      %v1617 = vmax.f32 %v1585, %v1504
      %v1618 = vmax.f32 %v1586, %v1506
      %v1619 = vmax.f32 %v1587, %v1557
      %v1620 = vmax.f32 %v1588, %v1559
      %v1621 = vmax.f32 %v1589, %v1402
      %v1622 = vmax.f32 %v1590, %v1404
      %v1623 = vmax.f32 %v1591, %v1455
      %v1624 = vmax.f32 %v1592, %v1457
      %v1625 = vmax.f32 %v1593, %v1508
      %v1626 = vmax.f32 %v1594, %v1510
      %v1627 = vmax.f32 %v1595, %v1561
      %v1628 = vmax.f32 %v1596, %v1563
      %1629 = vst [vmem:[#allocation2] sm:$0xff] %v1597
      %1630 = vst [vmem:[#allocation2 + $0x8] sm:$0xff] %v1598
      %1631 = vst [vmem:[#allocation2 + $0x10] sm:$0xff] %v1599
      %1632 = vst [vmem:[#allocation2 + $0x18] sm:$0xff] %v1600
      %1633 = vst [vmem:[#allocation2 + $0x20] sm:$0xff] %v1601
      %1634 = vst [vmem:[#allocation2 + $0x28] sm:$0xff] %v1602
      %1635 = vst [vmem:[#allocation2 + $0x30] sm:$0xff] %v1603
      %1636 = vst [vmem:[#allocation2 + $0x38] sm:$0xff] %v1604
      %1637 = vst [vmem:[#allocation2 + $0x40] sm:$0xff] %v1605
      %1638 = vst [vmem:[#allocation2 + $0x48] sm:$0xff] %v1606
      %1639 = vst [vmem:[#allocation2 + $0x50] sm:$0xff] %v1607
      %1640 = vst [vmem:[#allocation2 + $0x58] sm:$0xff] %v1608
      %1641 = vst [vmem:[#allocation2 + $0x60] sm:$0xff] %v1609
      %1642 = vst [vmem:[#allocation2 + $0x68] sm:$0xff] %v1610
      %1643 = vst [vmem:[#allocation2 + $0x70] sm:$0xff] %v1611
      %1644 = vst [vmem:[#allocation2 + $0x78] sm:$0xff] %v1612
      %1645 = vst [vmem:[#allocation2 + $0x80] sm:$0xff] %v1613
      %1646 = vst [vmem:[#allocation2 + $0x88] sm:$0xff] %v1614
      %1647 = vst [vmem:[#allocation2 + $0x90] sm:$0xff] %v1615
      %1648 = vst [vmem:[#allocation2 + $0x98] sm:$0xff] %v1616
      %1649 = vst [vmem:[#allocation2 + $0xa0] sm:$0xff] %v1617
      %1650 = vst [vmem:[#allocation2 + $0xa8] sm:$0xff] %v1618
      %1651 = vst [vmem:[#allocation2 + $0xb0] sm:$0xff] %v1619
      %1652 = vst [vmem:[#allocation2 + $0xb8] sm:$0xff] %v1620
      %1653 = vst [vmem:[#allocation2 + $0xc0] sm:$0xff] %v1621
      %1654 = vst [vmem:[#allocation2 + $0xc8] sm:$0xff] %v1622
      %1655 = vst [vmem:[#allocation2 + $0xd0] sm:$0xff] %v1623
      %1656 = vst [vmem:[#allocation2 + $0xd8] sm:$0xff] %v1624
      %1657 = vst [vmem:[#allocation2 + $0xe0] sm:$0xff] %v1625
      %1658 = vst [vmem:[#allocation2 + $0xe8] sm:$0xff] %v1626
      %1659 = vst [vmem:[#allocation2 + $0xf0] sm:$0xff] %v1627
      %1660 = vst [vmem:[#allocation2 + $0xf8] sm:$0xff] %v1628
      %v1661 = vld [vmem:[%s200 + $0x80] sm:$0xff]
      %v1662 = vld [vmem:[%s200 + $0x88] sm:$0xff]
      %v1663 = vld [vmem:[%s200 + $0x90] sm:$0xff]
      %v1664 = vld [vmem:[%s200 + $0x98] sm:$0xff]
      %v1665 = vld [vmem:[%s200 + $0x280] sm:$0x11]
      %v1666 = vld [vmem:[%s200 + $0x288] sm:$0x11]
      %v1667 = vld [vmem:[%s200 + $0x290] sm:$0x11]
      %v1668 = vld [vmem:[%s200 + $0x298] sm:$0x11]
      %v1677 = vunpack.c.l.b16 %v1661
      %v1678 = vunpack.c.h.b16 %v1661
      %v1679 = vunpack.c.l.b16 %v1662
      %v1680 = vunpack.c.h.b16 %v1662
      %v1681 = vunpack.c.l.b16 %v1663
      %v1682 = vunpack.c.h.b16 %v1663
      %v1683 = vunpack.c.l.b16 %v1664
      %v1684 = vunpack.c.h.b16 %v1664
      %v1685 = vunpack.c.l.b16 %v1665
      %v1686 = vunpack.c.h.b16 %v1665
      %v1687 = vunpack.c.l.b16 %v1666
      %v1688 = vunpack.c.h.b16 %v1666
      %v1689 = vunpack.c.l.b16 %v1667
      %v1690 = vunpack.c.h.b16 %v1667
      %v1691 = vunpack.c.l.b16 %v1668
      %v1692 = vunpack.c.h.b16 %v1668
      %v1693 = vpack.c.b16 %v1685, %v1677
      %v1694 = vpack.c.b16 %v1686, %v1678
      %v1695 = vpack.c.b16 %v1687, %v1679
      %v1696 = vpack.c.b16 %v1688, %v1680
      %v1697 = vpack.c.b16 %v1689, %v1681
      %v1698 = vpack.c.b16 %v1690, %v1682
      %v1699 = vpack.c.b16 %v1691, %v1683
      %v1700 = vpack.c.b16 %v1692, %v1684
      %v1702 = vand.u32 %v1693, %v276
      %v1705 = vand.u32 %v1694, %v276
      %v1708 = vand.u32 %v1695, %v276
      %v1711 = vand.u32 %v1696, %v276
      %v1714 = vand.u32 %v1697, %v276
      %v1717 = vand.u32 %v1698, %v276
      %v1720 = vand.u32 %v1699, %v276
      %v1723 = vand.u32 %v1700, %v276
      %1725 = vmatprep.subr.bf16.mxu0 %v1705
      %1726 = vmatpush1.bf16.msra.mxu0 %v1702
      %1727 = vmatprep.subr.bf16.mxu0 0
      %1728 = vmatpush1.bf16.msra.mxu0 0
      %1729 = vmatprep.subr.bf16.mxu0 0
      %1730 = vmatpush1.bf16.msra.mxu0 0
      %1731 = vmatprep.subr.bf16.mxu0 0
      %1732 = vmatpush1.bf16.msra.mxu0 0
      %1733 = vmatprep.subr.bf16.mxu0 0
      %1734 = vmatpush1.bf16.msra.mxu0 0
      %1735 = vmatprep.subr.bf16.mxu0 0
      %1736 = vmatpush1.bf16.msra.mxu0 0
      %1737 = vmatprep.subr.bf16.mxu0 0
      %1738 = vmatpush1.bf16.msra.mxu0 0
      %1739 = vmatprep.subr.bf16.mxu0 0
      %1740 = vmatpush1.bf16.msra.mxu0 0
      %1741 = vmatprep.subr.bf16.mxu0 0
      %1742 = vmatpush1.bf16.msra.mxu0 0
      %1743 = vmatprep.subr.bf16.mxu0 0
      %1744 = vmatpush1.bf16.msra.mxu0 0
      %1745 = vmatprep.subr.bf16.mxu0 0
      %1746 = vmatpush1.bf16.msra.mxu0 0
      %1747 = vmatprep.subr.bf16.mxu0 0
      %1748 = vmatpush1.bf16.msra.mxu0 0
      %1749 = vmatprep.subr.bf16.mxu0 0
      %1750 = vmatpush1.bf16.msra.mxu0 0
      %1751 = vmatprep.subr.bf16.mxu0 0
      %1752 = vmatpush1.bf16.msra.mxu0 0
      %1753 = vmatprep.subr.bf16.mxu0 0
      %1754 = vmatpush1.bf16.msra.mxu0 0
      %1755 = vmatprep.subr.bf16.mxu0 0
      %1756 = vmatpush1.bf16.msra.mxu0 0
      %1757 = vmatprep.mubr.bf16.mxu0 0
      %1758 = vmatmul.mubr.bf16.gmra.mrb[0].mxu0 %v268
      %v1759 = vpop.f32.mrb[0].mxu0
      %v1760 = vadd.f32 0.0, %v1759
      %v1761 = vpop.f32.mrb[0].mxu0
      %v1762 = vadd.f32 0.0, %v1761
      %v1763 = vpop.f32.mrb[0].mxu0
      %v1764 = vadd.f32 0.0, %v1763
      %v1765 = vpop.f32.mrb[0].mxu0
      %v1766 = vadd.f32 0.0, %v1765
      %1767 = vmatprep.mubr.bf16.mxu0 0
      %1768 = vmatmul.mubr.bf16.gmra.mrb[0].mxu0 %v271
      %v1769 = vpop.f32.mrb[0].mxu0
      %v1770 = vadd.f32 0.0, %v1769
      %v1771 = vpop.f32.mrb[0].mxu0
      %v1772 = vadd.f32 0.0, %v1771
      %v1773 = vpop.f32.mrb[0].mxu0
      %v1774 = vadd.f32 0.0, %v1773
      %v1775 = vpop.f32.mrb[0].mxu0
      %v1776 = vadd.f32 0.0, %v1775
      %1777 = vdwg.mxu0
      %1778 = vmatprep.subr.bf16.mxu0 %v1711
      %1779 = vmatpush1.bf16.msra.mxu0 %v1708
      %1780 = vmatprep.subr.bf16.mxu0 0
      %1781 = vmatpush1.bf16.msra.mxu0 0
      %1782 = vmatprep.subr.bf16.mxu0 0
      %1783 = vmatpush1.bf16.msra.mxu0 0
      %1784 = vmatprep.subr.bf16.mxu0 0
      %1785 = vmatpush1.bf16.msra.mxu0 0
      %1786 = vmatprep.subr.bf16.mxu0 0
      %1787 = vmatpush1.bf16.msra.mxu0 0
      %1788 = vmatprep.subr.bf16.mxu0 0
      %1789 = vmatpush1.bf16.msra.mxu0 0
      %1790 = vmatprep.subr.bf16.mxu0 0
      %1791 = vmatpush1.bf16.msra.mxu0 0
      %1792 = vmatprep.subr.bf16.mxu0 0
      %1793 = vmatpush1.bf16.msra.mxu0 0
      %1794 = vmatprep.subr.bf16.mxu0 0
      %1795 = vmatpush1.bf16.msra.mxu0 0
      %1796 = vmatprep.subr.bf16.mxu0 0
      %1797 = vmatpush1.bf16.msra.mxu0 0
      %1798 = vmatprep.subr.bf16.mxu0 0
      %1799 = vmatpush1.bf16.msra.mxu0 0
      %1800 = vmatprep.subr.bf16.mxu0 0
      %1801 = vmatpush1.bf16.msra.mxu0 0
      %1802 = vmatprep.subr.bf16.mxu0 0
      %1803 = vmatpush1.bf16.msra.mxu0 0
      %1804 = vmatprep.subr.bf16.mxu0 0
      %1805 = vmatpush1.bf16.msra.mxu0 0
      %1806 = vmatprep.subr.bf16.mxu0 0
      %1807 = vmatpush1.bf16.msra.mxu0 0
      %1808 = vmatprep.subr.bf16.mxu0 0
      %1809 = vmatpush1.bf16.msra.mxu0 0
      %1810 = vmatprep.mubr.bf16.mxu0 0
      %1811 = vmatmul.mubr.bf16.gmra.mrb[0].mxu0 %v268
      %v1812 = vpop.f32.mrb[0].mxu0
      %v1813 = vadd.f32 0.0, %v1812
      %v1814 = vpop.f32.mrb[0].mxu0
      %v1815 = vadd.f32 0.0, %v1814
      %v1816 = vpop.f32.mrb[0].mxu0
      %v1817 = vadd.f32 0.0, %v1816
      %v1818 = vpop.f32.mrb[0].mxu0
      %v1819 = vadd.f32 0.0, %v1818
      %1820 = vmatprep.mubr.bf16.mxu0 0
      %1821 = vmatmul.mubr.bf16.gmra.mrb[0].mxu0 %v271
      %v1822 = vpop.f32.mrb[0].mxu0
      %v1823 = vadd.f32 0.0, %v1822
      %v1824 = vpop.f32.mrb[0].mxu0
      %v1825 = vadd.f32 0.0, %v1824
      %v1826 = vpop.f32.mrb[0].mxu0
      %v1827 = vadd.f32 0.0, %v1826
      %v1828 = vpop.f32.mrb[0].mxu0
      %v1829 = vadd.f32 0.0, %v1828
      %1830 = vdwg.mxu0
      %1831 = vmatprep.subr.bf16.mxu0 %v1717
      %1832 = vmatpush1.bf16.msra.mxu0 %v1714
      %1833 = vmatprep.subr.bf16.mxu0 0
      %1834 = vmatpush1.bf16.msra.mxu0 0
      %1835 = vmatprep.subr.bf16.mxu0 0
      %1836 = vmatpush1.bf16.msra.mxu0 0
      %1837 = vmatprep.subr.bf16.mxu0 0
      %1838 = vmatpush1.bf16.msra.mxu0 0
      %1839 = vmatprep.subr.bf16.mxu0 0
      %1840 = vmatpush1.bf16.msra.mxu0 0
      %1841 = vmatprep.subr.bf16.mxu0 0
      %1842 = vmatpush1.bf16.msra.mxu0 0
      %1843 = vmatprep.subr.bf16.mxu0 0
      %1844 = vmatpush1.bf16.msra.mxu0 0
      %1845 = vmatprep.subr.bf16.mxu0 0
      %1846 = vmatpush1.bf16.msra.mxu0 0
      %1847 = vmatprep.subr.bf16.mxu0 0
      %1848 = vmatpush1.bf16.msra.mxu0 0
      %1849 = vmatprep.subr.bf16.mxu0 0
      %1850 = vmatpush1.bf16.msra.mxu0 0
      %1851 = vmatprep.subr.bf16.mxu0 0
      %1852 = vmatpush1.bf16.msra.mxu0 0
      %1853 = vmatprep.subr.bf16.mxu0 0
      %1854 = vmatpush1.bf16.msra.mxu0 0
      %1855 = vmatprep.subr.bf16.mxu0 0
      %1856 = vmatpush1.bf16.msra.mxu0 0
      %1857 = vmatprep.subr.bf16.mxu0 0
      %1858 = vmatpush1.bf16.msra.mxu0 0
      %1859 = vmatprep.subr.bf16.mxu0 0
      %1860 = vmatpush1.bf16.msra.mxu0 0
      %1861 = vmatprep.subr.bf16.mxu0 0
      %1862 = vmatpush1.bf16.msra.mxu0 0
      %1863 = vmatprep.mubr.bf16.mxu0 0
      %1864 = vmatmul.mubr.bf16.gmra.mrb[0].mxu0 %v268
      %v1865 = vpop.f32.mrb[0].mxu0
      %v1866 = vadd.f32 0.0, %v1865
      %v1867 = vpop.f32.mrb[0].mxu0
      %v1868 = vadd.f32 0.0, %v1867
      %v1869 = vpop.f32.mrb[0].mxu0
      %v1870 = vadd.f32 0.0, %v1869
      %v1871 = vpop.f32.mrb[0].mxu0
      %v1872 = vadd.f32 0.0, %v1871
      %1873 = vmatprep.mubr.bf16.mxu0 0
      %1874 = vmatmul.mubr.bf16.gmra.mrb[0].mxu0 %v271
      %v1875 = vpop.f32.mrb[0].mxu0
      %v1876 = vadd.f32 0.0, %v1875
      %v1877 = vpop.f32.mrb[0].mxu0
      %v1878 = vadd.f32 0.0, %v1877
      %v1879 = vpop.f32.mrb[0].mxu0
      %v1880 = vadd.f32 0.0, %v1879
      %v1881 = vpop.f32.mrb[0].mxu0
      %v1882 = vadd.f32 0.0, %v1881
      %1883 = vdwg.mxu0
      %1884 = vmatprep.subr.bf16.mxu0 %v1723
      %1885 = vmatpush1.bf16.msra.mxu0 %v1720
      %1886 = vmatprep.subr.bf16.mxu0 0
      %1887 = vmatpush1.bf16.msra.mxu0 0
      %1888 = vmatprep.subr.bf16.mxu0 0
      %1889 = vmatpush1.bf16.msra.mxu0 0
      %1890 = vmatprep.subr.bf16.mxu0 0
      %1891 = vmatpush1.bf16.msra.mxu0 0
      %1892 = vmatprep.subr.bf16.mxu0 0
      %1893 = vmatpush1.bf16.msra.mxu0 0
      %1894 = vmatprep.subr.bf16.mxu0 0
      %1895 = vmatpush1.bf16.msra.mxu0 0
      %1896 = vmatprep.subr.bf16.mxu0 0
      %1897 = vmatpush1.bf16.msra.mxu0 0
      %1898 = vmatprep.subr.bf16.mxu0 0
      %1899 = vmatpush1.bf16.msra.mxu0 0
      %1900 = vmatprep.subr.bf16.mxu0 0
      %1901 = vmatpush1.bf16.msra.mxu0 0
      %1902 = vmatprep.subr.bf16.mxu0 0
      %1903 = vmatpush1.bf16.msra.mxu0 0
      %1904 = vmatprep.subr.bf16.mxu0 0
      %1905 = vmatpush1.bf16.msra.mxu0 0
      %1906 = vmatprep.subr.bf16.mxu0 0
      %1907 = vmatpush1.bf16.msra.mxu0 0
      %1908 = vmatprep.subr.bf16.mxu0 0
      %1909 = vmatpush1.bf16.msra.mxu0 0
      %1910 = vmatprep.subr.bf16.mxu0 0
      %1911 = vmatpush1.bf16.msra.mxu0 0
      %1912 = vmatprep.subr.bf16.mxu0 0
      %1913 = vmatpush1.bf16.msra.mxu0 0
      %1914 = vmatprep.subr.bf16.mxu0 0
      %1915 = vmatpush1.bf16.msra.mxu0 0
      %1916 = vmatprep.mubr.bf16.mxu0 0
      %1917 = vmatmul.mubr.bf16.gmra.mrb[0].mxu0 %v268
      %v1918 = vpop.f32.mrb[0].mxu0
      %v1919 = vadd.f32 0.0, %v1918
      %v1920 = vpop.f32.mrb[0].mxu0
      %v1921 = vadd.f32 0.0, %v1920
      %v1922 = vpop.f32.mrb[0].mxu0
      %v1923 = vadd.f32 0.0, %v1922
      %v1924 = vpop.f32.mrb[0].mxu0
      %v1925 = vadd.f32 0.0, %v1924
      %1926 = vmatprep.mubr.bf16.mxu0 0
      %1927 = vmatmul.mubr.bf16.gmra.mrb[0].mxu0 %v271
      %v1928 = vpop.f32.mrb[0].mxu0
      %v1929 = vadd.f32 0.0, %v1928
      %v1930 = vpop.f32.mrb[0].mxu0
      %v1931 = vadd.f32 0.0, %v1930
      %v1932 = vpop.f32.mrb[0].mxu0
      %v1933 = vadd.f32 0.0, %v1932
      %v1934 = vpop.f32.mrb[0].mxu0
      %v1935 = vadd.f32 0.0, %v1934
      %1936 = vdwg.mxu0
      %v1937 = vld [vmem:[#allocation2] sm:$0xff]
      %v1938 = vld [vmem:[#allocation2 + $0x8] sm:$0xff]
      %v1939 = vld [vmem:[#allocation2 + $0x10] sm:$0xff]
      %v1940 = vld [vmem:[#allocation2 + $0x18] sm:$0xff]
      %v1941 = vld [vmem:[#allocation2 + $0x20] sm:$0xff]
      %v1942 = vld [vmem:[#allocation2 + $0x28] sm:$0xff]
      %v1943 = vld [vmem:[#allocation2 + $0x30] sm:$0xff]
      %v1944 = vld [vmem:[#allocation2 + $0x38] sm:$0xff]
      %v1945 = vld [vmem:[#allocation2 + $0x40] sm:$0xff]
      %v1946 = vld [vmem:[#allocation2 + $0x48] sm:$0xff]
      %v1947 = vld [vmem:[#allocation2 + $0x50] sm:$0xff]
      %v1948 = vld [vmem:[#allocation2 + $0x58] sm:$0xff]
      %v1949 = vld [vmem:[#allocation2 + $0x60] sm:$0xff]
      %v1950 = vld [vmem:[#allocation2 + $0x68] sm:$0xff]
      %v1951 = vld [vmem:[#allocation2 + $0x70] sm:$0xff]
      %v1952 = vld [vmem:[#allocation2 + $0x78] sm:$0xff]
      %v1953 = vld [vmem:[#allocation2 + $0x80] sm:$0xff]
      %v1954 = vld [vmem:[#allocation2 + $0x88] sm:$0xff]
      %v1955 = vld [vmem:[#allocation2 + $0x90] sm:$0xff]
      %v1956 = vld [vmem:[#allocation2 + $0x98] sm:$0xff]
      %v1957 = vld [vmem:[#allocation2 + $0xa0] sm:$0xff]
      %v1958 = vld [vmem:[#allocation2 + $0xa8] sm:$0xff]
      %v1959 = vld [vmem:[#allocation2 + $0xb0] sm:$0xff]
      %v1960 = vld [vmem:[#allocation2 + $0xb8] sm:$0xff]
      %v1961 = vld [vmem:[#allocation2 + $0xc0] sm:$0xff]
      %v1962 = vld [vmem:[#allocation2 + $0xc8] sm:$0xff]
      %v1963 = vld [vmem:[#allocation2 + $0xd0] sm:$0xff]
      %v1964 = vld [vmem:[#allocation2 + $0xd8] sm:$0xff]
      %v1965 = vld [vmem:[#allocation2 + $0xe0] sm:$0xff]
      %v1966 = vld [vmem:[#allocation2 + $0xe8] sm:$0xff]
      %v1967 = vld [vmem:[#allocation2 + $0xf0] sm:$0xff]
      %v1968 = vld [vmem:[#allocation2 + $0xf8] sm:$0xff]
      %v1969 = vmax.f32 %v1937, %v1760
      %v1970 = vmax.f32 %v1938, %v1762
      %v1971 = vmax.f32 %v1939, %v1813
      %v1972 = vmax.f32 %v1940, %v1815
      %v1973 = vmax.f32 %v1941, %v1866
      %v1974 = vmax.f32 %v1942, %v1868
      %v1975 = vmax.f32 %v1943, %v1919
      %v1976 = vmax.f32 %v1944, %v1921
      %v1977 = vmax.f32 %v1945, %v1764
      %v1978 = vmax.f32 %v1946, %v1766
      %v1979 = vmax.f32 %v1947, %v1817
      %v1980 = vmax.f32 %v1948, %v1819
      %v1981 = vmax.f32 %v1949, %v1870
      %v1982 = vmax.f32 %v1950, %v1872
      %v1983 = vmax.f32 %v1951, %v1923
      %v1984 = vmax.f32 %v1952, %v1925
      %v1985 = vmax.f32 %v1953, %v1770
      %v1986 = vmax.f32 %v1954, %v1772
      %v1987 = vmax.f32 %v1955, %v1823
      %v1988 = vmax.f32 %v1956, %v1825
      %v1989 = vmax.f32 %v1957, %v1876
      %v1990 = vmax.f32 %v1958, %v1878
      %v1991 = vmax.f32 %v1959, %v1929
      %v1992 = vmax.f32 %v1960, %v1931
      %v1993 = vmax.f32 %v1961, %v1774
      %v1994 = vmax.f32 %v1962, %v1776
      %v1995 = vmax.f32 %v1963, %v1827
      %v1996 = vmax.f32 %v1964, %v1829
      %v1997 = vmax.f32 %v1965, %v1880
      %v1998 = vmax.f32 %v1966, %v1882
      %v1999 = vmax.f32 %v1967, %v1933
      %v2000 = vmax.f32 %v1968, %v1935
      %2001 = vst [vmem:[#allocation2] sm:$0xff] %v1969
      %2002 = vst [vmem:[#allocation2 + $0x8] sm:$0xff] %v1970
      %2003 = vst [vmem:[#allocation2 + $0x10] sm:$0xff] %v1971
      %2004 = vst [vmem:[#allocation2 + $0x18] sm:$0xff] %v1972
      %2005 = vst [vmem:[#allocation2 + $0x20] sm:$0xff] %v1973
      %2006 = vst [vmem:[#allocation2 + $0x28] sm:$0xff] %v1974
      %2007 = vst [vmem:[#allocation2 + $0x30] sm:$0xff] %v1975
      %2008 = vst [vmem:[#allocation2 + $0x38] sm:$0xff] %v1976
      %2009 = vst [vmem:[#allocation2 + $0x40] sm:$0xff] %v1977
      %2010 = vst [vmem:[#allocation2 + $0x48] sm:$0xff] %v1978
      %2011 = vst [vmem:[#allocation2 + $0x50] sm:$0xff] %v1979
      %2012 = vst [vmem:[#allocation2 + $0x58] sm:$0xff] %v1980
      %2013 = vst [vmem:[#allocation2 + $0x60] sm:$0xff] %v1981
      %2014 = vst [vmem:[#allocation2 + $0x68] sm:$0xff] %v1982
      %2015 = vst [vmem:[#allocation2 + $0x70] sm:$0xff] %v1983
      %2016 = vst [vmem:[#allocation2 + $0x78] sm:$0xff] %v1984
      %2017 = vst [vmem:[#allocation2 + $0x80] sm:$0xff] %v1985
      %2018 = vst [vmem:[#allocation2 + $0x88] sm:$0xff] %v1986
      %2019 = vst [vmem:[#allocation2 + $0x90] sm:$0xff] %v1987
      %2020 = vst [vmem:[#allocation2 + $0x98] sm:$0xff] %v1988
      %2021 = vst [vmem:[#allocation2 + $0xa0] sm:$0xff] %v1989
      %2022 = vst [vmem:[#allocation2 + $0xa8] sm:$0xff] %v1990
      %2023 = vst [vmem:[#allocation2 + $0xb0] sm:$0xff] %v1991
      %2024 = vst [vmem:[#allocation2 + $0xb8] sm:$0xff] %v1992
      %2025 = vst [vmem:[#allocation2 + $0xc0] sm:$0xff] %v1993
      %2026 = vst [vmem:[#allocation2 + $0xc8] sm:$0xff] %v1994
      %2027 = vst [vmem:[#allocation2 + $0xd0] sm:$0xff] %v1995
      %2028 = vst [vmem:[#allocation2 + $0xd8] sm:$0xff] %v1996
      %2029 = vst [vmem:[#allocation2 + $0xe0] sm:$0xff] %v1997
      %2030 = vst [vmem:[#allocation2 + $0xe8] sm:$0xff] %v1998
      %2031 = vst [vmem:[#allocation2 + $0xf0] sm:$0xff] %v1999
      %2032 = vst [vmem:[#allocation2 + $0xf8] sm:$0xff] %v2000
      %v2033 = vld [vmem:[%s200 + $0xa0] sm:$0xff]
      %v2034 = vld [vmem:[%s200 + $0xa8] sm:$0xff]
      %v2035 = vld [vmem:[%s200 + $0xb0] sm:$0xff]
      %v2036 = vld [vmem:[%s200 + $0xb8] sm:$0xff]
      %v2037 = vld [vmem:[%s200 + $0x2a0] sm:$0x11]
      %v2038 = vld [vmem:[%s200 + $0x2a8] sm:$0x11]
      %v2039 = vld [vmem:[%s200 + $0x2b0] sm:$0x11]
      %v2040 = vld [vmem:[%s200 + $0x2b8] sm:$0x11]
      %v2049 = vunpack.c.l.b16 %v2033
      %v2050 = vunpack.c.h.b16 %v2033
      %v2051 = vunpack.c.l.b16 %v2034
      %v2052 = vunpack.c.h.b16 %v2034
      %v2053 = vunpack.c.l.b16 %v2035
      %v2054 = vunpack.c.h.b16 %v2035
      %v2055 = vunpack.c.l.b16 %v2036
      %v2056 = vunpack.c.h.b16 %v2036
      %v2057 = vunpack.c.l.b16 %v2037
      %v2058 = vunpack.c.h.b16 %v2037
      %v2059 = vunpack.c.l.b16 %v2038
      %v2060 = vunpack.c.h.b16 %v2038
      %v2061 = vunpack.c.l.b16 %v2039
      %v2062 = vunpack.c.h.b16 %v2039
      %v2063 = vunpack.c.l.b16 %v2040
      %v2064 = vunpack.c.h.b16 %v2040
      %v2065 = vpack.c.b16 %v2057, %v2049
      %v2066 = vpack.c.b16 %v2058, %v2050
      %v2067 = vpack.c.b16 %v2059, %v2051
      %v2068 = vpack.c.b16 %v2060, %v2052
      %v2069 = vpack.c.b16 %v2061, %v2053
      %v2070 = vpack.c.b16 %v2062, %v2054
      %v2071 = vpack.c.b16 %v2063, %v2055
      %v2072 = vpack.c.b16 %v2064, %v2056
      %v2074 = vand.u32 %v2065, %v276
      %v2077 = vand.u32 %v2066, %v276
      %v2080 = vand.u32 %v2067, %v276
      %v2083 = vand.u32 %v2068, %v276
      %v2086 = vand.u32 %v2069, %v276
      %v2089 = vand.u32 %v2070, %v276
      %v2092 = vand.u32 %v2071, %v276
      %v2095 = vand.u32 %v2072, %v276
      %2097 = vmatprep.subr.bf16.mxu0 %v2077
      %2098 = vmatpush1.bf16.msra.mxu0 %v2074
      %2099 = vmatprep.subr.bf16.mxu0 0
      %2100 = vmatpush1.bf16.msra.mxu0 0
      %2101 = vmatprep.subr.bf16.mxu0 0
      %2102 = vmatpush1.bf16.msra.mxu0 0
      %2103 = vmatprep.subr.bf16.mxu0 0
      %2104 = vmatpush1.bf16.msra.mxu0 0
      %2105 = vmatprep.subr.bf16.mxu0 0
      %2106 = vmatpush1.bf16.msra.mxu0 0
      %2107 = vmatprep.subr.bf16.mxu0 0
      %2108 = vmatpush1.bf16.msra.mxu0 0
      %2109 = vmatprep.subr.bf16.mxu0 0
      %2110 = vmatpush1.bf16.msra.mxu0 0
      %2111 = vmatprep.subr.bf16.mxu0 0
      %2112 = vmatpush1.bf16.msra.mxu0 0
      %2113 = vmatprep.subr.bf16.mxu0 0
      %2114 = vmatpush1.bf16.msra.mxu0 0
      %2115 = vmatprep.subr.bf16.mxu0 0
      %2116 = vmatpush1.bf16.msra.mxu0 0
      %2117 = vmatprep.subr.bf16.mxu0 0
      %2118 = vmatpush1.bf16.msra.mxu0 0
      %2119 = vmatprep.subr.bf16.mxu0 0
      %2120 = vmatpush1.bf16.msra.mxu0 0
      %2121 = vmatprep.subr.bf16.mxu0 0
      %2122 = vmatpush1.bf16.msra.mxu0 0
      %2123 = vmatprep.subr.bf16.mxu0 0
      %2124 = vmatpush1.bf16.msra.mxu0 0
      %2125 = vmatprep.subr.bf16.mxu0 0
      %2126 = vmatpush1.bf16.msra.mxu0 0
      %2127 = vmatprep.subr.bf16.mxu0 0
      %2128 = vmatpush1.bf16.msra.mxu0 0
      %2129 = vmatprep.mubr.bf16.mxu0 0
      %2130 = vmatmul.mubr.bf16.gmra.mrb[0].mxu0 %v268
      %v2131 = vpop.f32.mrb[0].mxu0
      %v2132 = vadd.f32 0.0, %v2131
      %v2133 = vpop.f32.mrb[0].mxu0
      %v2134 = vadd.f32 0.0, %v2133
      %v2135 = vpop.f32.mrb[0].mxu0
      %v2136 = vadd.f32 0.0, %v2135
      %v2137 = vpop.f32.mrb[0].mxu0
      %v2138 = vadd.f32 0.0, %v2137
      %2139 = vmatprep.mubr.bf16.mxu0 0
      %2140 = vmatmul.mubr.bf16.gmra.mrb[0].mxu0 %v271
      %v2141 = vpop.f32.mrb[0].mxu0
      %v2142 = vadd.f32 0.0, %v2141
      %v2143 = vpop.f32.mrb[0].mxu0
      %v2144 = vadd.f32 0.0, %v2143
      %v2145 = vpop.f32.mrb[0].mxu0
      %v2146 = vadd.f32 0.0, %v2145
      %v2147 = vpop.f32.mrb[0].mxu0
      %v2148 = vadd.f32 0.0, %v2147
      %2149 = vdwg.mxu0
      %2150 = vmatprep.subr.bf16.mxu0 %v2083
      %2151 = vmatpush1.bf16.msra.mxu0 %v2080
      %2152 = vmatprep.subr.bf16.mxu0 0
      %2153 = vmatpush1.bf16.msra.mxu0 0
      %2154 = vmatprep.subr.bf16.mxu0 0
      %2155 = vmatpush1.bf16.msra.mxu0 0
      %2156 = vmatprep.subr.bf16.mxu0 0
      %2157 = vmatpush1.bf16.msra.mxu0 0
      %2158 = vmatprep.subr.bf16.mxu0 0
      %2159 = vmatpush1.bf16.msra.mxu0 0
      %2160 = vmatprep.subr.bf16.mxu0 0
      %2161 = vmatpush1.bf16.msra.mxu0 0
      %2162 = vmatprep.subr.bf16.mxu0 0
      %2163 = vmatpush1.bf16.msra.mxu0 0
      %2164 = vmatprep.subr.bf16.mxu0 0
      %2165 = vmatpush1.bf16.msra.mxu0 0
      %2166 = vmatprep.subr.bf16.mxu0 0
      %2167 = vmatpush1.bf16.msra.mxu0 0
      %2168 = vmatprep.subr.bf16.mxu0 0
      %2169 = vmatpush1.bf16.msra.mxu0 0
      %2170 = vmatprep.subr.bf16.mxu0 0
      %2171 = vmatpush1.bf16.msra.mxu0 0
      %2172 = vmatprep.subr.bf16.mxu0 0
      %2173 = vmatpush1.bf16.msra.mxu0 0
      %2174 = vmatprep.subr.bf16.mxu0 0
      %2175 = vmatpush1.bf16.msra.mxu0 0
      %2176 = vmatprep.subr.bf16.mxu0 0
      %2177 = vmatpush1.bf16.msra.mxu0 0
      %2178 = vmatprep.subr.bf16.mxu0 0
      %2179 = vmatpush1.bf16.msra.mxu0 0
      %2180 = vmatprep.subr.bf16.mxu0 0
      %2181 = vmatpush1.bf16.msra.mxu0 0
      %2182 = vmatprep.mubr.bf16.mxu0 0
      %2183 = vmatmul.mubr.bf16.gmra.mrb[0].mxu0 %v268
      %v2184 = vpop.f32.mrb[0].mxu0
      %v2185 = vadd.f32 0.0, %v2184
      %v2186 = vpop.f32.mrb[0].mxu0
      %v2187 = vadd.f32 0.0, %v2186
      %v2188 = vpop.f32.mrb[0].mxu0
      %v2189 = vadd.f32 0.0, %v2188
      %v2190 = vpop.f32.mrb[0].mxu0
      %v2191 = vadd.f32 0.0, %v2190
      %2192 = vmatprep.mubr.bf16.mxu0 0
      %2193 = vmatmul.mubr.bf16.gmra.mrb[0].mxu0 %v271
      %v2194 = vpop.f32.mrb[0].mxu0
      %v2195 = vadd.f32 0.0, %v2194
      %v2196 = vpop.f32.mrb[0].mxu0
      %v2197 = vadd.f32 0.0, %v2196
      %v2198 = vpop.f32.mrb[0].mxu0
      %v2199 = vadd.f32 0.0, %v2198
      %v2200 = vpop.f32.mrb[0].mxu0
      %v2201 = vadd.f32 0.0, %v2200
      %2202 = vdwg.mxu0
      %2203 = vmatprep.subr.bf16.mxu0 %v2089
      %2204 = vmatpush1.bf16.msra.mxu0 %v2086
      %2205 = vmatprep.subr.bf16.mxu0 0
      %2206 = vmatpush1.bf16.msra.mxu0 0
      %2207 = vmatprep.subr.bf16.mxu0 0
      %2208 = vmatpush1.bf16.msra.mxu0 0
      %2209 = vmatprep.subr.bf16.mxu0 0
      %2210 = vmatpush1.bf16.msra.mxu0 0
      %2211 = vmatprep.subr.bf16.mxu0 0
      %2212 = vmatpush1.bf16.msra.mxu0 0
      %2213 = vmatprep.subr.bf16.mxu0 0
      %2214 = vmatpush1.bf16.msra.mxu0 0
      %2215 = vmatprep.subr.bf16.mxu0 0
      %2216 = vmatpush1.bf16.msra.mxu0 0
      %2217 = vmatprep.subr.bf16.mxu0 0
      %2218 = vmatpush1.bf16.msra.mxu0 0
      %2219 = vmatprep.subr.bf16.mxu0 0
      %2220 = vmatpush1.bf16.msra.mxu0 0
      %2221 = vmatprep.subr.bf16.mxu0 0
      %2222 = vmatpush1.bf16.msra.mxu0 0
      %2223 = vmatprep.subr.bf16.mxu0 0
      %2224 = vmatpush1.bf16.msra.mxu0 0
      %2225 = vmatprep.subr.bf16.mxu0 0
      %2226 = vmatpush1.bf16.msra.mxu0 0
      %2227 = vmatprep.subr.bf16.mxu0 0
      %2228 = vmatpush1.bf16.msra.mxu0 0
      %2229 = vmatprep.subr.bf16.mxu0 0
      %2230 = vmatpush1.bf16.msra.mxu0 0
      %2231 = vmatprep.subr.bf16.mxu0 0
      %2232 = vmatpush1.bf16.msra.mxu0 0
      %2233 = vmatprep.subr.bf16.mxu0 0
      %2234 = vmatpush1.bf16.msra.mxu0 0
      %2235 = vmatprep.mubr.bf16.mxu0 0
      %2236 = vmatmul.mubr.bf16.gmra.mrb[0].mxu0 %v268
      %v2237 = vpop.f32.mrb[0].mxu0
      %v2238 = vadd.f32 0.0, %v2237
      %v2239 = vpop.f32.mrb[0].mxu0
      %v2240 = vadd.f32 0.0, %v2239
      %v2241 = vpop.f32.mrb[0].mxu0
      %v2242 = vadd.f32 0.0, %v2241
      %v2243 = vpop.f32.mrb[0].mxu0
      %v2244 = vadd.f32 0.0, %v2243
      %2245 = vmatprep.mubr.bf16.mxu0 0
      %2246 = vmatmul.mubr.bf16.gmra.mrb[0].mxu0 %v271
      %v2247 = vpop.f32.mrb[0].mxu0
      %v2248 = vadd.f32 0.0, %v2247
      %v2249 = vpop.f32.mrb[0].mxu0
      %v2250 = vadd.f32 0.0, %v2249
      %v2251 = vpop.f32.mrb[0].mxu0
      %v2252 = vadd.f32 0.0, %v2251
      %v2253 = vpop.f32.mrb[0].mxu0
      %v2254 = vadd.f32 0.0, %v2253
      %2255 = vdwg.mxu0
      %2256 = vmatprep.subr.bf16.mxu0 %v2095
      %2257 = vmatpush1.bf16.msra.mxu0 %v2092
      %2258 = vmatprep.subr.bf16.mxu0 0
      %2259 = vmatpush1.bf16.msra.mxu0 0
      %2260 = vmatprep.subr.bf16.mxu0 0
      %2261 = vmatpush1.bf16.msra.mxu0 0
      %2262 = vmatprep.subr.bf16.mxu0 0
      %2263 = vmatpush1.bf16.msra.mxu0 0
      %2264 = vmatprep.subr.bf16.mxu0 0
      %2265 = vmatpush1.bf16.msra.mxu0 0
      %2266 = vmatprep.subr.bf16.mxu0 0
      %2267 = vmatpush1.bf16.msra.mxu0 0
      %2268 = vmatprep.subr.bf16.mxu0 0
      %2269 = vmatpush1.bf16.msra.mxu0 0
      %2270 = vmatprep.subr.bf16.mxu0 0
      %2271 = vmatpush1.bf16.msra.mxu0 0
      %2272 = vmatprep.subr.bf16.mxu0 0
      %2273 = vmatpush1.bf16.msra.mxu0 0
      %2274 = vmatprep.subr.bf16.mxu0 0
      %2275 = vmatpush1.bf16.msra.mxu0 0
      %2276 = vmatprep.subr.bf16.mxu0 0
      %2277 = vmatpush1.bf16.msra.mxu0 0
      %2278 = vmatprep.subr.bf16.mxu0 0
      %2279 = vmatpush1.bf16.msra.mxu0 0
      %2280 = vmatprep.subr.bf16.mxu0 0
      %2281 = vmatpush1.bf16.msra.mxu0 0
      %2282 = vmatprep.subr.bf16.mxu0 0
      %2283 = vmatpush1.bf16.msra.mxu0 0
      %2284 = vmatprep.subr.bf16.mxu0 0
      %2285 = vmatpush1.bf16.msra.mxu0 0
      %2286 = vmatprep.subr.bf16.mxu0 0
      %2287 = vmatpush1.bf16.msra.mxu0 0
      %2288 = vmatprep.mubr.bf16.mxu0 0
      %2289 = vmatmul.mubr.bf16.gmra.mrb[0].mxu0 %v268
      %v2290 = vpop.f32.mrb[0].mxu0
      %v2291 = vadd.f32 0.0, %v2290
      %v2292 = vpop.f32.mrb[0].mxu0
      %v2293 = vadd.f32 0.0, %v2292
      %v2294 = vpop.f32.mrb[0].mxu0
      %v2295 = vadd.f32 0.0, %v2294
      %v2296 = vpop.f32.mrb[0].mxu0
      %v2297 = vadd.f32 0.0, %v2296
      %2298 = vmatprep.mubr.bf16.mxu0 0
      %2299 = vmatmul.mubr.bf16.gmra.mrb[0].mxu0 %v271
      %v2300 = vpop.f32.mrb[0].mxu0
      %v2301 = vadd.f32 0.0, %v2300
      %v2302 = vpop.f32.mrb[0].mxu0
      %v2303 = vadd.f32 0.0, %v2302
      %v2304 = vpop.f32.mrb[0].mxu0
      %v2305 = vadd.f32 0.0, %v2304
      %v2306 = vpop.f32.mrb[0].mxu0
      %v2307 = vadd.f32 0.0, %v2306
      %2308 = vdwg.mxu0
      %v2309 = vld [vmem:[#allocation2] sm:$0xff]
      %v2310 = vld [vmem:[#allocation2 + $0x8] sm:$0xff]
      %v2311 = vld [vmem:[#allocation2 + $0x10] sm:$0xff]
      %v2312 = vld [vmem:[#allocation2 + $0x18] sm:$0xff]
      %v2313 = vld [vmem:[#allocation2 + $0x20] sm:$0xff]
      %v2314 = vld [vmem:[#allocation2 + $0x28] sm:$0xff]
      %v2315 = vld [vmem:[#allocation2 + $0x30] sm:$0xff]
      %v2316 = vld [vmem:[#allocation2 + $0x38] sm:$0xff]
      %v2317 = vld [vmem:[#allocation2 + $0x40] sm:$0xff]
      %v2318 = vld [vmem:[#allocation2 + $0x48] sm:$0xff]
      %v2319 = vld [vmem:[#allocation2 + $0x50] sm:$0xff]
      %v2320 = vld [vmem:[#allocation2 + $0x58] sm:$0xff]
      %v2321 = vld [vmem:[#allocation2 + $0x60] sm:$0xff]
      %v2322 = vld [vmem:[#allocation2 + $0x68] sm:$0xff]
      %v2323 = vld [vmem:[#allocation2 + $0x70] sm:$0xff]
      %v2324 = vld [vmem:[#allocation2 + $0x78] sm:$0xff]
      %v2325 = vld [vmem:[#allocation2 + $0x80] sm:$0xff]
      %v2326 = vld [vmem:[#allocation2 + $0x88] sm:$0xff]
      %v2327 = vld [vmem:[#allocation2 + $0x90] sm:$0xff]
      %v2328 = vld [vmem:[#allocation2 + $0x98] sm:$0xff]
      %v2329 = vld [vmem:[#allocation2 + $0xa0] sm:$0xff]
      %v2330 = vld [vmem:[#allocation2 + $0xa8] sm:$0xff]
      %v2331 = vld [vmem:[#allocation2 + $0xb0] sm:$0xff]
      %v2332 = vld [vmem:[#allocation2 + $0xb8] sm:$0xff]
      %v2333 = vld [vmem:[#allocation2 + $0xc0] sm:$0xff]
      %v2334 = vld [vmem:[#allocation2 + $0xc8] sm:$0xff]
      %v2335 = vld [vmem:[#allocation2 + $0xd0] sm:$0xff]
      %v2336 = vld [vmem:[#allocation2 + $0xd8] sm:$0xff]
      %v2337 = vld [vmem:[#allocation2 + $0xe0] sm:$0xff]
      %v2338 = vld [vmem:[#allocation2 + $0xe8] sm:$0xff]
      %v2339 = vld [vmem:[#allocation2 + $0xf0] sm:$0xff]
      %v2340 = vld [vmem:[#allocation2 + $0xf8] sm:$0xff]
      %v2341 = vmax.f32 %v2309, %v2132
      %v2342 = vmax.f32 %v2310, %v2134
      %v2343 = vmax.f32 %v2311, %v2185
      %v2344 = vmax.f32 %v2312, %v2187
      %v2345 = vmax.f32 %v2313, %v2238
      %v2346 = vmax.f32 %v2314, %v2240
      %v2347 = vmax.f32 %v2315, %v2291
      %v2348 = vmax.f32 %v2316, %v2293
      %v2349 = vmax.f32 %v2317, %v2136
      %v2350 = vmax.f32 %v2318, %v2138
      %v2351 = vmax.f32 %v2319, %v2189
      %v2352 = vmax.f32 %v2320, %v2191
      %v2353 = vmax.f32 %v2321, %v2242
      %v2354 = vmax.f32 %v2322, %v2244
      %v2355 = vmax.f32 %v2323, %v2295
      %v2356 = vmax.f32 %v2324, %v2297
      %v2357 = vmax.f32 %v2325, %v2142
      %v2358 = vmax.f32 %v2326, %v2144
      %v2359 = vmax.f32 %v2327, %v2195
      %v2360 = vmax.f32 %v2328, %v2197
      %v2361 = vmax.f32 %v2329, %v2248
      %v2362 = vmax.f32 %v2330, %v2250
      %v2363 = vmax.f32 %v2331, %v2301
      %v2364 = vmax.f32 %v2332, %v2303
      %v2365 = vmax.f32 %v2333, %v2146
      %v2366 = vmax.f32 %v2334, %v2148
      %v2367 = vmax.f32 %v2335, %v2199
      %v2368 = vmax.f32 %v2336, %v2201
      %v2369 = vmax.f32 %v2337, %v2252
      %v2370 = vmax.f32 %v2338, %v2254
      %v2371 = vmax.f32 %v2339, %v2305
      %v2372 = vmax.f32 %v2340, %v2307
      %2373 = vst [vmem:[#allocation2] sm:$0xff] %v2341
      %2374 = vst [vmem:[#allocation2 + $0x8] sm:$0xff] %v2342
      %2375 = vst [vmem:[#allocation2 + $0x10] sm:$0xff] %v2343
      %2376 = vst [vmem:[#allocation2 + $0x18] sm:$0xff] %v2344
      %2377 = vst [vmem:[#allocation2 + $0x20] sm:$0xff] %v2345
      %2378 = vst [vmem:[#allocation2 + $0x28] sm:$0xff] %v2346
      %2379 = vst [vmem:[#allocation2 + $0x30] sm:$0xff] %v2347
      %2380 = vst [vmem:[#allocation2 + $0x38] sm:$0xff] %v2348
      %2381 = vst [vmem:[#allocation2 + $0x40] sm:$0xff] %v2349
      %2382 = vst [vmem:[#allocation2 + $0x48] sm:$0xff] %v2350
      %2383 = vst [vmem:[#allocation2 + $0x50] sm:$0xff] %v2351
      %2384 = vst [vmem:[#allocation2 + $0x58] sm:$0xff] %v2352
      %2385 = vst [vmem:[#allocation2 + $0x60] sm:$0xff] %v2353
      %2386 = vst [vmem:[#allocation2 + $0x68] sm:$0xff] %v2354
      %2387 = vst [vmem:[#allocation2 + $0x70] sm:$0xff] %v2355
      %2388 = vst [vmem:[#allocation2 + $0x78] sm:$0xff] %v2356
      %2389 = vst [vmem:[#allocation2 + $0x80] sm:$0xff] %v2357
      %2390 = vst [vmem:[#allocation2 + $0x88] sm:$0xff] %v2358
      %2391 = vst [vmem:[#allocation2 + $0x90] sm:$0xff] %v2359
      %2392 = vst [vmem:[#allocation2 + $0x98] sm:$0xff] %v2360
      %2393 = vst [vmem:[#allocation2 + $0xa0] sm:$0xff] %v2361
      %2394 = vst [vmem:[#allocation2 + $0xa8] sm:$0xff] %v2362
      %2395 = vst [vmem:[#allocation2 + $0xb0] sm:$0xff] %v2363
      %2396 = vst [vmem:[#allocation2 + $0xb8] sm:$0xff] %v2364
      %2397 = vst [vmem:[#allocation2 + $0xc0] sm:$0xff] %v2365
      %2398 = vst [vmem:[#allocation2 + $0xc8] sm:$0xff] %v2366
      %2399 = vst [vmem:[#allocation2 + $0xd0] sm:$0xff] %v2367
      %2400 = vst [vmem:[#allocation2 + $0xd8] sm:$0xff] %v2368
      %2401 = vst [vmem:[#allocation2 + $0xe0] sm:$0xff] %v2369
      %2402 = vst [vmem:[#allocation2 + $0xe8] sm:$0xff] %v2370
      %2403 = vst [vmem:[#allocation2 + $0xf0] sm:$0xff] %v2371
      %2404 = vst [vmem:[#allocation2 + $0xf8] sm:$0xff] %v2372
      %v2405 = vld [vmem:[%s200 + $0xc0] sm:$0xff]
      %v2406 = vld [vmem:[%s200 + $0xc8] sm:$0xff]
      %v2407 = vld [vmem:[%s200 + $0xd0] sm:$0xff]
      %v2408 = vld [vmem:[%s200 + $0xd8] sm:$0xff]
      %v2409 = vld [vmem:[%s200 + $0x2c0] sm:$0x11]
      %v2410 = vld [vmem:[%s200 + $0x2c8] sm:$0x11]
      %v2411 = vld [vmem:[%s200 + $0x2d0] sm:$0x11]
      %v2412 = vld [vmem:[%s200 + $0x2d8] sm:$0x11]
      %v2421 = vunpack.c.l.b16 %v2405
      %v2422 = vunpack.c.h.b16 %v2405
      %v2423 = vunpack.c.l.b16 %v2406
      %v2424 = vunpack.c.h.b16 %v2406
      %v2425 = vunpack.c.l.b16 %v2407
      %v2426 = vunpack.c.h.b16 %v2407
      %v2427 = vunpack.c.l.b16 %v2408
      %v2428 = vunpack.c.h.b16 %v2408
      %v2429 = vunpack.c.l.b16 %v2409
      %v2430 = vunpack.c.h.b16 %v2409
      %v2431 = vunpack.c.l.b16 %v2410
      %v2432 = vunpack.c.h.b16 %v2410
      %v2433 = vunpack.c.l.b16 %v2411
      %v2434 = vunpack.c.h.b16 %v2411
      %v2435 = vunpack.c.l.b16 %v2412
      %v2436 = vunpack.c.h.b16 %v2412
      %v2437 = vpack.c.b16 %v2429, %v2421
      %v2438 = vpack.c.b16 %v2430, %v2422
      %v2439 = vpack.c.b16 %v2431, %v2423
      %v2440 = vpack.c.b16 %v2432, %v2424
      %v2441 = vpack.c.b16 %v2433, %v2425
      %v2442 = vpack.c.b16 %v2434, %v2426
      %v2443 = vpack.c.b16 %v2435, %v2427
      %v2444 = vpack.c.b16 %v2436, %v2428
      %v2446 = vand.u32 %v2437, %v276
      %v2449 = vand.u32 %v2438, %v276
      %v2452 = vand.u32 %v2439, %v276
      %v2455 = vand.u32 %v2440, %v276
      %v2458 = vand.u32 %v2441, %v276
      %v2461 = vand.u32 %v2442, %v276
      %v2464 = vand.u32 %v2443, %v276
      %v2467 = vand.u32 %v2444, %v276
      %2469 = vmatprep.subr.bf16.mxu0 %v2449
      %2470 = vmatpush1.bf16.msra.mxu0 %v2446
      %2471 = vmatprep.subr.bf16.mxu0 0
      %2472 = vmatpush1.bf16.msra.mxu0 0
      %2473 = vmatprep.subr.bf16.mxu0 0
      %2474 = vmatpush1.bf16.msra.mxu0 0
      %2475 = vmatprep.subr.bf16.mxu0 0
      %2476 = vmatpush1.bf16.msra.mxu0 0
      %2477 = vmatprep.subr.bf16.mxu0 0
      %2478 = vmatpush1.bf16.msra.mxu0 0
      %2479 = vmatprep.subr.bf16.mxu0 0
      %2480 = vmatpush1.bf16.msra.mxu0 0
      %2481 = vmatprep.subr.bf16.mxu0 0
      %2482 = vmatpush1.bf16.msra.mxu0 0
      %2483 = vmatprep.subr.bf16.mxu0 0
      %2484 = vmatpush1.bf16.msra.mxu0 0
      %2485 = vmatprep.subr.bf16.mxu0 0
      %2486 = vmatpush1.bf16.msra.mxu0 0
      %2487 = vmatprep.subr.bf16.mxu0 0
      %2488 = vmatpush1.bf16.msra.mxu0 0
      %2489 = vmatprep.subr.bf16.mxu0 0
      %2490 = vmatpush1.bf16.msra.mxu0 0
      %2491 = vmatprep.subr.bf16.mxu0 0
      %2492 = vmatpush1.bf16.msra.mxu0 0
      %2493 = vmatprep.subr.bf16.mxu0 0
      %2494 = vmatpush1.bf16.msra.mxu0 0
      %2495 = vmatprep.subr.bf16.mxu0 0
      %2496 = vmatpush1.bf16.msra.mxu0 0
      %2497 = vmatprep.subr.bf16.mxu0 0
      %2498 = vmatpush1.bf16.msra.mxu0 0
      %2499 = vmatprep.subr.bf16.mxu0 0
      %2500 = vmatpush1.bf16.msra.mxu0 0
      %2501 = vmatprep.mubr.bf16.mxu0 0
      %2502 = vmatmul.mubr.bf16.gmra.mrb[0].mxu0 %v268
      %v2503 = vpop.f32.mrb[0].mxu0
      %v2504 = vadd.f32 0.0, %v2503
      %v2505 = vpop.f32.mrb[0].mxu0
      %v2506 = vadd.f32 0.0, %v2505
      %v2507 = vpop.f32.mrb[0].mxu0
      %v2508 = vadd.f32 0.0, %v2507
      %v2509 = vpop.f32.mrb[0].mxu0
      %v2510 = vadd.f32 0.0, %v2509
      %2511 = vmatprep.mubr.bf16.mxu0 0
      %2512 = vmatmul.mubr.bf16.gmra.mrb[0].mxu0 %v271
      %v2513 = vpop.f32.mrb[0].mxu0
      %v2514 = vadd.f32 0.0, %v2513
      %v2515 = vpop.f32.mrb[0].mxu0
      %v2516 = vadd.f32 0.0, %v2515
      %v2517 = vpop.f32.mrb[0].mxu0
      %v2518 = vadd.f32 0.0, %v2517
      %v2519 = vpop.f32.mrb[0].mxu0
      %v2520 = vadd.f32 0.0, %v2519
      %2521 = vdwg.mxu0
      %2522 = vmatprep.subr.bf16.mxu0 %v2455
      %2523 = vmatpush1.bf16.msra.mxu0 %v2452
      %2524 = vmatprep.subr.bf16.mxu0 0
      %2525 = vmatpush1.bf16.msra.mxu0 0
      %2526 = vmatprep.subr.bf16.mxu0 0
      %2527 = vmatpush1.bf16.msra.mxu0 0
      %2528 = vmatprep.subr.bf16.mxu0 0
      %2529 = vmatpush1.bf16.msra.mxu0 0
      %2530 = vmatprep.subr.bf16.mxu0 0
      %2531 = vmatpush1.bf16.msra.mxu0 0
      %2532 = vmatprep.subr.bf16.mxu0 0
      %2533 = vmatpush1.bf16.msra.mxu0 0
      %2534 = vmatprep.subr.bf16.mxu0 0
      %2535 = vmatpush1.bf16.msra.mxu0 0
      %2536 = vmatprep.subr.bf16.mxu0 0
      %2537 = vmatpush1.bf16.msra.mxu0 0
      %2538 = vmatprep.subr.bf16.mxu0 0
      %2539 = vmatpush1.bf16.msra.mxu0 0
      %2540 = vmatprep.subr.bf16.mxu0 0
      %2541 = vmatpush1.bf16.msra.mxu0 0
      %2542 = vmatprep.subr.bf16.mxu0 0
      %2543 = vmatpush1.bf16.msra.mxu0 0
      %2544 = vmatprep.subr.bf16.mxu0 0
      %2545 = vmatpush1.bf16.msra.mxu0 0
      %2546 = vmatprep.subr.bf16.mxu0 0
      %2547 = vmatpush1.bf16.msra.mxu0 0
      %2548 = vmatprep.subr.bf16.mxu0 0
      %2549 = vmatpush1.bf16.msra.mxu0 0
      %2550 = vmatprep.subr.bf16.mxu0 0
      %2551 = vmatpush1.bf16.msra.mxu0 0
      %2552 = vmatprep.subr.bf16.mxu0 0
      %2553 = vmatpush1.bf16.msra.mxu0 0
      %2554 = vmatprep.mubr.bf16.mxu0 0
      %2555 = vmatmul.mubr.bf16.gmra.mrb[0].mxu0 %v268
      %v2556 = vpop.f32.mrb[0].mxu0
      %v2557 = vadd.f32 0.0, %v2556
      %v2558 = vpop.f32.mrb[0].mxu0
      %v2559 = vadd.f32 0.0, %v2558
      %v2560 = vpop.f32.mrb[0].mxu0
      %v2561 = vadd.f32 0.0, %v2560
      %v2562 = vpop.f32.mrb[0].mxu0
      %v2563 = vadd.f32 0.0, %v2562
      %2564 = vmatprep.mubr.bf16.mxu0 0
      %2565 = vmatmul.mubr.bf16.gmra.mrb[0].mxu0 %v271
      %v2566 = vpop.f32.mrb[0].mxu0
      %v2567 = vadd.f32 0.0, %v2566
      %v2568 = vpop.f32.mrb[0].mxu0
      %v2569 = vadd.f32 0.0, %v2568
      %v2570 = vpop.f32.mrb[0].mxu0
      %v2571 = vadd.f32 0.0, %v2570
      %v2572 = vpop.f32.mrb[0].mxu0
      %v2573 = vadd.f32 0.0, %v2572
      %2574 = vdwg.mxu0
      %2575 = vmatprep.subr.bf16.mxu0 %v2461
      %2576 = vmatpush1.bf16.msra.mxu0 %v2458
      %2577 = vmatprep.subr.bf16.mxu0 0
      %2578 = vmatpush1.bf16.msra.mxu0 0
      %2579 = vmatprep.subr.bf16.mxu0 0
      %2580 = vmatpush1.bf16.msra.mxu0 0
      %2581 = vmatprep.subr.bf16.mxu0 0
      %2582 = vmatpush1.bf16.msra.mxu0 0
      %2583 = vmatprep.subr.bf16.mxu0 0
      %2584 = vmatpush1.bf16.msra.mxu0 0
      %2585 = vmatprep.subr.bf16.mxu0 0
      %2586 = vmatpush1.bf16.msra.mxu0 0
      %2587 = vmatprep.subr.bf16.mxu0 0
      %2588 = vmatpush1.bf16.msra.mxu0 0
      %2589 = vmatprep.subr.bf16.mxu0 0
      %2590 = vmatpush1.bf16.msra.mxu0 0
      %2591 = vmatprep.subr.bf16.mxu0 0
      %2592 = vmatpush1.bf16.msra.mxu0 0
      %2593 = vmatprep.subr.bf16.mxu0 0
      %2594 = vmatpush1.bf16.msra.mxu0 0
      %2595 = vmatprep.subr.bf16.mxu0 0
      %2596 = vmatpush1.bf16.msra.mxu0 0
      %2597 = vmatprep.subr.bf16.mxu0 0
      %2598 = vmatpush1.bf16.msra.mxu0 0
      %2599 = vmatprep.subr.bf16.mxu0 0
      %2600 = vmatpush1.bf16.msra.mxu0 0
      %2601 = vmatprep.subr.bf16.mxu0 0
      %2602 = vmatpush1.bf16.msra.mxu0 0
      %2603 = vmatprep.subr.bf16.mxu0 0
      %2604 = vmatpush1.bf16.msra.mxu0 0
      %2605 = vmatprep.subr.bf16.mxu0 0
      %2606 = vmatpush1.bf16.msra.mxu0 0
      %2607 = vmatprep.mubr.bf16.mxu0 0
      %2608 = vmatmul.mubr.bf16.gmra.mrb[0].mxu0 %v268
      %v2609 = vpop.f32.mrb[0].mxu0
      %v2610 = vadd.f32 0.0, %v2609
      %v2611 = vpop.f32.mrb[0].mxu0
      %v2612 = vadd.f32 0.0, %v2611
      %v2613 = vpop.f32.mrb[0].mxu0
      %v2614 = vadd.f32 0.0, %v2613
      %v2615 = vpop.f32.mrb[0].mxu0
      %v2616 = vadd.f32 0.0, %v2615
      %2617 = vmatprep.mubr.bf16.mxu0 0
      %2618 = vmatmul.mubr.bf16.gmra.mrb[0].mxu0 %v271
      %v2619 = vpop.f32.mrb[0].mxu0
      %v2620 = vadd.f32 0.0, %v2619
      %v2621 = vpop.f32.mrb[0].mxu0
      %v2622 = vadd.f32 0.0, %v2621
      %v2623 = vpop.f32.mrb[0].mxu0
      %v2624 = vadd.f32 0.0, %v2623
      %v2625 = vpop.f32.mrb[0].mxu0
      %v2626 = vadd.f32 0.0, %v2625
      %2627 = vdwg.mxu0
      %2628 = vmatprep.subr.bf16.mxu0 %v2467
      %2629 = vmatpush1.bf16.msra.mxu0 %v2464
      %2630 = vmatprep.subr.bf16.mxu0 0
      %2631 = vmatpush1.bf16.msra.mxu0 0
      %2632 = vmatprep.subr.bf16.mxu0 0
      %2633 = vmatpush1.bf16.msra.mxu0 0
      %2634 = vmatprep.subr.bf16.mxu0 0
      %2635 = vmatpush1.bf16.msra.mxu0 0
      %2636 = vmatprep.subr.bf16.mxu0 0
      %2637 = vmatpush1.bf16.msra.mxu0 0
      %2638 = vmatprep.subr.bf16.mxu0 0
      %2639 = vmatpush1.bf16.msra.mxu0 0
      %2640 = vmatprep.subr.bf16.mxu0 0
      %2641 = vmatpush1.bf16.msra.mxu0 0
      %2642 = vmatprep.subr.bf16.mxu0 0
      %2643 = vmatpush1.bf16.msra.mxu0 0
      %2644 = vmatprep.subr.bf16.mxu0 0
      %2645 = vmatpush1.bf16.msra.mxu0 0
      %2646 = vmatprep.subr.bf16.mxu0 0
      %2647 = vmatpush1.bf16.msra.mxu0 0
      %2648 = vmatprep.subr.bf16.mxu0 0
      %2649 = vmatpush1.bf16.msra.mxu0 0
      %2650 = vmatprep.subr.bf16.mxu0 0
      %2651 = vmatpush1.bf16.msra.mxu0 0
      %2652 = vmatprep.subr.bf16.mxu0 0
      %2653 = vmatpush1.bf16.msra.mxu0 0
      %2654 = vmatprep.subr.bf16.mxu0 0
      %2655 = vmatpush1.bf16.msra.mxu0 0
      %2656 = vmatprep.subr.bf16.mxu0 0
      %2657 = vmatpush1.bf16.msra.mxu0 0
      %2658 = vmatprep.subr.bf16.mxu0 0
      %2659 = vmatpush1.bf16.msra.mxu0 0
      %2660 = vmatprep.mubr.bf16.mxu0 0
      %2661 = vmatmul.mubr.bf16.gmra.mrb[0].mxu0 %v268
      %v2662 = vpop.f32.mrb[0].mxu0
      %v2663 = vadd.f32 0.0, %v2662
      %v2664 = vpop.f32.mrb[0].mxu0
      %v2665 = vadd.f32 0.0, %v2664
      %v2666 = vpop.f32.mrb[0].mxu0
      %v2667 = vadd.f32 0.0, %v2666
      %v2668 = vpop.f32.mrb[0].mxu0
      %v2669 = vadd.f32 0.0, %v2668
      %2670 = vmatprep.mubr.bf16.mxu0 0
      %2671 = vmatmul.mubr.bf16.gmra.mrb[0].mxu0 %v271
      %v2672 = vpop.f32.mrb[0].mxu0
      %v2673 = vadd.f32 0.0, %v2672
      %v2674 = vpop.f32.mrb[0].mxu0
      %v2675 = vadd.f32 0.0, %v2674
      %v2676 = vpop.f32.mrb[0].mxu0
      %v2677 = vadd.f32 0.0, %v2676
      %v2678 = vpop.f32.mrb[0].mxu0
      %v2679 = vadd.f32 0.0, %v2678
      %2680 = vdwg.mxu0
      %v2681 = vld [vmem:[#allocation2] sm:$0xff]
      %v2682 = vld [vmem:[#allocation2 + $0x8] sm:$0xff]
      %v2683 = vld [vmem:[#allocation2 + $0x10] sm:$0xff]
      %v2684 = vld [vmem:[#allocation2 + $0x18] sm:$0xff]
      %v2685 = vld [vmem:[#allocation2 + $0x20] sm:$0xff]
      %v2686 = vld [vmem:[#allocation2 + $0x28] sm:$0xff]
      %v2687 = vld [vmem:[#allocation2 + $0x30] sm:$0xff]
      %v2688 = vld [vmem:[#allocation2 + $0x38] sm:$0xff]
      %v2689 = vld [vmem:[#allocation2 + $0x40] sm:$0xff]
      %v2690 = vld [vmem:[#allocation2 + $0x48] sm:$0xff]
      %v2691 = vld [vmem:[#allocation2 + $0x50] sm:$0xff]
      %v2692 = vld [vmem:[#allocation2 + $0x58] sm:$0xff]
      %v2693 = vld [vmem:[#allocation2 + $0x60] sm:$0xff]
      %v2694 = vld [vmem:[#allocation2 + $0x68] sm:$0xff]
      %v2695 = vld [vmem:[#allocation2 + $0x70] sm:$0xff]
      %v2696 = vld [vmem:[#allocation2 + $0x78] sm:$0xff]
      %v2697 = vld [vmem:[#allocation2 + $0x80] sm:$0xff]
      %v2698 = vld [vmem:[#allocation2 + $0x88] sm:$0xff]
      %v2699 = vld [vmem:[#allocation2 + $0x90] sm:$0xff]
      %v2700 = vld [vmem:[#allocation2 + $0x98] sm:$0xff]
      %v2701 = vld [vmem:[#allocation2 + $0xa0] sm:$0xff]
      %v2702 = vld [vmem:[#allocation2 + $0xa8] sm:$0xff]
      %v2703 = vld [vmem:[#allocation2 + $0xb0] sm:$0xff]
      %v2704 = vld [vmem:[#allocation2 + $0xb8] sm:$0xff]
      %v2705 = vld [vmem:[#allocation2 + $0xc0] sm:$0xff]
      %v2706 = vld [vmem:[#allocation2 + $0xc8] sm:$0xff]
      %v2707 = vld [vmem:[#allocation2 + $0xd0] sm:$0xff]
      %v2708 = vld [vmem:[#allocation2 + $0xd8] sm:$0xff]
      %v2709 = vld [vmem:[#allocation2 + $0xe0] sm:$0xff]
      %v2710 = vld [vmem:[#allocation2 + $0xe8] sm:$0xff]
      %v2711 = vld [vmem:[#allocation2 + $0xf0] sm:$0xff]
      %v2712 = vld [vmem:[#allocation2 + $0xf8] sm:$0xff]
      %v2713 = vmax.f32 %v2681, %v2504
      %v2714 = vmax.f32 %v2682, %v2506
      %v2715 = vmax.f32 %v2683, %v2557
      %v2716 = vmax.f32 %v2684, %v2559
      %v2717 = vmax.f32 %v2685, %v2610
      %v2718 = vmax.f32 %v2686, %v2612
      %v2719 = vmax.f32 %v2687, %v2663
      %v2720 = vmax.f32 %v2688, %v2665
      %v2721 = vmax.f32 %v2689, %v2508
      %v2722 = vmax.f32 %v2690, %v2510
      %v2723 = vmax.f32 %v2691, %v2561
      %v2724 = vmax.f32 %v2692, %v2563
      %v2725 = vmax.f32 %v2693, %v2614
      %v2726 = vmax.f32 %v2694, %v2616
      %v2727 = vmax.f32 %v2695, %v2667
      %v2728 = vmax.f32 %v2696, %v2669
      %v2729 = vmax.f32 %v2697, %v2514
      %v2730 = vmax.f32 %v2698, %v2516
      %v2731 = vmax.f32 %v2699, %v2567
      %v2732 = vmax.f32 %v2700, %v2569
      %v2733 = vmax.f32 %v2701, %v2620
      %v2734 = vmax.f32 %v2702, %v2622
      %v2735 = vmax.f32 %v2703, %v2673
      %v2736 = vmax.f32 %v2704, %v2675
      %v2737 = vmax.f32 %v2705, %v2518
      %v2738 = vmax.f32 %v2706, %v2520
      %v2739 = vmax.f32 %v2707, %v2571
      %v2740 = vmax.f32 %v2708, %v2573
      %v2741 = vmax.f32 %v2709, %v2624
      %v2742 = vmax.f32 %v2710, %v2626
      %v2743 = vmax.f32 %v2711, %v2677
      %v2744 = vmax.f32 %v2712, %v2679
      %2745 = vst [vmem:[#allocation2] sm:$0xff] %v2713
      %2746 = vst [vmem:[#allocation2 + $0x8] sm:$0xff] %v2714
      %2747 = vst [vmem:[#allocation2 + $0x10] sm:$0xff] %v2715
      %2748 = vst [vmem:[#allocation2 + $0x18] sm:$0xff] %v2716
      %2749 = vst [vmem:[#allocation2 + $0x20] sm:$0xff] %v2717
      %2750 = vst [vmem:[#allocation2 + $0x28] sm:$0xff] %v2718
      %2751 = vst [vmem:[#allocation2 + $0x30] sm:$0xff] %v2719
      %2752 = vst [vmem:[#allocation2 + $0x38] sm:$0xff] %v2720
      %2753 = vst [vmem:[#allocation2 + $0x40] sm:$0xff] %v2721
      %2754 = vst [vmem:[#allocation2 + $0x48] sm:$0xff] %v2722
      %2755 = vst [vmem:[#allocation2 + $0x50] sm:$0xff] %v2723
      %2756 = vst [vmem:[#allocation2 + $0x58] sm:$0xff] %v2724
      %2757 = vst [vmem:[#allocation2 + $0x60] sm:$0xff] %v2725
      %2758 = vst [vmem:[#allocation2 + $0x68] sm:$0xff] %v2726
      %2759 = vst [vmem:[#allocation2 + $0x70] sm:$0xff] %v2727
      %2760 = vst [vmem:[#allocation2 + $0x78] sm:$0xff] %v2728
      %2761 = vst [vmem:[#allocation2 + $0x80] sm:$0xff] %v2729
      %2762 = vst [vmem:[#allocation2 + $0x88] sm:$0xff] %v2730
      %2763 = vst [vmem:[#allocation2 + $0x90] sm:$0xff] %v2731
      %2764 = vst [vmem:[#allocation2 + $0x98] sm:$0xff] %v2732
      %2765 = vst [vmem:[#allocation2 + $0xa0] sm:$0xff] %v2733
      %2766 = vst [vmem:[#allocation2 + $0xa8] sm:$0xff] %v2734
      %2767 = vst [vmem:[#allocation2 + $0xb0] sm:$0xff] %v2735
      %2768 = vst [vmem:[#allocation2 + $0xb8] sm:$0xff] %v2736
      %2769 = vst [vmem:[#allocation2 + $0xc0] sm:$0xff] %v2737
      %2770 = vst [vmem:[#allocation2 + $0xc8] sm:$0xff] %v2738
      %2771 = vst [vmem:[#allocation2 + $0xd0] sm:$0xff] %v2739
      %2772 = vst [vmem:[#allocation2 + $0xd8] sm:$0xff] %v2740
      %2773 = vst [vmem:[#allocation2 + $0xe0] sm:$0xff] %v2741
      %2774 = vst [vmem:[#allocation2 + $0xe8] sm:$0xff] %v2742
      %2775 = vst [vmem:[#allocation2 + $0xf0] sm:$0xff] %v2743
      %2776 = vst [vmem:[#allocation2 + $0xf8] sm:$0xff] %v2744
      %v2777 = vld [vmem:[%s200 + $0xe0] sm:$0xff]
      %v2778 = vld [vmem:[%s200 + $0xe8] sm:$0xff]
      %v2779 = vld [vmem:[%s200 + $0xf0] sm:$0xff]
      %v2780 = vld [vmem:[%s200 + $0xf8] sm:$0xff]
      %v2781 = vld [vmem:[%s200 + $0x2e0] sm:$0x11]
      %v2782 = vld [vmem:[%s200 + $0x2e8] sm:$0x11]
      %v2783 = vld [vmem:[%s200 + $0x2f0] sm:$0x11]
      %v2784 = vld [vmem:[%s200 + $0x2f8] sm:$0x11]
      %v2793 = vunpack.c.l.b16 %v2777
      %v2794 = vunpack.c.h.b16 %v2777
      %v2795 = vunpack.c.l.b16 %v2778
      %v2796 = vunpack.c.h.b16 %v2778
      %v2797 = vunpack.c.l.b16 %v2779
      %v2798 = vunpack.c.h.b16 %v2779
      %v2799 = vunpack.c.l.b16 %v2780
      %v2800 = vunpack.c.h.b16 %v2780
      %v2801 = vunpack.c.l.b16 %v2781
      %v2802 = vunpack.c.h.b16 %v2781
      %v2803 = vunpack.c.l.b16 %v2782
      %v2804 = vunpack.c.h.b16 %v2782
      %v2805 = vunpack.c.l.b16 %v2783
      %v2806 = vunpack.c.h.b16 %v2783
      %v2807 = vunpack.c.l.b16 %v2784
      %v2808 = vunpack.c.h.b16 %v2784
      %v2809 = vpack.c.b16 %v2801, %v2793
      %v2810 = vpack.c.b16 %v2802, %v2794
      %v2811 = vpack.c.b16 %v2803, %v2795
      %v2812 = vpack.c.b16 %v2804, %v2796
      %v2813 = vpack.c.b16 %v2805, %v2797
      %v2814 = vpack.c.b16 %v2806, %v2798
      %v2815 = vpack.c.b16 %v2807, %v2799
      %v2816 = vpack.c.b16 %v2808, %v2800
      %v2818 = vand.u32 %v2809, %v276
      %v2821 = vand.u32 %v2810, %v276
      %v2824 = vand.u32 %v2811, %v276
      %v2827 = vand.u32 %v2812, %v276
      %v2830 = vand.u32 %v2813, %v276
      %v2833 = vand.u32 %v2814, %v276
      %v2836 = vand.u32 %v2815, %v276
      %v2839 = vand.u32 %v2816, %v276
      %2841 = vmatprep.subr.bf16.mxu0 %v2821
      %2842 = vmatpush1.bf16.msra.mxu0 %v2818
      %2843 = vmatprep.subr.bf16.mxu0 0
      %2844 = vmatpush1.bf16.msra.mxu0 0
      %2845 = vmatprep.subr.bf16.mxu0 0
      %2846 = vmatpush1.bf16.msra.mxu0 0
      %2847 = vmatprep.subr.bf16.mxu0 0
      %2848 = vmatpush1.bf16.msra.mxu0 0
      %2849 = vmatprep.subr.bf16.mxu0 0
      %2850 = vmatpush1.bf16.msra.mxu0 0
      %2851 = vmatprep.subr.bf16.mxu0 0
      %2852 = vmatpush1.bf16.msra.mxu0 0
      %2853 = vmatprep.subr.bf16.mxu0 0
      %2854 = vmatpush1.bf16.msra.mxu0 0
      %2855 = vmatprep.subr.bf16.mxu0 0
      %2856 = vmatpush1.bf16.msra.mxu0 0
      %2857 = vmatprep.subr.bf16.mxu0 0
      %2858 = vmatpush1.bf16.msra.mxu0 0
      %2859 = vmatprep.subr.bf16.mxu0 0
      %2860 = vmatpush1.bf16.msra.mxu0 0
      %2861 = vmatprep.subr.bf16.mxu0 0
      %2862 = vmatpush1.bf16.msra.mxu0 0
      %2863 = vmatprep.subr.bf16.mxu0 0
      %2864 = vmatpush1.bf16.msra.mxu0 0
      %2865 = vmatprep.subr.bf16.mxu0 0
      %2866 = vmatpush1.bf16.msra.mxu0 0
      %2867 = vmatprep.subr.bf16.mxu0 0
      %2868 = vmatpush1.bf16.msra.mxu0 0
      %2869 = vmatprep.subr.bf16.mxu0 0
      %2870 = vmatpush1.bf16.msra.mxu0 0
      %2871 = vmatprep.subr.bf16.mxu0 0
      %2872 = vmatpush1.bf16.msra.mxu0 0
      %2873 = vmatprep.mubr.bf16.mxu0 0
      %2874 = vmatmul.mubr.bf16.gmra.mrb[0].mxu0 %v268
      %v2875 = vpop.f32.mrb[0].mxu0
      %v2876 = vadd.f32 0.0, %v2875
      %v2877 = vpop.f32.mrb[0].mxu0
      %v2878 = vadd.f32 0.0, %v2877
      %v2879 = vpop.f32.mrb[0].mxu0
      %v2880 = vadd.f32 0.0, %v2879
      %v2881 = vpop.f32.mrb[0].mxu0
      %v2882 = vadd.f32 0.0, %v2881
      %2883 = vmatprep.mubr.bf16.mxu0 0
      %2884 = vmatmul.mubr.bf16.gmra.mrb[0].mxu0 %v271
      %v2885 = vpop.f32.mrb[0].mxu0
      %v2886 = vadd.f32 0.0, %v2885
      %v2887 = vpop.f32.mrb[0].mxu0
      %v2888 = vadd.f32 0.0, %v2887
      %v2889 = vpop.f32.mrb[0].mxu0
      %v2890 = vadd.f32 0.0, %v2889
      %v2891 = vpop.f32.mrb[0].mxu0
      %v2892 = vadd.f32 0.0, %v2891
      %2893 = vdwg.mxu0
      %2894 = vmatprep.subr.bf16.mxu0 %v2827
      %2895 = vmatpush1.bf16.msra.mxu0 %v2824
      %2896 = vmatprep.subr.bf16.mxu0 0
      %2897 = vmatpush1.bf16.msra.mxu0 0
      %2898 = vmatprep.subr.bf16.mxu0 0
      %2899 = vmatpush1.bf16.msra.mxu0 0
      %2900 = vmatprep.subr.bf16.mxu0 0
      %2901 = vmatpush1.bf16.msra.mxu0 0
      %2902 = vmatprep.subr.bf16.mxu0 0
      %2903 = vmatpush1.bf16.msra.mxu0 0
      %2904 = vmatprep.subr.bf16.mxu0 0
      %2905 = vmatpush1.bf16.msra.mxu0 0
      %2906 = vmatprep.subr.bf16.mxu0 0
      %2907 = vmatpush1.bf16.msra.mxu0 0
      %2908 = vmatprep.subr.bf16.mxu0 0
      %2909 = vmatpush1.bf16.msra.mxu0 0
      %2910 = vmatprep.subr.bf16.mxu0 0
      %2911 = vmatpush1.bf16.msra.mxu0 0
      %2912 = vmatprep.subr.bf16.mxu0 0
      %2913 = vmatpush1.bf16.msra.mxu0 0
      %2914 = vmatprep.subr.bf16.mxu0 0
      %2915 = vmatpush1.bf16.msra.mxu0 0
      %2916 = vmatprep.subr.bf16.mxu0 0
      %2917 = vmatpush1.bf16.msra.mxu0 0
      %2918 = vmatprep.subr.bf16.mxu0 0
      %2919 = vmatpush1.bf16.msra.mxu0 0
      %2920 = vmatprep.subr.bf16.mxu0 0
      %2921 = vmatpush1.bf16.msra.mxu0 0
      %2922 = vmatprep.subr.bf16.mxu0 0
      %2923 = vmatpush1.bf16.msra.mxu0 0
      %2924 = vmatprep.subr.bf16.mxu0 0
      %2925 = vmatpush1.bf16.msra.mxu0 0
      %2926 = vmatprep.mubr.bf16.mxu0 0
      %2927 = vmatmul.mubr.bf16.gmra.mrb[0].mxu0 %v268
      %v2928 = vpop.f32.mrb[0].mxu0
      %v2929 = vadd.f32 0.0, %v2928
      %v2930 = vpop.f32.mrb[0].mxu0
      %v2931 = vadd.f32 0.0, %v2930
      %v2932 = vpop.f32.mrb[0].mxu0
      %v2933 = vadd.f32 0.0, %v2932
      %v2934 = vpop.f32.mrb[0].mxu0
      %v2935 = vadd.f32 0.0, %v2934
      %2936 = vmatprep.mubr.bf16.mxu0 0
      %2937 = vmatmul.mubr.bf16.gmra.mrb[0].mxu0 %v271
      %v2938 = vpop.f32.mrb[0].mxu0
      %v2939 = vadd.f32 0.0, %v2938
      %v2940 = vpop.f32.mrb[0].mxu0
      %v2941 = vadd.f32 0.0, %v2940
      %v2942 = vpop.f32.mrb[0].mxu0
      %v2943 = vadd.f32 0.0, %v2942
      %v2944 = vpop.f32.mrb[0].mxu0
      %v2945 = vadd.f32 0.0, %v2944
      %2946 = vdwg.mxu0
      %2947 = vmatprep.subr.bf16.mxu0 %v2833
      %2948 = vmatpush1.bf16.msra.mxu0 %v2830
      %2949 = vmatprep.subr.bf16.mxu0 0
      %2950 = vmatpush1.bf16.msra.mxu0 0
      %2951 = vmatprep.subr.bf16.mxu0 0
      %2952 = vmatpush1.bf16.msra.mxu0 0
      %2953 = vmatprep.subr.bf16.mxu0 0
      %2954 = vmatpush1.bf16.msra.mxu0 0
      %2955 = vmatprep.subr.bf16.mxu0 0
      %2956 = vmatpush1.bf16.msra.mxu0 0
      %2957 = vmatprep.subr.bf16.mxu0 0
      %2958 = vmatpush1.bf16.msra.mxu0 0
      %2959 = vmatprep.subr.bf16.mxu0 0
      %2960 = vmatpush1.bf16.msra.mxu0 0
      %2961 = vmatprep.subr.bf16.mxu0 0
      %2962 = vmatpush1.bf16.msra.mxu0 0
      %2963 = vmatprep.subr.bf16.mxu0 0
      %2964 = vmatpush1.bf16.msra.mxu0 0
      %2965 = vmatprep.subr.bf16.mxu0 0
      %2966 = vmatpush1.bf16.msra.mxu0 0
      %2967 = vmatprep.subr.bf16.mxu0 0
      %2968 = vmatpush1.bf16.msra.mxu0 0
      %2969 = vmatprep.subr.bf16.mxu0 0
      %2970 = vmatpush1.bf16.msra.mxu0 0
      %2971 = vmatprep.subr.bf16.mxu0 0
      %2972 = vmatpush1.bf16.msra.mxu0 0
      %2973 = vmatprep.subr.bf16.mxu0 0
      %2974 = vmatpush1.bf16.msra.mxu0 0
      %2975 = vmatprep.subr.bf16.mxu0 0
      %2976 = vmatpush1.bf16.msra.mxu0 0
      %2977 = vmatprep.subr.bf16.mxu0 0
      %2978 = vmatpush1.bf16.msra.mxu0 0
      %2979 = vmatprep.mubr.bf16.mxu0 0
      %2980 = vmatmul.mubr.bf16.gmra.mrb[0].mxu0 %v268
      %v2981 = vpop.f32.mrb[0].mxu0
      %v2982 = vadd.f32 0.0, %v2981
      %v2983 = vpop.f32.mrb[0].mxu0
      %v2984 = vadd.f32 0.0, %v2983
      %v2985 = vpop.f32.mrb[0].mxu0
      %v2986 = vadd.f32 0.0, %v2985
      %v2987 = vpop.f32.mrb[0].mxu0
      %v2988 = vadd.f32 0.0, %v2987
      %2989 = vmatprep.mubr.bf16.mxu0 0
      %2990 = vmatmul.mubr.bf16.gmra.mrb[0].mxu0 %v271
      %v2991 = vpop.f32.mrb[0].mxu0
      %v2992 = vadd.f32 0.0, %v2991
      %v2993 = vpop.f32.mrb[0].mxu0
      %v2994 = vadd.f32 0.0, %v2993
      %v2995 = vpop.f32.mrb[0].mxu0
      %v2996 = vadd.f32 0.0, %v2995
      %v2997 = vpop.f32.mrb[0].mxu0
      %v2998 = vadd.f32 0.0, %v2997
      %2999 = vdwg.mxu0
      %3000 = vmatprep.subr.bf16.mxu0 %v2839
      %3001 = vmatpush1.bf16.msra.mxu0 %v2836
      %3002 = vmatprep.subr.bf16.mxu0 0
      %3003 = vmatpush1.bf16.msra.mxu0 0
      %3004 = vmatprep.subr.bf16.mxu0 0
      %3005 = vmatpush1.bf16.msra.mxu0 0
      %3006 = vmatprep.subr.bf16.mxu0 0
      %3007 = vmatpush1.bf16.msra.mxu0 0
      %3008 = vmatprep.subr.bf16.mxu0 0
      %3009 = vmatpush1.bf16.msra.mxu0 0
      %3010 = vmatprep.subr.bf16.mxu0 0
      %3011 = vmatpush1.bf16.msra.mxu0 0
      %3012 = vmatprep.subr.bf16.mxu0 0
      %3013 = vmatpush1.bf16.msra.mxu0 0
      %3014 = vmatprep.subr.bf16.mxu0 0
      %3015 = vmatpush1.bf16.msra.mxu0 0
      %3016 = vmatprep.subr.bf16.mxu0 0
      %3017 = vmatpush1.bf16.msra.mxu0 0
      %3018 = vmatprep.subr.bf16.mxu0 0
      %3019 = vmatpush1.bf16.msra.mxu0 0
      %3020 = vmatprep.subr.bf16.mxu0 0
      %3021 = vmatpush1.bf16.msra.mxu0 0
      %3022 = vmatprep.subr.bf16.mxu0 0
      %3023 = vmatpush1.bf16.msra.mxu0 0
      %3024 = vmatprep.subr.bf16.mxu0 0
      %3025 = vmatpush1.bf16.msra.mxu0 0
      %3026 = vmatprep.subr.bf16.mxu0 0
      %3027 = vmatpush1.bf16.msra.mxu0 0
      %3028 = vmatprep.subr.bf16.mxu0 0
      %3029 = vmatpush1.bf16.msra.mxu0 0
      %3030 = vmatprep.subr.bf16.mxu0 0
      %3031 = vmatpush1.bf16.msra.mxu0 0
      %3032 = vmatprep.mubr.bf16.mxu0 0
      %3033 = vmatmul.mubr.bf16.gmra.mrb[0].mxu0 %v268
      %v3034 = vpop.f32.mrb[0].mxu0
      %v3035 = vadd.f32 0.0, %v3034
      %v3036 = vpop.f32.mrb[0].mxu0
      %v3037 = vadd.f32 0.0, %v3036
      %v3038 = vpop.f32.mrb[0].mxu0
      %v3039 = vadd.f32 0.0, %v3038
      %v3040 = vpop.f32.mrb[0].mxu0
      %v3041 = vadd.f32 0.0, %v3040
      %3042 = vmatprep.mubr.bf16.mxu0 0
      %3043 = vmatmul.mubr.bf16.gmra.mrb[0].mxu0 %v271
      %v3044 = vpop.f32.mrb[0].mxu0
      %v3045 = vadd.f32 0.0, %v3044
      %v3046 = vpop.f32.mrb[0].mxu0
      %v3047 = vadd.f32 0.0, %v3046
      %v3048 = vpop.f32.mrb[0].mxu0
      %v3049 = vadd.f32 0.0, %v3048
      %v3050 = vpop.f32.mrb[0].mxu0
      %v3051 = vadd.f32 0.0, %v3050
      %3052 = vdwg.mxu0
      %v3053 = vld [vmem:[#allocation2] sm:$0xff]
      %v3054 = vld [vmem:[#allocation2 + $0x8] sm:$0xff]
      %v3055 = vld [vmem:[#allocation2 + $0x10] sm:$0xff]
      %v3056 = vld [vmem:[#allocation2 + $0x18] sm:$0xff]
      %v3057 = vld [vmem:[#allocation2 + $0x20] sm:$0xff]
      %v3058 = vld [vmem:[#allocation2 + $0x28] sm:$0xff]
      %v3059 = vld [vmem:[#allocation2 + $0x30] sm:$0xff]
      %v3060 = vld [vmem:[#allocation2 + $0x38] sm:$0xff]
      %v3061 = vld [vmem:[#allocation2 + $0x40] sm:$0xff]
      %v3062 = vld [vmem:[#allocation2 + $0x48] sm:$0xff]
      %v3063 = vld [vmem:[#allocation2 + $0x50] sm:$0xff]
      %v3064 = vld [vmem:[#allocation2 + $0x58] sm:$0xff]
      %v3065 = vld [vmem:[#allocation2 + $0x60] sm:$0xff]
      %v3066 = vld [vmem:[#allocation2 + $0x68] sm:$0xff]
      %v3067 = vld [vmem:[#allocation2 + $0x70] sm:$0xff]
      %v3068 = vld [vmem:[#allocation2 + $0x78] sm:$0xff]
      %v3069 = vld [vmem:[#allocation2 + $0x80] sm:$0xff]
      %v3070 = vld [vmem:[#allocation2 + $0x88] sm:$0xff]
      %v3071 = vld [vmem:[#allocation2 + $0x90] sm:$0xff]
      %v3072 = vld [vmem:[#allocation2 + $0x98] sm:$0xff]
      %v3073 = vld [vmem:[#allocation2 + $0xa0] sm:$0xff]
      %v3074 = vld [vmem:[#allocation2 + $0xa8] sm:$0xff]
      %v3075 = vld [vmem:[#allocation2 + $0xb0] sm:$0xff]
      %v3076 = vld [vmem:[#allocation2 + $0xb8] sm:$0xff]
      %v3077 = vld [vmem:[#allocation2 + $0xc0] sm:$0xff]
      %v3078 = vld [vmem:[#allocation2 + $0xc8] sm:$0xff]
      %v3079 = vld [vmem:[#allocation2 + $0xd0] sm:$0xff]
      %v3080 = vld [vmem:[#allocation2 + $0xd8] sm:$0xff]
      %v3081 = vld [vmem:[#allocation2 + $0xe0] sm:$0xff]
      %v3082 = vld [vmem:[#allocation2 + $0xe8] sm:$0xff]
      %v3083 = vld [vmem:[#allocation2 + $0xf0] sm:$0xff]
      %v3084 = vld [vmem:[#allocation2 + $0xf8] sm:$0xff]
      %v3085 = vmax.f32 %v3053, %v2876
      %v3086 = vmax.f32 %v3054, %v2878
      %v3087 = vmax.f32 %v3055, %v2929
      %v3088 = vmax.f32 %v3056, %v2931
      %v3089 = vmax.f32 %v3057, %v2982
      %v3090 = vmax.f32 %v3058, %v2984
      %v3091 = vmax.f32 %v3059, %v3035
      %v3092 = vmax.f32 %v3060, %v3037
      %v3093 = vmax.f32 %v3061, %v2880
      %v3094 = vmax.f32 %v3062, %v2882
      %v3095 = vmax.f32 %v3063, %v2933
      %v3096 = vmax.f32 %v3064, %v2935
      %v3097 = vmax.f32 %v3065, %v2986
      %v3098 = vmax.f32 %v3066, %v2988
      %v3099 = vmax.f32 %v3067, %v3039
      %v3100 = vmax.f32 %v3068, %v3041
      %v3101 = vmax.f32 %v3069, %v2886
      %v3102 = vmax.f32 %v3070, %v2888
      %v3103 = vmax.f32 %v3071, %v2939
      %v3104 = vmax.f32 %v3072, %v2941
      %v3105 = vmax.f32 %v3073, %v2992
      %v3106 = vmax.f32 %v3074, %v2994
      %v3107 = vmax.f32 %v3075, %v3045
      %v3108 = vmax.f32 %v3076, %v3047
      %v3109 = vmax.f32 %v3077, %v2890
      %v3110 = vmax.f32 %v3078, %v2892
      %v3111 = vmax.f32 %v3079, %v2943
      %v3112 = vmax.f32 %v3080, %v2945
      %v3113 = vmax.f32 %v3081, %v2996
      %v3114 = vmax.f32 %v3082, %v2998
      %v3115 = vmax.f32 %v3083, %v3049
      %v3116 = vmax.f32 %v3084, %v3051
      %3117 = vst [vmem:[#allocation2] sm:$0xff] %v3085
      %3118 = vst [vmem:[#allocation2 + $0x8] sm:$0xff] %v3086
      %3119 = vst [vmem:[#allocation2 + $0x10] sm:$0xff] %v3087
      %3120 = vst [vmem:[#allocation2 + $0x18] sm:$0xff] %v3088
      %3121 = vst [vmem:[#allocation2 + $0x20] sm:$0xff] %v3089
      %3122 = vst [vmem:[#allocation2 + $0x28] sm:$0xff] %v3090
      %3123 = vst [vmem:[#allocation2 + $0x30] sm:$0xff] %v3091
      %3124 = vst [vmem:[#allocation2 + $0x38] sm:$0xff] %v3092
      %3125 = vst [vmem:[#allocation2 + $0x40] sm:$0xff] %v3093
      %3126 = vst [vmem:[#allocation2 + $0x48] sm:$0xff] %v3094
      %3127 = vst [vmem:[#allocation2 + $0x50] sm:$0xff] %v3095
      %3128 = vst [vmem:[#allocation2 + $0x58] sm:$0xff] %v3096
      %3129 = vst [vmem:[#allocation2 + $0x60] sm:$0xff] %v3097
      %3130 = vst [vmem:[#allocation2 + $0x68] sm:$0xff] %v3098
      %3131 = vst [vmem:[#allocation2 + $0x70] sm:$0xff] %v3099
      %3132 = vst [vmem:[#allocation2 + $0x78] sm:$0xff] %v3100
      %3133 = vst [vmem:[#allocation2 + $0x80] sm:$0xff] %v3101
      %3134 = vst [vmem:[#allocation2 + $0x88] sm:$0xff] %v3102
      %3135 = vst [vmem:[#allocation2 + $0x90] sm:$0xff] %v3103
      %3136 = vst [vmem:[#allocation2 + $0x98] sm:$0xff] %v3104
      %3137 = vst [vmem:[#allocation2 + $0xa0] sm:$0xff] %v3105
      %3138 = vst [vmem:[#allocation2 + $0xa8] sm:$0xff] %v3106
      %3139 = vst [vmem:[#allocation2 + $0xb0] sm:$0xff] %v3107
      %3140 = vst [vmem:[#allocation2 + $0xb8] sm:$0xff] %v3108
      %3141 = vst [vmem:[#allocation2 + $0xc0] sm:$0xff] %v3109
      %3142 = vst [vmem:[#allocation2 + $0xc8] sm:$0xff] %v3110
      %3143 = vst [vmem:[#allocation2 + $0xd0] sm:$0xff] %v3111
      %3144 = vst [vmem:[#allocation2 + $0xd8] sm:$0xff] %v3112
      %3145 = vst [vmem:[#allocation2 + $0xe0] sm:$0xff] %v3113
      %3146 = vst [vmem:[#allocation2 + $0xe8] sm:$0xff] %v3114
      %3147 = vst [vmem:[#allocation2 + $0xf0] sm:$0xff] %v3115
      %3148 = vst [vmem:[#allocation2 + $0xf8] sm:$0xff] %v3116
      %v3149 = vld [vmem:[%s200 + $0x100] sm:$0xff]
      %v3150 = vld [vmem:[%s200 + $0x108] sm:$0xff]
      %v3151 = vld [vmem:[%s200 + $0x110] sm:$0xff]
      %v3152 = vld [vmem:[%s200 + $0x118] sm:$0xff]
      %v3153 = vld [vmem:[%s200 + $0x300] sm:$0x11]
      %v3154 = vld [vmem:[%s200 + $0x308] sm:$0x11]
      %v3155 = vld [vmem:[%s200 + $0x310] sm:$0x11]
      %v3156 = vld [vmem:[%s200 + $0x318] sm:$0x11]
      %v3165 = vunpack.c.l.b16 %v3149
      %v3166 = vunpack.c.h.b16 %v3149
      %v3167 = vunpack.c.l.b16 %v3150
      %v3168 = vunpack.c.h.b16 %v3150
      %v3169 = vunpack.c.l.b16 %v3151
      %v3170 = vunpack.c.h.b16 %v3151
      %v3171 = vunpack.c.l.b16 %v3152
      %v3172 = vunpack.c.h.b16 %v3152
      %v3173 = vunpack.c.l.b16 %v3153
      %v3174 = vunpack.c.h.b16 %v3153
      %v3175 = vunpack.c.l.b16 %v3154
      %v3176 = vunpack.c.h.b16 %v3154
      %v3177 = vunpack.c.l.b16 %v3155
      %v3178 = vunpack.c.h.b16 %v3155
      %v3179 = vunpack.c.l.b16 %v3156
      %v3180 = vunpack.c.h.b16 %v3156
      %v3181 = vpack.c.b16 %v3173, %v3165
      %v3182 = vpack.c.b16 %v3174, %v3166
      %v3183 = vpack.c.b16 %v3175, %v3167
      %v3184 = vpack.c.b16 %v3176, %v3168
      %v3185 = vpack.c.b16 %v3177, %v3169
      %v3186 = vpack.c.b16 %v3178, %v3170
      %v3187 = vpack.c.b16 %v3179, %v3171
      %v3188 = vpack.c.b16 %v3180, %v3172
      %v3190 = vand.u32 %v3181, %v276
      %v3193 = vand.u32 %v3182, %v276
      %v3196 = vand.u32 %v3183, %v276
      %v3199 = vand.u32 %v3184, %v276
      %v3202 = vand.u32 %v3185, %v276
      %v3205 = vand.u32 %v3186, %v276
      %v3208 = vand.u32 %v3187, %v276
      %v3211 = vand.u32 %v3188, %v276
      %3213 = vmatprep.subr.bf16.mxu0 %v3193
      %3214 = vmatpush1.bf16.msra.mxu0 %v3190
      %3215 = vmatprep.subr.bf16.mxu0 0
      %3216 = vmatpush1.bf16.msra.mxu0 0
      %3217 = vmatprep.subr.bf16.mxu0 0
      %3218 = vmatpush1.bf16.msra.mxu0 0
      %3219 = vmatprep.subr.bf16.mxu0 0
      %3220 = vmatpush1.bf16.msra.mxu0 0
      %3221 = vmatprep.subr.bf16.mxu0 0
      %3222 = vmatpush1.bf16.msra.mxu0 0
      %3223 = vmatprep.subr.bf16.mxu0 0
      %3224 = vmatpush1.bf16.msra.mxu0 0
      %3225 = vmatprep.subr.bf16.mxu0 0
      %3226 = vmatpush1.bf16.msra.mxu0 0
      %3227 = vmatprep.subr.bf16.mxu0 0
      %3228 = vmatpush1.bf16.msra.mxu0 0
      %3229 = vmatprep.subr.bf16.mxu0 0
      %3230 = vmatpush1.bf16.msra.mxu0 0
      %3231 = vmatprep.subr.bf16.mxu0 0
      %3232 = vmatpush1.bf16.msra.mxu0 0
      %3233 = vmatprep.subr.bf16.mxu0 0
      %3234 = vmatpush1.bf16.msra.mxu0 0
      %3235 = vmatprep.subr.bf16.mxu0 0
      %3236 = vmatpush1.bf16.msra.mxu0 0
      %3237 = vmatprep.subr.bf16.mxu0 0
      %3238 = vmatpush1.bf16.msra.mxu0 0
      %3239 = vmatprep.subr.bf16.mxu0 0
      %3240 = vmatpush1.bf16.msra.mxu0 0
      %3241 = vmatprep.subr.bf16.mxu0 0
      %3242 = vmatpush1.bf16.msra.mxu0 0
      %3243 = vmatprep.subr.bf16.mxu0 0
      %3244 = vmatpush1.bf16.msra.mxu0 0
      %3245 = vmatprep.mubr.bf16.mxu0 0
      %3246 = vmatmul.mubr.bf16.gmra.mrb[0].mxu0 %v268
      %v3247 = vpop.f32.mrb[0].mxu0
      %v3248 = vadd.f32 0.0, %v3247
      %v3249 = vpop.f32.mrb[0].mxu0
      %v3250 = vadd.f32 0.0, %v3249
      %v3251 = vpop.f32.mrb[0].mxu0
      %v3252 = vadd.f32 0.0, %v3251
      %v3253 = vpop.f32.mrb[0].mxu0
      %v3254 = vadd.f32 0.0, %v3253
      %3255 = vmatprep.mubr.bf16.mxu0 0
      %3256 = vmatmul.mubr.bf16.gmra.mrb[0].mxu0 %v271
      %v3257 = vpop.f32.mrb[0].mxu0
      %v3258 = vadd.f32 0.0, %v3257
      %v3259 = vpop.f32.mrb[0].mxu0
      %v3260 = vadd.f32 0.0, %v3259
      %v3261 = vpop.f32.mrb[0].mxu0
      %v3262 = vadd.f32 0.0, %v3261
      %v3263 = vpop.f32.mrb[0].mxu0
      %v3264 = vadd.f32 0.0, %v3263
      %3265 = vdwg.mxu0
      %3266 = vmatprep.subr.bf16.mxu0 %v3199
      %3267 = vmatpush1.bf16.msra.mxu0 %v3196
      %3268 = vmatprep.subr.bf16.mxu0 0
      %3269 = vmatpush1.bf16.msra.mxu0 0
      %3270 = vmatprep.subr.bf16.mxu0 0
      %3271 = vmatpush1.bf16.msra.mxu0 0
      %3272 = vmatprep.subr.bf16.mxu0 0
      %3273 = vmatpush1.bf16.msra.mxu0 0
      %3274 = vmatprep.subr.bf16.mxu0 0
      %3275 = vmatpush1.bf16.msra.mxu0 0
      %3276 = vmatprep.subr.bf16.mxu0 0
      %3277 = vmatpush1.bf16.msra.mxu0 0
      %3278 = vmatprep.subr.bf16.mxu0 0
      %3279 = vmatpush1.bf16.msra.mxu0 0
      %3280 = vmatprep.subr.bf16.mxu0 0
      %3281 = vmatpush1.bf16.msra.mxu0 0
      %3282 = vmatprep.subr.bf16.mxu0 0
      %3283 = vmatpush1.bf16.msra.mxu0 0
      %3284 = vmatprep.subr.bf16.mxu0 0
      %3285 = vmatpush1.bf16.msra.mxu0 0
      %3286 = vmatprep.subr.bf16.mxu0 0
      %3287 = vmatpush1.bf16.msra.mxu0 0
      %3288 = vmatprep.subr.bf16.mxu0 0
      %3289 = vmatpush1.bf16.msra.mxu0 0
      %3290 = vmatprep.subr.bf16.mxu0 0
      %3291 = vmatpush1.bf16.msra.mxu0 0
      %3292 = vmatprep.subr.bf16.mxu0 0
      %3293 = vmatpush1.bf16.msra.mxu0 0
      %3294 = vmatprep.subr.bf16.mxu0 0
      %3295 = vmatpush1.bf16.msra.mxu0 0
      %3296 = vmatprep.subr.bf16.mxu0 0
      %3297 = vmatpush1.bf16.msra.mxu0 0
      %3298 = vmatprep.mubr.bf16.mxu0 0
      %3299 = vmatmul.mubr.bf16.gmra.mrb[0].mxu0 %v268
      %v3300 = vpop.f32.mrb[0].mxu0
      %v3301 = vadd.f32 0.0, %v3300
      %v3302 = vpop.f32.mrb[0].mxu0
      %v3303 = vadd.f32 0.0, %v3302
      %v3304 = vpop.f32.mrb[0].mxu0
      %v3305 = vadd.f32 0.0, %v3304
      %v3306 = vpop.f32.mrb[0].mxu0
      %v3307 = vadd.f32 0.0, %v3306
      %3308 = vmatprep.mubr.bf16.mxu0 0
      %3309 = vmatmul.mubr.bf16.gmra.mrb[0].mxu0 %v271
      %v3310 = vpop.f32.mrb[0].mxu0
      %v3311 = vadd.f32 0.0, %v3310
      %v3312 = vpop.f32.mrb[0].mxu0
      %v3313 = vadd.f32 0.0, %v3312
      %v3314 = vpop.f32.mrb[0].mxu0
      %v3315 = vadd.f32 0.0, %v3314
      %v3316 = vpop.f32.mrb[0].mxu0
      %v3317 = vadd.f32 0.0, %v3316
      %3318 = vdwg.mxu0
      %3319 = vmatprep.subr.bf16.mxu0 %v3205
      %3320 = vmatpush1.bf16.msra.mxu0 %v3202
      %3321 = vmatprep.subr.bf16.mxu0 0
      %3322 = vmatpush1.bf16.msra.mxu0 0
      %3323 = vmatprep.subr.bf16.mxu0 0
      %3324 = vmatpush1.bf16.msra.mxu0 0
      %3325 = vmatprep.subr.bf16.mxu0 0
      %3326 = vmatpush1.bf16.msra.mxu0 0
      %3327 = vmatprep.subr.bf16.mxu0 0
      %3328 = vmatpush1.bf16.msra.mxu0 0
      %3329 = vmatprep.subr.bf16.mxu0 0
      %3330 = vmatpush1.bf16.msra.mxu0 0
      %3331 = vmatprep.subr.bf16.mxu0 0
      %3332 = vmatpush1.bf16.msra.mxu0 0
      %3333 = vmatprep.subr.bf16.mxu0 0
      %3334 = vmatpush1.bf16.msra.mxu0 0
      %3335 = vmatprep.subr.bf16.mxu0 0
      %3336 = vmatpush1.bf16.msra.mxu0 0
      %3337 = vmatprep.subr.bf16.mxu0 0
      %3338 = vmatpush1.bf16.msra.mxu0 0
      %3339 = vmatprep.subr.bf16.mxu0 0
      %3340 = vmatpush1.bf16.msra.mxu0 0
      %3341 = vmatprep.subr.bf16.mxu0 0
      %3342 = vmatpush1.bf16.msra.mxu0 0
      %3343 = vmatprep.subr.bf16.mxu0 0
      %3344 = vmatpush1.bf16.msra.mxu0 0
      %3345 = vmatprep.subr.bf16.mxu0 0
      %3346 = vmatpush1.bf16.msra.mxu0 0
      %3347 = vmatprep.subr.bf16.mxu0 0
      %3348 = vmatpush1.bf16.msra.mxu0 0
      %3349 = vmatprep.subr.bf16.mxu0 0
      %3350 = vmatpush1.bf16.msra.mxu0 0
      %3351 = vmatprep.mubr.bf16.mxu0 0
      %3352 = vmatmul.mubr.bf16.gmra.mrb[0].mxu0 %v268
      %v3353 = vpop.f32.mrb[0].mxu0
      %v3354 = vadd.f32 0.0, %v3353
      %v3355 = vpop.f32.mrb[0].mxu0
      %v3356 = vadd.f32 0.0, %v3355
      %v3357 = vpop.f32.mrb[0].mxu0
      %v3358 = vadd.f32 0.0, %v3357
      %v3359 = vpop.f32.mrb[0].mxu0
      %v3360 = vadd.f32 0.0, %v3359
      %3361 = vmatprep.mubr.bf16.mxu0 0
      %3362 = vmatmul.mubr.bf16.gmra.mrb[0].mxu0 %v271
      %v3363 = vpop.f32.mrb[0].mxu0
      %v3364 = vadd.f32 0.0, %v3363
      %v3365 = vpop.f32.mrb[0].mxu0
      %v3366 = vadd.f32 0.0, %v3365
      %v3367 = vpop.f32.mrb[0].mxu0
      %v3368 = vadd.f32 0.0, %v3367
      %v3369 = vpop.f32.mrb[0].mxu0
      %v3370 = vadd.f32 0.0, %v3369
      %3371 = vdwg.mxu0
      %3372 = vmatprep.subr.bf16.mxu0 %v3211
      %3373 = vmatpush1.bf16.msra.mxu0 %v3208
      %3374 = vmatprep.subr.bf16.mxu0 0
      %3375 = vmatpush1.bf16.msra.mxu0 0
      %3376 = vmatprep.subr.bf16.mxu0 0
      %3377 = vmatpush1.bf16.msra.mxu0 0
      %3378 = vmatprep.subr.bf16.mxu0 0
      %3379 = vmatpush1.bf16.msra.mxu0 0
      %3380 = vmatprep.subr.bf16.mxu0 0
      %3381 = vmatpush1.bf16.msra.mxu0 0
      %3382 = vmatprep.subr.bf16.mxu0 0
      %3383 = vmatpush1.bf16.msra.mxu0 0
      %3384 = vmatprep.subr.bf16.mxu0 0
      %3385 = vmatpush1.bf16.msra.mxu0 0
      %3386 = vmatprep.subr.bf16.mxu0 0
      %3387 = vmatpush1.bf16.msra.mxu0 0
      %3388 = vmatprep.subr.bf16.mxu0 0
      %3389 = vmatpush1.bf16.msra.mxu0 0
      %3390 = vmatprep.subr.bf16.mxu0 0
      %3391 = vmatpush1.bf16.msra.mxu0 0
      %3392 = vmatprep.subr.bf16.mxu0 0
      %3393 = vmatpush1.bf16.msra.mxu0 0
      %3394 = vmatprep.subr.bf16.mxu0 0
      %3395 = vmatpush1.bf16.msra.mxu0 0
      %3396 = vmatprep.subr.bf16.mxu0 0
      %3397 = vmatpush1.bf16.msra.mxu0 0
      %3398 = vmatprep.subr.bf16.mxu0 0
      %3399 = vmatpush1.bf16.msra.mxu0 0
      %3400 = vmatprep.subr.bf16.mxu0 0
      %3401 = vmatpush1.bf16.msra.mxu0 0
      %3402 = vmatprep.subr.bf16.mxu0 0
      %3403 = vmatpush1.bf16.msra.mxu0 0
      %3404 = vmatprep.mubr.bf16.mxu0 0
      %3405 = vmatmul.mubr.bf16.gmra.mrb[0].mxu0 %v268
      %v3406 = vpop.f32.mrb[0].mxu0
      %v3407 = vadd.f32 0.0, %v3406
      %v3408 = vpop.f32.mrb[0].mxu0
      %v3409 = vadd.f32 0.0, %v3408
      %v3410 = vpop.f32.mrb[0].mxu0
      %v3411 = vadd.f32 0.0, %v3410
      %v3412 = vpop.f32.mrb[0].mxu0
      %v3413 = vadd.f32 0.0, %v3412
      %3414 = vmatprep.mubr.bf16.mxu0 0
      %3415 = vmatmul.mubr.bf16.gmra.mrb[0].mxu0 %v271
      %v3416 = vpop.f32.mrb[0].mxu0
      %v3417 = vadd.f32 0.0, %v3416
      %v3418 = vpop.f32.mrb[0].mxu0
      %v3419 = vadd.f32 0.0, %v3418
      %v3420 = vpop.f32.mrb[0].mxu0
      %v3421 = vadd.f32 0.0, %v3420
      %v3422 = vpop.f32.mrb[0].mxu0
      %v3423 = vadd.f32 0.0, %v3422
      %3424 = vdwg.mxu0
      %v3425 = vld [vmem:[#allocation2] sm:$0xff]
      %v3426 = vld [vmem:[#allocation2 + $0x8] sm:$0xff]
      %v3427 = vld [vmem:[#allocation2 + $0x10] sm:$0xff]
      %v3428 = vld [vmem:[#allocation2 + $0x18] sm:$0xff]
      %v3429 = vld [vmem:[#allocation2 + $0x20] sm:$0xff]
      %v3430 = vld [vmem:[#allocation2 + $0x28] sm:$0xff]
      %v3431 = vld [vmem:[#allocation2 + $0x30] sm:$0xff]
      %v3432 = vld [vmem:[#allocation2 + $0x38] sm:$0xff]
      %v3433 = vld [vmem:[#allocation2 + $0x40] sm:$0xff]
      %v3434 = vld [vmem:[#allocation2 + $0x48] sm:$0xff]
      %v3435 = vld [vmem:[#allocation2 + $0x50] sm:$0xff]
      %v3436 = vld [vmem:[#allocation2 + $0x58] sm:$0xff]
      %v3437 = vld [vmem:[#allocation2 + $0x60] sm:$0xff]
      %v3438 = vld [vmem:[#allocation2 + $0x68] sm:$0xff]
      %v3439 = vld [vmem:[#allocation2 + $0x70] sm:$0xff]
      %v3440 = vld [vmem:[#allocation2 + $0x78] sm:$0xff]
      %v3441 = vld [vmem:[#allocation2 + $0x80] sm:$0xff]
      %v3442 = vld [vmem:[#allocation2 + $0x88] sm:$0xff]
      %v3443 = vld [vmem:[#allocation2 + $0x90] sm:$0xff]
      %v3444 = vld [vmem:[#allocation2 + $0x98] sm:$0xff]
      %v3445 = vld [vmem:[#allocation2 + $0xa0] sm:$0xff]
      %v3446 = vld [vmem:[#allocation2 + $0xa8] sm:$0xff]
      %v3447 = vld [vmem:[#allocation2 + $0xb0] sm:$0xff]
      %v3448 = vld [vmem:[#allocation2 + $0xb8] sm:$0xff]
      %v3449 = vld [vmem:[#allocation2 + $0xc0] sm:$0xff]
      %v3450 = vld [vmem:[#allocation2 + $0xc8] sm:$0xff]
      %v3451 = vld [vmem:[#allocation2 + $0xd0] sm:$0xff]
      %v3452 = vld [vmem:[#allocation2 + $0xd8] sm:$0xff]
      %v3453 = vld [vmem:[#allocation2 + $0xe0] sm:$0xff]
      %v3454 = vld [vmem:[#allocation2 + $0xe8] sm:$0xff]
      %v3455 = vld [vmem:[#allocation2 + $0xf0] sm:$0xff]
      %v3456 = vld [vmem:[#allocation2 + $0xf8] sm:$0xff]
      %v3457 = vmax.f32 %v3425, %v3248
      %v3458 = vmax.f32 %v3426, %v3250
      %v3459 = vmax.f32 %v3427, %v3301
      %v3460 = vmax.f32 %v3428, %v3303
      %v3461 = vmax.f32 %v3429, %v3354
      %v3462 = vmax.f32 %v3430, %v3356
      %v3463 = vmax.f32 %v3431, %v3407
      %v3464 = vmax.f32 %v3432, %v3409
      %v3465 = vmax.f32 %v3433, %v3252
      %v3466 = vmax.f32 %v3434, %v3254
      %v3467 = vmax.f32 %v3435, %v3305
      %v3468 = vmax.f32 %v3436, %v3307
      %v3469 = vmax.f32 %v3437, %v3358
      %v3470 = vmax.f32 %v3438, %v3360
      %v3471 = vmax.f32 %v3439, %v3411
      %v3472 = vmax.f32 %v3440, %v3413
      %v3473 = vmax.f32 %v3441, %v3258
      %v3474 = vmax.f32 %v3442, %v3260
      %v3475 = vmax.f32 %v3443, %v3311
      %v3476 = vmax.f32 %v3444, %v3313
      %v3477 = vmax.f32 %v3445, %v3364
      %v3478 = vmax.f32 %v3446, %v3366
      %v3479 = vmax.f32 %v3447, %v3417
      %v3480 = vmax.f32 %v3448, %v3419
      %v3481 = vmax.f32 %v3449, %v3262
      %v3482 = vmax.f32 %v3450, %v3264
      %v3483 = vmax.f32 %v3451, %v3315
      %v3484 = vmax.f32 %v3452, %v3317
      %v3485 = vmax.f32 %v3453, %v3368
      %v3486 = vmax.f32 %v3454, %v3370
      %v3487 = vmax.f32 %v3455, %v3421
      %v3488 = vmax.f32 %v3456, %v3423
      %3489 = vst [vmem:[#allocation2] sm:$0xff] %v3457
      %3490 = vst [vmem:[#allocation2 + $0x8] sm:$0xff] %v3458
      %3491 = vst [vmem:[#allocation2 + $0x10] sm:$0xff] %v3459
      %3492 = vst [vmem:[#allocation2 + $0x18] sm:$0xff] %v3460
      %3493 = vst [vmem:[#allocation2 + $0x20] sm:$0xff] %v3461
      %3494 = vst [vmem:[#allocation2 + $0x28] sm:$0xff] %v3462
      %3495 = vst [vmem:[#allocation2 + $0x30] sm:$0xff] %v3463
      %3496 = vst [vmem:[#allocation2 + $0x38] sm:$0xff] %v3464
      %3497 = vst [vmem:[#allocation2 + $0x40] sm:$0xff] %v3465
      %3498 = vst [vmem:[#allocation2 + $0x48] sm:$0xff] %v3466
      %3499 = vst [vmem:[#allocation2 + $0x50] sm:$0xff] %v3467
      %3500 = vst [vmem:[#allocation2 + $0x58] sm:$0xff] %v3468
      %3501 = vst [vmem:[#allocation2 + $0x60] sm:$0xff] %v3469
      %3502 = vst [vmem:[#allocation2 + $0x68] sm:$0xff] %v3470
      %3503 = vst [vmem:[#allocation2 + $0x70] sm:$0xff] %v3471
      %3504 = vst [vmem:[#allocation2 + $0x78] sm:$0xff] %v3472
      %3505 = vst [vmem:[#allocation2 + $0x80] sm:$0xff] %v3473
      %3506 = vst [vmem:[#allocation2 + $0x88] sm:$0xff] %v3474
      %3507 = vst [vmem:[#allocation2 + $0x90] sm:$0xff] %v3475
      %3508 = vst [vmem:[#allocation2 + $0x98] sm:$0xff] %v3476
      %3509 = vst [vmem:[#allocation2 + $0xa0] sm:$0xff] %v3477
      %3510 = vst [vmem:[#allocation2 + $0xa8] sm:$0xff] %v3478
      %3511 = vst [vmem:[#allocation2 + $0xb0] sm:$0xff] %v3479
      %3512 = vst [vmem:[#allocation2 + $0xb8] sm:$0xff] %v3480
      %3513 = vst [vmem:[#allocation2 + $0xc0] sm:$0xff] %v3481
      %3514 = vst [vmem:[#allocation2 + $0xc8] sm:$0xff] %v3482
      %3515 = vst [vmem:[#allocation2 + $0xd0] sm:$0xff] %v3483
      %3516 = vst [vmem:[#allocation2 + $0xd8] sm:$0xff] %v3484
      %3517 = vst [vmem:[#allocation2 + $0xe0] sm:$0xff] %v3485
      %3518 = vst [vmem:[#allocation2 + $0xe8] sm:$0xff] %v3486
      %3519 = vst [vmem:[#allocation2 + $0xf0] sm:$0xff] %v3487
      %3520 = vst [vmem:[#allocation2 + $0xf8] sm:$0xff] %v3488
      %v3521 = vld [vmem:[%s200 + $0x120] sm:$0xff]
      %v3522 = vld [vmem:[%s200 + $0x128] sm:$0xff]
      %v3523 = vld [vmem:[%s200 + $0x130] sm:$0xff]
      %v3524 = vld [vmem:[%s200 + $0x138] sm:$0xff]
      %v3525 = vld [vmem:[%s200 + $0x320] sm:$0x11]
      %v3526 = vld [vmem:[%s200 + $0x328] sm:$0x11]
      %v3527 = vld [vmem:[%s200 + $0x330] sm:$0x11]
      %v3528 = vld [vmem:[%s200 + $0x338] sm:$0x11]
      %v3537 = vunpack.c.l.b16 %v3521
      %v3538 = vunpack.c.h.b16 %v3521
      %v3539 = vunpack.c.l.b16 %v3522
      %v3540 = vunpack.c.h.b16 %v3522
      %v3541 = vunpack.c.l.b16 %v3523
      %v3542 = vunpack.c.h.b16 %v3523
      %v3543 = vunpack.c.l.b16 %v3524
      %v3544 = vunpack.c.h.b16 %v3524
      %v3545 = vunpack.c.l.b16 %v3525
      %v3546 = vunpack.c.h.b16 %v3525
      %v3547 = vunpack.c.l.b16 %v3526
      %v3548 = vunpack.c.h.b16 %v3526
      %v3549 = vunpack.c.l.b16 %v3527
      %v3550 = vunpack.c.h.b16 %v3527
      %v3551 = vunpack.c.l.b16 %v3528
      %v3552 = vunpack.c.h.b16 %v3528
      %v3553 = vpack.c.b16 %v3545, %v3537
      %v3554 = vpack.c.b16 %v3546, %v3538
      %v3555 = vpack.c.b16 %v3547, %v3539
      %v3556 = vpack.c.b16 %v3548, %v3540
      %v3557 = vpack.c.b16 %v3549, %v3541
      %v3558 = vpack.c.b16 %v3550, %v3542
      %v3559 = vpack.c.b16 %v3551, %v3543
      %v3560 = vpack.c.b16 %v3552, %v3544
      %v3562 = vand.u32 %v3553, %v276
      %v3565 = vand.u32 %v3554, %v276
      %v3568 = vand.u32 %v3555, %v276
      %v3571 = vand.u32 %v3556, %v276
      %v3574 = vand.u32 %v3557, %v276
      %v3577 = vand.u32 %v3558, %v276
      %v3580 = vand.u32 %v3559, %v276
      %v3583 = vand.u32 %v3560, %v276
      %3585 = vmatprep.subr.bf16.mxu0 %v3565
      %3586 = vmatpush1.bf16.msra.mxu0 %v3562
      %3587 = vmatprep.subr.bf16.mxu0 0
      %3588 = vmatpush1.bf16.msra.mxu0 0
      %3589 = vmatprep.subr.bf16.mxu0 0
      %3590 = vmatpush1.bf16.msra.mxu0 0
      %3591 = vmatprep.subr.bf16.mxu0 0
      %3592 = vmatpush1.bf16.msra.mxu0 0
      %3593 = vmatprep.subr.bf16.mxu0 0
      %3594 = vmatpush1.bf16.msra.mxu0 0
      %3595 = vmatprep.subr.bf16.mxu0 0
      %3596 = vmatpush1.bf16.msra.mxu0 0
      %3597 = vmatprep.subr.bf16.mxu0 0
      %3598 = vmatpush1.bf16.msra.mxu0 0
      %3599 = vmatprep.subr.bf16.mxu0 0
      %3600 = vmatpush1.bf16.msra.mxu0 0
      %3601 = vmatprep.subr.bf16.mxu0 0
      %3602 = vmatpush1.bf16.msra.mxu0 0
      %3603 = vmatprep.subr.bf16.mxu0 0
      %3604 = vmatpush1.bf16.msra.mxu0 0
      %3605 = vmatprep.subr.bf16.mxu0 0
      %3606 = vmatpush1.bf16.msra.mxu0 0
      %3607 = vmatprep.subr.bf16.mxu0 0
      %3608 = vmatpush1.bf16.msra.mxu0 0
      %3609 = vmatprep.subr.bf16.mxu0 0
      %3610 = vmatpush1.bf16.msra.mxu0 0
      %3611 = vmatprep.subr.bf16.mxu0 0
      %3612 = vmatpush1.bf16.msra.mxu0 0
      %3613 = vmatprep.subr.bf16.mxu0 0
      %3614 = vmatpush1.bf16.msra.mxu0 0
      %3615 = vmatprep.subr.bf16.mxu0 0
      %3616 = vmatpush1.bf16.msra.mxu0 0
      %3617 = vmatprep.mubr.bf16.mxu0 0
      %3618 = vmatmul.mubr.bf16.gmra.mrb[0].mxu0 %v268
      %v3619 = vpop.f32.mrb[0].mxu0
      %v3620 = vadd.f32 0.0, %v3619
      %v3621 = vpop.f32.mrb[0].mxu0
      %v3622 = vadd.f32 0.0, %v3621
      %v3623 = vpop.f32.mrb[0].mxu0
      %v3624 = vadd.f32 0.0, %v3623
      %v3625 = vpop.f32.mrb[0].mxu0
      %v3626 = vadd.f32 0.0, %v3625
      %3627 = vmatprep.mubr.bf16.mxu0 0
      %3628 = vmatmul.mubr.bf16.gmra.mrb[0].mxu0 %v271
      %v3629 = vpop.f32.mrb[0].mxu0
      %v3630 = vadd.f32 0.0, %v3629
      %v3631 = vpop.f32.mrb[0].mxu0
      %v3632 = vadd.f32 0.0, %v3631
      %v3633 = vpop.f32.mrb[0].mxu0
      %v3634 = vadd.f32 0.0, %v3633
      %v3635 = vpop.f32.mrb[0].mxu0
      %v3636 = vadd.f32 0.0, %v3635
      %3637 = vdwg.mxu0
      %3638 = vmatprep.subr.bf16.mxu0 %v3571
      %3639 = vmatpush1.bf16.msra.mxu0 %v3568
      %3640 = vmatprep.subr.bf16.mxu0 0
      %3641 = vmatpush1.bf16.msra.mxu0 0
      %3642 = vmatprep.subr.bf16.mxu0 0
      %3643 = vmatpush1.bf16.msra.mxu0 0
      %3644 = vmatprep.subr.bf16.mxu0 0
      %3645 = vmatpush1.bf16.msra.mxu0 0
      %3646 = vmatprep.subr.bf16.mxu0 0
      %3647 = vmatpush1.bf16.msra.mxu0 0
      %3648 = vmatprep.subr.bf16.mxu0 0
      %3649 = vmatpush1.bf16.msra.mxu0 0
      %3650 = vmatprep.subr.bf16.mxu0 0
      %3651 = vmatpush1.bf16.msra.mxu0 0
      %3652 = vmatprep.subr.bf16.mxu0 0
      %3653 = vmatpush1.bf16.msra.mxu0 0
      %3654 = vmatprep.subr.bf16.mxu0 0
      %3655 = vmatpush1.bf16.msra.mxu0 0
      %3656 = vmatprep.subr.bf16.mxu0 0
      %3657 = vmatpush1.bf16.msra.mxu0 0
      %3658 = vmatprep.subr.bf16.mxu0 0
      %3659 = vmatpush1.bf16.msra.mxu0 0
      %3660 = vmatprep.subr.bf16.mxu0 0
      %3661 = vmatpush1.bf16.msra.mxu0 0
      %3662 = vmatprep.subr.bf16.mxu0 0
      %3663 = vmatpush1.bf16.msra.mxu0 0
      %3664 = vmatprep.subr.bf16.mxu0 0
      %3665 = vmatpush1.bf16.msra.mxu0 0
      %3666 = vmatprep.subr.bf16.mxu0 0
      %3667 = vmatpush1.bf16.msra.mxu0 0
      %3668 = vmatprep.subr.bf16.mxu0 0
      %3669 = vmatpush1.bf16.msra.mxu0 0
      %3670 = vmatprep.mubr.bf16.mxu0 0
      %3671 = vmatmul.mubr.bf16.gmra.mrb[0].mxu0 %v268
      %v3672 = vpop.f32.mrb[0].mxu0
      %v3673 = vadd.f32 0.0, %v3672
      %v3674 = vpop.f32.mrb[0].mxu0
      %v3675 = vadd.f32 0.0, %v3674
      %v3676 = vpop.f32.mrb[0].mxu0
      %v3677 = vadd.f32 0.0, %v3676
      %v3678 = vpop.f32.mrb[0].mxu0
      %v3679 = vadd.f32 0.0, %v3678
      %3680 = vmatprep.mubr.bf16.mxu0 0
      %3681 = vmatmul.mubr.bf16.gmra.mrb[0].mxu0 %v271
      %v3682 = vpop.f32.mrb[0].mxu0
      %v3683 = vadd.f32 0.0, %v3682
      %v3684 = vpop.f32.mrb[0].mxu0
      %v3685 = vadd.f32 0.0, %v3684
      %v3686 = vpop.f32.mrb[0].mxu0
      %v3687 = vadd.f32 0.0, %v3686
      %v3688 = vpop.f32.mrb[0].mxu0
      %v3689 = vadd.f32 0.0, %v3688
      %3690 = vdwg.mxu0
      %3691 = vmatprep.subr.bf16.mxu0 %v3577
      %3692 = vmatpush1.bf16.msra.mxu0 %v3574
      %3693 = vmatprep.subr.bf16.mxu0 0
      %3694 = vmatpush1.bf16.msra.mxu0 0
      %3695 = vmatprep.subr.bf16.mxu0 0
      %3696 = vmatpush1.bf16.msra.mxu0 0
      %3697 = vmatprep.subr.bf16.mxu0 0
      %3698 = vmatpush1.bf16.msra.mxu0 0
      %3699 = vmatprep.subr.bf16.mxu0 0
      %3700 = vmatpush1.bf16.msra.mxu0 0
      %3701 = vmatprep.subr.bf16.mxu0 0
      %3702 = vmatpush1.bf16.msra.mxu0 0
      %3703 = vmatprep.subr.bf16.mxu0 0
      %3704 = vmatpush1.bf16.msra.mxu0 0
      %3705 = vmatprep.subr.bf16.mxu0 0
      %3706 = vmatpush1.bf16.msra.mxu0 0
      %3707 = vmatprep.subr.bf16.mxu0 0
      %3708 = vmatpush1.bf16.msra.mxu0 0
      %3709 = vmatprep.subr.bf16.mxu0 0
      %3710 = vmatpush1.bf16.msra.mxu0 0
      %3711 = vmatprep.subr.bf16.mxu0 0
      %3712 = vmatpush1.bf16.msra.mxu0 0
      %3713 = vmatprep.subr.bf16.mxu0 0
      %3714 = vmatpush1.bf16.msra.mxu0 0
      %3715 = vmatprep.subr.bf16.mxu0 0
      %3716 = vmatpush1.bf16.msra.mxu0 0
      %3717 = vmatprep.subr.bf16.mxu0 0
      %3718 = vmatpush1.bf16.msra.mxu0 0
      %3719 = vmatprep.subr.bf16.mxu0 0
      %3720 = vmatpush1.bf16.msra.mxu0 0
      %3721 = vmatprep.subr.bf16.mxu0 0
      %3722 = vmatpush1.bf16.msra.mxu0 0
      %3723 = vmatprep.mubr.bf16.mxu0 0
      %3724 = vmatmul.mubr.bf16.gmra.mrb[0].mxu0 %v268
      %v3725 = vpop.f32.mrb[0].mxu0
      %v3726 = vadd.f32 0.0, %v3725
      %v3727 = vpop.f32.mrb[0].mxu0
      %v3728 = vadd.f32 0.0, %v3727
      %v3729 = vpop.f32.mrb[0].mxu0
      %v3730 = vadd.f32 0.0, %v3729
      %v3731 = vpop.f32.mrb[0].mxu0
      %v3732 = vadd.f32 0.0, %v3731
      %3733 = vmatprep.mubr.bf16.mxu0 0
      %3734 = vmatmul.mubr.bf16.gmra.mrb[0].mxu0 %v271
      %v3735 = vpop.f32.mrb[0].mxu0
      %v3736 = vadd.f32 0.0, %v3735
      %v3737 = vpop.f32.mrb[0].mxu0
      %v3738 = vadd.f32 0.0, %v3737
      %v3739 = vpop.f32.mrb[0].mxu0
      %v3740 = vadd.f32 0.0, %v3739
      %v3741 = vpop.f32.mrb[0].mxu0
      %v3742 = vadd.f32 0.0, %v3741
      %3743 = vdwg.mxu0
      %3744 = vmatprep.subr.bf16.mxu0 %v3583
      %3745 = vmatpush1.bf16.msra.mxu0 %v3580
      %3746 = vmatprep.subr.bf16.mxu0 0
      %3747 = vmatpush1.bf16.msra.mxu0 0
      %3748 = vmatprep.subr.bf16.mxu0 0
      %3749 = vmatpush1.bf16.msra.mxu0 0
      %3750 = vmatprep.subr.bf16.mxu0 0
      %3751 = vmatpush1.bf16.msra.mxu0 0
      %3752 = vmatprep.subr.bf16.mxu0 0
      %3753 = vmatpush1.bf16.msra.mxu0 0
      %3754 = vmatprep.subr.bf16.mxu0 0
      %3755 = vmatpush1.bf16.msra.mxu0 0
      %3756 = vmatprep.subr.bf16.mxu0 0
      %3757 = vmatpush1.bf16.msra.mxu0 0
      %3758 = vmatprep.subr.bf16.mxu0 0
      %3759 = vmatpush1.bf16.msra.mxu0 0
      %3760 = vmatprep.subr.bf16.mxu0 0
      %3761 = vmatpush1.bf16.msra.mxu0 0
      %3762 = vmatprep.subr.bf16.mxu0 0
      %3763 = vmatpush1.bf16.msra.mxu0 0
      %3764 = vmatprep.subr.bf16.mxu0 0
      %3765 = vmatpush1.bf16.msra.mxu0 0
      %3766 = vmatprep.subr.bf16.mxu0 0
      %3767 = vmatpush1.bf16.msra.mxu0 0
      %3768 = vmatprep.subr.bf16.mxu0 0
      %3769 = vmatpush1.bf16.msra.mxu0 0
      %3770 = vmatprep.subr.bf16.mxu0 0
      %3771 = vmatpush1.bf16.msra.mxu0 0
      %3772 = vmatprep.subr.bf16.mxu0 0
      %3773 = vmatpush1.bf16.msra.mxu0 0
      %3774 = vmatprep.subr.bf16.mxu0 0
      %3775 = vmatpush1.bf16.msra.mxu0 0
      %3776 = vmatprep.mubr.bf16.mxu0 0
      %3777 = vmatmul.mubr.bf16.gmra.mrb[0].mxu0 %v268
      %v3778 = vpop.f32.mrb[0].mxu0
      %v3779 = vadd.f32 0.0, %v3778
      %v3780 = vpop.f32.mrb[0].mxu0
      %v3781 = vadd.f32 0.0, %v3780
      %v3782 = vpop.f32.mrb[0].mxu0
      %v3783 = vadd.f32 0.0, %v3782
      %v3784 = vpop.f32.mrb[0].mxu0
      %v3785 = vadd.f32 0.0, %v3784
      %3786 = vmatprep.mubr.bf16.mxu0 0
      %3787 = vmatmul.mubr.bf16.gmra.mrb[0].mxu0 %v271
      %v3788 = vpop.f32.mrb[0].mxu0
      %v3789 = vadd.f32 0.0, %v3788
      %v3790 = vpop.f32.mrb[0].mxu0
      %v3791 = vadd.f32 0.0, %v3790
      %v3792 = vpop.f32.mrb[0].mxu0
      %v3793 = vadd.f32 0.0, %v3792
      %v3794 = vpop.f32.mrb[0].mxu0
      %v3795 = vadd.f32 0.0, %v3794
      %3796 = vdwg.mxu0
      %v3797 = vld [vmem:[#allocation2] sm:$0xff]
      %v3798 = vld [vmem:[#allocation2 + $0x8] sm:$0xff]
      %v3799 = vld [vmem:[#allocation2 + $0x10] sm:$0xff]
      %v3800 = vld [vmem:[#allocation2 + $0x18] sm:$0xff]
      %v3801 = vld [vmem:[#allocation2 + $0x20] sm:$0xff]
      %v3802 = vld [vmem:[#allocation2 + $0x28] sm:$0xff]
      %v3803 = vld [vmem:[#allocation2 + $0x30] sm:$0xff]
      %v3804 = vld [vmem:[#allocation2 + $0x38] sm:$0xff]
      %v3805 = vld [vmem:[#allocation2 + $0x40] sm:$0xff]
      %v3806 = vld [vmem:[#allocation2 + $0x48] sm:$0xff]
      %v3807 = vld [vmem:[#allocation2 + $0x50] sm:$0xff]
      %v3808 = vld [vmem:[#allocation2 + $0x58] sm:$0xff]
      %v3809 = vld [vmem:[#allocation2 + $0x60] sm:$0xff]
      %v3810 = vld [vmem:[#allocation2 + $0x68] sm:$0xff]
      %v3811 = vld [vmem:[#allocation2 + $0x70] sm:$0xff]
      %v3812 = vld [vmem:[#allocation2 + $0x78] sm:$0xff]
      %v3813 = vld [vmem:[#allocation2 + $0x80] sm:$0xff]
      %v3814 = vld [vmem:[#allocation2 + $0x88] sm:$0xff]
      %v3815 = vld [vmem:[#allocation2 + $0x90] sm:$0xff]
      %v3816 = vld [vmem:[#allocation2 + $0x98] sm:$0xff]
      %v3817 = vld [vmem:[#allocation2 + $0xa0] sm:$0xff]
      %v3818 = vld [vmem:[#allocation2 + $0xa8] sm:$0xff]
      %v3819 = vld [vmem:[#allocation2 + $0xb0] sm:$0xff]
      %v3820 = vld [vmem:[#allocation2 + $0xb8] sm:$0xff]
      %v3821 = vld [vmem:[#allocation2 + $0xc0] sm:$0xff]
      %v3822 = vld [vmem:[#allocation2 + $0xc8] sm:$0xff]
      %v3823 = vld [vmem:[#allocation2 + $0xd0] sm:$0xff]
      %v3824 = vld [vmem:[#allocation2 + $0xd8] sm:$0xff]
      %v3825 = vld [vmem:[#allocation2 + $0xe0] sm:$0xff]
      %v3826 = vld [vmem:[#allocation2 + $0xe8] sm:$0xff]
      %v3827 = vld [vmem:[#allocation2 + $0xf0] sm:$0xff]
      %v3828 = vld [vmem:[#allocation2 + $0xf8] sm:$0xff]
      %v3829 = vmax.f32 %v3797, %v3620
      %v3830 = vmax.f32 %v3798, %v3622
      %v3831 = vmax.f32 %v3799, %v3673
      %v3832 = vmax.f32 %v3800, %v3675
      %v3833 = vmax.f32 %v3801, %v3726
      %v3834 = vmax.f32 %v3802, %v3728
      %v3835 = vmax.f32 %v3803, %v3779
      %v3836 = vmax.f32 %v3804, %v3781
      %v3837 = vmax.f32 %v3805, %v3624
      %v3838 = vmax.f32 %v3806, %v3626
      %v3839 = vmax.f32 %v3807, %v3677
      %v3840 = vmax.f32 %v3808, %v3679
      %v3841 = vmax.f32 %v3809, %v3730
      %v3842 = vmax.f32 %v3810, %v3732
      %v3843 = vmax.f32 %v3811, %v3783
      %v3844 = vmax.f32 %v3812, %v3785
      %v3845 = vmax.f32 %v3813, %v3630
      %v3846 = vmax.f32 %v3814, %v3632
      %v3847 = vmax.f32 %v3815, %v3683
      %v3848 = vmax.f32 %v3816, %v3685
      %v3849 = vmax.f32 %v3817, %v3736
      %v3850 = vmax.f32 %v3818, %v3738
      %v3851 = vmax.f32 %v3819, %v3789
      %v3852 = vmax.f32 %v3820, %v3791
      %v3853 = vmax.f32 %v3821, %v3634
      %v3854 = vmax.f32 %v3822, %v3636
      %v3855 = vmax.f32 %v3823, %v3687
      %v3856 = vmax.f32 %v3824, %v3689
      %v3857 = vmax.f32 %v3825, %v3740
      %v3858 = vmax.f32 %v3826, %v3742
      %v3859 = vmax.f32 %v3827, %v3793
      %v3860 = vmax.f32 %v3828, %v3795
      %3861 = vst [vmem:[#allocation2] sm:$0xff] %v3829
      %3862 = vst [vmem:[#allocation2 + $0x8] sm:$0xff] %v3830
      %3863 = vst [vmem:[#allocation2 + $0x10] sm:$0xff] %v3831
      %3864 = vst [vmem:[#allocation2 + $0x18] sm:$0xff] %v3832
      %3865 = vst [vmem:[#allocation2 + $0x20] sm:$0xff] %v3833
      %3866 = vst [vmem:[#allocation2 + $0x28] sm:$0xff] %v3834
      %3867 = vst [vmem:[#allocation2 + $0x30] sm:$0xff] %v3835
      %3868 = vst [vmem:[#allocation2 + $0x38] sm:$0xff] %v3836
      %3869 = vst [vmem:[#allocation2 + $0x40] sm:$0xff] %v3837
      %3870 = vst [vmem:[#allocation2 + $0x48] sm:$0xff] %v3838
      %3871 = vst [vmem:[#allocation2 + $0x50] sm:$0xff] %v3839
      %3872 = vst [vmem:[#allocation2 + $0x58] sm:$0xff] %v3840
      %3873 = vst [vmem:[#allocation2 + $0x60] sm:$0xff] %v3841
      %3874 = vst [vmem:[#allocation2 + $0x68] sm:$0xff] %v3842
      %3875 = vst [vmem:[#allocation2 + $0x70] sm:$0xff] %v3843
      %3876 = vst [vmem:[#allocation2 + $0x78] sm:$0xff] %v3844
      %3877 = vst [vmem:[#allocation2 + $0x80] sm:$0xff] %v3845
      %3878 = vst [vmem:[#allocation2 + $0x88] sm:$0xff] %v3846
      %3879 = vst [vmem:[#allocation2 + $0x90] sm:$0xff] %v3847
      %3880 = vst [vmem:[#allocation2 + $0x98] sm:$0xff] %v3848
      %3881 = vst [vmem:[#allocation2 + $0xa0] sm:$0xff] %v3849
      %3882 = vst [vmem:[#allocation2 + $0xa8] sm:$0xff] %v3850
      %3883 = vst [vmem:[#allocation2 + $0xb0] sm:$0xff] %v3851
      %3884 = vst [vmem:[#allocation2 + $0xb8] sm:$0xff] %v3852
      %3885 = vst [vmem:[#allocation2 + $0xc0] sm:$0xff] %v3853
      %3886 = vst [vmem:[#allocation2 + $0xc8] sm:$0xff] %v3854
      %3887 = vst [vmem:[#allocation2 + $0xd0] sm:$0xff] %v3855
      %3888 = vst [vmem:[#allocation2 + $0xd8] sm:$0xff] %v3856
      %3889 = vst [vmem:[#allocation2 + $0xe0] sm:$0xff] %v3857
      %3890 = vst [vmem:[#allocation2 + $0xe8] sm:$0xff] %v3858
      %3891 = vst [vmem:[#allocation2 + $0xf0] sm:$0xff] %v3859
      %3892 = vst [vmem:[#allocation2 + $0xf8] sm:$0xff] %v3860
      %v3893 = vld [vmem:[%s200 + $0x140] sm:$0xff]
      %v3894 = vld [vmem:[%s200 + $0x148] sm:$0xff]
      %v3895 = vld [vmem:[%s200 + $0x150] sm:$0xff]
      %v3896 = vld [vmem:[%s200 + $0x158] sm:$0xff]
      %v3897 = vld [vmem:[%s200 + $0x340] sm:$0x11]
      %v3898 = vld [vmem:[%s200 + $0x348] sm:$0x11]
      %v3899 = vld [vmem:[%s200 + $0x350] sm:$0x11]
      %v3900 = vld [vmem:[%s200 + $0x358] sm:$0x11]
      %v3909 = vunpack.c.l.b16 %v3893
      %v3910 = vunpack.c.h.b16 %v3893
      %v3911 = vunpack.c.l.b16 %v3894
      %v3912 = vunpack.c.h.b16 %v3894
      %v3913 = vunpack.c.l.b16 %v3895
      %v3914 = vunpack.c.h.b16 %v3895
      %v3915 = vunpack.c.l.b16 %v3896
      %v3916 = vunpack.c.h.b16 %v3896
      %v3917 = vunpack.c.l.b16 %v3897
      %v3918 = vunpack.c.h.b16 %v3897
      %v3919 = vunpack.c.l.b16 %v3898
      %v3920 = vunpack.c.h.b16 %v3898
      %v3921 = vunpack.c.l.b16 %v3899
      %v3922 = vunpack.c.h.b16 %v3899
      %v3923 = vunpack.c.l.b16 %v3900
      %v3924 = vunpack.c.h.b16 %v3900
      %v3925 = vpack.c.b16 %v3917, %v3909
      %v3926 = vpack.c.b16 %v3918, %v3910
      %v3927 = vpack.c.b16 %v3919, %v3911
      %v3928 = vpack.c.b16 %v3920, %v3912
      %v3929 = vpack.c.b16 %v3921, %v3913
      %v3930 = vpack.c.b16 %v3922, %v3914
      %v3931 = vpack.c.b16 %v3923, %v3915
      %v3932 = vpack.c.b16 %v3924, %v3916
      %v3934 = vand.u32 %v3925, %v276
      %v3937 = vand.u32 %v3926, %v276
      %v3940 = vand.u32 %v3927, %v276
      %v3943 = vand.u32 %v3928, %v276
      %v3946 = vand.u32 %v3929, %v276
      %v3949 = vand.u32 %v3930, %v276
      %v3952 = vand.u32 %v3931, %v276
      %v3955 = vand.u32 %v3932, %v276
      %3957 = vmatprep.subr.bf16.mxu0 %v3937
      %3958 = vmatpush1.bf16.msra.mxu0 %v3934
      %3959 = vmatprep.subr.bf16.mxu0 0
      %3960 = vmatpush1.bf16.msra.mxu0 0
      %3961 = vmatprep.subr.bf16.mxu0 0
      %3962 = vmatpush1.bf16.msra.mxu0 0
      %3963 = vmatprep.subr.bf16.mxu0 0
      %3964 = vmatpush1.bf16.msra.mxu0 0
      %3965 = vmatprep.subr.bf16.mxu0 0
      %3966 = vmatpush1.bf16.msra.mxu0 0
      %3967 = vmatprep.subr.bf16.mxu0 0
      %3968 = vmatpush1.bf16.msra.mxu0 0
      %3969 = vmatprep.subr.bf16.mxu0 0
      %3970 = vmatpush1.bf16.msra.mxu0 0
      %3971 = vmatprep.subr.bf16.mxu0 0
      %3972 = vmatpush1.bf16.msra.mxu0 0
      %3973 = vmatprep.subr.bf16.mxu0 0
      %3974 = vmatpush1.bf16.msra.mxu0 0
      %3975 = vmatprep.subr.bf16.mxu0 0
      %3976 = vmatpush1.bf16.msra.mxu0 0
      %3977 = vmatprep.subr.bf16.mxu0 0
      %3978 = vmatpush1.bf16.msra.mxu0 0
      %3979 = vmatprep.subr.bf16.mxu0 0
      %3980 = vmatpush1.bf16.msra.mxu0 0
      %3981 = vmatprep.subr.bf16.mxu0 0
      %3982 = vmatpush1.bf16.msra.mxu0 0
      %3983 = vmatprep.subr.bf16.mxu0 0
      %3984 = vmatpush1.bf16.msra.mxu0 0
      %3985 = vmatprep.subr.bf16.mxu0 0
      %3986 = vmatpush1.bf16.msra.mxu0 0
      %3987 = vmatprep.subr.bf16.mxu0 0
      %3988 = vmatpush1.bf16.msra.mxu0 0
      %3989 = vmatprep.mubr.bf16.mxu0 0
      %3990 = vmatmul.mubr.bf16.gmra.mrb[0].mxu0 %v268
      %v3991 = vpop.f32.mrb[0].mxu0
      %v3992 = vadd.f32 0.0, %v3991
      %v3993 = vpop.f32.mrb[0].mxu0
      %v3994 = vadd.f32 0.0, %v3993
      %v3995 = vpop.f32.mrb[0].mxu0
      %v3996 = vadd.f32 0.0, %v3995
      %v3997 = vpop.f32.mrb[0].mxu0
      %v3998 = vadd.f32 0.0, %v3997
      %3999 = vmatprep.mubr.bf16.mxu0 0
      %4000 = vmatmul.mubr.bf16.gmra.mrb[0].mxu0 %v271
      %v4001 = vpop.f32.mrb[0].mxu0
      %v4002 = vadd.f32 0.0, %v4001
      %v4003 = vpop.f32.mrb[0].mxu0
      %v4004 = vadd.f32 0.0, %v4003
      %v4005 = vpop.f32.mrb[0].mxu0
      %v4006 = vadd.f32 0.0, %v4005
      %v4007 = vpop.f32.mrb[0].mxu0
      %v4008 = vadd.f32 0.0, %v4007
      %4009 = vdwg.mxu0
      %4010 = vmatprep.subr.bf16.mxu0 %v3943
      %4011 = vmatpush1.bf16.msra.mxu0 %v3940
      %4012 = vmatprep.subr.bf16.mxu0 0
      %4013 = vmatpush1.bf16.msra.mxu0 0
      %4014 = vmatprep.subr.bf16.mxu0 0
      %4015 = vmatpush1.bf16.msra.mxu0 0
      %4016 = vmatprep.subr.bf16.mxu0 0
      %4017 = vmatpush1.bf16.msra.mxu0 0
      %4018 = vmatprep.subr.bf16.mxu0 0
      %4019 = vmatpush1.bf16.msra.mxu0 0
      %4020 = vmatprep.subr.bf16.mxu0 0
      %4021 = vmatpush1.bf16.msra.mxu0 0
      %4022 = vmatprep.subr.bf16.mxu0 0
      %4023 = vmatpush1.bf16.msra.mxu0 0
      %4024 = vmatprep.subr.bf16.mxu0 0
      %4025 = vmatpush1.bf16.msra.mxu0 0
      %4026 = vmatprep.subr.bf16.mxu0 0
      %4027 = vmatpush1.bf16.msra.mxu0 0
      %4028 = vmatprep.subr.bf16.mxu0 0
      %4029 = vmatpush1.bf16.msra.mxu0 0
      %4030 = vmatprep.subr.bf16.mxu0 0
      %4031 = vmatpush1.bf16.msra.mxu0 0
      %4032 = vmatprep.subr.bf16.mxu0 0
      %4033 = vmatpush1.bf16.msra.mxu0 0
      %4034 = vmatprep.subr.bf16.mxu0 0
      %4035 = vmatpush1.bf16.msra.mxu0 0
      %4036 = vmatprep.subr.bf16.mxu0 0
      %4037 = vmatpush1.bf16.msra.mxu0 0
      %4038 = vmatprep.subr.bf16.mxu0 0
      %4039 = vmatpush1.bf16.msra.mxu0 0
      %4040 = vmatprep.subr.bf16.mxu0 0
      %4041 = vmatpush1.bf16.msra.mxu0 0
      %4042 = vmatprep.mubr.bf16.mxu0 0
      %4043 = vmatmul.mubr.bf16.gmra.mrb[0].mxu0 %v268
      %v4044 = vpop.f32.mrb[0].mxu0
      %v4045 = vadd.f32 0.0, %v4044
      %v4046 = vpop.f32.mrb[0].mxu0
      %v4047 = vadd.f32 0.0, %v4046
      %v4048 = vpop.f32.mrb[0].mxu0
      %v4049 = vadd.f32 0.0, %v4048
      %v4050 = vpop.f32.mrb[0].mxu0
      %v4051 = vadd.f32 0.0, %v4050
      %4052 = vmatprep.mubr.bf16.mxu0 0
      %4053 = vmatmul.mubr.bf16.gmra.mrb[0].mxu0 %v271
      %v4054 = vpop.f32.mrb[0].mxu0
      %v4055 = vadd.f32 0.0, %v4054
      %v4056 = vpop.f32.mrb[0].mxu0
      %v4057 = vadd.f32 0.0, %v4056
      %v4058 = vpop.f32.mrb[0].mxu0
      %v4059 = vadd.f32 0.0, %v4058
      %v4060 = vpop.f32.mrb[0].mxu0
      %v4061 = vadd.f32 0.0, %v4060
      %4062 = vdwg.mxu0
      %4063 = vmatprep.subr.bf16.mxu0 %v3949
      %4064 = vmatpush1.bf16.msra.mxu0 %v3946
      %4065 = vmatprep.subr.bf16.mxu0 0
      %4066 = vmatpush1.bf16.msra.mxu0 0
      %4067 = vmatprep.subr.bf16.mxu0 0
      %4068 = vmatpush1.bf16.msra.mxu0 0
      %4069 = vmatprep.subr.bf16.mxu0 0
      %4070 = vmatpush1.bf16.msra.mxu0 0
      %4071 = vmatprep.subr.bf16.mxu0 0
      %4072 = vmatpush1.bf16.msra.mxu0 0
      %4073 = vmatprep.subr.bf16.mxu0 0
      %4074 = vmatpush1.bf16.msra.mxu0 0
      %4075 = vmatprep.subr.bf16.mxu0 0
      %4076 = vmatpush1.bf16.msra.mxu0 0
      %4077 = vmatprep.subr.bf16.mxu0 0
      %4078 = vmatpush1.bf16.msra.mxu0 0
      %4079 = vmatprep.subr.bf16.mxu0 0
      %4080 = vmatpush1.bf16.msra.mxu0 0
      %4081 = vmatprep.subr.bf16.mxu0 0
      %4082 = vmatpush1.bf16.msra.mxu0 0
      %4083 = vmatprep.subr.bf16.mxu0 0
      %4084 = vmatpush1.bf16.msra.mxu0 0
      %4085 = vmatprep.subr.bf16.mxu0 0
      %4086 = vmatpush1.bf16.msra.mxu0 0
      %4087 = vmatprep.subr.bf16.mxu0 0
      %4088 = vmatpush1.bf16.msra.mxu0 0
      %4089 = vmatprep.subr.bf16.mxu0 0
      %4090 = vmatpush1.bf16.msra.mxu0 0
      %4091 = vmatprep.subr.bf16.mxu0 0
      %4092 = vmatpush1.bf16.msra.mxu0 0
      %4093 = vmatprep.subr.bf16.mxu0 0
      %4094 = vmatpush1.bf16.msra.mxu0 0
      %4095 = vmatprep.mubr.bf16.mxu0 0
      %4096 = vmatmul.mubr.bf16.gmra.mrb[0].mxu0 %v268
      %v4097 = vpop.f32.mrb[0].mxu0
      %v4098 = vadd.f32 0.0, %v4097
      %v4099 = vpop.f32.mrb[0].mxu0
      %v4100 = vadd.f32 0.0, %v4099
      %v4101 = vpop.f32.mrb[0].mxu0
      %v4102 = vadd.f32 0.0, %v4101
      %v4103 = vpop.f32.mrb[0].mxu0
      %v4104 = vadd.f32 0.0, %v4103
      %4105 = vmatprep.mubr.bf16.mxu0 0
      %4106 = vmatmul.mubr.bf16.gmra.mrb[0].mxu0 %v271
      %v4107 = vpop.f32.mrb[0].mxu0
      %v4108 = vadd.f32 0.0, %v4107
      %v4109 = vpop.f32.mrb[0].mxu0
      %v4110 = vadd.f32 0.0, %v4109
      %v4111 = vpop.f32.mrb[0].mxu0
      %v4112 = vadd.f32 0.0, %v4111
      %v4113 = vpop.f32.mrb[0].mxu0
      %v4114 = vadd.f32 0.0, %v4113
      %4115 = vdwg.mxu0
      %4116 = vmatprep.subr.bf16.mxu0 %v3955
      %4117 = vmatpush1.bf16.msra.mxu0 %v3952
      %4118 = vmatprep.subr.bf16.mxu0 0
      %4119 = vmatpush1.bf16.msra.mxu0 0
      %4120 = vmatprep.subr.bf16.mxu0 0
      %4121 = vmatpush1.bf16.msra.mxu0 0
      %4122 = vmatprep.subr.bf16.mxu0 0
      %4123 = vmatpush1.bf16.msra.mxu0 0
      %4124 = vmatprep.subr.bf16.mxu0 0
      %4125 = vmatpush1.bf16.msra.mxu0 0
      %4126 = vmatprep.subr.bf16.mxu0 0
      %4127 = vmatpush1.bf16.msra.mxu0 0
      %4128 = vmatprep.subr.bf16.mxu0 0
      %4129 = vmatpush1.bf16.msra.mxu0 0
      %4130 = vmatprep.subr.bf16.mxu0 0
      %4131 = vmatpush1.bf16.msra.mxu0 0
      %4132 = vmatprep.subr.bf16.mxu0 0
      %4133 = vmatpush1.bf16.msra.mxu0 0
      %4134 = vmatprep.subr.bf16.mxu0 0
      %4135 = vmatpush1.bf16.msra.mxu0 0
      %4136 = vmatprep.subr.bf16.mxu0 0
      %4137 = vmatpush1.bf16.msra.mxu0 0
      %4138 = vmatprep.subr.bf16.mxu0 0
      %4139 = vmatpush1.bf16.msra.mxu0 0
      %4140 = vmatprep.subr.bf16.mxu0 0
      %4141 = vmatpush1.bf16.msra.mxu0 0
      %4142 = vmatprep.subr.bf16.mxu0 0
      %4143 = vmatpush1.bf16.msra.mxu0 0
      %4144 = vmatprep.subr.bf16.mxu0 0
      %4145 = vmatpush1.bf16.msra.mxu0 0
      %4146 = vmatprep.subr.bf16.mxu0 0
      %4147 = vmatpush1.bf16.msra.mxu0 0
      %4148 = vmatprep.mubr.bf16.mxu0 0
      %4149 = vmatmul.mubr.bf16.gmra.mrb[0].mxu0 %v268
      %v4150 = vpop.f32.mrb[0].mxu0
      %v4151 = vadd.f32 0.0, %v4150
      %v4152 = vpop.f32.mrb[0].mxu0
      %v4153 = vadd.f32 0.0, %v4152
      %v4154 = vpop.f32.mrb[0].mxu0
      %v4155 = vadd.f32 0.0, %v4154
      %v4156 = vpop.f32.mrb[0].mxu0
      %v4157 = vadd.f32 0.0, %v4156
      %4158 = vmatprep.mubr.bf16.mxu0 0
      %4159 = vmatmul.mubr.bf16.gmra.mrb[0].mxu0 %v271
      %v4160 = vpop.f32.mrb[0].mxu0
      %v4161 = vadd.f32 0.0, %v4160
      %v4162 = vpop.f32.mrb[0].mxu0
      %v4163 = vadd.f32 0.0, %v4162
      %v4164 = vpop.f32.mrb[0].mxu0
      %v4165 = vadd.f32 0.0, %v4164
      %v4166 = vpop.f32.mrb[0].mxu0
      %v4167 = vadd.f32 0.0, %v4166
      %4168 = vdwg.mxu0
      %v4169 = vld [vmem:[#allocation2] sm:$0xff]
      %v4170 = vld [vmem:[#allocation2 + $0x8] sm:$0xff]
      %v4171 = vld [vmem:[#allocation2 + $0x10] sm:$0xff]
      %v4172 = vld [vmem:[#allocation2 + $0x18] sm:$0xff]
      %v4173 = vld [vmem:[#allocation2 + $0x20] sm:$0xff]
      %v4174 = vld [vmem:[#allocation2 + $0x28] sm:$0xff]
      %v4175 = vld [vmem:[#allocation2 + $0x30] sm:$0xff]
      %v4176 = vld [vmem:[#allocation2 + $0x38] sm:$0xff]
      %v4177 = vld [vmem:[#allocation2 + $0x40] sm:$0xff]
      %v4178 = vld [vmem:[#allocation2 + $0x48] sm:$0xff]
      %v4179 = vld [vmem:[#allocation2 + $0x50] sm:$0xff]
      %v4180 = vld [vmem:[#allocation2 + $0x58] sm:$0xff]
      %v4181 = vld [vmem:[#allocation2 + $0x60] sm:$0xff]
      %v4182 = vld [vmem:[#allocation2 + $0x68] sm:$0xff]
      %v4183 = vld [vmem:[#allocation2 + $0x70] sm:$0xff]
      %v4184 = vld [vmem:[#allocation2 + $0x78] sm:$0xff]
      %v4185 = vld [vmem:[#allocation2 + $0x80] sm:$0xff]
      %v4186 = vld [vmem:[#allocation2 + $0x88] sm:$0xff]
      %v4187 = vld [vmem:[#allocation2 + $0x90] sm:$0xff]
      %v4188 = vld [vmem:[#allocation2 + $0x98] sm:$0xff]
      %v4189 = vld [vmem:[#allocation2 + $0xa0] sm:$0xff]
      %v4190 = vld [vmem:[#allocation2 + $0xa8] sm:$0xff]
      %v4191 = vld [vmem:[#allocation2 + $0xb0] sm:$0xff]
      %v4192 = vld [vmem:[#allocation2 + $0xb8] sm:$0xff]
      %v4193 = vld [vmem:[#allocation2 + $0xc0] sm:$0xff]
      %v4194 = vld [vmem:[#allocation2 + $0xc8] sm:$0xff]
      %v4195 = vld [vmem:[#allocation2 + $0xd0] sm:$0xff]
      %v4196 = vld [vmem:[#allocation2 + $0xd8] sm:$0xff]
      %v4197 = vld [vmem:[#allocation2 + $0xe0] sm:$0xff]
      %v4198 = vld [vmem:[#allocation2 + $0xe8] sm:$0xff]
      %v4199 = vld [vmem:[#allocation2 + $0xf0] sm:$0xff]
      %v4200 = vld [vmem:[#allocation2 + $0xf8] sm:$0xff]
      %v4201 = vmax.f32 %v4169, %v3992
      %v4202 = vmax.f32 %v4170, %v3994
      %v4203 = vmax.f32 %v4171, %v4045
      %v4204 = vmax.f32 %v4172, %v4047
      %v4205 = vmax.f32 %v4173, %v4098
      %v4206 = vmax.f32 %v4174, %v4100
      %v4207 = vmax.f32 %v4175, %v4151
      %v4208 = vmax.f32 %v4176, %v4153
      %v4209 = vmax.f32 %v4177, %v3996
      %v4210 = vmax.f32 %v4178, %v3998
      %v4211 = vmax.f32 %v4179, %v4049
      %v4212 = vmax.f32 %v4180, %v4051
      %v4213 = vmax.f32 %v4181, %v4102
      %v4214 = vmax.f32 %v4182, %v4104
      %v4215 = vmax.f32 %v4183, %v4155
      %v4216 = vmax.f32 %v4184, %v4157
      %v4217 = vmax.f32 %v4185, %v4002
      %v4218 = vmax.f32 %v4186, %v4004
      %v4219 = vmax.f32 %v4187, %v4055
      %v4220 = vmax.f32 %v4188, %v4057
      %v4221 = vmax.f32 %v4189, %v4108
      %v4222 = vmax.f32 %v4190, %v4110
      %v4223 = vmax.f32 %v4191, %v4161
      %v4224 = vmax.f32 %v4192, %v4163
      %v4225 = vmax.f32 %v4193, %v4006
      %v4226 = vmax.f32 %v4194, %v4008
      %v4227 = vmax.f32 %v4195, %v4059
      %v4228 = vmax.f32 %v4196, %v4061
      %v4229 = vmax.f32 %v4197, %v4112
      %v4230 = vmax.f32 %v4198, %v4114
      %v4231 = vmax.f32 %v4199, %v4165
      %v4232 = vmax.f32 %v4200, %v4167
      %4233 = vst [vmem:[#allocation2] sm:$0xff] %v4201
      %4234 = vst [vmem:[#allocation2 + $0x8] sm:$0xff] %v4202
      %4235 = vst [vmem:[#allocation2 + $0x10] sm:$0xff] %v4203
      %4236 = vst [vmem:[#allocation2 + $0x18] sm:$0xff] %v4204
      %4237 = vst [vmem:[#allocation2 + $0x20] sm:$0xff] %v4205
      %4238 = vst [vmem:[#allocation2 + $0x28] sm:$0xff] %v4206
      %4239 = vst [vmem:[#allocation2 + $0x30] sm:$0xff] %v4207
      %4240 = vst [vmem:[#allocation2 + $0x38] sm:$0xff] %v4208
      %4241 = vst [vmem:[#allocation2 + $0x40] sm:$0xff] %v4209
      %4242 = vst [vmem:[#allocation2 + $0x48] sm:$0xff] %v4210
      %4243 = vst [vmem:[#allocation2 + $0x50] sm:$0xff] %v4211
      %4244 = vst [vmem:[#allocation2 + $0x58] sm:$0xff] %v4212
      %4245 = vst [vmem:[#allocation2 + $0x60] sm:$0xff] %v4213
      %4246 = vst [vmem:[#allocation2 + $0x68] sm:$0xff] %v4214
      %4247 = vst [vmem:[#allocation2 + $0x70] sm:$0xff] %v4215
      %4248 = vst [vmem:[#allocation2 + $0x78] sm:$0xff] %v4216
      %4249 = vst [vmem:[#allocation2 + $0x80] sm:$0xff] %v4217
      %4250 = vst [vmem:[#allocation2 + $0x88] sm:$0xff] %v4218
      %4251 = vst [vmem:[#allocation2 + $0x90] sm:$0xff] %v4219
      %4252 = vst [vmem:[#allocation2 + $0x98] sm:$0xff] %v4220
      %4253 = vst [vmem:[#allocation2 + $0xa0] sm:$0xff] %v4221
      %4254 = vst [vmem:[#allocation2 + $0xa8] sm:$0xff] %v4222
      %4255 = vst [vmem:[#allocation2 + $0xb0] sm:$0xff] %v4223
      %4256 = vst [vmem:[#allocation2 + $0xb8] sm:$0xff] %v4224
      %4257 = vst [vmem:[#allocation2 + $0xc0] sm:$0xff] %v4225
      %4258 = vst [vmem:[#allocation2 + $0xc8] sm:$0xff] %v4226
      %4259 = vst [vmem:[#allocation2 + $0xd0] sm:$0xff] %v4227
      %4260 = vst [vmem:[#allocation2 + $0xd8] sm:$0xff] %v4228
      %4261 = vst [vmem:[#allocation2 + $0xe0] sm:$0xff] %v4229
      %4262 = vst [vmem:[#allocation2 + $0xe8] sm:$0xff] %v4230
      %4263 = vst [vmem:[#allocation2 + $0xf0] sm:$0xff] %v4231
      %4264 = vst [vmem:[#allocation2 + $0xf8] sm:$0xff] %v4232
      %v4265 = vld [vmem:[%s200 + $0x160] sm:$0xff]
      %v4266 = vld [vmem:[%s200 + $0x168] sm:$0xff]
      %v4267 = vld [vmem:[%s200 + $0x170] sm:$0xff]
      %v4268 = vld [vmem:[%s200 + $0x178] sm:$0xff]
      %v4269 = vld [vmem:[%s200 + $0x360] sm:$0x11]
      %v4270 = vld [vmem:[%s200 + $0x368] sm:$0x11]
      %v4271 = vld [vmem:[%s200 + $0x370] sm:$0x11]
      %v4272 = vld [vmem:[%s200 + $0x378] sm:$0x11]
      %v4281 = vunpack.c.l.b16 %v4265
      %v4282 = vunpack.c.h.b16 %v4265
      %v4283 = vunpack.c.l.b16 %v4266
      %v4284 = vunpack.c.h.b16 %v4266
      %v4285 = vunpack.c.l.b16 %v4267
      %v4286 = vunpack.c.h.b16 %v4267
      %v4287 = vunpack.c.l.b16 %v4268
      %v4288 = vunpack.c.h.b16 %v4268
      %v4289 = vunpack.c.l.b16 %v4269
      %v4290 = vunpack.c.h.b16 %v4269
      %v4291 = vunpack.c.l.b16 %v4270
      %v4292 = vunpack.c.h.b16 %v4270
      %v4293 = vunpack.c.l.b16 %v4271
      %v4294 = vunpack.c.h.b16 %v4271
      %v4295 = vunpack.c.l.b16 %v4272
      %v4296 = vunpack.c.h.b16 %v4272
      %v4297 = vpack.c.b16 %v4289, %v4281
      %v4298 = vpack.c.b16 %v4290, %v4282
      %v4299 = vpack.c.b16 %v4291, %v4283
      %v4300 = vpack.c.b16 %v4292, %v4284
      %v4301 = vpack.c.b16 %v4293, %v4285
      %v4302 = vpack.c.b16 %v4294, %v4286
      %v4303 = vpack.c.b16 %v4295, %v4287
      %v4304 = vpack.c.b16 %v4296, %v4288
      %v4306 = vand.u32 %v4297, %v276
      %v4309 = vand.u32 %v4298, %v276
      %v4312 = vand.u32 %v4299, %v276
      %v4315 = vand.u32 %v4300, %v276
      %v4318 = vand.u32 %v4301, %v276
      %v4321 = vand.u32 %v4302, %v276
      %v4324 = vand.u32 %v4303, %v276
      %v4327 = vand.u32 %v4304, %v276
      %4329 = vmatprep.subr.bf16.mxu0 %v4309
      %4330 = vmatpush1.bf16.msra.mxu0 %v4306
      %4331 = vmatprep.subr.bf16.mxu0 0
      %4332 = vmatpush1.bf16.msra.mxu0 0
      %4333 = vmatprep.subr.bf16.mxu0 0
      %4334 = vmatpush1.bf16.msra.mxu0 0
      %4335 = vmatprep.subr.bf16.mxu0 0
      %4336 = vmatpush1.bf16.msra.mxu0 0
      %4337 = vmatprep.subr.bf16.mxu0 0
      %4338 = vmatpush1.bf16.msra.mxu0 0
      %4339 = vmatprep.subr.bf16.mxu0 0
      %4340 = vmatpush1.bf16.msra.mxu0 0
      %4341 = vmatprep.subr.bf16.mxu0 0
      %4342 = vmatpush1.bf16.msra.mxu0 0
      %4343 = vmatprep.subr.bf16.mxu0 0
      %4344 = vmatpush1.bf16.msra.mxu0 0
      %4345 = vmatprep.subr.bf16.mxu0 0
      %4346 = vmatpush1.bf16.msra.mxu0 0
      %4347 = vmatprep.subr.bf16.mxu0 0
      %4348 = vmatpush1.bf16.msra.mxu0 0
      %4349 = vmatprep.subr.bf16.mxu0 0
      %4350 = vmatpush1.bf16.msra.mxu0 0
      %4351 = vmatprep.subr.bf16.mxu0 0
      %4352 = vmatpush1.bf16.msra.mxu0 0
      %4353 = vmatprep.subr.bf16.mxu0 0
      %4354 = vmatpush1.bf16.msra.mxu0 0
      %4355 = vmatprep.subr.bf16.mxu0 0
      %4356 = vmatpush1.bf16.msra.mxu0 0
      %4357 = vmatprep.subr.bf16.mxu0 0
      %4358 = vmatpush1.bf16.msra.mxu0 0
      %4359 = vmatprep.subr.bf16.mxu0 0
      %4360 = vmatpush1.bf16.msra.mxu0 0
      %4361 = vmatprep.mubr.bf16.mxu0 0
      %4362 = vmatmul.mubr.bf16.gmra.mrb[0].mxu0 %v268
      %v4363 = vpop.f32.mrb[0].mxu0
      %v4364 = vadd.f32 0.0, %v4363
      %v4365 = vpop.f32.mrb[0].mxu0
      %v4366 = vadd.f32 0.0, %v4365
      %v4367 = vpop.f32.mrb[0].mxu0
      %v4368 = vadd.f32 0.0, %v4367
      %v4369 = vpop.f32.mrb[0].mxu0
      %v4370 = vadd.f32 0.0, %v4369
      %4371 = vmatprep.mubr.bf16.mxu0 0
      %4372 = vmatmul.mubr.bf16.gmra.mrb[0].mxu0 %v271
      %v4373 = vpop.f32.mrb[0].mxu0
      %v4374 = vadd.f32 0.0, %v4373
      %v4375 = vpop.f32.mrb[0].mxu0
      %v4376 = vadd.f32 0.0, %v4375
      %v4377 = vpop.f32.mrb[0].mxu0
      %v4378 = vadd.f32 0.0, %v4377
      %v4379 = vpop.f32.mrb[0].mxu0
      %v4380 = vadd.f32 0.0, %v4379
      %4381 = vdwg.mxu0
      %4382 = vmatprep.subr.bf16.mxu0 %v4315
      %4383 = vmatpush1.bf16.msra.mxu0 %v4312
      %4384 = vmatprep.subr.bf16.mxu0 0
      %4385 = vmatpush1.bf16.msra.mxu0 0
      %4386 = vmatprep.subr.bf16.mxu0 0
      %4387 = vmatpush1.bf16.msra.mxu0 0
      %4388 = vmatprep.subr.bf16.mxu0 0
      %4389 = vmatpush1.bf16.msra.mxu0 0
      %4390 = vmatprep.subr.bf16.mxu0 0
      %4391 = vmatpush1.bf16.msra.mxu0 0
      %4392 = vmatprep.subr.bf16.mxu0 0
      %4393 = vmatpush1.bf16.msra.mxu0 0
      %4394 = vmatprep.subr.bf16.mxu0 0
      %4395 = vmatpush1.bf16.msra.mxu0 0
      %4396 = vmatprep.subr.bf16.mxu0 0
      %4397 = vmatpush1.bf16.msra.mxu0 0
      %4398 = vmatprep.subr.bf16.mxu0 0
      %4399 = vmatpush1.bf16.msra.mxu0 0
      %4400 = vmatprep.subr.bf16.mxu0 0
      %4401 = vmatpush1.bf16.msra.mxu0 0
      %4402 = vmatprep.subr.bf16.mxu0 0
      %4403 = vmatpush1.bf16.msra.mxu0 0
      %4404 = vmatprep.subr.bf16.mxu0 0
      %4405 = vmatpush1.bf16.msra.mxu0 0
      %4406 = vmatprep.subr.bf16.mxu0 0
      %4407 = vmatpush1.bf16.msra.mxu0 0
      %4408 = vmatprep.subr.bf16.mxu0 0
      %4409 = vmatpush1.bf16.msra.mxu0 0
      %4410 = vmatprep.subr.bf16.mxu0 0
      %4411 = vmatpush1.bf16.msra.mxu0 0
      %4412 = vmatprep.subr.bf16.mxu0 0
      %4413 = vmatpush1.bf16.msra.mxu0 0
      %4414 = vmatprep.mubr.bf16.mxu0 0
      %4415 = vmatmul.mubr.bf16.gmra.mrb[0].mxu0 %v268
      %v4416 = vpop.f32.mrb[0].mxu0
      %v4417 = vadd.f32 0.0, %v4416
      %v4418 = vpop.f32.mrb[0].mxu0
      %v4419 = vadd.f32 0.0, %v4418
      %v4420 = vpop.f32.mrb[0].mxu0
      %v4421 = vadd.f32 0.0, %v4420
      %v4422 = vpop.f32.mrb[0].mxu0
      %v4423 = vadd.f32 0.0, %v4422
      %4424 = vmatprep.mubr.bf16.mxu0 0
      %4425 = vmatmul.mubr.bf16.gmra.mrb[0].mxu0 %v271
      %v4426 = vpop.f32.mrb[0].mxu0
      %v4427 = vadd.f32 0.0, %v4426
      %v4428 = vpop.f32.mrb[0].mxu0
      %v4429 = vadd.f32 0.0, %v4428
      %v4430 = vpop.f32.mrb[0].mxu0
      %v4431 = vadd.f32 0.0, %v4430
      %v4432 = vpop.f32.mrb[0].mxu0
      %v4433 = vadd.f32 0.0, %v4432
      %4434 = vdwg.mxu0
      %4435 = vmatprep.subr.bf16.mxu0 %v4321
      %4436 = vmatpush1.bf16.msra.mxu0 %v4318
      %4437 = vmatprep.subr.bf16.mxu0 0
      %4438 = vmatpush1.bf16.msra.mxu0 0
      %4439 = vmatprep.subr.bf16.mxu0 0
      %4440 = vmatpush1.bf16.msra.mxu0 0
      %4441 = vmatprep.subr.bf16.mxu0 0
      %4442 = vmatpush1.bf16.msra.mxu0 0
      %4443 = vmatprep.subr.bf16.mxu0 0
      %4444 = vmatpush1.bf16.msra.mxu0 0
      %4445 = vmatprep.subr.bf16.mxu0 0
      %4446 = vmatpush1.bf16.msra.mxu0 0
      %4447 = vmatprep.subr.bf16.mxu0 0
      %4448 = vmatpush1.bf16.msra.mxu0 0
      %4449 = vmatprep.subr.bf16.mxu0 0
      %4450 = vmatpush1.bf16.msra.mxu0 0
      %4451 = vmatprep.subr.bf16.mxu0 0
      %4452 = vmatpush1.bf16.msra.mxu0 0
      %4453 = vmatprep.subr.bf16.mxu0 0
      %4454 = vmatpush1.bf16.msra.mxu0 0
      %4455 = vmatprep.subr.bf16.mxu0 0
      %4456 = vmatpush1.bf16.msra.mxu0 0
      %4457 = vmatprep.subr.bf16.mxu0 0
      %4458 = vmatpush1.bf16.msra.mxu0 0
      %4459 = vmatprep.subr.bf16.mxu0 0
      %4460 = vmatpush1.bf16.msra.mxu0 0
      %4461 = vmatprep.subr.bf16.mxu0 0
      %4462 = vmatpush1.bf16.msra.mxu0 0
      %4463 = vmatprep.subr.bf16.mxu0 0
      %4464 = vmatpush1.bf16.msra.mxu0 0
      %4465 = vmatprep.subr.bf16.mxu0 0
      %4466 = vmatpush1.bf16.msra.mxu0 0
      %4467 = vmatprep.mubr.bf16.mxu0 0
      %4468 = vmatmul.mubr.bf16.gmra.mrb[0].mxu0 %v268
      %v4469 = vpop.f32.mrb[0].mxu0
      %v4470 = vadd.f32 0.0, %v4469
      %v4471 = vpop.f32.mrb[0].mxu0
      %v4472 = vadd.f32 0.0, %v4471
      %v4473 = vpop.f32.mrb[0].mxu0
      %v4474 = vadd.f32 0.0, %v4473
      %v4475 = vpop.f32.mrb[0].mxu0
      %v4476 = vadd.f32 0.0, %v4475
      %4477 = vmatprep.mubr.bf16.mxu0 0
      %4478 = vmatmul.mubr.bf16.gmra.mrb[0].mxu0 %v271
      %v4479 = vpop.f32.mrb[0].mxu0
      %v4480 = vadd.f32 0.0, %v4479
      %v4481 = vpop.f32.mrb[0].mxu0
      %v4482 = vadd.f32 0.0, %v4481
      %v4483 = vpop.f32.mrb[0].mxu0
      %v4484 = vadd.f32 0.0, %v4483
      %v4485 = vpop.f32.mrb[0].mxu0
      %v4486 = vadd.f32 0.0, %v4485
      %4487 = vdwg.mxu0
      %4488 = vmatprep.subr.bf16.mxu0 %v4327
      %4489 = vmatpush1.bf16.msra.mxu0 %v4324
      %4490 = vmatprep.subr.bf16.mxu0 0
      %4491 = vmatpush1.bf16.msra.mxu0 0
      %4492 = vmatprep.subr.bf16.mxu0 0
      %4493 = vmatpush1.bf16.msra.mxu0 0
      %4494 = vmatprep.subr.bf16.mxu0 0
      %4495 = vmatpush1.bf16.msra.mxu0 0
      %4496 = vmatprep.subr.bf16.mxu0 0
      %4497 = vmatpush1.bf16.msra.mxu0 0
      %4498 = vmatprep.subr.bf16.mxu0 0
      %4499 = vmatpush1.bf16.msra.mxu0 0
      %4500 = vmatprep.subr.bf16.mxu0 0
      %4501 = vmatpush1.bf16.msra.mxu0 0
      %4502 = vmatprep.subr.bf16.mxu0 0
      %4503 = vmatpush1.bf16.msra.mxu0 0
      %4504 = vmatprep.subr.bf16.mxu0 0
      %4505 = vmatpush1.bf16.msra.mxu0 0
      %4506 = vmatprep.subr.bf16.mxu0 0
      %4507 = vmatpush1.bf16.msra.mxu0 0
      %4508 = vmatprep.subr.bf16.mxu0 0
      %4509 = vmatpush1.bf16.msra.mxu0 0
      %4510 = vmatprep.subr.bf16.mxu0 0
      %4511 = vmatpush1.bf16.msra.mxu0 0
      %4512 = vmatprep.subr.bf16.mxu0 0
      %4513 = vmatpush1.bf16.msra.mxu0 0
      %4514 = vmatprep.subr.bf16.mxu0 0
      %4515 = vmatpush1.bf16.msra.mxu0 0
      %4516 = vmatprep.subr.bf16.mxu0 0
      %4517 = vmatpush1.bf16.msra.mxu0 0
      %4518 = vmatprep.subr.bf16.mxu0 0
      %4519 = vmatpush1.bf16.msra.mxu0 0
      %4520 = vmatprep.mubr.bf16.mxu0 0
      %4521 = vmatmul.mubr.bf16.gmra.mrb[0].mxu0 %v268
      %v4522 = vpop.f32.mrb[0].mxu0
      %v4523 = vadd.f32 0.0, %v4522
      %v4524 = vpop.f32.mrb[0].mxu0
      %v4525 = vadd.f32 0.0, %v4524
      %v4526 = vpop.f32.mrb[0].mxu0
      %v4527 = vadd.f32 0.0, %v4526
      %v4528 = vpop.f32.mrb[0].mxu0
      %v4529 = vadd.f32 0.0, %v4528
      %4530 = vmatprep.mubr.bf16.mxu0 0
      %4531 = vmatmul.mubr.bf16.gmra.mrb[0].mxu0 %v271
      %v4532 = vpop.f32.mrb[0].mxu0
      %v4533 = vadd.f32 0.0, %v4532
      %v4534 = vpop.f32.mrb[0].mxu0
      %v4535 = vadd.f32 0.0, %v4534
      %v4536 = vpop.f32.mrb[0].mxu0
      %v4537 = vadd.f32 0.0, %v4536
      %v4538 = vpop.f32.mrb[0].mxu0
      %v4539 = vadd.f32 0.0, %v4538
      %4540 = vdwg.mxu0
      %v4541 = vld [vmem:[#allocation2] sm:$0xff]
      %v4542 = vld [vmem:[#allocation2 + $0x8] sm:$0xff]
      %v4543 = vld [vmem:[#allocation2 + $0x10] sm:$0xff]
      %v4544 = vld [vmem:[#allocation2 + $0x18] sm:$0xff]
      %v4545 = vld [vmem:[#allocation2 + $0x20] sm:$0xff]
      %v4546 = vld [vmem:[#allocation2 + $0x28] sm:$0xff]
      %v4547 = vld [vmem:[#allocation2 + $0x30] sm:$0xff]
      %v4548 = vld [vmem:[#allocation2 + $0x38] sm:$0xff]
      %v4549 = vld [vmem:[#allocation2 + $0x40] sm:$0xff]
      %v4550 = vld [vmem:[#allocation2 + $0x48] sm:$0xff]
      %v4551 = vld [vmem:[#allocation2 + $0x50] sm:$0xff]
      %v4552 = vld [vmem:[#allocation2 + $0x58] sm:$0xff]
      %v4553 = vld [vmem:[#allocation2 + $0x60] sm:$0xff]
      %v4554 = vld [vmem:[#allocation2 + $0x68] sm:$0xff]
      %v4555 = vld [vmem:[#allocation2 + $0x70] sm:$0xff]
      %v4556 = vld [vmem:[#allocation2 + $0x78] sm:$0xff]
      %v4557 = vld [vmem:[#allocation2 + $0x80] sm:$0xff]
      %v4558 = vld [vmem:[#allocation2 + $0x88] sm:$0xff]
      %v4559 = vld [vmem:[#allocation2 + $0x90] sm:$0xff]
      %v4560 = vld [vmem:[#allocation2 + $0x98] sm:$0xff]
      %v4561 = vld [vmem:[#allocation2 + $0xa0] sm:$0xff]
      %v4562 = vld [vmem:[#allocation2 + $0xa8] sm:$0xff]
      %v4563 = vld [vmem:[#allocation2 + $0xb0] sm:$0xff]
      %v4564 = vld [vmem:[#allocation2 + $0xb8] sm:$0xff]
      %v4565 = vld [vmem:[#allocation2 + $0xc0] sm:$0xff]
      %v4566 = vld [vmem:[#allocation2 + $0xc8] sm:$0xff]
      %v4567 = vld [vmem:[#allocation2 + $0xd0] sm:$0xff]
      %v4568 = vld [vmem:[#allocation2 + $0xd8] sm:$0xff]
      %v4569 = vld [vmem:[#allocation2 + $0xe0] sm:$0xff]
      %v4570 = vld [vmem:[#allocation2 + $0xe8] sm:$0xff]
      %v4571 = vld [vmem:[#allocation2 + $0xf0] sm:$0xff]
      %v4572 = vld [vmem:[#allocation2 + $0xf8] sm:$0xff]
      %v4573 = vmax.f32 %v4541, %v4364
      %v4574 = vmax.f32 %v4542, %v4366
      %v4575 = vmax.f32 %v4543, %v4417
      %v4576 = vmax.f32 %v4544, %v4419
      %v4577 = vmax.f32 %v4545, %v4470
      %v4578 = vmax.f32 %v4546, %v4472
      %v4579 = vmax.f32 %v4547, %v4523
      %v4580 = vmax.f32 %v4548, %v4525
      %v4581 = vmax.f32 %v4549, %v4368
      %v4582 = vmax.f32 %v4550, %v4370
      %v4583 = vmax.f32 %v4551, %v4421
      %v4584 = vmax.f32 %v4552, %v4423
      %v4585 = vmax.f32 %v4553, %v4474
      %v4586 = vmax.f32 %v4554, %v4476
      %v4587 = vmax.f32 %v4555, %v4527
      %v4588 = vmax.f32 %v4556, %v4529
      %v4589 = vmax.f32 %v4557, %v4374
      %v4590 = vmax.f32 %v4558, %v4376
      %v4591 = vmax.f32 %v4559, %v4427
      %v4592 = vmax.f32 %v4560, %v4429
      %v4593 = vmax.f32 %v4561, %v4480
      %v4594 = vmax.f32 %v4562, %v4482
      %v4595 = vmax.f32 %v4563, %v4533
      %v4596 = vmax.f32 %v4564, %v4535
      %v4597 = vmax.f32 %v4565, %v4378
      %v4598 = vmax.f32 %v4566, %v4380
      %v4599 = vmax.f32 %v4567, %v4431
      %v4600 = vmax.f32 %v4568, %v4433
      %v4601 = vmax.f32 %v4569, %v4484
      %v4602 = vmax.f32 %v4570, %v4486
      %v4603 = vmax.f32 %v4571, %v4537
      %v4604 = vmax.f32 %v4572, %v4539
      %4605 = vst [vmem:[#allocation2] sm:$0xff] %v4573
      %4606 = vst [vmem:[#allocation2 + $0x8] sm:$0xff] %v4574
      %4607 = vst [vmem:[#allocation2 + $0x10] sm:$0xff] %v4575
      %4608 = vst [vmem:[#allocation2 + $0x18] sm:$0xff] %v4576
      %4609 = vst [vmem:[#allocation2 + $0x20] sm:$0xff] %v4577
      %4610 = vst [vmem:[#allocation2 + $0x28] sm:$0xff] %v4578
      %4611 = vst [vmem:[#allocation2 + $0x30] sm:$0xff] %v4579
      %4612 = vst [vmem:[#allocation2 + $0x38] sm:$0xff] %v4580
      %4613 = vst [vmem:[#allocation2 + $0x40] sm:$0xff] %v4581
      %4614 = vst [vmem:[#allocation2 + $0x48] sm:$0xff] %v4582
      %4615 = vst [vmem:[#allocation2 + $0x50] sm:$0xff] %v4583
      %4616 = vst [vmem:[#allocation2 + $0x58] sm:$0xff] %v4584
      %4617 = vst [vmem:[#allocation2 + $0x60] sm:$0xff] %v4585
      %4618 = vst [vmem:[#allocation2 + $0x68] sm:$0xff] %v4586
      %4619 = vst [vmem:[#allocation2 + $0x70] sm:$0xff] %v4587
      %4620 = vst [vmem:[#allocation2 + $0x78] sm:$0xff] %v4588
      %4621 = vst [vmem:[#allocation2 + $0x80] sm:$0xff] %v4589
      %4622 = vst [vmem:[#allocation2 + $0x88] sm:$0xff] %v4590
      %4623 = vst [vmem:[#allocation2 + $0x90] sm:$0xff] %v4591
      %4624 = vst [vmem:[#allocation2 + $0x98] sm:$0xff] %v4592
      %4625 = vst [vmem:[#allocation2 + $0xa0] sm:$0xff] %v4593
      %4626 = vst [vmem:[#allocation2 + $0xa8] sm:$0xff] %v4594
      %4627 = vst [vmem:[#allocation2 + $0xb0] sm:$0xff] %v4595
      %4628 = vst [vmem:[#allocation2 + $0xb8] sm:$0xff] %v4596
      %4629 = vst [vmem:[#allocation2 + $0xc0] sm:$0xff] %v4597
      %4630 = vst [vmem:[#allocation2 + $0xc8] sm:$0xff] %v4598
      %4631 = vst [vmem:[#allocation2 + $0xd0] sm:$0xff] %v4599
      %4632 = vst [vmem:[#allocation2 + $0xd8] sm:$0xff] %v4600
      %4633 = vst [vmem:[#allocation2 + $0xe0] sm:$0xff] %v4601
      %4634 = vst [vmem:[#allocation2 + $0xe8] sm:$0xff] %v4602
      %4635 = vst [vmem:[#allocation2 + $0xf0] sm:$0xff] %v4603
      %4636 = vst [vmem:[#allocation2 + $0xf8] sm:$0xff] %v4604
      %v4637 = vld [vmem:[%s200 + $0x180] sm:$0xff]
      %v4638 = vld [vmem:[%s200 + $0x188] sm:$0xff]
      %v4639 = vld [vmem:[%s200 + $0x190] sm:$0xff]
      %v4640 = vld [vmem:[%s200 + $0x198] sm:$0xff]
      %v4641 = vld [vmem:[%s200 + $0x380] sm:$0x11]
      %v4642 = vld [vmem:[%s200 + $0x388] sm:$0x11]
      %v4643 = vld [vmem:[%s200 + $0x390] sm:$0x11]
      %v4644 = vld [vmem:[%s200 + $0x398] sm:$0x11]
      %v4653 = vunpack.c.l.b16 %v4637
      %v4654 = vunpack.c.h.b16 %v4637
      %v4655 = vunpack.c.l.b16 %v4638
      %v4656 = vunpack.c.h.b16 %v4638
      %v4657 = vunpack.c.l.b16 %v4639
      %v4658 = vunpack.c.h.b16 %v4639
      %v4659 = vunpack.c.l.b16 %v4640
      %v4660 = vunpack.c.h.b16 %v4640
      %v4661 = vunpack.c.l.b16 %v4641
      %v4662 = vunpack.c.h.b16 %v4641
      %v4663 = vunpack.c.l.b16 %v4642
      %v4664 = vunpack.c.h.b16 %v4642
      %v4665 = vunpack.c.l.b16 %v4643
      %v4666 = vunpack.c.h.b16 %v4643
      %v4667 = vunpack.c.l.b16 %v4644
      %v4668 = vunpack.c.h.b16 %v4644
      %v4669 = vpack.c.b16 %v4661, %v4653
      %v4670 = vpack.c.b16 %v4662, %v4654
      %v4671 = vpack.c.b16 %v4663, %v4655
      %v4672 = vpack.c.b16 %v4664, %v4656
      %v4673 = vpack.c.b16 %v4665, %v4657
      %v4674 = vpack.c.b16 %v4666, %v4658
      %v4675 = vpack.c.b16 %v4667, %v4659
      %v4676 = vpack.c.b16 %v4668, %v4660
      %v4678 = vand.u32 %v4669, %v276
      %v4681 = vand.u32 %v4670, %v276
      %v4684 = vand.u32 %v4671, %v276
      %v4687 = vand.u32 %v4672, %v276
      %v4690 = vand.u32 %v4673, %v276
      %v4693 = vand.u32 %v4674, %v276
      %v4696 = vand.u32 %v4675, %v276
      %v4699 = vand.u32 %v4676, %v276
      %4701 = vmatprep.subr.bf16.mxu0 %v4681
      %4702 = vmatpush1.bf16.msra.mxu0 %v4678
      %4703 = vmatprep.subr.bf16.mxu0 0
      %4704 = vmatpush1.bf16.msra.mxu0 0
      %4705 = vmatprep.subr.bf16.mxu0 0
      %4706 = vmatpush1.bf16.msra.mxu0 0
      %4707 = vmatprep.subr.bf16.mxu0 0
      %4708 = vmatpush1.bf16.msra.mxu0 0
      %4709 = vmatprep.subr.bf16.mxu0 0
      %4710 = vmatpush1.bf16.msra.mxu0 0
      %4711 = vmatprep.subr.bf16.mxu0 0
      %4712 = vmatpush1.bf16.msra.mxu0 0
      %4713 = vmatprep.subr.bf16.mxu0 0
      %4714 = vmatpush1.bf16.msra.mxu0 0
      %4715 = vmatprep.subr.bf16.mxu0 0
      %4716 = vmatpush1.bf16.msra.mxu0 0
      %4717 = vmatprep.subr.bf16.mxu0 0
      %4718 = vmatpush1.bf16.msra.mxu0 0
      %4719 = vmatprep.subr.bf16.mxu0 0
      %4720 = vmatpush1.bf16.msra.mxu0 0
      %4721 = vmatprep.subr.bf16.mxu0 0
      %4722 = vmatpush1.bf16.msra.mxu0 0
      %4723 = vmatprep.subr.bf16.mxu0 0
      %4724 = vmatpush1.bf16.msra.mxu0 0
      %4725 = vmatprep.subr.bf16.mxu0 0
      %4726 = vmatpush1.bf16.msra.mxu0 0
      %4727 = vmatprep.subr.bf16.mxu0 0
      %4728 = vmatpush1.bf16.msra.mxu0 0
      %4729 = vmatprep.subr.bf16.mxu0 0
      %4730 = vmatpush1.bf16.msra.mxu0 0
      %4731 = vmatprep.subr.bf16.mxu0 0
      %4732 = vmatpush1.bf16.msra.mxu0 0
      %4733 = vmatprep.mubr.bf16.mxu0 0
      %4734 = vmatmul.mubr.bf16.gmra.mrb[0].mxu0 %v268
      %v4735 = vpop.f32.mrb[0].mxu0
      %v4736 = vadd.f32 0.0, %v4735
      %v4737 = vpop.f32.mrb[0].mxu0
      %v4738 = vadd.f32 0.0, %v4737
      %v4739 = vpop.f32.mrb[0].mxu0
      %v4740 = vadd.f32 0.0, %v4739
      %v4741 = vpop.f32.mrb[0].mxu0
      %v4742 = vadd.f32 0.0, %v4741
      %4743 = vmatprep.mubr.bf16.mxu0 0
      %4744 = vmatmul.mubr.bf16.gmra.mrb[0].mxu0 %v271
      %v4745 = vpop.f32.mrb[0].mxu0
      %v4746 = vadd.f32 0.0, %v4745
      %v4747 = vpop.f32.mrb[0].mxu0
      %v4748 = vadd.f32 0.0, %v4747
      %v4749 = vpop.f32.mrb[0].mxu0
      %v4750 = vadd.f32 0.0, %v4749
      %v4751 = vpop.f32.mrb[0].mxu0
      %v4752 = vadd.f32 0.0, %v4751
      %4753 = vdwg.mxu0
      %4754 = vmatprep.subr.bf16.mxu0 %v4687
      %4755 = vmatpush1.bf16.msra.mxu0 %v4684
      %4756 = vmatprep.subr.bf16.mxu0 0
      %4757 = vmatpush1.bf16.msra.mxu0 0
      %4758 = vmatprep.subr.bf16.mxu0 0
      %4759 = vmatpush1.bf16.msra.mxu0 0
      %4760 = vmatprep.subr.bf16.mxu0 0
      %4761 = vmatpush1.bf16.msra.mxu0 0
      %4762 = vmatprep.subr.bf16.mxu0 0
      %4763 = vmatpush1.bf16.msra.mxu0 0
      %4764 = vmatprep.subr.bf16.mxu0 0
      %4765 = vmatpush1.bf16.msra.mxu0 0
      %4766 = vmatprep.subr.bf16.mxu0 0
      %4767 = vmatpush1.bf16.msra.mxu0 0
      %4768 = vmatprep.subr.bf16.mxu0 0
      %4769 = vmatpush1.bf16.msra.mxu0 0
      %4770 = vmatprep.subr.bf16.mxu0 0
      %4771 = vmatpush1.bf16.msra.mxu0 0
      %4772 = vmatprep.subr.bf16.mxu0 0
      %4773 = vmatpush1.bf16.msra.mxu0 0
      %4774 = vmatprep.subr.bf16.mxu0 0
      %4775 = vmatpush1.bf16.msra.mxu0 0
      %4776 = vmatprep.subr.bf16.mxu0 0
      %4777 = vmatpush1.bf16.msra.mxu0 0
      %4778 = vmatprep.subr.bf16.mxu0 0
      %4779 = vmatpush1.bf16.msra.mxu0 0
      %4780 = vmatprep.subr.bf16.mxu0 0
      %4781 = vmatpush1.bf16.msra.mxu0 0
      %4782 = vmatprep.subr.bf16.mxu0 0
      %4783 = vmatpush1.bf16.msra.mxu0 0
      %4784 = vmatprep.subr.bf16.mxu0 0
      %4785 = vmatpush1.bf16.msra.mxu0 0
      %4786 = vmatprep.mubr.bf16.mxu0 0
      %4787 = vmatmul.mubr.bf16.gmra.mrb[0].mxu0 %v268
      %v4788 = vpop.f32.mrb[0].mxu0
      %v4789 = vadd.f32 0.0, %v4788
      %v4790 = vpop.f32.mrb[0].mxu0
      %v4791 = vadd.f32 0.0, %v4790
      %v4792 = vpop.f32.mrb[0].mxu0
      %v4793 = vadd.f32 0.0, %v4792
      %v4794 = vpop.f32.mrb[0].mxu0
      %v4795 = vadd.f32 0.0, %v4794
      %4796 = vmatprep.mubr.bf16.mxu0 0
      %4797 = vmatmul.mubr.bf16.gmra.mrb[0].mxu0 %v271
      %v4798 = vpop.f32.mrb[0].mxu0
      %v4799 = vadd.f32 0.0, %v4798
      %v4800 = vpop.f32.mrb[0].mxu0
      %v4801 = vadd.f32 0.0, %v4800
      %v4802 = vpop.f32.mrb[0].mxu0
      %v4803 = vadd.f32 0.0, %v4802
      %v4804 = vpop.f32.mrb[0].mxu0
      %v4805 = vadd.f32 0.0, %v4804
      %4806 = vdwg.mxu0
      %4807 = vmatprep.subr.bf16.mxu0 %v4693
      %4808 = vmatpush1.bf16.msra.mxu0 %v4690
      %4809 = vmatprep.subr.bf16.mxu0 0
      %4810 = vmatpush1.bf16.msra.mxu0 0
      %4811 = vmatprep.subr.bf16.mxu0 0
      %4812 = vmatpush1.bf16.msra.mxu0 0
      %4813 = vmatprep.subr.bf16.mxu0 0
      %4814 = vmatpush1.bf16.msra.mxu0 0
      %4815 = vmatprep.subr.bf16.mxu0 0
      %4816 = vmatpush1.bf16.msra.mxu0 0
      %4817 = vmatprep.subr.bf16.mxu0 0
      %4818 = vmatpush1.bf16.msra.mxu0 0
      %4819 = vmatprep.subr.bf16.mxu0 0
      %4820 = vmatpush1.bf16.msra.mxu0 0
      %4821 = vmatprep.subr.bf16.mxu0 0
      %4822 = vmatpush1.bf16.msra.mxu0 0
      %4823 = vmatprep.subr.bf16.mxu0 0
      %4824 = vmatpush1.bf16.msra.mxu0 0
      %4825 = vmatprep.subr.bf16.mxu0 0
      %4826 = vmatpush1.bf16.msra.mxu0 0
      %4827 = vmatprep.subr.bf16.mxu0 0
      %4828 = vmatpush1.bf16.msra.mxu0 0
      %4829 = vmatprep.subr.bf16.mxu0 0
      %4830 = vmatpush1.bf16.msra.mxu0 0
      %4831 = vmatprep.subr.bf16.mxu0 0
      %4832 = vmatpush1.bf16.msra.mxu0 0
      %4833 = vmatprep.subr.bf16.mxu0 0
      %4834 = vmatpush1.bf16.msra.mxu0 0
      %4835 = vmatprep.subr.bf16.mxu0 0
      %4836 = vmatpush1.bf16.msra.mxu0 0
      %4837 = vmatprep.subr.bf16.mxu0 0
      %4838 = vmatpush1.bf16.msra.mxu0 0
      %4839 = vmatprep.mubr.bf16.mxu0 0
      %4840 = vmatmul.mubr.bf16.gmra.mrb[0].mxu0 %v268
      %v4841 = vpop.f32.mrb[0].mxu0
      %v4842 = vadd.f32 0.0, %v4841
      %v4843 = vpop.f32.mrb[0].mxu0
      %v4844 = vadd.f32 0.0, %v4843
      %v4845 = vpop.f32.mrb[0].mxu0
      %v4846 = vadd.f32 0.0, %v4845
      %v4847 = vpop.f32.mrb[0].mxu0
      %v4848 = vadd.f32 0.0, %v4847
      %4849 = vmatprep.mubr.bf16.mxu0 0
      %4850 = vmatmul.mubr.bf16.gmra.mrb[0].mxu0 %v271
      %v4851 = vpop.f32.mrb[0].mxu0
      %v4852 = vadd.f32 0.0, %v4851
      %v4853 = vpop.f32.mrb[0].mxu0
      %v4854 = vadd.f32 0.0, %v4853
      %v4855 = vpop.f32.mrb[0].mxu0
      %v4856 = vadd.f32 0.0, %v4855
      %v4857 = vpop.f32.mrb[0].mxu0
      %v4858 = vadd.f32 0.0, %v4857
      %4859 = vdwg.mxu0
      %4860 = vmatprep.subr.bf16.mxu0 %v4699
      %4861 = vmatpush1.bf16.msra.mxu0 %v4696
      %4862 = vmatprep.subr.bf16.mxu0 0
      %4863 = vmatpush1.bf16.msra.mxu0 0
      %4864 = vmatprep.subr.bf16.mxu0 0
      %4865 = vmatpush1.bf16.msra.mxu0 0
      %4866 = vmatprep.subr.bf16.mxu0 0
      %4867 = vmatpush1.bf16.msra.mxu0 0
      %4868 = vmatprep.subr.bf16.mxu0 0
      %4869 = vmatpush1.bf16.msra.mxu0 0
      %4870 = vmatprep.subr.bf16.mxu0 0
      %4871 = vmatpush1.bf16.msra.mxu0 0
      %4872 = vmatprep.subr.bf16.mxu0 0
      %4873 = vmatpush1.bf16.msra.mxu0 0
      %4874 = vmatprep.subr.bf16.mxu0 0
      %4875 = vmatpush1.bf16.msra.mxu0 0
      %4876 = vmatprep.subr.bf16.mxu0 0
      %4877 = vmatpush1.bf16.msra.mxu0 0
      %4878 = vmatprep.subr.bf16.mxu0 0
      %4879 = vmatpush1.bf16.msra.mxu0 0
      %4880 = vmatprep.subr.bf16.mxu0 0
      %4881 = vmatpush1.bf16.msra.mxu0 0
      %4882 = vmatprep.subr.bf16.mxu0 0
      %4883 = vmatpush1.bf16.msra.mxu0 0
      %4884 = vmatprep.subr.bf16.mxu0 0
      %4885 = vmatpush1.bf16.msra.mxu0 0
      %4886 = vmatprep.subr.bf16.mxu0 0
      %4887 = vmatpush1.bf16.msra.mxu0 0
      %4888 = vmatprep.subr.bf16.mxu0 0
      %4889 = vmatpush1.bf16.msra.mxu0 0
      %4890 = vmatprep.subr.bf16.mxu0 0
      %4891 = vmatpush1.bf16.msra.mxu0 0
      %4892 = vmatprep.mubr.bf16.mxu0 0
      %4893 = vmatmul.mubr.bf16.gmra.mrb[0].mxu0 %v268
      %v4894 = vpop.f32.mrb[0].mxu0
      %v4895 = vadd.f32 0.0, %v4894
      %v4896 = vpop.f32.mrb[0].mxu0
      %v4897 = vadd.f32 0.0, %v4896
      %v4898 = vpop.f32.mrb[0].mxu0
      %v4899 = vadd.f32 0.0, %v4898
      %v4900 = vpop.f32.mrb[0].mxu0
      %v4901 = vadd.f32 0.0, %v4900
      %4902 = vmatprep.mubr.bf16.mxu0 0
      %4903 = vmatmul.mubr.bf16.gmra.mrb[0].mxu0 %v271
      %v4904 = vpop.f32.mrb[0].mxu0
      %v4905 = vadd.f32 0.0, %v4904
      %v4906 = vpop.f32.mrb[0].mxu0
      %v4907 = vadd.f32 0.0, %v4906
      %v4908 = vpop.f32.mrb[0].mxu0
      %v4909 = vadd.f32 0.0, %v4908
      %v4910 = vpop.f32.mrb[0].mxu0
      %v4911 = vadd.f32 0.0, %v4910
      %4912 = vdwg.mxu0
      %v4913 = vld [vmem:[#allocation2] sm:$0xff]
      %v4914 = vld [vmem:[#allocation2 + $0x8] sm:$0xff]
      %v4915 = vld [vmem:[#allocation2 + $0x10] sm:$0xff]
      %v4916 = vld [vmem:[#allocation2 + $0x18] sm:$0xff]
      %v4917 = vld [vmem:[#allocation2 + $0x20] sm:$0xff]
      %v4918 = vld [vmem:[#allocation2 + $0x28] sm:$0xff]
      %v4919 = vld [vmem:[#allocation2 + $0x30] sm:$0xff]
      %v4920 = vld [vmem:[#allocation2 + $0x38] sm:$0xff]
      %v4921 = vld [vmem:[#allocation2 + $0x40] sm:$0xff]
      %v4922 = vld [vmem:[#allocation2 + $0x48] sm:$0xff]
      %v4923 = vld [vmem:[#allocation2 + $0x50] sm:$0xff]
      %v4924 = vld [vmem:[#allocation2 + $0x58] sm:$0xff]
      %v4925 = vld [vmem:[#allocation2 + $0x60] sm:$0xff]
      %v4926 = vld [vmem:[#allocation2 + $0x68] sm:$0xff]
      %v4927 = vld [vmem:[#allocation2 + $0x70] sm:$0xff]
      %v4928 = vld [vmem:[#allocation2 + $0x78] sm:$0xff]
      %v4929 = vld [vmem:[#allocation2 + $0x80] sm:$0xff]
      %v4930 = vld [vmem:[#allocation2 + $0x88] sm:$0xff]
      %v4931 = vld [vmem:[#allocation2 + $0x90] sm:$0xff]
      %v4932 = vld [vmem:[#allocation2 + $0x98] sm:$0xff]
      %v4933 = vld [vmem:[#allocation2 + $0xa0] sm:$0xff]
      %v4934 = vld [vmem:[#allocation2 + $0xa8] sm:$0xff]
      %v4935 = vld [vmem:[#allocation2 + $0xb0] sm:$0xff]
      %v4936 = vld [vmem:[#allocation2 + $0xb8] sm:$0xff]
      %v4937 = vld [vmem:[#allocation2 + $0xc0] sm:$0xff]
      %v4938 = vld [vmem:[#allocation2 + $0xc8] sm:$0xff]
      %v4939 = vld [vmem:[#allocation2 + $0xd0] sm:$0xff]
      %v4940 = vld [vmem:[#allocation2 + $0xd8] sm:$0xff]
      %v4941 = vld [vmem:[#allocation2 + $0xe0] sm:$0xff]
      %v4942 = vld [vmem:[#allocation2 + $0xe8] sm:$0xff]
      %v4943 = vld [vmem:[#allocation2 + $0xf0] sm:$0xff]
      %v4944 = vld [vmem:[#allocation2 + $0xf8] sm:$0xff]
      %v4945 = vmax.f32 %v4913, %v4736
      %v4946 = vmax.f32 %v4914, %v4738
      %v4947 = vmax.f32 %v4915, %v4789
      %v4948 = vmax.f32 %v4916, %v4791
      %v4949 = vmax.f32 %v4917, %v4842
      %v4950 = vmax.f32 %v4918, %v4844
      %v4951 = vmax.f32 %v4919, %v4895
      %v4952 = vmax.f32 %v4920, %v4897
      %v4953 = vmax.f32 %v4921, %v4740
      %v4954 = vmax.f32 %v4922, %v4742
      %v4955 = vmax.f32 %v4923, %v4793
      %v4956 = vmax.f32 %v4924, %v4795
      %v4957 = vmax.f32 %v4925, %v4846
      %v4958 = vmax.f32 %v4926, %v4848
      %v4959 = vmax.f32 %v4927, %v4899
      %v4960 = vmax.f32 %v4928, %v4901
      %v4961 = vmax.f32 %v4929, %v4746
      %v4962 = vmax.f32 %v4930, %v4748
      %v4963 = vmax.f32 %v4931, %v4799
      %v4964 = vmax.f32 %v4932, %v4801
      %v4965 = vmax.f32 %v4933, %v4852
      %v4966 = vmax.f32 %v4934, %v4854
      %v4967 = vmax.f32 %v4935, %v4905
      %v4968 = vmax.f32 %v4936, %v4907
      %v4969 = vmax.f32 %v4937, %v4750
      %v4970 = vmax.f32 %v4938, %v4752
      %v4971 = vmax.f32 %v4939, %v4803
      %v4972 = vmax.f32 %v4940, %v4805
      %v4973 = vmax.f32 %v4941, %v4856
      %v4974 = vmax.f32 %v4942, %v4858
      %v4975 = vmax.f32 %v4943, %v4909
      %v4976 = vmax.f32 %v4944, %v4911
      %4977 = vst [vmem:[#allocation2] sm:$0xff] %v4945
      %4978 = vst [vmem:[#allocation2 + $0x8] sm:$0xff] %v4946
      %4979 = vst [vmem:[#allocation2 + $0x10] sm:$0xff] %v4947
      %4980 = vst [vmem:[#allocation2 + $0x18] sm:$0xff] %v4948
      %4981 = vst [vmem:[#allocation2 + $0x20] sm:$0xff] %v4949
      %4982 = vst [vmem:[#allocation2 + $0x28] sm:$0xff] %v4950
      %4983 = vst [vmem:[#allocation2 + $0x30] sm:$0xff] %v4951
      %4984 = vst [vmem:[#allocation2 + $0x38] sm:$0xff] %v4952
      %4985 = vst [vmem:[#allocation2 + $0x40] sm:$0xff] %v4953
      %4986 = vst [vmem:[#allocation2 + $0x48] sm:$0xff] %v4954
      %4987 = vst [vmem:[#allocation2 + $0x50] sm:$0xff] %v4955
      %4988 = vst [vmem:[#allocation2 + $0x58] sm:$0xff] %v4956
      %4989 = vst [vmem:[#allocation2 + $0x60] sm:$0xff] %v4957
      %4990 = vst [vmem:[#allocation2 + $0x68] sm:$0xff] %v4958
      %4991 = vst [vmem:[#allocation2 + $0x70] sm:$0xff] %v4959
      %4992 = vst [vmem:[#allocation2 + $0x78] sm:$0xff] %v4960
      %4993 = vst [vmem:[#allocation2 + $0x80] sm:$0xff] %v4961
      %4994 = vst [vmem:[#allocation2 + $0x88] sm:$0xff] %v4962
      %4995 = vst [vmem:[#allocation2 + $0x90] sm:$0xff] %v4963
      %4996 = vst [vmem:[#allocation2 + $0x98] sm:$0xff] %v4964
      %4997 = vst [vmem:[#allocation2 + $0xa0] sm:$0xff] %v4965
      %4998 = vst [vmem:[#allocation2 + $0xa8] sm:$0xff] %v4966
      %4999 = vst [vmem:[#allocation2 + $0xb0] sm:$0xff] %v4967
      %5000 = vst [vmem:[#allocation2 + $0xb8] sm:$0xff] %v4968
      %5001 = vst [vmem:[#allocation2 + $0xc0] sm:$0xff] %v4969
      %5002 = vst [vmem:[#allocation2 + $0xc8] sm:$0xff] %v4970
      %5003 = vst [vmem:[#allocation2 + $0xd0] sm:$0xff] %v4971
      %5004 = vst [vmem:[#allocation2 + $0xd8] sm:$0xff] %v4972
      %5005 = vst [vmem:[#allocation2 + $0xe0] sm:$0xff] %v4973
      %5006 = vst [vmem:[#allocation2 + $0xe8] sm:$0xff] %v4974
      %5007 = vst [vmem:[#allocation2 + $0xf0] sm:$0xff] %v4975
      %5008 = vst [vmem:[#allocation2 + $0xf8] sm:$0xff] %v4976
      %v5009 = vld [vmem:[%s200 + $0x1a0] sm:$0xff]
      %v5010 = vld [vmem:[%s200 + $0x1a8] sm:$0xff]
      %v5011 = vld [vmem:[%s200 + $0x1b0] sm:$0xff]
      %v5012 = vld [vmem:[%s200 + $0x1b8] sm:$0xff]
      %v5013 = vld [vmem:[%s200 + $0x3a0] sm:$0x11]
      %v5014 = vld [vmem:[%s200 + $0x3a8] sm:$0x11]
      %v5015 = vld [vmem:[%s200 + $0x3b0] sm:$0x11]
      %v5016 = vld [vmem:[%s200 + $0x3b8] sm:$0x11]
      %v5025 = vunpack.c.l.b16 %v5009
      %v5026 = vunpack.c.h.b16 %v5009
      %v5027 = vunpack.c.l.b16 %v5010
      %v5028 = vunpack.c.h.b16 %v5010
      %v5029 = vunpack.c.l.b16 %v5011
      %v5030 = vunpack.c.h.b16 %v5011
      %v5031 = vunpack.c.l.b16 %v5012
      %v5032 = vunpack.c.h.b16 %v5012
      %v5033 = vunpack.c.l.b16 %v5013
      %v5034 = vunpack.c.h.b16 %v5013
      %v5035 = vunpack.c.l.b16 %v5014
      %v5036 = vunpack.c.h.b16 %v5014
      %v5037 = vunpack.c.l.b16 %v5015
      %v5038 = vunpack.c.h.b16 %v5015
      %v5039 = vunpack.c.l.b16 %v5016
      %v5040 = vunpack.c.h.b16 %v5016
      %v5041 = vpack.c.b16 %v5033, %v5025
      %v5042 = vpack.c.b16 %v5034, %v5026
      %v5043 = vpack.c.b16 %v5035, %v5027
      %v5044 = vpack.c.b16 %v5036, %v5028
      %v5045 = vpack.c.b16 %v5037, %v5029
      %v5046 = vpack.c.b16 %v5038, %v5030
      %v5047 = vpack.c.b16 %v5039, %v5031
      %v5048 = vpack.c.b16 %v5040, %v5032
      %v5050 = vand.u32 %v5041, %v276
      %v5053 = vand.u32 %v5042, %v276
      %v5056 = vand.u32 %v5043, %v276
      %v5059 = vand.u32 %v5044, %v276
      %v5062 = vand.u32 %v5045, %v276
      %v5065 = vand.u32 %v5046, %v276
      %v5068 = vand.u32 %v5047, %v276
      %v5071 = vand.u32 %v5048, %v276
      %5073 = vmatprep.subr.bf16.mxu0 %v5053
      %5074 = vmatpush1.bf16.msra.mxu0 %v5050
      %5075 = vmatprep.subr.bf16.mxu0 0
      %5076 = vmatpush1.bf16.msra.mxu0 0
      %5077 = vmatprep.subr.bf16.mxu0 0
      %5078 = vmatpush1.bf16.msra.mxu0 0
      %5079 = vmatprep.subr.bf16.mxu0 0
      %5080 = vmatpush1.bf16.msra.mxu0 0
      %5081 = vmatprep.subr.bf16.mxu0 0
      %5082 = vmatpush1.bf16.msra.mxu0 0
      %5083 = vmatprep.subr.bf16.mxu0 0
      %5084 = vmatpush1.bf16.msra.mxu0 0
      %5085 = vmatprep.subr.bf16.mxu0 0
      %5086 = vmatpush1.bf16.msra.mxu0 0
      %5087 = vmatprep.subr.bf16.mxu0 0
      %5088 = vmatpush1.bf16.msra.mxu0 0
      %5089 = vmatprep.subr.bf16.mxu0 0
      %5090 = vmatpush1.bf16.msra.mxu0 0
      %5091 = vmatprep.subr.bf16.mxu0 0
      %5092 = vmatpush1.bf16.msra.mxu0 0
      %5093 = vmatprep.subr.bf16.mxu0 0
      %5094 = vmatpush1.bf16.msra.mxu0 0
      %5095 = vmatprep.subr.bf16.mxu0 0
      %5096 = vmatpush1.bf16.msra.mxu0 0
      %5097 = vmatprep.subr.bf16.mxu0 0
      %5098 = vmatpush1.bf16.msra.mxu0 0
      %5099 = vmatprep.subr.bf16.mxu0 0
      %5100 = vmatpush1.bf16.msra.mxu0 0
      %5101 = vmatprep.subr.bf16.mxu0 0
      %5102 = vmatpush1.bf16.msra.mxu0 0
      %5103 = vmatprep.subr.bf16.mxu0 0
      %5104 = vmatpush1.bf16.msra.mxu0 0
      %5105 = vmatprep.mubr.bf16.mxu0 0
      %5106 = vmatmul.mubr.bf16.gmra.mrb[0].mxu0 %v268
      %v5107 = vpop.f32.mrb[0].mxu0
      %v5108 = vadd.f32 0.0, %v5107
      %v5109 = vpop.f32.mrb[0].mxu0
      %v5110 = vadd.f32 0.0, %v5109
      %v5111 = vpop.f32.mrb[0].mxu0
      %v5112 = vadd.f32 0.0, %v5111
      %v5113 = vpop.f32.mrb[0].mxu0
      %v5114 = vadd.f32 0.0, %v5113
      %5115 = vmatprep.mubr.bf16.mxu0 0
      %5116 = vmatmul.mubr.bf16.gmra.mrb[0].mxu0 %v271
      %v5117 = vpop.f32.mrb[0].mxu0
      %v5118 = vadd.f32 0.0, %v5117
      %v5119 = vpop.f32.mrb[0].mxu0
      %v5120 = vadd.f32 0.0, %v5119
      %v5121 = vpop.f32.mrb[0].mxu0
      %v5122 = vadd.f32 0.0, %v5121
      %v5123 = vpop.f32.mrb[0].mxu0
      %v5124 = vadd.f32 0.0, %v5123
      %5125 = vdwg.mxu0
      %5126 = vmatprep.subr.bf16.mxu0 %v5059
      %5127 = vmatpush1.bf16.msra.mxu0 %v5056
      %5128 = vmatprep.subr.bf16.mxu0 0
      %5129 = vmatpush1.bf16.msra.mxu0 0
      %5130 = vmatprep.subr.bf16.mxu0 0
      %5131 = vmatpush1.bf16.msra.mxu0 0
      %5132 = vmatprep.subr.bf16.mxu0 0
      %5133 = vmatpush1.bf16.msra.mxu0 0
      %5134 = vmatprep.subr.bf16.mxu0 0
      %5135 = vmatpush1.bf16.msra.mxu0 0
      %5136 = vmatprep.subr.bf16.mxu0 0
      %5137 = vmatpush1.bf16.msra.mxu0 0
      %5138 = vmatprep.subr.bf16.mxu0 0
      %5139 = vmatpush1.bf16.msra.mxu0 0
      %5140 = vmatprep.subr.bf16.mxu0 0
      %5141 = vmatpush1.bf16.msra.mxu0 0
      %5142 = vmatprep.subr.bf16.mxu0 0
      %5143 = vmatpush1.bf16.msra.mxu0 0
      %5144 = vmatprep.subr.bf16.mxu0 0
      %5145 = vmatpush1.bf16.msra.mxu0 0
      %5146 = vmatprep.subr.bf16.mxu0 0
      %5147 = vmatpush1.bf16.msra.mxu0 0
      %5148 = vmatprep.subr.bf16.mxu0 0
      %5149 = vmatpush1.bf16.msra.mxu0 0
      %5150 = vmatprep.subr.bf16.mxu0 0
      %5151 = vmatpush1.bf16.msra.mxu0 0
      %5152 = vmatprep.subr.bf16.mxu0 0
      %5153 = vmatpush1.bf16.msra.mxu0 0
      %5154 = vmatprep.subr.bf16.mxu0 0
      %5155 = vmatpush1.bf16.msra.mxu0 0
      %5156 = vmatprep.subr.bf16.mxu0 0
      %5157 = vmatpush1.bf16.msra.mxu0 0
      %5158 = vmatprep.mubr.bf16.mxu0 0
      %5159 = vmatmul.mubr.bf16.gmra.mrb[0].mxu0 %v268
      %v5160 = vpop.f32.mrb[0].mxu0
      %v5161 = vadd.f32 0.0, %v5160
      %v5162 = vpop.f32.mrb[0].mxu0
      %v5163 = vadd.f32 0.0, %v5162
      %v5164 = vpop.f32.mrb[0].mxu0
      %v5165 = vadd.f32 0.0, %v5164
      %v5166 = vpop.f32.mrb[0].mxu0
      %v5167 = vadd.f32 0.0, %v5166
      %5168 = vmatprep.mubr.bf16.mxu0 0
      %5169 = vmatmul.mubr.bf16.gmra.mrb[0].mxu0 %v271
      %v5170 = vpop.f32.mrb[0].mxu0
      %v5171 = vadd.f32 0.0, %v5170
      %v5172 = vpop.f32.mrb[0].mxu0
      %v5173 = vadd.f32 0.0, %v5172
      %v5174 = vpop.f32.mrb[0].mxu0
      %v5175 = vadd.f32 0.0, %v5174
      %v5176 = vpop.f32.mrb[0].mxu0
      %v5177 = vadd.f32 0.0, %v5176
      %5178 = vdwg.mxu0
      %5179 = vmatprep.subr.bf16.mxu0 %v5065
      %5180 = vmatpush1.bf16.msra.mxu0 %v5062
      %5181 = vmatprep.subr.bf16.mxu0 0
      %5182 = vmatpush1.bf16.msra.mxu0 0
      %5183 = vmatprep.subr.bf16.mxu0 0
      %5184 = vmatpush1.bf16.msra.mxu0 0
      %5185 = vmatprep.subr.bf16.mxu0 0
      %5186 = vmatpush1.bf16.msra.mxu0 0
      %5187 = vmatprep.subr.bf16.mxu0 0
      %5188 = vmatpush1.bf16.msra.mxu0 0
      %5189 = vmatprep.subr.bf16.mxu0 0
      %5190 = vmatpush1.bf16.msra.mxu0 0
      %5191 = vmatprep.subr.bf16.mxu0 0
      %5192 = vmatpush1.bf16.msra.mxu0 0
      %5193 = vmatprep.subr.bf16.mxu0 0
      %5194 = vmatpush1.bf16.msra.mxu0 0
      %5195 = vmatprep.subr.bf16.mxu0 0
      %5196 = vmatpush1.bf16.msra.mxu0 0
      %5197 = vmatprep.subr.bf16.mxu0 0
      %5198 = vmatpush1.bf16.msra.mxu0 0
      %5199 = vmatprep.subr.bf16.mxu0 0
      %5200 = vmatpush1.bf16.msra.mxu0 0
      %5201 = vmatprep.subr.bf16.mxu0 0
      %5202 = vmatpush1.bf16.msra.mxu0 0
      %5203 = vmatprep.subr.bf16.mxu0 0
      %5204 = vmatpush1.bf16.msra.mxu0 0
      %5205 = vmatprep.subr.bf16.mxu0 0
      %5206 = vmatpush1.bf16.msra.mxu0 0
      %5207 = vmatprep.subr.bf16.mxu0 0
      %5208 = vmatpush1.bf16.msra.mxu0 0
      %5209 = vmatprep.subr.bf16.mxu0 0
      %5210 = vmatpush1.bf16.msra.mxu0 0
      %5211 = vmatprep.mubr.bf16.mxu0 0
      %5212 = vmatmul.mubr.bf16.gmra.mrb[0].mxu0 %v268
      %v5213 = vpop.f32.mrb[0].mxu0
      %v5214 = vadd.f32 0.0, %v5213
      %v5215 = vpop.f32.mrb[0].mxu0
      %v5216 = vadd.f32 0.0, %v5215
      %v5217 = vpop.f32.mrb[0].mxu0
      %v5218 = vadd.f32 0.0, %v5217
      %v5219 = vpop.f32.mrb[0].mxu0
      %v5220 = vadd.f32 0.0, %v5219
      %5221 = vmatprep.mubr.bf16.mxu0 0
      %5222 = vmatmul.mubr.bf16.gmra.mrb[0].mxu0 %v271
      %v5223 = vpop.f32.mrb[0].mxu0
      %v5224 = vadd.f32 0.0, %v5223
      %v5225 = vpop.f32.mrb[0].mxu0
      %v5226 = vadd.f32 0.0, %v5225
      %v5227 = vpop.f32.mrb[0].mxu0
      %v5228 = vadd.f32 0.0, %v5227
      %v5229 = vpop.f32.mrb[0].mxu0
      %v5230 = vadd.f32 0.0, %v5229
      %5231 = vdwg.mxu0
      %5232 = vmatprep.subr.bf16.mxu0 %v5071
      %5233 = vmatpush1.bf16.msra.mxu0 %v5068
      %5234 = vmatprep.subr.bf16.mxu0 0
      %5235 = vmatpush1.bf16.msra.mxu0 0
      %5236 = vmatprep.subr.bf16.mxu0 0
      %5237 = vmatpush1.bf16.msra.mxu0 0
      %5238 = vmatprep.subr.bf16.mxu0 0
      %5239 = vmatpush1.bf16.msra.mxu0 0
      %5240 = vmatprep.subr.bf16.mxu0 0
      %5241 = vmatpush1.bf16.msra.mxu0 0
      %5242 = vmatprep.subr.bf16.mxu0 0
      %5243 = vmatpush1.bf16.msra.mxu0 0
      %5244 = vmatprep.subr.bf16.mxu0 0
      %5245 = vmatpush1.bf16.msra.mxu0 0
      %5246 = vmatprep.subr.bf16.mxu0 0
      %5247 = vmatpush1.bf16.msra.mxu0 0
      %5248 = vmatprep.subr.bf16.mxu0 0
      %5249 = vmatpush1.bf16.msra.mxu0 0
      %5250 = vmatprep.subr.bf16.mxu0 0
      %5251 = vmatpush1.bf16.msra.mxu0 0
      %5252 = vmatprep.subr.bf16.mxu0 0
      %5253 = vmatpush1.bf16.msra.mxu0 0
      %5254 = vmatprep.subr.bf16.mxu0 0
      %5255 = vmatpush1.bf16.msra.mxu0 0
      %5256 = vmatprep.subr.bf16.mxu0 0
      %5257 = vmatpush1.bf16.msra.mxu0 0
      %5258 = vmatprep.subr.bf16.mxu0 0
      %5259 = vmatpush1.bf16.msra.mxu0 0
      %5260 = vmatprep.subr.bf16.mxu0 0
      %5261 = vmatpush1.bf16.msra.mxu0 0
      %5262 = vmatprep.subr.bf16.mxu0 0
      %5263 = vmatpush1.bf16.msra.mxu0 0
      %5264 = vmatprep.mubr.bf16.mxu0 0
      %5265 = vmatmul.mubr.bf16.gmra.mrb[0].mxu0 %v268
      %v5266 = vpop.f32.mrb[0].mxu0
      %v5267 = vadd.f32 0.0, %v5266
      %v5268 = vpop.f32.mrb[0].mxu0
      %v5269 = vadd.f32 0.0, %v5268
      %v5270 = vpop.f32.mrb[0].mxu0
      %v5271 = vadd.f32 0.0, %v5270
      %v5272 = vpop.f32.mrb[0].mxu0
      %v5273 = vadd.f32 0.0, %v5272
      %5274 = vmatprep.mubr.bf16.mxu0 0
      %5275 = vmatmul.mubr.bf16.gmra.mrb[0].mxu0 %v271
      %v5276 = vpop.f32.mrb[0].mxu0
      %v5277 = vadd.f32 0.0, %v5276
      %v5278 = vpop.f32.mrb[0].mxu0
      %v5279 = vadd.f32 0.0, %v5278
      %v5280 = vpop.f32.mrb[0].mxu0
      %v5281 = vadd.f32 0.0, %v5280
      %v5282 = vpop.f32.mrb[0].mxu0
      %v5283 = vadd.f32 0.0, %v5282
      %5284 = vdwg.mxu0
      %v5285 = vld [vmem:[#allocation2] sm:$0xff]
      %v5286 = vld [vmem:[#allocation2 + $0x8] sm:$0xff]
      %v5287 = vld [vmem:[#allocation2 + $0x10] sm:$0xff]
      %v5288 = vld [vmem:[#allocation2 + $0x18] sm:$0xff]
      %v5289 = vld [vmem:[#allocation2 + $0x20] sm:$0xff]
      %v5290 = vld [vmem:[#allocation2 + $0x28] sm:$0xff]
      %v5291 = vld [vmem:[#allocation2 + $0x30] sm:$0xff]
      %v5292 = vld [vmem:[#allocation2 + $0x38] sm:$0xff]
      %v5293 = vld [vmem:[#allocation2 + $0x40] sm:$0xff]
      %v5294 = vld [vmem:[#allocation2 + $0x48] sm:$0xff]
      %v5295 = vld [vmem:[#allocation2 + $0x50] sm:$0xff]
      %v5296 = vld [vmem:[#allocation2 + $0x58] sm:$0xff]
      %v5297 = vld [vmem:[#allocation2 + $0x60] sm:$0xff]
      %v5298 = vld [vmem:[#allocation2 + $0x68] sm:$0xff]
      %v5299 = vld [vmem:[#allocation2 + $0x70] sm:$0xff]
      %v5300 = vld [vmem:[#allocation2 + $0x78] sm:$0xff]
      %v5301 = vld [vmem:[#allocation2 + $0x80] sm:$0xff]
      %v5302 = vld [vmem:[#allocation2 + $0x88] sm:$0xff]
      %v5303 = vld [vmem:[#allocation2 + $0x90] sm:$0xff]
      %v5304 = vld [vmem:[#allocation2 + $0x98] sm:$0xff]
      %v5305 = vld [vmem:[#allocation2 + $0xa0] sm:$0xff]
      %v5306 = vld [vmem:[#allocation2 + $0xa8] sm:$0xff]
      %v5307 = vld [vmem:[#allocation2 + $0xb0] sm:$0xff]
      %v5308 = vld [vmem:[#allocation2 + $0xb8] sm:$0xff]
      %v5309 = vld [vmem:[#allocation2 + $0xc0] sm:$0xff]
      %v5310 = vld [vmem:[#allocation2 + $0xc8] sm:$0xff]
      %v5311 = vld [vmem:[#allocation2 + $0xd0] sm:$0xff]
      %v5312 = vld [vmem:[#allocation2 + $0xd8] sm:$0xff]
      %v5313 = vld [vmem:[#allocation2 + $0xe0] sm:$0xff]
      %v5314 = vld [vmem:[#allocation2 + $0xe8] sm:$0xff]
      %v5315 = vld [vmem:[#allocation2 + $0xf0] sm:$0xff]
      %v5316 = vld [vmem:[#allocation2 + $0xf8] sm:$0xff]
      %v5317 = vmax.f32 %v5285, %v5108
      %v5318 = vmax.f32 %v5286, %v5110
      %v5319 = vmax.f32 %v5287, %v5161
      %v5320 = vmax.f32 %v5288, %v5163
      %v5321 = vmax.f32 %v5289, %v5214
      %v5322 = vmax.f32 %v5290, %v5216
      %v5323 = vmax.f32 %v5291, %v5267
      %v5324 = vmax.f32 %v5292, %v5269
      %v5325 = vmax.f32 %v5293, %v5112
      %v5326 = vmax.f32 %v5294, %v5114
      %v5327 = vmax.f32 %v5295, %v5165
      %v5328 = vmax.f32 %v5296, %v5167
      %v5329 = vmax.f32 %v5297, %v5218
      %v5330 = vmax.f32 %v5298, %v5220
      %v5331 = vmax.f32 %v5299, %v5271
      %v5332 = vmax.f32 %v5300, %v5273
      %v5333 = vmax.f32 %v5301, %v5118
      %v5334 = vmax.f32 %v5302, %v5120
      %v5335 = vmax.f32 %v5303, %v5171
      %v5336 = vmax.f32 %v5304, %v5173
      %v5337 = vmax.f32 %v5305, %v5224
      %v5338 = vmax.f32 %v5306, %v5226
      %v5339 = vmax.f32 %v5307, %v5277
      %v5340 = vmax.f32 %v5308, %v5279
      %v5341 = vmax.f32 %v5309, %v5122
      %v5342 = vmax.f32 %v5310, %v5124
      %v5343 = vmax.f32 %v5311, %v5175
      %v5344 = vmax.f32 %v5312, %v5177
      %v5345 = vmax.f32 %v5313, %v5228
      %v5346 = vmax.f32 %v5314, %v5230
      %v5347 = vmax.f32 %v5315, %v5281
      %v5348 = vmax.f32 %v5316, %v5283
      %5349 = vst [vmem:[#allocation2] sm:$0xff] %v5317
      %5350 = vst [vmem:[#allocation2 + $0x8] sm:$0xff] %v5318
      %5351 = vst [vmem:[#allocation2 + $0x10] sm:$0xff] %v5319
      %5352 = vst [vmem:[#allocation2 + $0x18] sm:$0xff] %v5320
      %5353 = vst [vmem:[#allocation2 + $0x20] sm:$0xff] %v5321
      %5354 = vst [vmem:[#allocation2 + $0x28] sm:$0xff] %v5322
      %5355 = vst [vmem:[#allocation2 + $0x30] sm:$0xff] %v5323
      %5356 = vst [vmem:[#allocation2 + $0x38] sm:$0xff] %v5324
      %5357 = vst [vmem:[#allocation2 + $0x40] sm:$0xff] %v5325
      %5358 = vst [vmem:[#allocation2 + $0x48] sm:$0xff] %v5326
      %5359 = vst [vmem:[#allocation2 + $0x50] sm:$0xff] %v5327
      %5360 = vst [vmem:[#allocation2 + $0x58] sm:$0xff] %v5328
      %5361 = vst [vmem:[#allocation2 + $0x60] sm:$0xff] %v5329
      %5362 = vst [vmem:[#allocation2 + $0x68] sm:$0xff] %v5330
      %5363 = vst [vmem:[#allocation2 + $0x70] sm:$0xff] %v5331
      %5364 = vst [vmem:[#allocation2 + $0x78] sm:$0xff] %v5332
      %5365 = vst [vmem:[#allocation2 + $0x80] sm:$0xff] %v5333
      %5366 = vst [vmem:[#allocation2 + $0x88] sm:$0xff] %v5334
      %5367 = vst [vmem:[#allocation2 + $0x90] sm:$0xff] %v5335
      %5368 = vst [vmem:[#allocation2 + $0x98] sm:$0xff] %v5336
      %5369 = vst [vmem:[#allocation2 + $0xa0] sm:$0xff] %v5337
      %5370 = vst [vmem:[#allocation2 + $0xa8] sm:$0xff] %v5338
      %5371 = vst [vmem:[#allocation2 + $0xb0] sm:$0xff] %v5339
      %5372 = vst [vmem:[#allocation2 + $0xb8] sm:$0xff] %v5340
      %5373 = vst [vmem:[#allocation2 + $0xc0] sm:$0xff] %v5341
      %5374 = vst [vmem:[#allocation2 + $0xc8] sm:$0xff] %v5342
      %5375 = vst [vmem:[#allocation2 + $0xd0] sm:$0xff] %v5343
      %5376 = vst [vmem:[#allocation2 + $0xd8] sm:$0xff] %v5344
      %5377 = vst [vmem:[#allocation2 + $0xe0] sm:$0xff] %v5345
      %5378 = vst [vmem:[#allocation2 + $0xe8] sm:$0xff] %v5346
      %5379 = vst [vmem:[#allocation2 + $0xf0] sm:$0xff] %v5347
      %5380 = vst [vmem:[#allocation2 + $0xf8] sm:$0xff] %v5348
      %v5381 = vld [vmem:[%s200 + $0x1c0] sm:$0xff]
      %v5382 = vld [vmem:[%s200 + $0x1c8] sm:$0xff]
      %v5383 = vld [vmem:[%s200 + $0x1d0] sm:$0xff]
      %v5384 = vld [vmem:[%s200 + $0x1d8] sm:$0xff]
      %v5385 = vld [vmem:[%s200 + $0x3c0] sm:$0x11]
      %v5386 = vld [vmem:[%s200 + $0x3c8] sm:$0x11]
      %v5387 = vld [vmem:[%s200 + $0x3d0] sm:$0x11]
      %v5388 = vld [vmem:[%s200 + $0x3d8] sm:$0x11]
      %v5397 = vunpack.c.l.b16 %v5381
      %v5398 = vunpack.c.h.b16 %v5381
      %v5399 = vunpack.c.l.b16 %v5382
      %v5400 = vunpack.c.h.b16 %v5382
      %v5401 = vunpack.c.l.b16 %v5383
      %v5402 = vunpack.c.h.b16 %v5383
      %v5403 = vunpack.c.l.b16 %v5384
      %v5404 = vunpack.c.h.b16 %v5384
      %v5405 = vunpack.c.l.b16 %v5385
      %v5406 = vunpack.c.h.b16 %v5385
      %v5407 = vunpack.c.l.b16 %v5386
      %v5408 = vunpack.c.h.b16 %v5386
      %v5409 = vunpack.c.l.b16 %v5387
      %v5410 = vunpack.c.h.b16 %v5387
      %v5411 = vunpack.c.l.b16 %v5388
      %v5412 = vunpack.c.h.b16 %v5388
      %v5413 = vpack.c.b16 %v5405, %v5397
      %v5414 = vpack.c.b16 %v5406, %v5398
      %v5415 = vpack.c.b16 %v5407, %v5399
      %v5416 = vpack.c.b16 %v5408, %v5400
      %v5417 = vpack.c.b16 %v5409, %v5401
      %v5418 = vpack.c.b16 %v5410, %v5402
      %v5419 = vpack.c.b16 %v5411, %v5403
      %v5420 = vpack.c.b16 %v5412, %v5404
      %v5422 = vand.u32 %v5413, %v276
      %v5425 = vand.u32 %v5414, %v276
      %v5428 = vand.u32 %v5415, %v276
      %v5431 = vand.u32 %v5416, %v276
      %v5434 = vand.u32 %v5417, %v276
      %v5437 = vand.u32 %v5418, %v276
      %v5440 = vand.u32 %v5419, %v276
      %v5443 = vand.u32 %v5420, %v276
      %5445 = vmatprep.subr.bf16.mxu0 %v5425
      %5446 = vmatpush1.bf16.msra.mxu0 %v5422
      %5447 = vmatprep.subr.bf16.mxu0 0
      %5448 = vmatpush1.bf16.msra.mxu0 0
      %5449 = vmatprep.subr.bf16.mxu0 0
      %5450 = vmatpush1.bf16.msra.mxu0 0
      %5451 = vmatprep.subr.bf16.mxu0 0
      %5452 = vmatpush1.bf16.msra.mxu0 0
      %5453 = vmatprep.subr.bf16.mxu0 0
      %5454 = vmatpush1.bf16.msra.mxu0 0
      %5455 = vmatprep.subr.bf16.mxu0 0
      %5456 = vmatpush1.bf16.msra.mxu0 0
      %5457 = vmatprep.subr.bf16.mxu0 0
      %5458 = vmatpush1.bf16.msra.mxu0 0
      %5459 = vmatprep.subr.bf16.mxu0 0
      %5460 = vmatpush1.bf16.msra.mxu0 0
      %5461 = vmatprep.subr.bf16.mxu0 0
      %5462 = vmatpush1.bf16.msra.mxu0 0
      %5463 = vmatprep.subr.bf16.mxu0 0
      %5464 = vmatpush1.bf16.msra.mxu0 0
      %5465 = vmatprep.subr.bf16.mxu0 0
      %5466 = vmatpush1.bf16.msra.mxu0 0
      %5467 = vmatprep.subr.bf16.mxu0 0
      %5468 = vmatpush1.bf16.msra.mxu0 0
      %5469 = vmatprep.subr.bf16.mxu0 0
      %5470 = vmatpush1.bf16.msra.mxu0 0
      %5471 = vmatprep.subr.bf16.mxu0 0
      %5472 = vmatpush1.bf16.msra.mxu0 0
      %5473 = vmatprep.subr.bf16.mxu0 0
      %5474 = vmatpush1.bf16.msra.mxu0 0
      %5475 = vmatprep.subr.bf16.mxu0 0
      %5476 = vmatpush1.bf16.msra.mxu0 0
      %5477 = vmatprep.mubr.bf16.mxu0 0
      %5478 = vmatmul.mubr.bf16.gmra.mrb[0].mxu0 %v268
      %v5479 = vpop.f32.mrb[0].mxu0
      %v5480 = vadd.f32 0.0, %v5479
      %v5481 = vpop.f32.mrb[0].mxu0
      %v5482 = vadd.f32 0.0, %v5481
      %v5483 = vpop.f32.mrb[0].mxu0
      %v5484 = vadd.f32 0.0, %v5483
      %v5485 = vpop.f32.mrb[0].mxu0
      %v5486 = vadd.f32 0.0, %v5485
      %5487 = vmatprep.mubr.bf16.mxu0 0
      %5488 = vmatmul.mubr.bf16.gmra.mrb[0].mxu0 %v271
      %v5489 = vpop.f32.mrb[0].mxu0
      %v5490 = vadd.f32 0.0, %v5489
      %v5491 = vpop.f32.mrb[0].mxu0
      %v5492 = vadd.f32 0.0, %v5491
      %v5493 = vpop.f32.mrb[0].mxu0
      %v5494 = vadd.f32 0.0, %v5493
      %v5495 = vpop.f32.mrb[0].mxu0
      %v5496 = vadd.f32 0.0, %v5495
      %5497 = vdwg.mxu0
      %5498 = vmatprep.subr.bf16.mxu0 %v5431
      %5499 = vmatpush1.bf16.msra.mxu0 %v5428
      %5500 = vmatprep.subr.bf16.mxu0 0
      %5501 = vmatpush1.bf16.msra.mxu0 0
      %5502 = vmatprep.subr.bf16.mxu0 0
      %5503 = vmatpush1.bf16.msra.mxu0 0
      %5504 = vmatprep.subr.bf16.mxu0 0
      %5505 = vmatpush1.bf16.msra.mxu0 0
      %5506 = vmatprep.subr.bf16.mxu0 0
      %5507 = vmatpush1.bf16.msra.mxu0 0
      %5508 = vmatprep.subr.bf16.mxu0 0
      %5509 = vmatpush1.bf16.msra.mxu0 0
      %5510 = vmatprep.subr.bf16.mxu0 0
      %5511 = vmatpush1.bf16.msra.mxu0 0
      %5512 = vmatprep.subr.bf16.mxu0 0
      %5513 = vmatpush1.bf16.msra.mxu0 0
      %5514 = vmatprep.subr.bf16.mxu0 0
      %5515 = vmatpush1.bf16.msra.mxu0 0
      %5516 = vmatprep.subr.bf16.mxu0 0
      %5517 = vmatpush1.bf16.msra.mxu0 0
      %5518 = vmatprep.subr.bf16.mxu0 0
      %5519 = vmatpush1.bf16.msra.mxu0 0
      %5520 = vmatprep.subr.bf16.mxu0 0
      %5521 = vmatpush1.bf16.msra.mxu0 0
      %5522 = vmatprep.subr.bf16.mxu0 0
      %5523 = vmatpush1.bf16.msra.mxu0 0
      %5524 = vmatprep.subr.bf16.mxu0 0
      %5525 = vmatpush1.bf16.msra.mxu0 0
      %5526 = vmatprep.subr.bf16.mxu0 0
      %5527 = vmatpush1.bf16.msra.mxu0 0
      %5528 = vmatprep.subr.bf16.mxu0 0
      %5529 = vmatpush1.bf16.msra.mxu0 0
      %5530 = vmatprep.mubr.bf16.mxu0 0
      %5531 = vmatmul.mubr.bf16.gmra.mrb[0].mxu0 %v268
      %v5532 = vpop.f32.mrb[0].mxu0
      %v5533 = vadd.f32 0.0, %v5532
      %v5534 = vpop.f32.mrb[0].mxu0
      %v5535 = vadd.f32 0.0, %v5534
      %v5536 = vpop.f32.mrb[0].mxu0
      %v5537 = vadd.f32 0.0, %v5536
      %v5538 = vpop.f32.mrb[0].mxu0
      %v5539 = vadd.f32 0.0, %v5538
      %5540 = vmatprep.mubr.bf16.mxu0 0
      %5541 = vmatmul.mubr.bf16.gmra.mrb[0].mxu0 %v271
      %v5542 = vpop.f32.mrb[0].mxu0
      %v5543 = vadd.f32 0.0, %v5542
      %v5544 = vpop.f32.mrb[0].mxu0
      %v5545 = vadd.f32 0.0, %v5544
      %v5546 = vpop.f32.mrb[0].mxu0
      %v5547 = vadd.f32 0.0, %v5546
      %v5548 = vpop.f32.mrb[0].mxu0
      %v5549 = vadd.f32 0.0, %v5548
      %5550 = vdwg.mxu0
      %5551 = vmatprep.subr.bf16.mxu0 %v5437
      %5552 = vmatpush1.bf16.msra.mxu0 %v5434
      %5553 = vmatprep.subr.bf16.mxu0 0
      %5554 = vmatpush1.bf16.msra.mxu0 0
      %5555 = vmatprep.subr.bf16.mxu0 0
      %5556 = vmatpush1.bf16.msra.mxu0 0
      %5557 = vmatprep.subr.bf16.mxu0 0
      %5558 = vmatpush1.bf16.msra.mxu0 0
      %5559 = vmatprep.subr.bf16.mxu0 0
      %5560 = vmatpush1.bf16.msra.mxu0 0
      %5561 = vmatprep.subr.bf16.mxu0 0
      %5562 = vmatpush1.bf16.msra.mxu0 0
      %5563 = vmatprep.subr.bf16.mxu0 0
      %5564 = vmatpush1.bf16.msra.mxu0 0
      %5565 = vmatprep.subr.bf16.mxu0 0
      %5566 = vmatpush1.bf16.msra.mxu0 0
      %5567 = vmatprep.subr.bf16.mxu0 0
      %5568 = vmatpush1.bf16.msra.mxu0 0
      %5569 = vmatprep.subr.bf16.mxu0 0
      %5570 = vmatpush1.bf16.msra.mxu0 0
      %5571 = vmatprep.subr.bf16.mxu0 0
      %5572 = vmatpush1.bf16.msra.mxu0 0
      %5573 = vmatprep.subr.bf16.mxu0 0
      %5574 = vmatpush1.bf16.msra.mxu0 0
      %5575 = vmatprep.subr.bf16.mxu0 0
      %5576 = vmatpush1.bf16.msra.mxu0 0
      %5577 = vmatprep.subr.bf16.mxu0 0
      %5578 = vmatpush1.bf16.msra.mxu0 0
      %5579 = vmatprep.subr.bf16.mxu0 0
      %5580 = vmatpush1.bf16.msra.mxu0 0
      %5581 = vmatprep.subr.bf16.mxu0 0
      %5582 = vmatpush1.bf16.msra.mxu0 0
      %5583 = vmatprep.mubr.bf16.mxu0 0
      %5584 = vmatmul.mubr.bf16.gmra.mrb[0].mxu0 %v268
      %v5585 = vpop.f32.mrb[0].mxu0
      %v5586 = vadd.f32 0.0, %v5585
      %v5587 = vpop.f32.mrb[0].mxu0
      %v5588 = vadd.f32 0.0, %v5587
      %v5589 = vpop.f32.mrb[0].mxu0
      %v5590 = vadd.f32 0.0, %v5589
      %v5591 = vpop.f32.mrb[0].mxu0
      %v5592 = vadd.f32 0.0, %v5591
      %5593 = vmatprep.mubr.bf16.mxu0 0
      %5594 = vmatmul.mubr.bf16.gmra.mrb[0].mxu0 %v271
      %v5595 = vpop.f32.mrb[0].mxu0
      %v5596 = vadd.f32 0.0, %v5595
      %v5597 = vpop.f32.mrb[0].mxu0
      %v5598 = vadd.f32 0.0, %v5597
      %v5599 = vpop.f32.mrb[0].mxu0
      %v5600 = vadd.f32 0.0, %v5599
      %v5601 = vpop.f32.mrb[0].mxu0
      %v5602 = vadd.f32 0.0, %v5601
      %5603 = vdwg.mxu0
      %5604 = vmatprep.subr.bf16.mxu0 %v5443
      %5605 = vmatpush1.bf16.msra.mxu0 %v5440
      %5606 = vmatprep.subr.bf16.mxu0 0
      %5607 = vmatpush1.bf16.msra.mxu0 0
      %5608 = vmatprep.subr.bf16.mxu0 0
      %5609 = vmatpush1.bf16.msra.mxu0 0
      %5610 = vmatprep.subr.bf16.mxu0 0
      %5611 = vmatpush1.bf16.msra.mxu0 0
      %5612 = vmatprep.subr.bf16.mxu0 0
      %5613 = vmatpush1.bf16.msra.mxu0 0
      %5614 = vmatprep.subr.bf16.mxu0 0
      %5615 = vmatpush1.bf16.msra.mxu0 0
      %5616 = vmatprep.subr.bf16.mxu0 0
      %5617 = vmatpush1.bf16.msra.mxu0 0
      %5618 = vmatprep.subr.bf16.mxu0 0
      %5619 = vmatpush1.bf16.msra.mxu0 0
      %5620 = vmatprep.subr.bf16.mxu0 0
      %5621 = vmatpush1.bf16.msra.mxu0 0
      %5622 = vmatprep.subr.bf16.mxu0 0
      %5623 = vmatpush1.bf16.msra.mxu0 0
      %5624 = vmatprep.subr.bf16.mxu0 0
      %5625 = vmatpush1.bf16.msra.mxu0 0
      %5626 = vmatprep.subr.bf16.mxu0 0
      %5627 = vmatpush1.bf16.msra.mxu0 0
      %5628 = vmatprep.subr.bf16.mxu0 0
      %5629 = vmatpush1.bf16.msra.mxu0 0
      %5630 = vmatprep.subr.bf16.mxu0 0
      %5631 = vmatpush1.bf16.msra.mxu0 0
      %5632 = vmatprep.subr.bf16.mxu0 0
      %5633 = vmatpush1.bf16.msra.mxu0 0
      %5634 = vmatprep.subr.bf16.mxu0 0
      %5635 = vmatpush1.bf16.msra.mxu0 0
      %5636 = vmatprep.mubr.bf16.mxu0 0
      %5637 = vmatmul.mubr.bf16.gmra.mrb[0].mxu0 %v268
      %v5638 = vpop.f32.mrb[0].mxu0
      %v5639 = vadd.f32 0.0, %v5638
      %v5640 = vpop.f32.mrb[0].mxu0
      %v5641 = vadd.f32 0.0, %v5640
      %v5642 = vpop.f32.mrb[0].mxu0
      %v5643 = vadd.f32 0.0, %v5642
      %v5644 = vpop.f32.mrb[0].mxu0
      %v5645 = vadd.f32 0.0, %v5644
      %5646 = vmatprep.mubr.bf16.mxu0 0
      %5647 = vmatmul.mubr.bf16.gmra.mrb[0].mxu0 %v271
      %v5648 = vpop.f32.mrb[0].mxu0
      %v5649 = vadd.f32 0.0, %v5648
      %v5650 = vpop.f32.mrb[0].mxu0
      %v5651 = vadd.f32 0.0, %v5650
      %v5652 = vpop.f32.mrb[0].mxu0
      %v5653 = vadd.f32 0.0, %v5652
      %v5654 = vpop.f32.mrb[0].mxu0
      %v5655 = vadd.f32 0.0, %v5654
      %5656 = vdwg.mxu0
      %v5657 = vld [vmem:[#allocation2] sm:$0xff]
      %v5658 = vld [vmem:[#allocation2 + $0x8] sm:$0xff]
      %v5659 = vld [vmem:[#allocation2 + $0x10] sm:$0xff]
      %v5660 = vld [vmem:[#allocation2 + $0x18] sm:$0xff]
      %v5661 = vld [vmem:[#allocation2 + $0x20] sm:$0xff]
      %v5662 = vld [vmem:[#allocation2 + $0x28] sm:$0xff]
      %v5663 = vld [vmem:[#allocation2 + $0x30] sm:$0xff]
      %v5664 = vld [vmem:[#allocation2 + $0x38] sm:$0xff]
      %v5665 = vld [vmem:[#allocation2 + $0x40] sm:$0xff]
      %v5666 = vld [vmem:[#allocation2 + $0x48] sm:$0xff]
      %v5667 = vld [vmem:[#allocation2 + $0x50] sm:$0xff]
      %v5668 = vld [vmem:[#allocation2 + $0x58] sm:$0xff]
      %v5669 = vld [vmem:[#allocation2 + $0x60] sm:$0xff]
      %v5670 = vld [vmem:[#allocation2 + $0x68] sm:$0xff]
      %v5671 = vld [vmem:[#allocation2 + $0x70] sm:$0xff]
      %v5672 = vld [vmem:[#allocation2 + $0x78] sm:$0xff]
      %v5673 = vld [vmem:[#allocation2 + $0x80] sm:$0xff]
      %v5674 = vld [vmem:[#allocation2 + $0x88] sm:$0xff]
      %v5675 = vld [vmem:[#allocation2 + $0x90] sm:$0xff]
      %v5676 = vld [vmem:[#allocation2 + $0x98] sm:$0xff]
      %v5677 = vld [vmem:[#allocation2 + $0xa0] sm:$0xff]
      %v5678 = vld [vmem:[#allocation2 + $0xa8] sm:$0xff]
      %v5679 = vld [vmem:[#allocation2 + $0xb0] sm:$0xff]
      %v5680 = vld [vmem:[#allocation2 + $0xb8] sm:$0xff]
      %v5681 = vld [vmem:[#allocation2 + $0xc0] sm:$0xff]
      %v5682 = vld [vmem:[#allocation2 + $0xc8] sm:$0xff]
      %v5683 = vld [vmem:[#allocation2 + $0xd0] sm:$0xff]
      %v5684 = vld [vmem:[#allocation2 + $0xd8] sm:$0xff]
      %v5685 = vld [vmem:[#allocation2 + $0xe0] sm:$0xff]
      %v5686 = vld [vmem:[#allocation2 + $0xe8] sm:$0xff]
      %v5687 = vld [vmem:[#allocation2 + $0xf0] sm:$0xff]
      %v5688 = vld [vmem:[#allocation2 + $0xf8] sm:$0xff]
      %v5689 = vmax.f32 %v5657, %v5480
      %v5690 = vmax.f32 %v5658, %v5482
      %v5691 = vmax.f32 %v5659, %v5533
      %v5692 = vmax.f32 %v5660, %v5535
      %v5693 = vmax.f32 %v5661, %v5586
      %v5694 = vmax.f32 %v5662, %v5588
      %v5695 = vmax.f32 %v5663, %v5639
      %v5696 = vmax.f32 %v5664, %v5641
      %v5697 = vmax.f32 %v5665, %v5484
      %v5698 = vmax.f32 %v5666, %v5486
      %v5699 = vmax.f32 %v5667, %v5537
      %v5700 = vmax.f32 %v5668, %v5539
      %v5701 = vmax.f32 %v5669, %v5590
      %v5702 = vmax.f32 %v5670, %v5592
      %v5703 = vmax.f32 %v5671, %v5643
      %v5704 = vmax.f32 %v5672, %v5645
      %v5705 = vmax.f32 %v5673, %v5490
      %v5706 = vmax.f32 %v5674, %v5492
      %v5707 = vmax.f32 %v5675, %v5543
      %v5708 = vmax.f32 %v5676, %v5545
      %v5709 = vmax.f32 %v5677, %v5596
      %v5710 = vmax.f32 %v5678, %v5598
      %v5711 = vmax.f32 %v5679, %v5649
      %v5712 = vmax.f32 %v5680, %v5651
      %v5713 = vmax.f32 %v5681, %v5494
      %v5714 = vmax.f32 %v5682, %v5496
      %v5715 = vmax.f32 %v5683, %v5547
      %v5716 = vmax.f32 %v5684, %v5549
      %v5717 = vmax.f32 %v5685, %v5600
      %v5718 = vmax.f32 %v5686, %v5602
      %v5719 = vmax.f32 %v5687, %v5653
      %v5720 = vmax.f32 %v5688, %v5655
      %5721 = vst [vmem:[#allocation2] sm:$0xff] %v5689
      %5722 = vst [vmem:[#allocation2 + $0x8] sm:$0xff] %v5690
      %5723 = vst [vmem:[#allocation2 + $0x10] sm:$0xff] %v5691
      %5724 = vst [vmem:[#allocation2 + $0x18] sm:$0xff] %v5692
      %5725 = vst [vmem:[#allocation2 + $0x20] sm:$0xff] %v5693
      %5726 = vst [vmem:[#allocation2 + $0x28] sm:$0xff] %v5694
      %5727 = vst [vmem:[#allocation2 + $0x30] sm:$0xff] %v5695
      %5728 = vst [vmem:[#allocation2 + $0x38] sm:$0xff] %v5696
      %5729 = vst [vmem:[#allocation2 + $0x40] sm:$0xff] %v5697
      %5730 = vst [vmem:[#allocation2 + $0x48] sm:$0xff] %v5698
      %5731 = vst [vmem:[#allocation2 + $0x50] sm:$0xff] %v5699
      %5732 = vst [vmem:[#allocation2 + $0x58] sm:$0xff] %v5700
      %5733 = vst [vmem:[#allocation2 + $0x60] sm:$0xff] %v5701
      %5734 = vst [vmem:[#allocation2 + $0x68] sm:$0xff] %v5702
      %5735 = vst [vmem:[#allocation2 + $0x70] sm:$0xff] %v5703
      %5736 = vst [vmem:[#allocation2 + $0x78] sm:$0xff] %v5704
      %5737 = vst [vmem:[#allocation2 + $0x80] sm:$0xff] %v5705
      %5738 = vst [vmem:[#allocation2 + $0x88] sm:$0xff] %v5706
      %5739 = vst [vmem:[#allocation2 + $0x90] sm:$0xff] %v5707
      %5740 = vst [vmem:[#allocation2 + $0x98] sm:$0xff] %v5708
      %5741 = vst [vmem:[#allocation2 + $0xa0] sm:$0xff] %v5709
      %5742 = vst [vmem:[#allocation2 + $0xa8] sm:$0xff] %v5710
      %5743 = vst [vmem:[#allocation2 + $0xb0] sm:$0xff] %v5711
      %5744 = vst [vmem:[#allocation2 + $0xb8] sm:$0xff] %v5712
      %5745 = vst [vmem:[#allocation2 + $0xc0] sm:$0xff] %v5713
      %5746 = vst [vmem:[#allocation2 + $0xc8] sm:$0xff] %v5714
      %5747 = vst [vmem:[#allocation2 + $0xd0] sm:$0xff] %v5715
      %5748 = vst [vmem:[#allocation2 + $0xd8] sm:$0xff] %v5716
      %5749 = vst [vmem:[#allocation2 + $0xe0] sm:$0xff] %v5717
      %5750 = vst [vmem:[#allocation2 + $0xe8] sm:$0xff] %v5718
      %5751 = vst [vmem:[#allocation2 + $0xf0] sm:$0xff] %v5719
      %5752 = vst [vmem:[#allocation2 + $0xf8] sm:$0xff] %v5720
      %v5753 = vld [vmem:[%s200 + $0x1e0] sm:$0xff]
      %v5754 = vld [vmem:[%s200 + $0x1e8] sm:$0xff]
      %v5755 = vld [vmem:[%s200 + $0x1f0] sm:$0xff]
      %v5756 = vld [vmem:[%s200 + $0x1f8] sm:$0xff]
      %v5757 = vld [vmem:[%s200 + $0x3e0] sm:$0x11]
      %v5758 = vld [vmem:[%s200 + $0x3e8] sm:$0x11]
      %v5759 = vld [vmem:[%s200 + $0x3f0] sm:$0x11]
      %v5760 = vld [vmem:[%s200 + $0x3f8] sm:$0x11]
      %v5769 = vunpack.c.l.b16 %v5753
      %v5770 = vunpack.c.h.b16 %v5753
      %v5771 = vunpack.c.l.b16 %v5754
      %v5772 = vunpack.c.h.b16 %v5754
      %v5773 = vunpack.c.l.b16 %v5755
      %v5774 = vunpack.c.h.b16 %v5755
      %v5775 = vunpack.c.l.b16 %v5756
      %v5776 = vunpack.c.h.b16 %v5756
      %v5777 = vunpack.c.l.b16 %v5757
      %v5778 = vunpack.c.h.b16 %v5757
      %v5779 = vunpack.c.l.b16 %v5758
      %v5780 = vunpack.c.h.b16 %v5758
      %v5781 = vunpack.c.l.b16 %v5759
      %v5782 = vunpack.c.h.b16 %v5759
      %v5783 = vunpack.c.l.b16 %v5760
      %v5784 = vunpack.c.h.b16 %v5760
      %v5785 = vpack.c.b16 %v5777, %v5769
      %v5786 = vpack.c.b16 %v5778, %v5770
      %v5787 = vpack.c.b16 %v5779, %v5771
      %v5788 = vpack.c.b16 %v5780, %v5772
      %v5789 = vpack.c.b16 %v5781, %v5773
      %v5790 = vpack.c.b16 %v5782, %v5774
      %v5791 = vpack.c.b16 %v5783, %v5775
      %v5792 = vpack.c.b16 %v5784, %v5776
      %v5794 = vand.u32 %v5785, %v276
      %v5797 = vand.u32 %v5786, %v276
      %v5800 = vand.u32 %v5787, %v276
      %v5803 = vand.u32 %v5788, %v276
      %v5806 = vand.u32 %v5789, %v276
      %v5809 = vand.u32 %v5790, %v276
      %v5812 = vand.u32 %v5791, %v276
      %v5815 = vand.u32 %v5792, %v276
      %5817 = vmatprep.subr.bf16.mxu0 %v5797
      %5818 = vmatpush1.bf16.msra.mxu0 %v5794
      %5819 = vmatprep.subr.bf16.mxu0 0
      %5820 = vmatpush1.bf16.msra.mxu0 0
      %5821 = vmatprep.subr.bf16.mxu0 0
      %5822 = vmatpush1.bf16.msra.mxu0 0
      %5823 = vmatprep.subr.bf16.mxu0 0
      %5824 = vmatpush1.bf16.msra.mxu0 0
      %5825 = vmatprep.subr.bf16.mxu0 0
      %5826 = vmatpush1.bf16.msra.mxu0 0
      %5827 = vmatprep.subr.bf16.mxu0 0
      %5828 = vmatpush1.bf16.msra.mxu0 0
      %5829 = vmatprep.subr.bf16.mxu0 0
      %5830 = vmatpush1.bf16.msra.mxu0 0
      %5831 = vmatprep.subr.bf16.mxu0 0
      %5832 = vmatpush1.bf16.msra.mxu0 0
      %5833 = vmatprep.subr.bf16.mxu0 0
      %5834 = vmatpush1.bf16.msra.mxu0 0
      %5835 = vmatprep.subr.bf16.mxu0 0
      %5836 = vmatpush1.bf16.msra.mxu0 0
      %5837 = vmatprep.subr.bf16.mxu0 0
      %5838 = vmatpush1.bf16.msra.mxu0 0
      %5839 = vmatprep.subr.bf16.mxu0 0
      %5840 = vmatpush1.bf16.msra.mxu0 0
      %5841 = vmatprep.subr.bf16.mxu0 0
      %5842 = vmatpush1.bf16.msra.mxu0 0
      %5843 = vmatprep.subr.bf16.mxu0 0
      %5844 = vmatpush1.bf16.msra.mxu0 0
      %5845 = vmatprep.subr.bf16.mxu0 0
      %5846 = vmatpush1.bf16.msra.mxu0 0
      %5847 = vmatprep.subr.bf16.mxu0 0
      %5848 = vmatpush1.bf16.msra.mxu0 0
      %5849 = vmatprep.mubr.bf16.mxu0 0
      %5850 = vmatmul.mubr.bf16.gmra.mrb[0].mxu0 %v268
      %v5851 = vpop.f32.mrb[0].mxu0
      %v5852 = vadd.f32 0.0, %v5851
      %v5853 = vpop.f32.mrb[0].mxu0
      %v5854 = vadd.f32 0.0, %v5853
      %v5855 = vpop.f32.mrb[0].mxu0
      %v5856 = vadd.f32 0.0, %v5855
      %v5857 = vpop.f32.mrb[0].mxu0
      %v5858 = vadd.f32 0.0, %v5857
      %5859 = vmatprep.mubr.bf16.mxu0 0
      %5860 = vmatmul.mubr.bf16.gmra.mrb[0].mxu0 %v271
      %v5861 = vpop.f32.mrb[0].mxu0
      %v5862 = vadd.f32 0.0, %v5861
      %v5863 = vpop.f32.mrb[0].mxu0
      %v5864 = vadd.f32 0.0, %v5863
      %v5865 = vpop.f32.mrb[0].mxu0
      %v5866 = vadd.f32 0.0, %v5865
      %v5867 = vpop.f32.mrb[0].mxu0
      %v5868 = vadd.f32 0.0, %v5867
      %5869 = vdwg.mxu0
      %5870 = vmatprep.subr.bf16.mxu0 %v5803
      %5871 = vmatpush1.bf16.msra.mxu0 %v5800
      %5872 = vmatprep.subr.bf16.mxu0 0
      %5873 = vmatpush1.bf16.msra.mxu0 0
      %5874 = vmatprep.subr.bf16.mxu0 0
      %5875 = vmatpush1.bf16.msra.mxu0 0
      %5876 = vmatprep.subr.bf16.mxu0 0
      %5877 = vmatpush1.bf16.msra.mxu0 0
      %5878 = vmatprep.subr.bf16.mxu0 0
      %5879 = vmatpush1.bf16.msra.mxu0 0
      %5880 = vmatprep.subr.bf16.mxu0 0
      %5881 = vmatpush1.bf16.msra.mxu0 0
      %5882 = vmatprep.subr.bf16.mxu0 0
      %5883 = vmatpush1.bf16.msra.mxu0 0
      %5884 = vmatprep.subr.bf16.mxu0 0
      %5885 = vmatpush1.bf16.msra.mxu0 0
      %5886 = vmatprep.subr.bf16.mxu0 0
      %5887 = vmatpush1.bf16.msra.mxu0 0
      %5888 = vmatprep.subr.bf16.mxu0 0
      %5889 = vmatpush1.bf16.msra.mxu0 0
      %5890 = vmatprep.subr.bf16.mxu0 0
      %5891 = vmatpush1.bf16.msra.mxu0 0
      %5892 = vmatprep.subr.bf16.mxu0 0
      %5893 = vmatpush1.bf16.msra.mxu0 0
      %5894 = vmatprep.subr.bf16.mxu0 0
      %5895 = vmatpush1.bf16.msra.mxu0 0
      %5896 = vmatprep.subr.bf16.mxu0 0
      %5897 = vmatpush1.bf16.msra.mxu0 0
      %5898 = vmatprep.subr.bf16.mxu0 0
      %5899 = vmatpush1.bf16.msra.mxu0 0
      %5900 = vmatprep.subr.bf16.mxu0 0
      %5901 = vmatpush1.bf16.msra.mxu0 0
      %5902 = vmatprep.mubr.bf16.mxu0 0
      %5903 = vmatmul.mubr.bf16.gmra.mrb[0].mxu0 %v268
      %v5904 = vpop.f32.mrb[0].mxu0
      %v5905 = vadd.f32 0.0, %v5904
      %v5906 = vpop.f32.mrb[0].mxu0
      %v5907 = vadd.f32 0.0, %v5906
      %v5908 = vpop.f32.mrb[0].mxu0
      %v5909 = vadd.f32 0.0, %v5908
      %v5910 = vpop.f32.mrb[0].mxu0
      %v5911 = vadd.f32 0.0, %v5910
      %5912 = vmatprep.mubr.bf16.mxu0 0
      %5913 = vmatmul.mubr.bf16.gmra.mrb[0].mxu0 %v271
      %v5914 = vpop.f32.mrb[0].mxu0
      %v5915 = vadd.f32 0.0, %v5914
      %v5916 = vpop.f32.mrb[0].mxu0
      %v5917 = vadd.f32 0.0, %v5916
      %v5918 = vpop.f32.mrb[0].mxu0
      %v5919 = vadd.f32 0.0, %v5918
      %v5920 = vpop.f32.mrb[0].mxu0
      %v5921 = vadd.f32 0.0, %v5920
      %5922 = vdwg.mxu0
      %5923 = vmatprep.subr.bf16.mxu0 %v5809
      %5924 = vmatpush1.bf16.msra.mxu0 %v5806
      %5925 = vmatprep.subr.bf16.mxu0 0
      %5926 = vmatpush1.bf16.msra.mxu0 0
      %5927 = vmatprep.subr.bf16.mxu0 0
      %5928 = vmatpush1.bf16.msra.mxu0 0
      %5929 = vmatprep.subr.bf16.mxu0 0
      %5930 = vmatpush1.bf16.msra.mxu0 0
      %5931 = vmatprep.subr.bf16.mxu0 0
      %5932 = vmatpush1.bf16.msra.mxu0 0
      %5933 = vmatprep.subr.bf16.mxu0 0
      %5934 = vmatpush1.bf16.msra.mxu0 0
      %5935 = vmatprep.subr.bf16.mxu0 0
      %5936 = vmatpush1.bf16.msra.mxu0 0
      %5937 = vmatprep.subr.bf16.mxu0 0
      %5938 = vmatpush1.bf16.msra.mxu0 0
      %5939 = vmatprep.subr.bf16.mxu0 0
      %5940 = vmatpush1.bf16.msra.mxu0 0
      %5941 = vmatprep.subr.bf16.mxu0 0
      %5942 = vmatpush1.bf16.msra.mxu0 0
      %5943 = vmatprep.subr.bf16.mxu0 0
      %5944 = vmatpush1.bf16.msra.mxu0 0
      %5945 = vmatprep.subr.bf16.mxu0 0
      %5946 = vmatpush1.bf16.msra.mxu0 0
      %5947 = vmatprep.subr.bf16.mxu0 0
      %5948 = vmatpush1.bf16.msra.mxu0 0
      %5949 = vmatprep.subr.bf16.mxu0 0
      %5950 = vmatpush1.bf16.msra.mxu0 0
      %5951 = vmatprep.subr.bf16.mxu0 0
      %5952 = vmatpush1.bf16.msra.mxu0 0
      %5953 = vmatprep.subr.bf16.mxu0 0
      %5954 = vmatpush1.bf16.msra.mxu0 0
      %5955 = vmatprep.mubr.bf16.mxu0 0
      %5956 = vmatmul.mubr.bf16.gmra.mrb[0].mxu0 %v268
      %v5957 = vpop.f32.mrb[0].mxu0
      %v5958 = vadd.f32 0.0, %v5957
      %v5959 = vpop.f32.mrb[0].mxu0
      %v5960 = vadd.f32 0.0, %v5959
      %v5961 = vpop.f32.mrb[0].mxu0
      %v5962 = vadd.f32 0.0, %v5961
      %v5963 = vpop.f32.mrb[0].mxu0
      %v5964 = vadd.f32 0.0, %v5963
      %5965 = vmatprep.mubr.bf16.mxu0 0
      %5966 = vmatmul.mubr.bf16.gmra.mrb[0].mxu0 %v271
      %v5967 = vpop.f32.mrb[0].mxu0
      %v5968 = vadd.f32 0.0, %v5967
      %v5969 = vpop.f32.mrb[0].mxu0
      %v5970 = vadd.f32 0.0, %v5969
      %v5971 = vpop.f32.mrb[0].mxu0
      %v5972 = vadd.f32 0.0, %v5971
      %v5973 = vpop.f32.mrb[0].mxu0
      %v5974 = vadd.f32 0.0, %v5973
      %5975 = vdwg.mxu0
      %5976 = vmatprep.subr.bf16.mxu0 %v5815
      %5977 = vmatpush1.bf16.msra.mxu0 %v5812
      %5978 = vmatprep.subr.bf16.mxu0 0
      %5979 = vmatpush1.bf16.msra.mxu0 0
      %5980 = vmatprep.subr.bf16.mxu0 0
      %5981 = vmatpush1.bf16.msra.mxu0 0
      %5982 = vmatprep.subr.bf16.mxu0 0
      %5983 = vmatpush1.bf16.msra.mxu0 0
      %5984 = vmatprep.subr.bf16.mxu0 0
      %5985 = vmatpush1.bf16.msra.mxu0 0
      %5986 = vmatprep.subr.bf16.mxu0 0
      %5987 = vmatpush1.bf16.msra.mxu0 0
      %5988 = vmatprep.subr.bf16.mxu0 0
      %5989 = vmatpush1.bf16.msra.mxu0 0
      %5990 = vmatprep.subr.bf16.mxu0 0
      %5991 = vmatpush1.bf16.msra.mxu0 0
      %5992 = vmatprep.subr.bf16.mxu0 0
      %5993 = vmatpush1.bf16.msra.mxu0 0
      %5994 = vmatprep.subr.bf16.mxu0 0
      %5995 = vmatpush1.bf16.msra.mxu0 0
      %5996 = vmatprep.subr.bf16.mxu0 0
      %5997 = vmatpush1.bf16.msra.mxu0 0
      %5998 = vmatprep.subr.bf16.mxu0 0
      %5999 = vmatpush1.bf16.msra.mxu0 0
      %6000 = vmatprep.subr.bf16.mxu0 0
      %6001 = vmatpush1.bf16.msra.mxu0 0
      %6002 = vmatprep.subr.bf16.mxu0 0
      %6003 = vmatpush1.bf16.msra.mxu0 0
      %6004 = vmatprep.subr.bf16.mxu0 0
      %6005 = vmatpush1.bf16.msra.mxu0 0
      %6006 = vmatprep.subr.bf16.mxu0 0
      %6007 = vmatpush1.bf16.msra.mxu0 0
      %6008 = vmatprep.mubr.bf16.mxu0 0
      %6009 = vmatmul.mubr.bf16.gmra.mrb[0].mxu0 %v268
      %v6010 = vpop.f32.mrb[0].mxu0
      %v6011 = vadd.f32 0.0, %v6010
      %v6012 = vpop.f32.mrb[0].mxu0
      %v6013 = vadd.f32 0.0, %v6012
      %v6014 = vpop.f32.mrb[0].mxu0
      %v6015 = vadd.f32 0.0, %v6014
      %v6016 = vpop.f32.mrb[0].mxu0
      %v6017 = vadd.f32 0.0, %v6016
      %6018 = vmatprep.mubr.bf16.mxu0 0
      %6019 = vmatmul.mubr.bf16.gmra.mrb[0].mxu0 %v271
      %v6020 = vpop.f32.mrb[0].mxu0
      %v6021 = vadd.f32 0.0, %v6020
      %v6022 = vpop.f32.mrb[0].mxu0
      %v6023 = vadd.f32 0.0, %v6022
      %v6024 = vpop.f32.mrb[0].mxu0
      %v6025 = vadd.f32 0.0, %v6024
      %v6026 = vpop.f32.mrb[0].mxu0
      %v6027 = vadd.f32 0.0, %v6026
      %6028 = vdwg.mxu0
      %v6029 = vld [vmem:[#allocation2] sm:$0xff]
      %v6030 = vld [vmem:[#allocation2 + $0x8] sm:$0xff]
      %v6031 = vld [vmem:[#allocation2 + $0x10] sm:$0xff]
      %v6032 = vld [vmem:[#allocation2 + $0x18] sm:$0xff]
      %v6033 = vld [vmem:[#allocation2 + $0x20] sm:$0xff]
      %v6034 = vld [vmem:[#allocation2 + $0x28] sm:$0xff]
      %v6035 = vld [vmem:[#allocation2 + $0x30] sm:$0xff]
      %v6036 = vld [vmem:[#allocation2 + $0x38] sm:$0xff]
      %v6037 = vld [vmem:[#allocation2 + $0x40] sm:$0xff]
      %v6038 = vld [vmem:[#allocation2 + $0x48] sm:$0xff]
      %v6039 = vld [vmem:[#allocation2 + $0x50] sm:$0xff]
      %v6040 = vld [vmem:[#allocation2 + $0x58] sm:$0xff]
      %v6041 = vld [vmem:[#allocation2 + $0x60] sm:$0xff]
      %v6042 = vld [vmem:[#allocation2 + $0x68] sm:$0xff]
      %v6043 = vld [vmem:[#allocation2 + $0x70] sm:$0xff]
      %v6044 = vld [vmem:[#allocation2 + $0x78] sm:$0xff]
      %v6045 = vld [vmem:[#allocation2 + $0x80] sm:$0xff]
      %v6046 = vld [vmem:[#allocation2 + $0x88] sm:$0xff]
      %v6047 = vld [vmem:[#allocation2 + $0x90] sm:$0xff]
      %v6048 = vld [vmem:[#allocation2 + $0x98] sm:$0xff]
      %v6049 = vld [vmem:[#allocation2 + $0xa0] sm:$0xff]
      %v6050 = vld [vmem:[#allocation2 + $0xa8] sm:$0xff]
      %v6051 = vld [vmem:[#allocation2 + $0xb0] sm:$0xff]
      %v6052 = vld [vmem:[#allocation2 + $0xb8] sm:$0xff]
      %v6053 = vld [vmem:[#allocation2 + $0xc0] sm:$0xff]
      %v6054 = vld [vmem:[#allocation2 + $0xc8] sm:$0xff]
      %v6055 = vld [vmem:[#allocation2 + $0xd0] sm:$0xff]
      %v6056 = vld [vmem:[#allocation2 + $0xd8] sm:$0xff]
      %v6057 = vld [vmem:[#allocation2 + $0xe0] sm:$0xff]
      %v6058 = vld [vmem:[#allocation2 + $0xe8] sm:$0xff]
      %v6059 = vld [vmem:[#allocation2 + $0xf0] sm:$0xff]
      %v6060 = vld [vmem:[#allocation2 + $0xf8] sm:$0xff]
      %v6061 = vmax.f32 %v6029, %v5852
      %v6062 = vmax.f32 %v6030, %v5854
      %v6063 = vmax.f32 %v6031, %v5905
      %v6064 = vmax.f32 %v6032, %v5907
      %v6065 = vmax.f32 %v6033, %v5958
      %v6066 = vmax.f32 %v6034, %v5960
      %v6067 = vmax.f32 %v6035, %v6011
      %v6068 = vmax.f32 %v6036, %v6013
      %v6069 = vmax.f32 %v6037, %v5856
      %v6070 = vmax.f32 %v6038, %v5858
      %v6071 = vmax.f32 %v6039, %v5909
      %v6072 = vmax.f32 %v6040, %v5911
      %v6073 = vmax.f32 %v6041, %v5962
      %v6074 = vmax.f32 %v6042, %v5964
      %v6075 = vmax.f32 %v6043, %v6015
      %v6076 = vmax.f32 %v6044, %v6017
      %v6077 = vmax.f32 %v6045, %v5862
      %v6078 = vmax.f32 %v6046, %v5864
      %v6079 = vmax.f32 %v6047, %v5915
      %v6080 = vmax.f32 %v6048, %v5917
      %v6081 = vmax.f32 %v6049, %v5968
      %v6082 = vmax.f32 %v6050, %v5970
      %v6083 = vmax.f32 %v6051, %v6021
      %v6084 = vmax.f32 %v6052, %v6023
      %v6085 = vmax.f32 %v6053, %v5866
      %v6086 = vmax.f32 %v6054, %v5868
      %v6087 = vmax.f32 %v6055, %v5919
      %v6088 = vmax.f32 %v6056, %v5921
      %v6089 = vmax.f32 %v6057, %v5972
      %v6090 = vmax.f32 %v6058, %v5974
      %v6091 = vmax.f32 %v6059, %v6025
      %v6092 = vmax.f32 %v6060, %v6027
      %6093 = vst [vmem:[#allocation2] sm:$0xff] %v6061
      %6094 = vst [vmem:[#allocation2 + $0x8] sm:$0xff] %v6062
      %6095 = vst [vmem:[#allocation2 + $0x10] sm:$0xff] %v6063
      %6096 = vst [vmem:[#allocation2 + $0x18] sm:$0xff] %v6064
      %6097 = vst [vmem:[#allocation2 + $0x20] sm:$0xff] %v6065
      %6098 = vst [vmem:[#allocation2 + $0x28] sm:$0xff] %v6066
      %6099 = vst [vmem:[#allocation2 + $0x30] sm:$0xff] %v6067
      %6100 = vst [vmem:[#allocation2 + $0x38] sm:$0xff] %v6068
      %6101 = vst [vmem:[#allocation2 + $0x40] sm:$0xff] %v6069
      %6102 = vst [vmem:[#allocation2 + $0x48] sm:$0xff] %v6070
      %6103 = vst [vmem:[#allocation2 + $0x50] sm:$0xff] %v6071
      %6104 = vst [vmem:[#allocation2 + $0x58] sm:$0xff] %v6072
      %6105 = vst [vmem:[#allocation2 + $0x60] sm:$0xff] %v6073
      %6106 = vst [vmem:[#allocation2 + $0x68] sm:$0xff] %v6074
      %6107 = vst [vmem:[#allocation2 + $0x70] sm:$0xff] %v6075
      %6108 = vst [vmem:[#allocation2 + $0x78] sm:$0xff] %v6076
      %6109 = vst [vmem:[#allocation2 + $0x80] sm:$0xff] %v6077
      %6110 = vst [vmem:[#allocation2 + $0x88] sm:$0xff] %v6078
      %6111 = vst [vmem:[#allocation2 + $0x90] sm:$0xff] %v6079
      %6112 = vst [vmem:[#allocation2 + $0x98] sm:$0xff] %v6080
      %6113 = vst [vmem:[#allocation2 + $0xa0] sm:$0xff] %v6081
      %6114 = vst [vmem:[#allocation2 + $0xa8] sm:$0xff] %v6082
      %6115 = vst [vmem:[#allocation2 + $0xb0] sm:$0xff] %v6083
      %6116 = vst [vmem:[#allocation2 + $0xb8] sm:$0xff] %v6084
      %6117 = vst [vmem:[#allocation2 + $0xc0] sm:$0xff] %v6085
      %6118 = vst [vmem:[#allocation2 + $0xc8] sm:$0xff] %v6086
      %6119 = vst [vmem:[#allocation2 + $0xd0] sm:$0xff] %v6087
      %6120 = vst [vmem:[#allocation2 + $0xd8] sm:$0xff] %v6088
      %6121 = vst [vmem:[#allocation2 + $0xe0] sm:$0xff] %v6089
      %6122 = vst [vmem:[#allocation2 + $0xe8] sm:$0xff] %v6090
      %6123 = vst [vmem:[#allocation2 + $0xf0] sm:$0xff] %v6091
      %6124 = vst [vmem:[#allocation2 + $0xf8] sm:$0xff] %v6092
      %v6125 = vlaneseq
      %v6126 = vand.u32 %v6125, 127
      %v6127 = vadd.s32 %v6126, 128
      %v6128 = vadd.s32 %v6126, 256
      %v6129 = vadd.s32 %v6126, 384
      %v6130 = vadd.s32 %v6126, 512
      %v6131 = vadd.s32 %v6126, 640
      %v6132 = vadd.s32 %v6126, 768
      %v6133 = vadd.s32 %v6126, 896
      %v6134 = vld [vmem:[#allocation2] sm:$0xff]
      %v6135 = vld [vmem:[#allocation2 + $0x8] sm:$0xff]
      %v6136 = vld [vmem:[#allocation2 + $0x10] sm:$0xff]
      %v6137 = vld [vmem:[#allocation2 + $0x18] sm:$0xff]
      %v6138 = vld [vmem:[#allocation2 + $0x20] sm:$0xff]
      %v6139 = vld [vmem:[#allocation2 + $0x28] sm:$0xff]
      %v6140 = vld [vmem:[#allocation2 + $0x30] sm:$0xff]
      %v6141 = vld [vmem:[#allocation2 + $0x38] sm:$0xff]
      %v6142 = vld [vmem:[#allocation2 + $0x40] sm:$0xff]
      %v6143 = vld [vmem:[#allocation2 + $0x48] sm:$0xff]
      %v6144 = vld [vmem:[#allocation2 + $0x50] sm:$0xff]
      %v6145 = vld [vmem:[#allocation2 + $0x58] sm:$0xff]
      %v6146 = vld [vmem:[#allocation2 + $0x60] sm:$0xff]
      %v6147 = vld [vmem:[#allocation2 + $0x68] sm:$0xff]
      %v6148 = vld [vmem:[#allocation2 + $0x70] sm:$0xff]
      %v6149 = vld [vmem:[#allocation2 + $0x78] sm:$0xff]
      %v6150 = vld [vmem:[#allocation2 + $0x80] sm:$0xff]
      %v6151 = vld [vmem:[#allocation2 + $0x88] sm:$0xff]
      %v6152 = vld [vmem:[#allocation2 + $0x90] sm:$0xff]
      %v6153 = vld [vmem:[#allocation2 + $0x98] sm:$0xff]
      %v6154 = vld [vmem:[#allocation2 + $0xa0] sm:$0xff]
      %v6155 = vld [vmem:[#allocation2 + $0xa8] sm:$0xff]
      %v6156 = vld [vmem:[#allocation2 + $0xb0] sm:$0xff]
      %v6157 = vld [vmem:[#allocation2 + $0xb8] sm:$0xff]
      %v6158 = vld [vmem:[#allocation2 + $0xc0] sm:$0xff]
      %v6159 = vld [vmem:[#allocation2 + $0xc8] sm:$0xff]
      %v6160 = vld [vmem:[#allocation2 + $0xd0] sm:$0xff]
      %v6161 = vld [vmem:[#allocation2 + $0xd8] sm:$0xff]
      %v6162 = vld [vmem:[#allocation2 + $0xe0] sm:$0xff]
      %v6163 = vld [vmem:[#allocation2 + $0xe8] sm:$0xff]
      %v6164 = vld [vmem:[#allocation2 + $0xf0] sm:$0xff]
      %v6165 = vld [vmem:[#allocation2 + $0xf8] sm:$0xff]
      %v6166 = vld [vmem:[%s2] sm:$0xff]
      %v6167 = vld [vmem:[%s2 + $0x8] sm:$0xff]
      %v6168 = vld [vmem:[%s2 + $0x10] sm:$0xff]
      %v6169 = vld [vmem:[%s2 + $0x18] sm:$0xff]
      %6171 = vset.pattern.permute.xlu0 0
      %6172 = vperm.xlu0 %6171, %v6166
      %v6173 = vpop.permute.xlu0 %6172
      %6176 = vset.pattern.permute.xlu0 0
      %6177 = vperm.xlu0 %6176, %v6167
      %v6178 = vpop.permute.xlu0 %6177
      %6181 = vset.pattern.permute.xlu0 0
      %6182 = vperm.xlu0 %6181, %v6168
      %v6183 = vpop.permute.xlu0 %6182
      %6186 = vset.pattern.permute.xlu0 0
      %6187 = vperm.xlu0 %6186, %v6169
      %v6188 = vpop.permute.xlu0 %6187
      %v6190 = vadd.f32 %v6134, %v6173
      %v6191 = vadd.f32 %v6135, %v6173
      %v6192 = vadd.f32 %v6136, %v6173
      %v6193 = vadd.f32 %v6137, %v6173
      %v6194 = vadd.f32 %v6138, %v6173
      %v6195 = vadd.f32 %v6139, %v6173
      %v6196 = vadd.f32 %v6140, %v6173
      %v6197 = vadd.f32 %v6141, %v6173
      %v6198 = vadd.f32 %v6142, %v6178
      %v6199 = vadd.f32 %v6143, %v6178
      %v6200 = vadd.f32 %v6144, %v6178
      %v6201 = vadd.f32 %v6145, %v6178
      %v6202 = vadd.f32 %v6146, %v6178
      %v6203 = vadd.f32 %v6147, %v6178
      %v6204 = vadd.f32 %v6148, %v6178
      %v6205 = vadd.f32 %v6149, %v6178
      %v6206 = vadd.f32 %v6150, %v6183
      %v6207 = vadd.f32 %v6151, %v6183
      %v6208 = vadd.f32 %v6152, %v6183
      %v6209 = vadd.f32 %v6153, %v6183
      %v6210 = vadd.f32 %v6154, %v6183
      %v6211 = vadd.f32 %v6155, %v6183
      %v6212 = vadd.f32 %v6156, %v6183
      %v6213 = vadd.f32 %v6157, %v6183
      %v6214 = vadd.f32 %v6158, %v6188
      %v6215 = vadd.f32 %v6159, %v6188
      %v6216 = vadd.f32 %v6160, %v6188
      %v6217 = vadd.f32 %v6161, %v6188
      %v6218 = vadd.f32 %v6162, %v6188
      %v6219 = vadd.f32 %v6163, %v6188
      %v6220 = vadd.f32 %v6164, %v6188
      %v6221 = vadd.f32 %v6165, %v6188
      %v6222 = vmax.f32 %v6190, 0.0
      %v6223 = vmax.f32 %v6191, 0.0
      %v6224 = vmax.f32 %v6192, 0.0
      %v6225 = vmax.f32 %v6193, 0.0
      %v6226 = vmax.f32 %v6194, 0.0
      %v6227 = vmax.f32 %v6195, 0.0
      %v6228 = vmax.f32 %v6196, 0.0
      %v6229 = vmax.f32 %v6197, 0.0
      %v6230 = vmax.f32 %v6198, 0.0
      %v6231 = vmax.f32 %v6199, 0.0
      %v6232 = vmax.f32 %v6200, 0.0
      %v6233 = vmax.f32 %v6201, 0.0
      %v6234 = vmax.f32 %v6202, 0.0
      %v6235 = vmax.f32 %v6203, 0.0
      %v6236 = vmax.f32 %v6204, 0.0
      %v6237 = vmax.f32 %v6205, 0.0
      %v6238 = vmax.f32 %v6206, 0.0
      %v6239 = vmax.f32 %v6207, 0.0
      %v6240 = vmax.f32 %v6208, 0.0
      %v6241 = vmax.f32 %v6209, 0.0
      %v6242 = vmax.f32 %v6210, 0.0
      %v6243 = vmax.f32 %v6211, 0.0
      %v6244 = vmax.f32 %v6212, 0.0
      %v6245 = vmax.f32 %v6213, 0.0
      %v6246 = vmax.f32 %v6214, 0.0
      %v6247 = vmax.f32 %v6215, 0.0
      %v6248 = vmax.f32 %v6216, 0.0
      %v6249 = vmax.f32 %v6217, 0.0
      %v6250 = vmax.f32 %v6218, 0.0
      %v6251 = vmax.f32 %v6219, 0.0
      %v6252 = vmax.f32 %v6220, 0.0
      %v6253 = vmax.f32 %v6221, 0.0
      %vm6254 = vcmp.lt.s32.totalorder %v6126, 961
      %vm6255 = vcmp.lt.s32.totalorder %v6127, 961
      %vm6256 = vcmp.lt.s32.totalorder %v6128, 961
      %vm6257 = vcmp.lt.s32.totalorder %v6129, 961
      %vm6258 = vcmp.lt.s32.totalorder %v6130, 961
      %vm6259 = vcmp.lt.s32.totalorder %v6131, 961
      %vm6260 = vcmp.lt.s32.totalorder %v6132, 961
      %vm6261 = vcmp.lt.s32.totalorder %v6133, 961
      %v6262 = vsel %vm6254, %v6222, 0.0
      %v6263 = vsel %vm6255, %v6223, 0.0
      %v6264 = vsel %vm6256, %v6224, 0.0
      %v6265 = vsel %vm6257, %v6225, 0.0
      %v6266 = vsel %vm6258, %v6226, 0.0
      %v6267 = vsel %vm6259, %v6227, 0.0
      %v6268 = vsel %vm6260, %v6228, 0.0
      %v6269 = vsel %vm6261, %v6229, 0.0
      %v6270 = vsel %vm6254, %v6230, 0.0
      %v6271 = vsel %vm6255, %v6231, 0.0
      %v6272 = vsel %vm6256, %v6232, 0.0
      %v6273 = vsel %vm6257, %v6233, 0.0
      %v6274 = vsel %vm6258, %v6234, 0.0
      %v6275 = vsel %vm6259, %v6235, 0.0
      %v6276 = vsel %vm6260, %v6236, 0.0
      %v6277 = vsel %vm6261, %v6237, 0.0
      %v6278 = vsel %vm6254, %v6238, 0.0
      %v6279 = vsel %vm6255, %v6239, 0.0
      %v6280 = vsel %vm6256, %v6240, 0.0
      %v6281 = vsel %vm6257, %v6241, 0.0
      %v6282 = vsel %vm6258, %v6242, 0.0
      %v6283 = vsel %vm6259, %v6243, 0.0
      %v6284 = vsel %vm6260, %v6244, 0.0
      %v6285 = vsel %vm6261, %v6245, 0.0
      %v6286 = vsel %vm6254, %v6246, 0.0
      %v6287 = vsel %vm6255, %v6247, 0.0
      %v6288 = vsel %vm6256, %v6248, 0.0
      %v6289 = vsel %vm6257, %v6249, 0.0
      %v6290 = vsel %vm6258, %v6250, 0.0
      %v6291 = vsel %vm6259, %v6251, 0.0
      %v6292 = vsel %vm6260, %v6252, 0.0
      %v6293 = vsel %vm6261, %v6253, 0.0
      %v6294 = vpack.c.bf16 %v6270, %v6262
      %v6295 = vpack.c.bf16 %v6271, %v6263
      %v6296 = vpack.c.bf16 %v6272, %v6264
      %v6297 = vpack.c.bf16 %v6273, %v6265
      %v6298 = vpack.c.bf16 %v6274, %v6266
      %v6299 = vpack.c.bf16 %v6275, %v6267
      %v6300 = vpack.c.bf16 %v6276, %v6268
      %v6301 = vpack.c.bf16 %v6277, %v6269
      %v6302 = vpack.c.bf16 %v6286, %v6278
      %v6303 = vpack.c.bf16 %v6287, %v6279
      %v6304 = vpack.c.bf16 %v6288, %v6280
      %v6305 = vpack.c.bf16 %v6289, %v6281
      %v6306 = vpack.c.bf16 %v6290, %v6282
      %v6307 = vpack.c.bf16 %v6291, %v6283
      %v6308 = vpack.c.bf16 %v6292, %v6284
      %v6309 = vpack.c.bf16 %v6293, %v6285
      %v6326 = vunpack.c.l.b16 %v6294
      %v6327 = vunpack.c.l.b16 %v6295
      %v6328 = vunpack.c.l.b16 %v6296
      %v6329 = vunpack.c.l.b16 %v6297
      %v6330 = vunpack.c.l.b16 %v6298
      %v6331 = vunpack.c.l.b16 %v6299
      %v6332 = vunpack.c.l.b16 %v6300
      %v6333 = vunpack.c.l.b16 %v6301
      %v6334 = vunpack.c.h.b16 %v6294
      %v6335 = vunpack.c.h.b16 %v6295
      %v6336 = vunpack.c.h.b16 %v6296
      %v6337 = vunpack.c.h.b16 %v6297
      %v6338 = vunpack.c.h.b16 %v6298
      %v6339 = vunpack.c.h.b16 %v6299
      %v6340 = vunpack.c.h.b16 %v6300
      %v6341 = vunpack.c.h.b16 %v6301
      %v6342 = vunpack.c.l.b16 %v6302
      %v6343 = vunpack.c.l.b16 %v6303
      %v6344 = vunpack.c.l.b16 %v6304
      %v6345 = vunpack.c.l.b16 %v6305
      %v6346 = vunpack.c.l.b16 %v6306
      %v6347 = vunpack.c.l.b16 %v6307
      %v6348 = vunpack.c.l.b16 %v6308
      %v6349 = vunpack.c.l.b16 %v6309
      %v6350 = vunpack.c.h.b16 %v6302
      %v6351 = vunpack.c.h.b16 %v6303
      %v6352 = vunpack.c.h.b16 %v6304
      %v6353 = vunpack.c.h.b16 %v6305
      %v6354 = vunpack.c.h.b16 %v6306
      %v6355 = vunpack.c.h.b16 %v6307
      %v6356 = vunpack.c.h.b16 %v6308
      %v6357 = vunpack.c.h.b16 %v6309
      %v6358 = vpack.c.b16 %v6327, %v6326
      %v6359 = vpack.c.b16 %v6329, %v6328
      %v6360 = vpack.c.b16 %v6331, %v6330
      %v6361 = vpack.c.b16 %v6333, %v6332
      %v6362 = vpack.c.b16 %v6335, %v6334
      %v6363 = vpack.c.b16 %v6337, %v6336
      %v6364 = vpack.c.b16 %v6339, %v6338
      %v6365 = vpack.c.b16 %v6341, %v6340
      %v6366 = vpack.c.b16 %v6343, %v6342
      %v6367 = vpack.c.b16 %v6345, %v6344
      %v6368 = vpack.c.b16 %v6347, %v6346
      %v6369 = vpack.c.b16 %v6349, %v6348
      %v6370 = vpack.c.b16 %v6351, %v6350
      %v6371 = vpack.c.b16 %v6353, %v6352
      %v6372 = vpack.c.b16 %v6355, %v6354
      %v6373 = vpack.c.b16 %v6357, %v6356
      %6390 = vst [vmem:[%s205] sm:$0xff] %v6358
      %6391 = vst [vmem:[%s205 + $0x8] sm:$0xff] %v6359
      %6392 = vst [vmem:[%s205 + $0x10] sm:$0xff] %v6360
      %6393 = vst [vmem:[%s205 + $0x18] sm:$0xff] %v6361
      %6394 = vst [vmem:[%s205 + $0x20] sm:$0xff] %v6362
      %6395 = vst [vmem:[%s205 + $0x28] sm:$0xff] %v6363
      %6396 = vst [vmem:[%s205 + $0x30] sm:$0xff] %v6364
      %6397 = vst [vmem:[%s205 + $0x38] sm:$0xff] %v6365
      %6398 = vst [vmem:[%s205 + $0x40] sm:$0xff] %v6366
      %6399 = vst [vmem:[%s205 + $0x48] sm:$0xff] %v6367
      %6400 = vst [vmem:[%s205 + $0x50] sm:$0xff] %v6368
      %6401 = vst [vmem:[%s205 + $0x58] sm:$0xff] %v6369
      %6402 = vst [vmem:[%s205 + $0x60] sm:$0xff] %v6370
      %6403 = vst [vmem:[%s205 + $0x68] sm:$0xff] %v6371
      %6404 = vst [vmem:[%s205 + $0x70] sm:$0xff] %v6372
      %6405 = vst [vmem:[%s205 + $0x78] sm:$0xff] %v6373
      %v6406 = vadd.f32 %v6262, %v6263
      %v6407 = vadd.f32 %v6406, %v6264
      %v6408 = vadd.f32 %v6407, %v6265
      %v6409 = vadd.f32 %v6408, %v6266
      %v6410 = vadd.f32 %v6409, %v6267
      %v6411 = vadd.f32 %v6410, %v6268
      %v6412 = vadd.f32 %v6411, %v6269
      %6413 = vadd.xlane.f32.xlu0 %v6412
      %v6414 = vpop.xlane.xlu0 %6413
      %v6415 = vadd.f32 %v6270, %v6271
      %v6416 = vadd.f32 %v6415, %v6272
      %v6417 = vadd.f32 %v6416, %v6273
      %v6418 = vadd.f32 %v6417, %v6274
      %v6419 = vadd.f32 %v6418, %v6275
      %v6420 = vadd.f32 %v6419, %v6276
      %v6421 = vadd.f32 %v6420, %v6277
      %6422 = vadd.xlane.f32.xlu0 %v6421
      %v6423 = vpop.xlane.xlu0 %6422
      %v6424 = vadd.f32 %v6278, %v6279
      %v6425 = vadd.f32 %v6424, %v6280
      %v6426 = vadd.f32 %v6425, %v6281
      %v6427 = vadd.f32 %v6426, %v6282
      %v6428 = vadd.f32 %v6427, %v6283
      %v6429 = vadd.f32 %v6428, %v6284
      %v6430 = vadd.f32 %v6429, %v6285
      %6431 = vadd.xlane.f32.xlu0 %v6430
      %v6432 = vpop.xlane.xlu0 %6431
      %v6433 = vadd.f32 %v6286, %v6287
      %v6434 = vadd.f32 %v6433, %v6288
      %v6435 = vadd.f32 %v6434, %v6289
      %v6436 = vadd.f32 %v6435, %v6290
      %v6437 = vadd.f32 %v6436, %v6291
      %v6438 = vadd.f32 %v6437, %v6292
      %v6439 = vadd.f32 %v6438, %v6293
      %6440 = vadd.xlane.f32.xlu0 %v6439
      %v6441 = vpop.xlane.xlu0 %6440
      %vm6442 = vcmask 7168
      %6443 = vst.msk [vmem:[%s210] sm:$0xff] %vm6442, %v6414
      %6444 = vst.msk [vmem:[%s210 + $0x8] sm:$0xff] %vm6442, %v6423
      %6445 = vst.msk [vmem:[%s210 + $0x10] sm:$0xff] %vm6442, %v6432
      %6446 = vst.msk [vmem:[%s210 + $0x18] sm:$0xff] %vm6442, %v6441
      %v6447 = vmul.f32 %v6262, %v6262
      %v6448 = vmul.f32 %v6263, %v6263
      %v6449 = vmul.f32 %v6264, %v6264
      %v6450 = vmul.f32 %v6265, %v6265
      %v6451 = vmul.f32 %v6266, %v6266
      %v6452 = vmul.f32 %v6267, %v6267
      %v6453 = vmul.f32 %v6268, %v6268
      %v6454 = vmul.f32 %v6269, %v6269
      %v6455 = vmul.f32 %v6270, %v6270
      %v6456 = vmul.f32 %v6271, %v6271
      %v6457 = vmul.f32 %v6272, %v6272
      %v6458 = vmul.f32 %v6273, %v6273
      %v6459 = vmul.f32 %v6274, %v6274
      %v6460 = vmul.f32 %v6275, %v6275
      %v6461 = vmul.f32 %v6276, %v6276
      %v6462 = vmul.f32 %v6277, %v6277
      %v6463 = vmul.f32 %v6278, %v6278
      %v6464 = vmul.f32 %v6279, %v6279
      %v6465 = vmul.f32 %v6280, %v6280
      %v6466 = vmul.f32 %v6281, %v6281
      %v6467 = vmul.f32 %v6282, %v6282
      %v6468 = vmul.f32 %v6283, %v6283
      %v6469 = vmul.f32 %v6284, %v6284
      %v6470 = vmul.f32 %v6285, %v6285
      %v6471 = vmul.f32 %v6286, %v6286
      %v6472 = vmul.f32 %v6287, %v6287
      %v6473 = vmul.f32 %v6288, %v6288
      %v6474 = vmul.f32 %v6289, %v6289
      %v6475 = vmul.f32 %v6290, %v6290
      %v6476 = vmul.f32 %v6291, %v6291
      %v6477 = vmul.f32 %v6292, %v6292
      %v6478 = vmul.f32 %v6293, %v6293
      %v6479 = vadd.f32 %v6447, %v6448
      %v6480 = vadd.f32 %v6479, %v6449
      %v6481 = vadd.f32 %v6480, %v6450
      %v6482 = vadd.f32 %v6481, %v6451
      %v6483 = vadd.f32 %v6482, %v6452
      %v6484 = vadd.f32 %v6483, %v6453
      %v6485 = vadd.f32 %v6484, %v6454
      %6486 = vadd.xlane.f32.xlu0 %v6485
      %v6487 = vpop.xlane.xlu0 %6486
      %v6488 = vadd.f32 %v6455, %v6456
      %v6489 = vadd.f32 %v6488, %v6457
      %v6490 = vadd.f32 %v6489, %v6458
      %v6491 = vadd.f32 %v6490, %v6459
      %v6492 = vadd.f32 %v6491, %v6460
      %v6493 = vadd.f32 %v6492, %v6461
      %v6494 = vadd.f32 %v6493, %v6462
      %6495 = vadd.xlane.f32.xlu0 %v6494
      %v6496 = vpop.xlane.xlu0 %6495
      %v6497 = vadd.f32 %v6463, %v6464
      %v6498 = vadd.f32 %v6497, %v6465
      %v6499 = vadd.f32 %v6498, %v6466
      %v6500 = vadd.f32 %v6499, %v6467
      %v6501 = vadd.f32 %v6500, %v6468
      %v6502 = vadd.f32 %v6501, %v6469
      %v6503 = vadd.f32 %v6502, %v6470
      %6504 = vadd.xlane.f32.xlu0 %v6503
      %v6505 = vpop.xlane.xlu0 %6504
      %v6506 = vadd.f32 %v6471, %v6472
      %v6507 = vadd.f32 %v6506, %v6473
      %v6508 = vadd.f32 %v6507, %v6474
      %v6509 = vadd.f32 %v6508, %v6475
      %v6510 = vadd.f32 %v6509, %v6476
      %v6511 = vadd.f32 %v6510, %v6477
      %v6512 = vadd.f32 %v6511, %v6478
      %6513 = vadd.xlane.f32.xlu0 %v6512
      %v6514 = vpop.xlane.xlu0 %6513
      %vm6515 = vcmask 15368
      %6516 = vst.msk [vmem:[%s210] sm:$0xff] %vm6515, %v6487
      %6517 = vst.msk [vmem:[%s210 + $0x8] sm:$0xff] %vm6515, %v6496
      %6518 = vst.msk [vmem:[%s210 + $0x10] sm:$0xff] %vm6515, %v6505
      %6519 = vst.msk [vmem:[%s210 + $0x18] sm:$0xff] %vm6515, %v6514
      %p6520 = scmp.lt.s32.totalorder %s16, 1
      %s6521 = scalar_select %p6520, %s16, 1
      %s6522 = smul.addr %s6521, 32
      %s6523 = smul.addr %s6522, 4
      %s6524 = scalar_lea.vmem %s3, %s6523
      %p6525 = scmp.lt.s32.totalorder %s16, 1
      %s6526 = scalar_select %p6525, %s16, 1
      %s6527 = smul.addr %s6526, 4
      %s6528 = smul.addr %s6527, 8
      %s6529 = scalar_lea.vmem %s4, %s6528
      // Predicated region
      $region33: #{actor_critic_tag_forward.2} parent=31 // pred_check
        %p6530 = pneg %p102
      $region34: #{actor_critic_tag_forward.2} parent=31 // pred_check_branch
        %6532 = sbr.rel (%p6530) target = $region36
      $region35: #{actor_critic_tag_forward.2} parent=31 // pred_region
        _
      $region36: #{actor_critic_tag_forward.2} parent=31 // pred_fallthru
        _
      // Predicated region
      $region37: #{actor_critic_tag_forward.2} parent=31 // pred_check
        %p6533 = pneg %p128
      $region38: #{actor_critic_tag_forward.2} parent=31 // pred_check_branch
        %6535 = sbr.rel (%p6533) target = $region40
      $region39: #{actor_critic_tag_forward.2} parent=31 // pred_region
        _
      $region40: #{actor_critic_tag_forward.2} parent=31 // pred_fallthru
        _
    $region32: #{actor_critic_tag_forward.2} parent=5 // pred_fallthru
      _
    %p6536 = scmp.le.s32.totalorder 2, %s11
    // Predicated region
    $region41: #{actor_critic_tag_forward.2} parent=5 // pred_check
      %p6537 = pneg %p6536
    $region42: #{actor_critic_tag_forward.2} parent=5 // pred_check_branch
      %6539 = sbr.rel (%p6537) target = $region44
    $region43: #{actor_critic_tag_forward.2} parent=5 // pred_region
      %s6540 = ssub.s32 %s11, 2
      // Predicated region
      $region45: #{actor_critic_tag_forward.2} parent=43 // pred_check
        %p6541 = pneg %p108
      $region46: #{actor_critic_tag_forward.2} parent=43 // pred_check_branch
        %6543 = sbr.rel (%p6541) target = $region48
      $region47: #{actor_critic_tag_forward.2} parent=43 // pred_region
        %p6544 = scmp.lt.s32.totalorder %s17, 1
        %s6545 = scalar_select %p6544, %s17, 1
        %s6546 = smul.addr %s6545, 32
        %s6547 = smul.addr %s6546, 4
        %s6548 = scalar_lea.vmem %s3, %s6547
      $region48: #{actor_critic_tag_forward.2} parent=43 // pred_fallthru
        _
      // Predicated region
      $region49: #{actor_critic_tag_forward.2} parent=43 // pred_check
        %p6549 = pneg %p134
      $region50: #{actor_critic_tag_forward.2} parent=43 // pred_check_branch
        %6551 = sbr.rel (%p6549) target = $region52
      $region51: #{actor_critic_tag_forward.2} parent=43 // pred_region
        %p6552 = scmp.lt.s32.totalorder %s17, 1
        %s6553 = scalar_select %p6552, %s17, 1
        %s6554 = smul.addr %s6553, 4
        %s6555 = smul.addr %s6554, 8
        %s6556 = scalar_lea.vmem %s4, %s6555
      $region52: #{actor_critic_tag_forward.2} parent=43 // pred_fallthru
        _
    $region44: #{actor_critic_tag_forward.2} parent=5 // pred_fallthru
      _
  $region6: #{actor_critic_tag_forward.2} parent=0 // loop_footer
    %s15 = sadd.s32 1, %s11
  $region7: #{actor_critic_tag_forward.2} parent=0 // loop_footer_branch
    %10 = sbr.rel target = $region3
  $region8: #{actor_critic_tag_forward.2} parent=0 // loop_exit
    _

// kernel: actor_critic_tag_forward.3
$region0: #{actor_critic_tag_forward.3}
  #allocation0 [shape = 'u32[]', space=smem, size = 0x4, offset = 0x4, fixed_abs, tag = 'smem constant byte address 0x4 - core index']
  #allocation1 [shape = 'u32[144,128]{1,0:T(1,128)}', space=vmem, size = 0x12000, scoped, tag = 'internal scratch']
  #allocation2 [shape = 'f32[2,128]{1,0:T(2,128)}', space=vmem, size = 0x400, scoped, tag = 'scratch operand']
  %s0 = inlined_call_operand.vmem [shape: bf16[2,32768], index: 0, kind: input, shape index: {}]
  %s1 = inlined_call_operand.vmem [shape: s8[32768,128], index: 1, kind: input, shape index: {}]
  %s2 = inlined_call_operand.vmem [shape: f32[2,2,128], index: 2, kind: output, shape index: {}]
  %s3 = sld [smem:[#allocation0]]
  $region49: #{actor_critic_tag_forward.3} parent=0
    _
  %s5 = ssub.s32 1, %s3
  %s6 = scalar_select 0, %s5, %s3
  loop: start=0, step=1, limit=6
  $region2: #{actor_critic_tag_forward.3} parent=0 // loop_pre_header
    _
  $region3: #{actor_critic_tag_forward.3} parent=0 // loop_header
    %s8 = sphi 0, %s12
    %p9 = scmp.ge.s32.totalorder %s8, 6
    %s15 = sphi 0, %s27
    %s16 = sphi 0, %s23
    %s17 = sphi 0, %s15
    %s18 = sphi 0, %s16
    %s19 = sphi 0, %s17
    %s20 = sphi 0, %s18
    %s34 = sphi 0, %s36
    %s37 = sphi 0, %s34
    %s38 = sphi 0, %s37
    %s54 = sphi 0, %s38
    %s64 = sphi 0, %s66
    %s67 = sphi 0, %s64
    %s68 = sphi 0, %s67
    %s84 = sphi 0, %s68
    %s90 = sphi 0, %s92
    %s93 = sphi 0, %s90
    %s94 = sphi 0, %s93
    %s110 = sphi 0, %s94
  $region4: #{actor_critic_tag_forward.3} parent=0 // loop_header_branch
    %11 = sbr.rel (%p9) target = $region8
  $region5: #{actor_critic_tag_forward.3} parent=0 // loop_body
    %s13 = ssub.s32 %s8, 1
    %s14 = ssub.s32 %s8, 2
    %s21 = sadd.s32 1, %s16
    %p22 = scmp.ge.s32.totalorder %s21, 2
    %s23 = scalar_select %p22, 0, %s21
    %s24 = sadd.s32 1, %s15
    %s25 = scalar_select %p22, %s24, %s15
    %p26 = scmp.ge.s32.totalorder %s25, 2
    %s27 = scalar_select %p26, 0, %s25
    %s28 = smul.u32 %s15, 2
    %s29 = sadd.s32 %s28, %s16
    %s30 = smul.u32 %s27, 2
    %s31 = sadd.s32 %s30, %s23
    %s32 = ssub.s32 %s29, %s31
    %p33 = scmp.eq.s32.totalorder %s32, 0
    %s35 = sadd.s32 %s34, 1
    %s36 = scalar_select %p33, %s34, %s35
    %p39 = pneg %p33
    %p40 = scmp.eq.s32.totalorder %s8, 3
    %p41 = por %p39, %p40
    %p42 = scmp.ne.s32.totalorder %s34, %s37
    %p43 = scmp.eq.s32.totalorder %s8, 0
    %p44 = por %p42, %p43
    %p45 = scmp.ne.s32.totalorder %s34, %s37
    %p46 = scmp.eq.s32.totalorder %s13, 3
    %p47 = por %p45, %p46
    %p48 = scmp.ne.s32.totalorder %s37, %s38
    %p49 = scmp.eq.s32.totalorder %s13, 0
    %p50 = por %p48, %p49
    %p51 = scmp.ne.s32.totalorder %s37, %s38
    %p52 = scmp.eq.s32.totalorder %s14, 3
    %p53 = por %p51, %p52
    %p55 = scmp.ne.s32.totalorder %s38, %s54
    %p56 = scmp.eq.s32.totalorder %s14, 0
    %p57 = por %p55, %p56
    %s58 = smul.u32 %s15, 2
    %s59 = sadd.s32 %s58, %s16
    %s60 = smul.u32 %s27, 2
    %s61 = sadd.s32 %s60, %s23
    %s62 = ssub.s32 %s59, %s61
    %p63 = scmp.eq.s32.totalorder %s62, 0
    %s65 = sadd.s32 %s64, 1
    %s66 = scalar_select %p63, %s64, %s65
    %p69 = pneg %p63
    %p70 = scmp.eq.s32.totalorder %s8, 3
    %p71 = por %p69, %p70
    %p72 = scmp.ne.s32.totalorder %s64, %s67
    %p73 = scmp.eq.s32.totalorder %s8, 0
    %p74 = por %p72, %p73
    %p75 = scmp.ne.s32.totalorder %s64, %s67
    %p76 = scmp.eq.s32.totalorder %s13, 3
    %p77 = por %p75, %p76
    %p78 = scmp.ne.s32.totalorder %s67, %s68
    %p79 = scmp.eq.s32.totalorder %s13, 0
    %p80 = por %p78, %p79
    %p81 = scmp.ne.s32.totalorder %s67, %s68
    %p82 = scmp.eq.s32.totalorder %s14, 3
    %p83 = por %p81, %p82
    %p85 = scmp.ne.s32.totalorder %s68, %s84
    %p86 = scmp.eq.s32.totalorder %s14, 0
    %p87 = por %p85, %p86
    %s88 = ssub.s32 %s15, %s27
    %p89 = scmp.eq.s32.totalorder %s88, 0
    %s91 = sadd.s32 %s90, 1
    %s92 = scalar_select %p89, %s90, %s91
    %p95 = pneg %p89
    %p96 = scmp.eq.s32.totalorder %s8, 3
    %p97 = por %p95, %p96
    %p98 = scmp.ne.s32.totalorder %s90, %s93
    %p99 = scmp.eq.s32.totalorder %s8, 0
    %p100 = por %p98, %p99
    %p101 = scmp.ne.s32.totalorder %s90, %s93
    %p102 = scmp.eq.s32.totalorder %s13, 3
    %p103 = por %p101, %p102
    %p104 = scmp.ne.s32.totalorder %s93, %s94
    %p105 = scmp.eq.s32.totalorder %s13, 0
    %p106 = por %p104, %p105
    %p107 = scmp.ne.s32.totalorder %s93, %s94
    %p108 = scmp.eq.s32.totalorder %s14, 3
    %p109 = por %p107, %p108
    %p111 = scmp.ne.s32.totalorder %s94, %s110
    %p112 = scmp.eq.s32.totalorder %s14, 0
    %p113 = por %p111, %p112
    %p114 = scmp.le.s32.totalorder 1, %s8
    %p115 = scmp.lt.s32.totalorder %s8, 5
    %p116 = pnand %p114, %p115
    %p117 = pneg %p116
    // Predicated region
    $region9: #{actor_critic_tag_forward.3} parent=5 // pred_check
      _
    $region10: #{actor_critic_tag_forward.3} parent=5 // pred_check_branch
      %119 = sbr.rel (%p116) target = $region12
    $region11: #{actor_critic_tag_forward.3} parent=5 // pred_region
      %s120 = ssub.s32 %s8, 1
    $region12: #{actor_critic_tag_forward.3} parent=5 // pred_fallthru
      _
    %p121 = scmp.lt.s32.totalorder %s8, 4
    // Predicated region
    $region13: #{actor_critic_tag_forward.3} parent=5 // pred_check
      %p122 = pneg %p121
    $region14: #{actor_critic_tag_forward.3} parent=5 // pred_check_branch
      %124 = sbr.rel (%p122) target = $region16
    $region15: #{actor_critic_tag_forward.3} parent=5 // pred_region
      // Predicated region
      $region17: #{actor_critic_tag_forward.3} parent=15 // pred_check
        %p125 = pneg %p44
      $region18: #{actor_critic_tag_forward.3} parent=15 // pred_check_branch
        %127 = sbr.rel (%p125) target = $region20
      $region19: #{actor_critic_tag_forward.3} parent=15 // pred_region
        %s128 = smul.u32 %s15, 2
        %s129 = sadd.s32 %s128, %s16
        %s130 = smul.u32 64, %s129
        %p131 = scmp.lt.s32.totalorder %s130, 255
        %s132 = scalar_select %p131, %s130, 255
        %s133 = scalar_lea.vmem %s0, %s132
        %s134 = smul.u32 %s15, 2
        %s135 = sadd.s32 %s134, %s16
        %s136 = smul.u32 64, %s135
      $region20: #{actor_critic_tag_forward.3} parent=15 // pred_fallthru
        _
      // Predicated region
      $region21: #{actor_critic_tag_forward.3} parent=15 // pred_check
        %p137 = pneg %p74
      $region22: #{actor_critic_tag_forward.3} parent=15 // pred_check_branch
        %139 = sbr.rel (%p137) target = $region24
      $region23: #{actor_critic_tag_forward.3} parent=15 // pred_region
        %s140 = smul.u32 %s15, 2
        %s141 = sadd.s32 %s140, %s16
        %s142 = smul.u32 256, %s141
        %p143 = scmp.lt.s32.totalorder %s142, 1023
        %s144 = scalar_select %p143, %s142, 1023
        %s145 = smul.addr %s144, 8
        %s146 = scalar_lea.vmem %s1, %s145
        %s147 = smul.u32 %s15, 2
        %s148 = sadd.s32 %s147, %s16
        %s149 = smul.u32 256, %s148
      $region24: #{actor_critic_tag_forward.3} parent=15 // pred_fallthru
        _
    $region16: #{actor_critic_tag_forward.3} parent=5 // pred_fallthru
      _
    %p150 = scmp.le.s32.totalorder 1, %s8
    %p151 = scmp.lt.s32.totalorder %s8, 5
    %p152 = pnand %p150, %p151
    %p153 = pneg %p152
    // Predicated region
    $region25: #{actor_critic_tag_forward.3} parent=5 // pred_check
      _
    $region26: #{actor_critic_tag_forward.3} parent=5 // pred_check_branch
      %155 = sbr.rel (%p152) target = $region28
    $region27: #{actor_critic_tag_forward.3} parent=5 // pred_region
      %s156 = ssub.s32 %s8, 1
      %s157 = smul.u32 %s17, 2
      %s158 = sadd.s32 %s157, %s18
      %s159 = smul.u32 64, %s158
      %p160 = scmp.lt.s32.totalorder %s159, 255
      %s161 = scalar_select %p160, %s159, 255
      %s162 = scalar_lea.vmem %s0, %s161
      %p163 = pneg %p50
      %p164 = pneg %p47
      %s165 = smul.u32 %s17, 2
      %s166 = sadd.s32 %s165, %s18
      %s167 = smul.u32 256, %s166
      %p168 = scmp.lt.s32.totalorder %s167, 1023
      %s169 = scalar_select %p168, %s167, 1023
      %s170 = smul.addr %s169, 8
      %s171 = scalar_lea.vmem %s1, %s170
      %p172 = pneg %p80
      %p173 = pneg %p77
      %p174 = pneg %p106
      %p175 = pneg %p103
      %p176 = scmp.lt.s32.totalorder %s17, 1
      %s177 = scalar_select %p176, %s17, 1
      %s178 = smul.addr %s177, 2
      %s179 = scalar_lea.vmem %s2, %s178
      %s180 = smul.u32 %s17, 2
      %s181 = sadd.s32 %s180, %s18
      %s182 = smul.u32 64, %s181
      %p183 = scmp.lt.s32.totalorder %s182, 255
      %s184 = scalar_select %p183, %s182, 255
      %s185 = scalar_lea.vmem %s0, %s184
      %s186 = smul.u32 %s17, 2
      %s187 = sadd.s32 %s186, %s18
      %s188 = smul.u32 64, %s187
      %s189 = smul.u32 %s17, 2
      %s190 = sadd.s32 %s189, %s18
      %s191 = smul.u32 256, %s190
      %p192 = scmp.lt.s32.totalorder %s191, 1023
      %s193 = scalar_select %p192, %s191, 1023
      %s194 = smul.addr %s193, 8
      %s195 = scalar_lea.vmem %s1, %s194
      %s196 = smul.u32 %s17, 2
      %s197 = sadd.s32 %s196, %s18
      %s198 = smul.u32 256, %s197
      %p199 = scmp.lt.s32.totalorder %s17, 1
      %s200 = scalar_select %p199, %s17, 1
      %s201 = smul.addr %s200, 2
      %s202 = scalar_lea.vmem %s2, %s201
      %p204 = scmp.eq.s32.totalorder %s18, 0
      // Predicated region
      $region29: #{actor_critic_tag_forward.3} parent=27 // pred_check
        %p205 = pneg %p204
      $region30: #{actor_critic_tag_forward.3} parent=27 // pred_check_branch
        %207 = sbr.rel (%p205) target = $region32
      $region31: #{actor_critic_tag_forward.3} parent=27 // pred_region
        %208 = vst [vmem:[#allocation2] sm:$0x3] 0.0
      $region32: #{actor_critic_tag_forward.3} parent=27 // pred_fallthru
        _
      %v209 = vld [vmem:[%s195] sm:$0xff]
      %v210 = vld [vmem:[%s195 + $0x8] sm:$0xff]
      %v211 = vld [vmem:[%s195 + $0x10] sm:$0xff]
      %v212 = vld [vmem:[%s195 + $0x18] sm:$0xff]
      %v213 = vld [vmem:[%s195 + $0x20] sm:$0xff]
      %v214 = vld [vmem:[%s195 + $0x28] sm:$0xff]
      %v215 = vld [vmem:[%s195 + $0x30] sm:$0xff]
      %v216 = vld [vmem:[%s195 + $0x38] sm:$0xff]
      %v217 = vld [vmem:[%s195 + $0x40] sm:$0xff]
      %v218 = vld [vmem:[%s195 + $0x48] sm:$0xff]
      %v219 = vld [vmem:[%s195 + $0x50] sm:$0xff]
      %v220 = vld [vmem:[%s195 + $0x58] sm:$0xff]
      %v221 = vld [vmem:[%s195 + $0x60] sm:$0xff]
      %v222 = vld [vmem:[%s195 + $0x68] sm:$0xff]
      %v223 = vld [vmem:[%s195 + $0x70] sm:$0xff]
      %v224 = vld [vmem:[%s195 + $0x78] sm:$0xff]
      %v225 = vld [vmem:[%s195 + $0x80] sm:$0xff]
      %v226 = vld [vmem:[%s195 + $0x88] sm:$0xff]
      %v227 = vld [vmem:[%s195 + $0x90] sm:$0xff]
      %v228 = vld [vmem:[%s195 + $0x98] sm:$0xff]
      %v229 = vld [vmem:[%s195 + $0xa0] sm:$0xff]
      %v230 = vld [vmem:[%s195 + $0xa8] sm:$0xff]
      %v231 = vld [vmem:[%s195 + $0xb0] sm:$0xff]
      %v232 = vld [vmem:[%s195 + $0xb8] sm:$0xff]
      %v233 = vld [vmem:[%s195 + $0xc0] sm:$0xff]
      %v234 = vld [vmem:[%s195 + $0xc8] sm:$0xff]
      %v235 = vld [vmem:[%s195 + $0xd0] sm:$0xff]
      %v236 = vld [vmem:[%s195 + $0xd8] sm:$0xff]
      %v237 = vld [vmem:[%s195 + $0xe0] sm:$0xff]
      %v238 = vld [vmem:[%s195 + $0xe8] sm:$0xff]
      %v239 = vld [vmem:[%s195 + $0xf0] sm:$0xff]
      %v240 = vld [vmem:[%s195 + $0xf8] sm:$0xff]
      %v241 = vld [vmem:[%s195 + $0x100] sm:$0xff]
      %v242 = vld [vmem:[%s195 + $0x108] sm:$0xff]
      %v243 = vld [vmem:[%s195 + $0x110] sm:$0xff]
      %v244 = vld [vmem:[%s195 + $0x118] sm:$0xff]
      %v245 = vld [vmem:[%s195 + $0x120] sm:$0xff]
      %v246 = vld [vmem:[%s195 + $0x128] sm:$0xff]
      %v247 = vld [vmem:[%s195 + $0x130] sm:$0xff]
      %v248 = vld [vmem:[%s195 + $0x138] sm:$0xff]
      %v249 = vld [vmem:[%s195 + $0x140] sm:$0xff]
      %v250 = vld [vmem:[%s195 + $0x148] sm:$0xff]
      %v251 = vld [vmem:[%s195 + $0x150] sm:$0xff]
      %v252 = vld [vmem:[%s195 + $0x158] sm:$0xff]
      %v253 = vld [vmem:[%s195 + $0x160] sm:$0xff]
      %v254 = vld [vmem:[%s195 + $0x168] sm:$0xff]
      %v255 = vld [vmem:[%s195 + $0x170] sm:$0xff]
      %v256 = vld [vmem:[%s195 + $0x178] sm:$0xff]
      %v257 = vld [vmem:[%s195 + $0x180] sm:$0xff]
      %v258 = vld [vmem:[%s195 + $0x188] sm:$0xff]
      %v259 = vld [vmem:[%s195 + $0x190] sm:$0xff]
      %v260 = vld [vmem:[%s195 + $0x198] sm:$0xff]
      %v261 = vld [vmem:[%s195 + $0x1a0] sm:$0xff]
      %v262 = vld [vmem:[%s195 + $0x1a8] sm:$0xff]
      %v263 = vld [vmem:[%s195 + $0x1b0] sm:$0xff]
      %v264 = vld [vmem:[%s195 + $0x1b8] sm:$0xff]
      %v265 = vld [vmem:[%s195 + $0x1c0] sm:$0xff]
      %v266 = vld [vmem:[%s195 + $0x1c8] sm:$0xff]
      %v267 = vld [vmem:[%s195 + $0x1d0] sm:$0xff]
      %v268 = vld [vmem:[%s195 + $0x1d8] sm:$0xff]
      %v269 = vld [vmem:[%s195 + $0x1e0] sm:$0xff]
      %v270 = vld [vmem:[%s195 + $0x1e8] sm:$0xff]
      %v271 = vld [vmem:[%s195 + $0x1f0] sm:$0xff]
      %v272 = vld [vmem:[%s195 + $0x1f8] sm:$0xff]
      %v273 = vunpack.c.l.s8.bf16 %v209
      %v274 = vunpack.c.h.s8.bf16 %v209
      %v275 = vunpack.c.l.s8.bf16 %v210
      %v276 = vunpack.c.h.s8.bf16 %v210
      %v277 = vunpack.c.l.s8.bf16 %v211
      %v278 = vunpack.c.h.s8.bf16 %v211
      %v279 = vunpack.c.l.s8.bf16 %v212
      %v280 = vunpack.c.h.s8.bf16 %v212
      %v281 = vunpack.c.l.s8.bf16 %v213
      %v282 = vunpack.c.h.s8.bf16 %v213
      %v283 = vunpack.c.l.s8.bf16 %v214
      %v284 = vunpack.c.h.s8.bf16 %v214
      %v285 = vunpack.c.l.s8.bf16 %v215
      %v286 = vunpack.c.h.s8.bf16 %v215
      %v287 = vunpack.c.l.s8.bf16 %v216
      %v288 = vunpack.c.h.s8.bf16 %v216
      %v289 = vunpack.c.l.s8.bf16 %v217
      %v290 = vunpack.c.h.s8.bf16 %v217
      %v291 = vunpack.c.l.s8.bf16 %v218
      %v292 = vunpack.c.h.s8.bf16 %v218
      %v293 = vunpack.c.l.s8.bf16 %v219
      %v294 = vunpack.c.h.s8.bf16 %v219
      %v295 = vunpack.c.l.s8.bf16 %v220
      %v296 = vunpack.c.h.s8.bf16 %v220
      %v297 = vunpack.c.l.s8.bf16 %v221
      %v298 = vunpack.c.h.s8.bf16 %v221
      %v299 = vunpack.c.l.s8.bf16 %v222
      %v300 = vunpack.c.h.s8.bf16 %v222
      %v301 = vunpack.c.l.s8.bf16 %v223
      %v302 = vunpack.c.h.s8.bf16 %v223
      %v303 = vunpack.c.l.s8.bf16 %v224
      %v304 = vunpack.c.h.s8.bf16 %v224
      %v305 = vunpack.c.l.s8.bf16 %v225
      %v306 = vunpack.c.h.s8.bf16 %v225
      %v307 = vunpack.c.l.s8.bf16 %v226
      %v308 = vunpack.c.h.s8.bf16 %v226
      %v309 = vunpack.c.l.s8.bf16 %v227
      %v310 = vunpack.c.h.s8.bf16 %v227
      %v311 = vunpack.c.l.s8.bf16 %v228
      %v312 = vunpack.c.h.s8.bf16 %v228
      %v313 = vunpack.c.l.s8.bf16 %v229
      %v314 = vunpack.c.h.s8.bf16 %v229
      %v315 = vunpack.c.l.s8.bf16 %v230
      %v316 = vunpack.c.h.s8.bf16 %v230
      %v317 = vunpack.c.l.s8.bf16 %v231
      %v318 = vunpack.c.h.s8.bf16 %v231
      %v319 = vunpack.c.l.s8.bf16 %v232
      %v320 = vunpack.c.h.s8.bf16 %v232
      %v321 = vunpack.c.l.s8.bf16 %v233
      %v322 = vunpack.c.h.s8.bf16 %v233
      %v323 = vunpack.c.l.s8.bf16 %v234
      %v324 = vunpack.c.h.s8.bf16 %v234
      %v325 = vunpack.c.l.s8.bf16 %v235
      %v326 = vunpack.c.h.s8.bf16 %v235
      %v327 = vunpack.c.l.s8.bf16 %v236
      %v328 = vunpack.c.h.s8.bf16 %v236
      %v329 = vunpack.c.l.s8.bf16 %v237
      %v330 = vunpack.c.h.s8.bf16 %v237
      %v331 = vunpack.c.l.s8.bf16 %v238
      %v332 = vunpack.c.h.s8.bf16 %v238
      %v333 = vunpack.c.l.s8.bf16 %v239
      %v334 = vunpack.c.h.s8.bf16 %v239
      %v335 = vunpack.c.l.s8.bf16 %v240
      %v336 = vunpack.c.h.s8.bf16 %v240
      %v337 = vunpack.c.l.s8.bf16 %v241
      %v338 = vunpack.c.h.s8.bf16 %v241
      %v339 = vunpack.c.l.s8.bf16 %v242
      %v340 = vunpack.c.h.s8.bf16 %v242
      %v341 = vunpack.c.l.s8.bf16 %v243
      %v342 = vunpack.c.h.s8.bf16 %v243
      %v343 = vunpack.c.l.s8.bf16 %v244
      %v344 = vunpack.c.h.s8.bf16 %v244
      %v345 = vunpack.c.l.s8.bf16 %v245
      %v346 = vunpack.c.h.s8.bf16 %v245
      %v347 = vunpack.c.l.s8.bf16 %v246
      %v348 = vunpack.c.h.s8.bf16 %v246
      %v349 = vunpack.c.l.s8.bf16 %v247
      %v350 = vunpack.c.h.s8.bf16 %v247
      %v351 = vunpack.c.l.s8.bf16 %v248
      %v352 = vunpack.c.h.s8.bf16 %v248
      %v353 = vunpack.c.l.s8.bf16 %v249
      %v354 = vunpack.c.h.s8.bf16 %v249
      %v355 = vunpack.c.l.s8.bf16 %v250
      %v356 = vunpack.c.h.s8.bf16 %v250
      %v357 = vunpack.c.l.s8.bf16 %v251
      %v358 = vunpack.c.h.s8.bf16 %v251
      %v359 = vunpack.c.l.s8.bf16 %v252
      %v360 = vunpack.c.h.s8.bf16 %v252
      %v361 = vunpack.c.l.s8.bf16 %v253
      %v362 = vunpack.c.h.s8.bf16 %v253
      %v363 = vunpack.c.l.s8.bf16 %v254
      %v364 = vunpack.c.h.s8.bf16 %v254
      %v365 = vunpack.c.l.s8.bf16 %v255
      %v366 = vunpack.c.h.s8.bf16 %v255
      %v367 = vunpack.c.l.s8.bf16 %v256
      %v368 = vunpack.c.h.s8.bf16 %v256
      %v369 = vunpack.c.l.s8.bf16 %v257
      %v370 = vunpack.c.h.s8.bf16 %v257
      %v371 = vunpack.c.l.s8.bf16 %v258
      %v372 = vunpack.c.h.s8.bf16 %v258
      %v373 = vunpack.c.l.s8.bf16 %v259
      %v374 = vunpack.c.h.s8.bf16 %v259
      %v375 = vunpack.c.l.s8.bf16 %v260
      %v376 = vunpack.c.h.s8.bf16 %v260
      %v377 = vunpack.c.l.s8.bf16 %v261
      %v378 = vunpack.c.h.s8.bf16 %v261
      %v379 = vunpack.c.l.s8.bf16 %v262
      %v380 = vunpack.c.h.s8.bf16 %v262
      %v381 = vunpack.c.l.s8.bf16 %v263
      %v382 = vunpack.c.h.s8.bf16 %v263
      %v383 = vunpack.c.l.s8.bf16 %v264
      %v384 = vunpack.c.h.s8.bf16 %v264
      %v385 = vunpack.c.l.s8.bf16 %v265
      %v386 = vunpack.c.h.s8.bf16 %v265
      %v387 = vunpack.c.l.s8.bf16 %v266
      %v388 = vunpack.c.h.s8.bf16 %v266
      %v389 = vunpack.c.l.s8.bf16 %v267
      %v390 = vunpack.c.h.s8.bf16 %v267
      %v391 = vunpack.c.l.s8.bf16 %v268
      %v392 = vunpack.c.h.s8.bf16 %v268
      %v393 = vunpack.c.l.s8.bf16 %v269
      %v394 = vunpack.c.h.s8.bf16 %v269
      %v395 = vunpack.c.l.s8.bf16 %v270
      %v396 = vunpack.c.h.s8.bf16 %v270
      %v397 = vunpack.c.l.s8.bf16 %v271
      %v398 = vunpack.c.h.s8.bf16 %v271
      %v399 = vunpack.c.l.s8.bf16 %v272
      %v400 = vunpack.c.h.s8.bf16 %v272
      %v401 = vld [vmem:[#allocation2] sm:$0x3]
      %v402 = vld [vmem:[%s185] sm:$0xff]
      %v403 = vld [vmem:[%s185 + $0x8] sm:$0xff]
      %v406 = vcombine.high %v402, %v402
      %v408 = vunpack.c.l.s4 1966171168
      %v409 = vunpack.c.0.s8 %v408
      %v410 = vlaneseq
      %v411 = vshrl.u32 %v410, 7
      %v412 = vsub.s32 %v409, %v411
      %v413 = vrot.slane %v402, %v412
      %v415 = vunpack.c.l.s4 1966171168
      %v416 = vunpack.c.0.s8 %v415
      %v417 = vlaneseq
      %v418 = vshrl.u32 %v417, 7
      %v419 = vsub.s32 %v416, %v418
      %v420 = vrot.slane %v406, %v419
      %v421 = vcombine.high %v413, %v413
      %v422 = vcombine.high %v420, %v420
      %v424 = vunpack.c.l.s4 1966171168
      %v425 = vunpack.c.0.s8 %v424
      %v426 = vlaneseq
      %v427 = vshrl.u32 %v426, 7
      %v428 = vsub.s32 %v425, %v427
      %v429 = vrot.slane %v413, %v428
      %v431 = vunpack.c.l.s4 1966171168
      %v432 = vunpack.c.0.s8 %v431
      %v433 = vlaneseq
      %v434 = vshrl.u32 %v433, 7
      %v435 = vsub.s32 %v432, %v434
      %v436 = vrot.slane %v420, %v435
      %v438 = vunpack.c.l.s4 1966171168
      %v439 = vunpack.c.0.s8 %v438
      %v440 = vlaneseq
      %v441 = vshrl.u32 %v440, 7
      %v442 = vsub.s32 %v439, %v441
      %v443 = vrot.slane %v421, %v442
      %v445 = vunpack.c.l.s4 1966171168
      %v446 = vunpack.c.0.s8 %v445
      %v447 = vlaneseq
      %v448 = vshrl.u32 %v447, 7
      %v449 = vsub.s32 %v446, %v448
      %v450 = vrot.slane %v422, %v449
      %v451 = vcombine.high %v429, %v429
      %v452 = vcombine.high %v436, %v436
      %v453 = vcombine.high %v443, %v443
      %v454 = vcombine.high %v450, %v450
      %v455 = vcombine.high %v403, %v403
      %v457 = vunpack.c.l.s4 1966171168
      %v458 = vunpack.c.0.s8 %v457
      %v459 = vlaneseq
      %v460 = vshrl.u32 %v459, 7
      %v461 = vsub.s32 %v458, %v460
      %v462 = vrot.slane %v403, %v461
      %v464 = vunpack.c.l.s4 1966171168
      %v465 = vunpack.c.0.s8 %v464
      %v466 = vlaneseq
      %v467 = vshrl.u32 %v466, 7
      %v468 = vsub.s32 %v465, %v467
      %v469 = vrot.slane %v455, %v468
      %v470 = vcombine.high %v462, %v462
      %v471 = vcombine.high %v469, %v469
      %v473 = vunpack.c.l.s4 1966171168
      %v474 = vunpack.c.0.s8 %v473
      %v475 = vlaneseq
      %v476 = vshrl.u32 %v475, 7
      %v477 = vsub.s32 %v474, %v476
      %v478 = vrot.slane %v462, %v477
      %v480 = vunpack.c.l.s4 1966171168
      %v481 = vunpack.c.0.s8 %v480
      %v482 = vlaneseq
      %v483 = vshrl.u32 %v482, 7
      %v484 = vsub.s32 %v481, %v483
      %v485 = vrot.slane %v469, %v484
      %v487 = vunpack.c.l.s4 1966171168
      %v488 = vunpack.c.0.s8 %v487
      %v489 = vlaneseq
      %v490 = vshrl.u32 %v489, 7
      %v491 = vsub.s32 %v488, %v490
      %v492 = vrot.slane %v470, %v491
      %v494 = vunpack.c.l.s4 1966171168
      %v495 = vunpack.c.0.s8 %v494
      %v496 = vlaneseq
      %v497 = vshrl.u32 %v496, 7
      %v498 = vsub.s32 %v495, %v497
      %v499 = vrot.slane %v471, %v498
      %v500 = vcombine.high %v478, %v478
      %v501 = vcombine.high %v485, %v485
      %v502 = vcombine.high %v492, %v492
      %v503 = vcombine.high %v499, %v499
      %520 = vmatprep.subr.bf16.mxu0 0
      %521 = vmatpush1.bf16.msra.mxu0 %v273
      %522 = vmatprep.subr.bf16.mxu0 0
      %523 = vmatpush1.bf16.msra.mxu0 %v274
      %524 = vmatprep.subr.bf16.mxu0 0
      %525 = vmatpush1.bf16.msra.mxu0 %v275
      %526 = vmatprep.subr.bf16.mxu0 0
      %527 = vmatpush1.bf16.msra.mxu0 %v276
      %528 = vmatprep.subr.bf16.mxu0 0
      %529 = vmatpush1.bf16.msra.mxu0 %v277
      %530 = vmatprep.subr.bf16.mxu0 0
      %531 = vmatpush1.bf16.msra.mxu0 %v278
      %532 = vmatprep.subr.bf16.mxu0 0
      %533 = vmatpush1.bf16.msra.mxu0 %v279
      %534 = vmatprep.subr.bf16.mxu0 0
      %535 = vmatpush1.bf16.msra.mxu0 %v280
      %536 = vmatprep.subr.bf16.mxu0 0
      %537 = vmatpush1.bf16.msra.mxu0 %v281
      %538 = vmatprep.subr.bf16.mxu0 0
      %539 = vmatpush1.bf16.msra.mxu0 %v282
      %540 = vmatprep.subr.bf16.mxu0 0
      %541 = vmatpush1.bf16.msra.mxu0 %v283
      %542 = vmatprep.subr.bf16.mxu0 0
      %543 = vmatpush1.bf16.msra.mxu0 %v284
      %544 = vmatprep.subr.bf16.mxu0 0
      %545 = vmatpush1.bf16.msra.mxu0 %v285
      %546 = vmatprep.subr.bf16.mxu0 0
      %547 = vmatpush1.bf16.msra.mxu0 %v286
      %548 = vmatprep.subr.bf16.mxu0 0
      %549 = vmatpush1.bf16.msra.mxu0 %v287
      %550 = vmatprep.subr.bf16.mxu0 0
      %551 = vmatpush1.bf16.msra.mxu0 %v288
      %552 = vmatprep.mubr.bf16.mxu0 %v443
      %553 = vmatmul.mubr.bf16.gmra.mrb[0].mxu0 %v429
      %v554 = vpop.f32.mrb[0].mxu0
      %v555 = vadd.f32 0.0, %v554
      %v556 = vpop.f32.mrb[0].mxu0
      %v557 = vpop.f32.mrb[0].mxu0
      %v558 = vpop.f32.mrb[0].mxu0
      %559 = vdwg.mxu0
      %560 = vmatprep.subr.bf16.mxu0 0
      %561 = vmatpush1.bf16.msra.mxu0 %v289
      %562 = vmatprep.subr.bf16.mxu0 0
      %563 = vmatpush1.bf16.msra.mxu0 %v290
      %564 = vmatprep.subr.bf16.mxu0 0
      %565 = vmatpush1.bf16.msra.mxu0 %v291
      %566 = vmatprep.subr.bf16.mxu0 0
      %567 = vmatpush1.bf16.msra.mxu0 %v292
      %568 = vmatprep.subr.bf16.mxu0 0
      %569 = vmatpush1.bf16.msra.mxu0 %v293
      %570 = vmatprep.subr.bf16.mxu0 0
      %571 = vmatpush1.bf16.msra.mxu0 %v294
      %572 = vmatprep.subr.bf16.mxu0 0
      %573 = vmatpush1.bf16.msra.mxu0 %v295
      %574 = vmatprep.subr.bf16.mxu0 0
      %575 = vmatpush1.bf16.msra.mxu0 %v296
      %576 = vmatprep.subr.bf16.mxu0 0
      %577 = vmatpush1.bf16.msra.mxu0 %v297
      %578 = vmatprep.subr.bf16.mxu0 0
      %579 = vmatpush1.bf16.msra.mxu0 %v298
      %580 = vmatprep.subr.bf16.mxu0 0
      %581 = vmatpush1.bf16.msra.mxu0 %v299
      %582 = vmatprep.subr.bf16.mxu0 0
      %583 = vmatpush1.bf16.msra.mxu0 %v300
      %584 = vmatprep.subr.bf16.mxu0 0
      %585 = vmatpush1.bf16.msra.mxu0 %v301
      %586 = vmatprep.subr.bf16.mxu0 0
      %587 = vmatpush1.bf16.msra.mxu0 %v302
      %588 = vmatprep.subr.bf16.mxu0 0
      %589 = vmatpush1.bf16.msra.mxu0 %v303
      %590 = vmatprep.subr.bf16.mxu0 0
      %591 = vmatpush1.bf16.msra.mxu0 %v304
      %592 = vmatprep.mubr.bf16.mxu0 %v453
      %593 = vmatmul.mubr.bf16.gmra.mrb[0].mxu0 %v451
      %v594 = vpop.f32.mrb[0].mxu0
      %v595 = vadd.f32 %v555, %v594
      %v596 = vpop.f32.mrb[0].mxu0
      %v597 = vpop.f32.mrb[0].mxu0
      %v598 = vpop.f32.mrb[0].mxu0
      %599 = vdwg.mxu0
      %600 = vmatprep.subr.bf16.mxu0 0
      %601 = vmatpush1.bf16.msra.mxu0 %v305
      %602 = vmatprep.subr.bf16.mxu0 0
      %603 = vmatpush1.bf16.msra.mxu0 %v306
      %604 = vmatprep.subr.bf16.mxu0 0
      %605 = vmatpush1.bf16.msra.mxu0 %v307
      %606 = vmatprep.subr.bf16.mxu0 0
      %607 = vmatpush1.bf16.msra.mxu0 %v308
      %608 = vmatprep.subr.bf16.mxu0 0
      %609 = vmatpush1.bf16.msra.mxu0 %v309
      %610 = vmatprep.subr.bf16.mxu0 0
      %611 = vmatpush1.bf16.msra.mxu0 %v310
      %612 = vmatprep.subr.bf16.mxu0 0
      %613 = vmatpush1.bf16.msra.mxu0 %v311
      %614 = vmatprep.subr.bf16.mxu0 0
      %615 = vmatpush1.bf16.msra.mxu0 %v312
      %616 = vmatprep.subr.bf16.mxu0 0
      %617 = vmatpush1.bf16.msra.mxu0 %v313
      %618 = vmatprep.subr.bf16.mxu0 0
      %619 = vmatpush1.bf16.msra.mxu0 %v314
      %620 = vmatprep.subr.bf16.mxu0 0
      %621 = vmatpush1.bf16.msra.mxu0 %v315
      %622 = vmatprep.subr.bf16.mxu0 0
      %623 = vmatpush1.bf16.msra.mxu0 %v316
      %624 = vmatprep.subr.bf16.mxu0 0
      %625 = vmatpush1.bf16.msra.mxu0 %v317
      %626 = vmatprep.subr.bf16.mxu0 0
      %627 = vmatpush1.bf16.msra.mxu0 %v318
      %628 = vmatprep.subr.bf16.mxu0 0
      %629 = vmatpush1.bf16.msra.mxu0 %v319
      %630 = vmatprep.subr.bf16.mxu0 0
      %631 = vmatpush1.bf16.msra.mxu0 %v320
      %632 = vmatprep.mubr.bf16.mxu0 %v450
      %633 = vmatmul.mubr.bf16.gmra.mrb[0].mxu0 %v436
      %v634 = vpop.f32.mrb[0].mxu0
      %v635 = vadd.f32 %v595, %v634
      %v636 = vpop.f32.mrb[0].mxu0
      %v637 = vpop.f32.mrb[0].mxu0
      %v638 = vpop.f32.mrb[0].mxu0
      %639 = vdwg.mxu0
      %640 = vmatprep.subr.bf16.mxu0 0
      %641 = vmatpush1.bf16.msra.mxu0 %v321
      %642 = vmatprep.subr.bf16.mxu0 0
      %643 = vmatpush1.bf16.msra.mxu0 %v322
      %644 = vmatprep.subr.bf16.mxu0 0
      %645 = vmatpush1.bf16.msra.mxu0 %v323
      %646 = vmatprep.subr.bf16.mxu0 0
      %647 = vmatpush1.bf16.msra.mxu0 %v324
      %648 = vmatprep.subr.bf16.mxu0 0
      %649 = vmatpush1.bf16.msra.mxu0 %v325
      %650 = vmatprep.subr.bf16.mxu0 0
      %651 = vmatpush1.bf16.msra.mxu0 %v326
      %652 = vmatprep.subr.bf16.mxu0 0
      %653 = vmatpush1.bf16.msra.mxu0 %v327
      %654 = vmatprep.subr.bf16.mxu0 0
      %655 = vmatpush1.bf16.msra.mxu0 %v328
      %656 = vmatprep.subr.bf16.mxu0 0
      %657 = vmatpush1.bf16.msra.mxu0 %v329
      %658 = vmatprep.subr.bf16.mxu0 0
      %659 = vmatpush1.bf16.msra.mxu0 %v330
      %660 = vmatprep.subr.bf16.mxu0 0
      %661 = vmatpush1.bf16.msra.mxu0 %v331
      %662 = vmatprep.subr.bf16.mxu0 0
      %663 = vmatpush1.bf16.msra.mxu0 %v332
      %664 = vmatprep.subr.bf16.mxu0 0
      %665 = vmatpush1.bf16.msra.mxu0 %v333
      %666 = vmatprep.subr.bf16.mxu0 0
      %667 = vmatpush1.bf16.msra.mxu0 %v334
      %668 = vmatprep.subr.bf16.mxu0 0
      %669 = vmatpush1.bf16.msra.mxu0 %v335
      %670 = vmatprep.subr.bf16.mxu0 0
      %671 = vmatpush1.bf16.msra.mxu0 %v336
      %672 = vmatprep.mubr.bf16.mxu0 %v454
      %673 = vmatmul.mubr.bf16.gmra.mrb[0].mxu0 %v452
      %v674 = vpop.f32.mrb[0].mxu0
      %v675 = vadd.f32 %v635, %v674
      %v676 = vpop.f32.mrb[0].mxu0
      %v677 = vpop.f32.mrb[0].mxu0
      %v678 = vpop.f32.mrb[0].mxu0
      %679 = vdwg.mxu0
      %680 = vmatprep.subr.bf16.mxu0 0
      %681 = vmatpush1.bf16.msra.mxu0 %v337
      %682 = vmatprep.subr.bf16.mxu0 0
      %683 = vmatpush1.bf16.msra.mxu0 %v338
      %684 = vmatprep.subr.bf16.mxu0 0
      %685 = vmatpush1.bf16.msra.mxu0 %v339
      %686 = vmatprep.subr.bf16.mxu0 0
      %687 = vmatpush1.bf16.msra.mxu0 %v340
      %688 = vmatprep.subr.bf16.mxu0 0
      %689 = vmatpush1.bf16.msra.mxu0 %v341
      %690 = vmatprep.subr.bf16.mxu0 0
      %691 = vmatpush1.bf16.msra.mxu0 %v342
      %692 = vmatprep.subr.bf16.mxu0 0
      %693 = vmatpush1.bf16.msra.mxu0 %v343
      %694 = vmatprep.subr.bf16.mxu0 0
      %695 = vmatpush1.bf16.msra.mxu0 %v344
      %696 = vmatprep.subr.bf16.mxu0 0
      %697 = vmatpush1.bf16.msra.mxu0 %v345
      %698 = vmatprep.subr.bf16.mxu0 0
      %699 = vmatpush1.bf16.msra.mxu0 %v346
      %700 = vmatprep.subr.bf16.mxu0 0
      %701 = vmatpush1.bf16.msra.mxu0 %v347
      %702 = vmatprep.subr.bf16.mxu0 0
      %703 = vmatpush1.bf16.msra.mxu0 %v348
      %704 = vmatprep.subr.bf16.mxu0 0
      %705 = vmatpush1.bf16.msra.mxu0 %v349
      %706 = vmatprep.subr.bf16.mxu0 0
      %707 = vmatpush1.bf16.msra.mxu0 %v350
      %708 = vmatprep.subr.bf16.mxu0 0
      %709 = vmatpush1.bf16.msra.mxu0 %v351
      %710 = vmatprep.subr.bf16.mxu0 0
      %711 = vmatpush1.bf16.msra.mxu0 %v352
      %712 = vmatprep.mubr.bf16.mxu0 %v492
      %713 = vmatmul.mubr.bf16.gmra.mrb[0].mxu0 %v478
      %v714 = vpop.f32.mrb[0].mxu0
      %v715 = vadd.f32 %v675, %v714
      %v716 = vpop.f32.mrb[0].mxu0
      %v717 = vpop.f32.mrb[0].mxu0
      %v718 = vpop.f32.mrb[0].mxu0
      %719 = vdwg.mxu0
      %720 = vmatprep.subr.bf16.mxu0 0
      %721 = vmatpush1.bf16.msra.mxu0 %v353
      %722 = vmatprep.subr.bf16.mxu0 0
      %723 = vmatpush1.bf16.msra.mxu0 %v354
      %724 = vmatprep.subr.bf16.mxu0 0
      %725 = vmatpush1.bf16.msra.mxu0 %v355
      %726 = vmatprep.subr.bf16.mxu0 0
      %727 = vmatpush1.bf16.msra.mxu0 %v356
      %728 = vmatprep.subr.bf16.mxu0 0
      %729 = vmatpush1.bf16.msra.mxu0 %v357
      %730 = vmatprep.subr.bf16.mxu0 0
      %731 = vmatpush1.bf16.msra.mxu0 %v358
      %732 = vmatprep.subr.bf16.mxu0 0
      %733 = vmatpush1.bf16.msra.mxu0 %v359
      %734 = vmatprep.subr.bf16.mxu0 0
      %735 = vmatpush1.bf16.msra.mxu0 %v360
      %736 = vmatprep.subr.bf16.mxu0 0
      %737 = vmatpush1.bf16.msra.mxu0 %v361
      %738 = vmatprep.subr.bf16.mxu0 0
      %739 = vmatpush1.bf16.msra.mxu0 %v362
      %740 = vmatprep.subr.bf16.mxu0 0
      %741 = vmatpush1.bf16.msra.mxu0 %v363
      %742 = vmatprep.subr.bf16.mxu0 0
      %743 = vmatpush1.bf16.msra.mxu0 %v364
      %744 = vmatprep.subr.bf16.mxu0 0
      %745 = vmatpush1.bf16.msra.mxu0 %v365
      %746 = vmatprep.subr.bf16.mxu0 0
      %747 = vmatpush1.bf16.msra.mxu0 %v366
      %748 = vmatprep.subr.bf16.mxu0 0
      %749 = vmatpush1.bf16.msra.mxu0 %v367
      %750 = vmatprep.subr.bf16.mxu0 0
      %751 = vmatpush1.bf16.msra.mxu0 %v368
      %752 = vmatprep.mubr.bf16.mxu0 %v502
      %753 = vmatmul.mubr.bf16.gmra.mrb[0].mxu0 %v500
      %v754 = vpop.f32.mrb[0].mxu0
      %v755 = vadd.f32 %v715, %v754
      %v756 = vpop.f32.mrb[0].mxu0
      %v757 = vpop.f32.mrb[0].mxu0
      %v758 = vpop.f32.mrb[0].mxu0
      %759 = vdwg.mxu0
      %760 = vmatprep.subr.bf16.mxu0 0
      %761 = vmatpush1.bf16.msra.mxu0 %v369
      %762 = vmatprep.subr.bf16.mxu0 0
      %763 = vmatpush1.bf16.msra.mxu0 %v370
      %764 = vmatprep.subr.bf16.mxu0 0
      %765 = vmatpush1.bf16.msra.mxu0 %v371
      %766 = vmatprep.subr.bf16.mxu0 0
      %767 = vmatpush1.bf16.msra.mxu0 %v372
      %768 = vmatprep.subr.bf16.mxu0 0
      %769 = vmatpush1.bf16.msra.mxu0 %v373
      %770 = vmatprep.subr.bf16.mxu0 0
      %771 = vmatpush1.bf16.msra.mxu0 %v374
      %772 = vmatprep.subr.bf16.mxu0 0
      %773 = vmatpush1.bf16.msra.mxu0 %v375
      %774 = vmatprep.subr.bf16.mxu0 0
      %775 = vmatpush1.bf16.msra.mxu0 %v376
      %776 = vmatprep.subr.bf16.mxu0 0
      %777 = vmatpush1.bf16.msra.mxu0 %v377
      %778 = vmatprep.subr.bf16.mxu0 0
      %779 = vmatpush1.bf16.msra.mxu0 %v378
      %780 = vmatprep.subr.bf16.mxu0 0
      %781 = vmatpush1.bf16.msra.mxu0 %v379
      %782 = vmatprep.subr.bf16.mxu0 0
      %783 = vmatpush1.bf16.msra.mxu0 %v380
      %784 = vmatprep.subr.bf16.mxu0 0
      %785 = vmatpush1.bf16.msra.mxu0 %v381
      %786 = vmatprep.subr.bf16.mxu0 0
      %787 = vmatpush1.bf16.msra.mxu0 %v382
      %788 = vmatprep.subr.bf16.mxu0 0
      %789 = vmatpush1.bf16.msra.mxu0 %v383
      %790 = vmatprep.subr.bf16.mxu0 0
      %791 = vmatpush1.bf16.msra.mxu0 %v384
      %792 = vmatprep.mubr.bf16.mxu0 %v499
      %793 = vmatmul.mubr.bf16.gmra.mrb[0].mxu0 %v485
      %v794 = vpop.f32.mrb[0].mxu0
      %v795 = vadd.f32 %v755, %v794
      %v796 = vpop.f32.mrb[0].mxu0
      %v797 = vpop.f32.mrb[0].mxu0
      %v798 = vpop.f32.mrb[0].mxu0
      %799 = vdwg.mxu0
      %800 = vmatprep.subr.bf16.mxu0 0
      %801 = vmatpush1.bf16.msra.mxu0 %v385
      %802 = vmatprep.subr.bf16.mxu0 0
      %803 = vmatpush1.bf16.msra.mxu0 %v386
      %804 = vmatprep.subr.bf16.mxu0 0
      %805 = vmatpush1.bf16.msra.mxu0 %v387
      %806 = vmatprep.subr.bf16.mxu0 0
      %807 = vmatpush1.bf16.msra.mxu0 %v388
      %808 = vmatprep.subr.bf16.mxu0 0
      %809 = vmatpush1.bf16.msra.mxu0 %v389
      %810 = vmatprep.subr.bf16.mxu0 0
      %811 = vmatpush1.bf16.msra.mxu0 %v390
      %812 = vmatprep.subr.bf16.mxu0 0
      %813 = vmatpush1.bf16.msra.mxu0 %v391
      %814 = vmatprep.subr.bf16.mxu0 0
      %815 = vmatpush1.bf16.msra.mxu0 %v392
      %816 = vmatprep.subr.bf16.mxu0 0
      %817 = vmatpush1.bf16.msra.mxu0 %v393
      %818 = vmatprep.subr.bf16.mxu0 0
      %819 = vmatpush1.bf16.msra.mxu0 %v394
      %820 = vmatprep.subr.bf16.mxu0 0
      %821 = vmatpush1.bf16.msra.mxu0 %v395
      %822 = vmatprep.subr.bf16.mxu0 0
      %823 = vmatpush1.bf16.msra.mxu0 %v396
      %824 = vmatprep.subr.bf16.mxu0 0
      %825 = vmatpush1.bf16.msra.mxu0 %v397
      %826 = vmatprep.subr.bf16.mxu0 0
      %827 = vmatpush1.bf16.msra.mxu0 %v398
      %828 = vmatprep.subr.bf16.mxu0 0
      %829 = vmatpush1.bf16.msra.mxu0 %v399
      %830 = vmatprep.subr.bf16.mxu0 0
      %831 = vmatpush1.bf16.msra.mxu0 %v400
      %832 = vmatprep.mubr.bf16.mxu0 %v503
      %833 = vmatmul.mubr.bf16.gmra.mrb[0].mxu0 %v501
      %v834 = vpop.f32.mrb[0].mxu0
      %v835 = vadd.f32 %v795, %v834
      %v836 = vpop.f32.mrb[0].mxu0
      %v837 = vpop.f32.mrb[0].mxu0
      %v838 = vpop.f32.mrb[0].mxu0
      %839 = vdwg.mxu0
      %v840 = vadd.f32 %v401, %v835
      %841 = vst [vmem:[#allocation2] sm:$0x3] %v840
      %v842 = vld [vmem:[%s195 + $0x200] sm:$0xff]
      %v843 = vld [vmem:[%s195 + $0x208] sm:$0xff]
      %v844 = vld [vmem:[%s195 + $0x210] sm:$0xff]
      %v845 = vld [vmem:[%s195 + $0x218] sm:$0xff]
      %v846 = vld [vmem:[%s195 + $0x220] sm:$0xff]
      %v847 = vld [vmem:[%s195 + $0x228] sm:$0xff]
      %v848 = vld [vmem:[%s195 + $0x230] sm:$0xff]
      %v849 = vld [vmem:[%s195 + $0x238] sm:$0xff]
      %v850 = vld [vmem:[%s195 + $0x240] sm:$0xff]
      %v851 = vld [vmem:[%s195 + $0x248] sm:$0xff]
      %v852 = vld [vmem:[%s195 + $0x250] sm:$0xff]
      %v853 = vld [vmem:[%s195 + $0x258] sm:$0xff]
      %v854 = vld [vmem:[%s195 + $0x260] sm:$0xff]
      %v855 = vld [vmem:[%s195 + $0x268] sm:$0xff]
      %v856 = vld [vmem:[%s195 + $0x270] sm:$0xff]
      %v857 = vld [vmem:[%s195 + $0x278] sm:$0xff]
      %v858 = vld [vmem:[%s195 + $0x280] sm:$0xff]
      %v859 = vld [vmem:[%s195 + $0x288] sm:$0xff]
      %v860 = vld [vmem:[%s195 + $0x290] sm:$0xff]
      %v861 = vld [vmem:[%s195 + $0x298] sm:$0xff]
      %v862 = vld [vmem:[%s195 + $0x2a0] sm:$0xff]
      %v863 = vld [vmem:[%s195 + $0x2a8] sm:$0xff]
      %v864 = vld [vmem:[%s195 + $0x2b0] sm:$0xff]
      %v865 = vld [vmem:[%s195 + $0x2b8] sm:$0xff]
      %v866 = vld [vmem:[%s195 + $0x2c0] sm:$0xff]
      %v867 = vld [vmem:[%s195 + $0x2c8] sm:$0xff]
      %v868 = vld [vmem:[%s195 + $0x2d0] sm:$0xff]
      %v869 = vld [vmem:[%s195 + $0x2d8] sm:$0xff]
      %v870 = vld [vmem:[%s195 + $0x2e0] sm:$0xff]
      %v871 = vld [vmem:[%s195 + $0x2e8] sm:$0xff]
      %v872 = vld [vmem:[%s195 + $0x2f0] sm:$0xff]
      %v873 = vld [vmem:[%s195 + $0x2f8] sm:$0xff]
      %v874 = vld [vmem:[%s195 + $0x300] sm:$0xff]
      %v875 = vld [vmem:[%s195 + $0x308] sm:$0xff]
      %v876 = vld [vmem:[%s195 + $0x310] sm:$0xff]
      %v877 = vld [vmem:[%s195 + $0x318] sm:$0xff]
      %v878 = vld [vmem:[%s195 + $0x320] sm:$0xff]
      %v879 = vld [vmem:[%s195 + $0x328] sm:$0xff]
      %v880 = vld [vmem:[%s195 + $0x330] sm:$0xff]
      %v881 = vld [vmem:[%s195 + $0x338] sm:$0xff]
      %v882 = vld [vmem:[%s195 + $0x340] sm:$0xff]
      %v883 = vld [vmem:[%s195 + $0x348] sm:$0xff]
      %v884 = vld [vmem:[%s195 + $0x350] sm:$0xff]
      %v885 = vld [vmem:[%s195 + $0x358] sm:$0xff]
      %v886 = vld [vmem:[%s195 + $0x360] sm:$0xff]
      %v887 = vld [vmem:[%s195 + $0x368] sm:$0xff]
      %v888 = vld [vmem:[%s195 + $0x370] sm:$0xff]
      %v889 = vld [vmem:[%s195 + $0x378] sm:$0xff]
      %v890 = vld [vmem:[%s195 + $0x380] sm:$0xff]
      %v891 = vld [vmem:[%s195 + $0x388] sm:$0xff]
      %v892 = vld [vmem:[%s195 + $0x390] sm:$0xff]
      %v893 = vld [vmem:[%s195 + $0x398] sm:$0xff]
      %v894 = vld [vmem:[%s195 + $0x3a0] sm:$0xff]
      %v895 = vld [vmem:[%s195 + $0x3a8] sm:$0xff]
      %v896 = vld [vmem:[%s195 + $0x3b0] sm:$0xff]
      %v897 = vld [vmem:[%s195 + $0x3b8] sm:$0xff]
      %v898 = vld [vmem:[%s195 + $0x3c0] sm:$0xff]
      %v899 = vld [vmem:[%s195 + $0x3c8] sm:$0xff]
      %v900 = vld [vmem:[%s195 + $0x3d0] sm:$0xff]
      %v901 = vld [vmem:[%s195 + $0x3d8] sm:$0xff]
      %v902 = vld [vmem:[%s195 + $0x3e0] sm:$0xff]
      %v903 = vld [vmem:[%s195 + $0x3e8] sm:$0xff]
      %v904 = vld [vmem:[%s195 + $0x3f0] sm:$0xff]
      %v905 = vld [vmem:[%s195 + $0x3f8] sm:$0xff]
      %v906 = vunpack.c.l.s8.bf16 %v842
      %v907 = vunpack.c.h.s8.bf16 %v842
      %v908 = vunpack.c.l.s8.bf16 %v843
      %v909 = vunpack.c.h.s8.bf16 %v843
      %v910 = vunpack.c.l.s8.bf16 %v844
      %v911 = vunpack.c.h.s8.bf16 %v844
      %v912 = vunpack.c.l.s8.bf16 %v845
      %v913 = vunpack.c.h.s8.bf16 %v845
      %v914 = vunpack.c.l.s8.bf16 %v846
      %v915 = vunpack.c.h.s8.bf16 %v846
      %v916 = vunpack.c.l.s8.bf16 %v847
      %v917 = vunpack.c.h.s8.bf16 %v847
      %v918 = vunpack.c.l.s8.bf16 %v848
      %v919 = vunpack.c.h.s8.bf16 %v848
      %v920 = vunpack.c.l.s8.bf16 %v849
      %v921 = vunpack.c.h.s8.bf16 %v849
      %v922 = vunpack.c.l.s8.bf16 %v850
      %v923 = vunpack.c.h.s8.bf16 %v850
      %v924 = vunpack.c.l.s8.bf16 %v851
      %v925 = vunpack.c.h.s8.bf16 %v851
      %v926 = vunpack.c.l.s8.bf16 %v852
      %v927 = vunpack.c.h.s8.bf16 %v852
      %v928 = vunpack.c.l.s8.bf16 %v853
      %v929 = vunpack.c.h.s8.bf16 %v853
      %v930 = vunpack.c.l.s8.bf16 %v854
      %v931 = vunpack.c.h.s8.bf16 %v854
      %v932 = vunpack.c.l.s8.bf16 %v855
      %v933 = vunpack.c.h.s8.bf16 %v855
      %v934 = vunpack.c.l.s8.bf16 %v856
      %v935 = vunpack.c.h.s8.bf16 %v856
      %v936 = vunpack.c.l.s8.bf16 %v857
      %v937 = vunpack.c.h.s8.bf16 %v857
      %v938 = vunpack.c.l.s8.bf16 %v858
      %v939 = vunpack.c.h.s8.bf16 %v858
      %v940 = vunpack.c.l.s8.bf16 %v859
      %v941 = vunpack.c.h.s8.bf16 %v859
      %v942 = vunpack.c.l.s8.bf16 %v860
      %v943 = vunpack.c.h.s8.bf16 %v860
      %v944 = vunpack.c.l.s8.bf16 %v861
      %v945 = vunpack.c.h.s8.bf16 %v861
      %v946 = vunpack.c.l.s8.bf16 %v862
      %v947 = vunpack.c.h.s8.bf16 %v862
      %v948 = vunpack.c.l.s8.bf16 %v863
      %v949 = vunpack.c.h.s8.bf16 %v863
      %v950 = vunpack.c.l.s8.bf16 %v864
      %v951 = vunpack.c.h.s8.bf16 %v864
      %v952 = vunpack.c.l.s8.bf16 %v865
      %v953 = vunpack.c.h.s8.bf16 %v865
      %v954 = vunpack.c.l.s8.bf16 %v866
      %v955 = vunpack.c.h.s8.bf16 %v866
      %v956 = vunpack.c.l.s8.bf16 %v867
      %v957 = vunpack.c.h.s8.bf16 %v867
      %v958 = vunpack.c.l.s8.bf16 %v868
      %v959 = vunpack.c.h.s8.bf16 %v868
      %v960 = vunpack.c.l.s8.bf16 %v869
      %v961 = vunpack.c.h.s8.bf16 %v869
      %v962 = vunpack.c.l.s8.bf16 %v870
      %v963 = vunpack.c.h.s8.bf16 %v870
      %v964 = vunpack.c.l.s8.bf16 %v871
      %v965 = vunpack.c.h.s8.bf16 %v871
      %v966 = vunpack.c.l.s8.bf16 %v872
      %v967 = vunpack.c.h.s8.bf16 %v872
      %v968 = vunpack.c.l.s8.bf16 %v873
      %v969 = vunpack.c.h.s8.bf16 %v873
      %v970 = vunpack.c.l.s8.bf16 %v874
      %v971 = vunpack.c.h.s8.bf16 %v874
      %v972 = vunpack.c.l.s8.bf16 %v875
      %v973 = vunpack.c.h.s8.bf16 %v875
      %v974 = vunpack.c.l.s8.bf16 %v876
      %v975 = vunpack.c.h.s8.bf16 %v876
      %v976 = vunpack.c.l.s8.bf16 %v877
      %v977 = vunpack.c.h.s8.bf16 %v877
      %v978 = vunpack.c.l.s8.bf16 %v878
      %v979 = vunpack.c.h.s8.bf16 %v878
      %v980 = vunpack.c.l.s8.bf16 %v879
      %v981 = vunpack.c.h.s8.bf16 %v879
      %v982 = vunpack.c.l.s8.bf16 %v880
      %v983 = vunpack.c.h.s8.bf16 %v880
      %v984 = vunpack.c.l.s8.bf16 %v881
      %v985 = vunpack.c.h.s8.bf16 %v881
      %v986 = vunpack.c.l.s8.bf16 %v882
      %v987 = vunpack.c.h.s8.bf16 %v882
      %v988 = vunpack.c.l.s8.bf16 %v883
      %v989 = vunpack.c.h.s8.bf16 %v883
      %v990 = vunpack.c.l.s8.bf16 %v884
      %v991 = vunpack.c.h.s8.bf16 %v884
      %v992 = vunpack.c.l.s8.bf16 %v885
      %v993 = vunpack.c.h.s8.bf16 %v885
      %v994 = vunpack.c.l.s8.bf16 %v886
      %v995 = vunpack.c.h.s8.bf16 %v886
      %v996 = vunpack.c.l.s8.bf16 %v887
      %v997 = vunpack.c.h.s8.bf16 %v887
      %v998 = vunpack.c.l.s8.bf16 %v888
      %v999 = vunpack.c.h.s8.bf16 %v888
      %v1000 = vunpack.c.l.s8.bf16 %v889
      %v1001 = vunpack.c.h.s8.bf16 %v889
      %v1002 = vunpack.c.l.s8.bf16 %v890
      %v1003 = vunpack.c.h.s8.bf16 %v890
      %v1004 = vunpack.c.l.s8.bf16 %v891
      %v1005 = vunpack.c.h.s8.bf16 %v891
      %v1006 = vunpack.c.l.s8.bf16 %v892
      %v1007 = vunpack.c.h.s8.bf16 %v892
      %v1008 = vunpack.c.l.s8.bf16 %v893
      %v1009 = vunpack.c.h.s8.bf16 %v893
      %v1010 = vunpack.c.l.s8.bf16 %v894
      %v1011 = vunpack.c.h.s8.bf16 %v894
      %v1012 = vunpack.c.l.s8.bf16 %v895
      %v1013 = vunpack.c.h.s8.bf16 %v895
      %v1014 = vunpack.c.l.s8.bf16 %v896
      %v1015 = vunpack.c.h.s8.bf16 %v896
      %v1016 = vunpack.c.l.s8.bf16 %v897
      %v1017 = vunpack.c.h.s8.bf16 %v897
      %v1018 = vunpack.c.l.s8.bf16 %v898
      %v1019 = vunpack.c.h.s8.bf16 %v898
      %v1020 = vunpack.c.l.s8.bf16 %v899
      %v1021 = vunpack.c.h.s8.bf16 %v899
      %v1022 = vunpack.c.l.s8.bf16 %v900
      %v1023 = vunpack.c.h.s8.bf16 %v900
      %v1024 = vunpack.c.l.s8.bf16 %v901
      %v1025 = vunpack.c.h.s8.bf16 %v901
      %v1026 = vunpack.c.l.s8.bf16 %v902
      %v1027 = vunpack.c.h.s8.bf16 %v902
      %v1028 = vunpack.c.l.s8.bf16 %v903
      %v1029 = vunpack.c.h.s8.bf16 %v903
      %v1030 = vunpack.c.l.s8.bf16 %v904
      %v1031 = vunpack.c.h.s8.bf16 %v904
      %v1032 = vunpack.c.l.s8.bf16 %v905
      %v1033 = vunpack.c.h.s8.bf16 %v905
      %v1034 = vld [vmem:[#allocation2] sm:$0x3]
      %v1035 = vld [vmem:[%s185 + $0x10] sm:$0xff]
      %v1036 = vld [vmem:[%s185 + $0x18] sm:$0xff]
      %v1039 = vcombine.high %v1035, %v1035
      %v1041 = vunpack.c.l.s4 1966171168
      %v1042 = vunpack.c.0.s8 %v1041
      %v1043 = vlaneseq
      %v1044 = vshrl.u32 %v1043, 7
      %v1045 = vsub.s32 %v1042, %v1044
      %v1046 = vrot.slane %v1035, %v1045
      %v1048 = vunpack.c.l.s4 1966171168
      %v1049 = vunpack.c.0.s8 %v1048
      %v1050 = vlaneseq
      %v1051 = vshrl.u32 %v1050, 7
      %v1052 = vsub.s32 %v1049, %v1051
      %v1053 = vrot.slane %v1039, %v1052
      %v1054 = vcombine.high %v1046, %v1046
      %v1055 = vcombine.high %v1053, %v1053
      %v1057 = vunpack.c.l.s4 1966171168
      %v1058 = vunpack.c.0.s8 %v1057
      %v1059 = vlaneseq
      %v1060 = vshrl.u32 %v1059, 7
      %v1061 = vsub.s32 %v1058, %v1060
      %v1062 = vrot.slane %v1046, %v1061
      %v1064 = vunpack.c.l.s4 1966171168
      %v1065 = vunpack.c.0.s8 %v1064
      %v1066 = vlaneseq
      %v1067 = vshrl.u32 %v1066, 7
      %v1068 = vsub.s32 %v1065, %v1067
      %v1069 = vrot.slane %v1053, %v1068
      %v1071 = vunpack.c.l.s4 1966171168
      %v1072 = vunpack.c.0.s8 %v1071
      %v1073 = vlaneseq
      %v1074 = vshrl.u32 %v1073, 7
      %v1075 = vsub.s32 %v1072, %v1074
      %v1076 = vrot.slane %v1054, %v1075
      %v1078 = vunpack.c.l.s4 1966171168
      %v1079 = vunpack.c.0.s8 %v1078
      %v1080 = vlaneseq
      %v1081 = vshrl.u32 %v1080, 7
      %v1082 = vsub.s32 %v1079, %v1081
      %v1083 = vrot.slane %v1055, %v1082
      %v1084 = vcombine.high %v1062, %v1062
      %v1085 = vcombine.high %v1069, %v1069
      %v1086 = vcombine.high %v1076, %v1076
      %v1087 = vcombine.high %v1083, %v1083
      %v1088 = vcombine.high %v1036, %v1036
      %v1090 = vunpack.c.l.s4 1966171168
      %v1091 = vunpack.c.0.s8 %v1090
      %v1092 = vlaneseq
      %v1093 = vshrl.u32 %v1092, 7
      %v1094 = vsub.s32 %v1091, %v1093
      %v1095 = vrot.slane %v1036, %v1094
      %v1097 = vunpack.c.l.s4 1966171168
      %v1098 = vunpack.c.0.s8 %v1097
      %v1099 = vlaneseq
      %v1100 = vshrl.u32 %v1099, 7
      %v1101 = vsub.s32 %v1098, %v1100
      %v1102 = vrot.slane %v1088, %v1101
      %v1103 = vcombine.high %v1095, %v1095
      %v1104 = vcombine.high %v1102, %v1102
      %v1106 = vunpack.c.l.s4 1966171168
      %v1107 = vunpack.c.0.s8 %v1106
      %v1108 = vlaneseq
      %v1109 = vshrl.u32 %v1108, 7
      %v1110 = vsub.s32 %v1107, %v1109
      %v1111 = vrot.slane %v1095, %v1110
      %v1113 = vunpack.c.l.s4 1966171168
      %v1114 = vunpack.c.0.s8 %v1113
      %v1115 = vlaneseq
      %v1116 = vshrl.u32 %v1115, 7
      %v1117 = vsub.s32 %v1114, %v1116
      %v1118 = vrot.slane %v1102, %v1117
      %v1120 = vunpack.c.l.s4 1966171168
      %v1121 = vunpack.c.0.s8 %v1120
      %v1122 = vlaneseq
      %v1123 = vshrl.u32 %v1122, 7
      %v1124 = vsub.s32 %v1121, %v1123
      %v1125 = vrot.slane %v1103, %v1124
      %v1127 = vunpack.c.l.s4 1966171168
      %v1128 = vunpack.c.0.s8 %v1127
      %v1129 = vlaneseq
      %v1130 = vshrl.u32 %v1129, 7
      %v1131 = vsub.s32 %v1128, %v1130
      %v1132 = vrot.slane %v1104, %v1131
      %v1133 = vcombine.high %v1111, %v1111
      %v1134 = vcombine.high %v1118, %v1118
      %v1135 = vcombine.high %v1125, %v1125
      %v1136 = vcombine.high %v1132, %v1132
      %1153 = vmatprep.subr.bf16.mxu0 0
      %1154 = vmatpush1.bf16.msra.mxu0 %v906
      %1155 = vmatprep.subr.bf16.mxu0 0
      %1156 = vmatpush1.bf16.msra.mxu0 %v907
      %1157 = vmatprep.subr.bf16.mxu0 0
      %1158 = vmatpush1.bf16.msra.mxu0 %v908
      %1159 = vmatprep.subr.bf16.mxu0 0
      %1160 = vmatpush1.bf16.msra.mxu0 %v909
      %1161 = vmatprep.subr.bf16.mxu0 0
      %1162 = vmatpush1.bf16.msra.mxu0 %v910
      %1163 = vmatprep.subr.bf16.mxu0 0
      %1164 = vmatpush1.bf16.msra.mxu0 %v911
      %1165 = vmatprep.subr.bf16.mxu0 0
      %1166 = vmatpush1.bf16.msra.mxu0 %v912
      %1167 = vmatprep.subr.bf16.mxu0 0
      %1168 = vmatpush1.bf16.msra.mxu0 %v913
      %1169 = vmatprep.subr.bf16.mxu0 0
      %1170 = vmatpush1.bf16.msra.mxu0 %v914
      %1171 = vmatprep.subr.bf16.mxu0 0
      %1172 = vmatpush1.bf16.msra.mxu0 %v915
      %1173 = vmatprep.subr.bf16.mxu0 0
      %1174 = vmatpush1.bf16.msra.mxu0 %v916
      %1175 = vmatprep.subr.bf16.mxu0 0
      %1176 = vmatpush1.bf16.msra.mxu0 %v917
      %1177 = vmatprep.subr.bf16.mxu0 0
      %1178 = vmatpush1.bf16.msra.mxu0 %v918
      %1179 = vmatprep.subr.bf16.mxu0 0
      %1180 = vmatpush1.bf16.msra.mxu0 %v919
      %1181 = vmatprep.subr.bf16.mxu0 0
      %1182 = vmatpush1.bf16.msra.mxu0 %v920
      %1183 = vmatprep.subr.bf16.mxu0 0
      %1184 = vmatpush1.bf16.msra.mxu0 %v921
      %1185 = vmatprep.mubr.bf16.mxu0 %v1076
      %1186 = vmatmul.mubr.bf16.gmra.mrb[0].mxu0 %v1062
      %v1187 = vpop.f32.mrb[0].mxu0
      %v1188 = vadd.f32 0.0, %v1187
      %v1189 = vpop.f32.mrb[0].mxu0
      %v1190 = vpop.f32.mrb[0].mxu0
      %v1191 = vpop.f32.mrb[0].mxu0
      %1192 = vdwg.mxu0
      %1193 = vmatprep.subr.bf16.mxu0 0
      %1194 = vmatpush1.bf16.msra.mxu0 %v922
      %1195 = vmatprep.subr.bf16.mxu0 0
      %1196 = vmatpush1.bf16.msra.mxu0 %v923
      %1197 = vmatprep.subr.bf16.mxu0 0
      %1198 = vmatpush1.bf16.msra.mxu0 %v924
      %1199 = vmatprep.subr.bf16.mxu0 0
      %1200 = vmatpush1.bf16.msra.mxu0 %v925
      %1201 = vmatprep.subr.bf16.mxu0 0
      %1202 = vmatpush1.bf16.msra.mxu0 %v926
      %1203 = vmatprep.subr.bf16.mxu0 0
      %1204 = vmatpush1.bf16.msra.mxu0 %v927
      %1205 = vmatprep.subr.bf16.mxu0 0
      %1206 = vmatpush1.bf16.msra.mxu0 %v928
      %1207 = vmatprep.subr.bf16.mxu0 0
      %1208 = vmatpush1.bf16.msra.mxu0 %v929
      %1209 = vmatprep.subr.bf16.mxu0 0
      %1210 = vmatpush1.bf16.msra.mxu0 %v930
      %1211 = vmatprep.subr.bf16.mxu0 0
      %1212 = vmatpush1.bf16.msra.mxu0 %v931
      %1213 = vmatprep.subr.bf16.mxu0 0
      %1214 = vmatpush1.bf16.msra.mxu0 %v932
      %1215 = vmatprep.subr.bf16.mxu0 0
      %1216 = vmatpush1.bf16.msra.mxu0 %v933
      %1217 = vmatprep.subr.bf16.mxu0 0
      %1218 = vmatpush1.bf16.msra.mxu0 %v934
      %1219 = vmatprep.subr.bf16.mxu0 0
      %1220 = vmatpush1.bf16.msra.mxu0 %v935
      %1221 = vmatprep.subr.bf16.mxu0 0
      %1222 = vmatpush1.bf16.msra.mxu0 %v936
      %1223 = vmatprep.subr.bf16.mxu0 0
      %1224 = vmatpush1.bf16.msra.mxu0 %v937
      %1225 = vmatprep.mubr.bf16.mxu0 %v1086
      %1226 = vmatmul.mubr.bf16.gmra.mrb[0].mxu0 %v1084
      %v1227 = vpop.f32.mrb[0].mxu0
      %v1228 = vadd.f32 %v1188, %v1227
      %v1229 = vpop.f32.mrb[0].mxu0
      %v1230 = vpop.f32.mrb[0].mxu0
      %v1231 = vpop.f32.mrb[0].mxu0
      %1232 = vdwg.mxu0
      %1233 = vmatprep.subr.bf16.mxu0 0
      %1234 = vmatpush1.bf16.msra.mxu0 %v938
      %1235 = vmatprep.subr.bf16.mxu0 0
      %1236 = vmatpush1.bf16.msra.mxu0 %v939
      %1237 = vmatprep.subr.bf16.mxu0 0
      %1238 = vmatpush1.bf16.msra.mxu0 %v940
      %1239 = vmatprep.subr.bf16.mxu0 0
      %1240 = vmatpush1.bf16.msra.mxu0 %v941
      %1241 = vmatprep.subr.bf16.mxu0 0
      %1242 = vmatpush1.bf16.msra.mxu0 %v942
      %1243 = vmatprep.subr.bf16.mxu0 0
      %1244 = vmatpush1.bf16.msra.mxu0 %v943
      %1245 = vmatprep.subr.bf16.mxu0 0
      %1246 = vmatpush1.bf16.msra.mxu0 %v944
      %1247 = vmatprep.subr.bf16.mxu0 0
      %1248 = vmatpush1.bf16.msra.mxu0 %v945
      %1249 = vmatprep.subr.bf16.mxu0 0
      %1250 = vmatpush1.bf16.msra.mxu0 %v946
      %1251 = vmatprep.subr.bf16.mxu0 0
      %1252 = vmatpush1.bf16.msra.mxu0 %v947
      %1253 = vmatprep.subr.bf16.mxu0 0
      %1254 = vmatpush1.bf16.msra.mxu0 %v948
      %1255 = vmatprep.subr.bf16.mxu0 0
      %1256 = vmatpush1.bf16.msra.mxu0 %v949
      %1257 = vmatprep.subr.bf16.mxu0 0
      %1258 = vmatpush1.bf16.msra.mxu0 %v950
      %1259 = vmatprep.subr.bf16.mxu0 0
      %1260 = vmatpush1.bf16.msra.mxu0 %v951
      %1261 = vmatprep.subr.bf16.mxu0 0
      %1262 = vmatpush1.bf16.msra.mxu0 %v952
      %1263 = vmatprep.subr.bf16.mxu0 0
      %1264 = vmatpush1.bf16.msra.mxu0 %v953
      %1265 = vmatprep.mubr.bf16.mxu0 %v1083
      %1266 = vmatmul.mubr.bf16.gmra.mrb[0].mxu0 %v1069
      %v1267 = vpop.f32.mrb[0].mxu0
      %v1268 = vadd.f32 %v1228, %v1267
      %v1269 = vpop.f32.mrb[0].mxu0
      %v1270 = vpop.f32.mrb[0].mxu0
      %v1271 = vpop.f32.mrb[0].mxu0
      %1272 = vdwg.mxu0
      %1273 = vmatprep.subr.bf16.mxu0 0
      %1274 = vmatpush1.bf16.msra.mxu0 %v954
      %1275 = vmatprep.subr.bf16.mxu0 0
      %1276 = vmatpush1.bf16.msra.mxu0 %v955
      %1277 = vmatprep.subr.bf16.mxu0 0
      %1278 = vmatpush1.bf16.msra.mxu0 %v956
      %1279 = vmatprep.subr.bf16.mxu0 0
      %1280 = vmatpush1.bf16.msra.mxu0 %v957
      %1281 = vmatprep.subr.bf16.mxu0 0
      %1282 = vmatpush1.bf16.msra.mxu0 %v958
      %1283 = vmatprep.subr.bf16.mxu0 0
      %1284 = vmatpush1.bf16.msra.mxu0 %v959
      %1285 = vmatprep.subr.bf16.mxu0 0
      %1286 = vmatpush1.bf16.msra.mxu0 %v960
      %1287 = vmatprep.subr.bf16.mxu0 0
      %1288 = vmatpush1.bf16.msra.mxu0 %v961
      %1289 = vmatprep.subr.bf16.mxu0 0
      %1290 = vmatpush1.bf16.msra.mxu0 %v962
      %1291 = vmatprep.subr.bf16.mxu0 0
      %1292 = vmatpush1.bf16.msra.mxu0 %v963
      %1293 = vmatprep.subr.bf16.mxu0 0
      %1294 = vmatpush1.bf16.msra.mxu0 %v964
      %1295 = vmatprep.subr.bf16.mxu0 0
      %1296 = vmatpush1.bf16.msra.mxu0 %v965
      %1297 = vmatprep.subr.bf16.mxu0 0
      %1298 = vmatpush1.bf16.msra.mxu0 %v966
      %1299 = vmatprep.subr.bf16.mxu0 0
      %1300 = vmatpush1.bf16.msra.mxu0 %v967
      %1301 = vmatprep.subr.bf16.mxu0 0
      %1302 = vmatpush1.bf16.msra.mxu0 %v968
      %1303 = vmatprep.subr.bf16.mxu0 0
      %1304 = vmatpush1.bf16.msra.mxu0 %v969
      %1305 = vmatprep.mubr.bf16.mxu0 %v1087
      %1306 = vmatmul.mubr.bf16.gmra.mrb[0].mxu0 %v1085
      %v1307 = vpop.f32.mrb[0].mxu0
      %v1308 = vadd.f32 %v1268, %v1307
      %v1309 = vpop.f32.mrb[0].mxu0
      %v1310 = vpop.f32.mrb[0].mxu0
      %v1311 = vpop.f32.mrb[0].mxu0
      %1312 = vdwg.mxu0
      %1313 = vmatprep.subr.bf16.mxu0 0
      %1314 = vmatpush1.bf16.msra.mxu0 %v970
      %1315 = vmatprep.subr.bf16.mxu0 0
      %1316 = vmatpush1.bf16.msra.mxu0 %v971
      %1317 = vmatprep.subr.bf16.mxu0 0
      %1318 = vmatpush1.bf16.msra.mxu0 %v972
      %1319 = vmatprep.subr.bf16.mxu0 0
      %1320 = vmatpush1.bf16.msra.mxu0 %v973
      %1321 = vmatprep.subr.bf16.mxu0 0
      %1322 = vmatpush1.bf16.msra.mxu0 %v974
      %1323 = vmatprep.subr.bf16.mxu0 0
      %1324 = vmatpush1.bf16.msra.mxu0 %v975
      %1325 = vmatprep.subr.bf16.mxu0 0
      %1326 = vmatpush1.bf16.msra.mxu0 %v976
      %1327 = vmatprep.subr.bf16.mxu0 0
      %1328 = vmatpush1.bf16.msra.mxu0 %v977
      %1329 = vmatprep.subr.bf16.mxu0 0
      %1330 = vmatpush1.bf16.msra.mxu0 %v978
      %1331 = vmatprep.subr.bf16.mxu0 0
      %1332 = vmatpush1.bf16.msra.mxu0 %v979
      %1333 = vmatprep.subr.bf16.mxu0 0
      %1334 = vmatpush1.bf16.msra.mxu0 %v980
      %1335 = vmatprep.subr.bf16.mxu0 0
      %1336 = vmatpush1.bf16.msra.mxu0 %v981
      %1337 = vmatprep.subr.bf16.mxu0 0
      %1338 = vmatpush1.bf16.msra.mxu0 %v982
      %1339 = vmatprep.subr.bf16.mxu0 0
      %1340 = vmatpush1.bf16.msra.mxu0 %v983
      %1341 = vmatprep.subr.bf16.mxu0 0
      %1342 = vmatpush1.bf16.msra.mxu0 %v984
      %1343 = vmatprep.subr.bf16.mxu0 0
      %1344 = vmatpush1.bf16.msra.mxu0 %v985
      %1345 = vmatprep.mubr.bf16.mxu0 %v1125
      %1346 = vmatmul.mubr.bf16.gmra.mrb[0].mxu0 %v1111
      %v1347 = vpop.f32.mrb[0].mxu0
      %v1348 = vadd.f32 %v1308, %v1347
      %v1349 = vpop.f32.mrb[0].mxu0
      %v1350 = vpop.f32.mrb[0].mxu0
      %v1351 = vpop.f32.mrb[0].mxu0
      %1352 = vdwg.mxu0
      %1353 = vmatprep.subr.bf16.mxu0 0
      %1354 = vmatpush1.bf16.msra.mxu0 %v986
      %1355 = vmatprep.subr.bf16.mxu0 0
      %1356 = vmatpush1.bf16.msra.mxu0 %v987
      %1357 = vmatprep.subr.bf16.mxu0 0
      %1358 = vmatpush1.bf16.msra.mxu0 %v988
      %1359 = vmatprep.subr.bf16.mxu0 0
      %1360 = vmatpush1.bf16.msra.mxu0 %v989
      %1361 = vmatprep.subr.bf16.mxu0 0
      %1362 = vmatpush1.bf16.msra.mxu0 %v990
      %1363 = vmatprep.subr.bf16.mxu0 0
      %1364 = vmatpush1.bf16.msra.mxu0 %v991
      %1365 = vmatprep.subr.bf16.mxu0 0
      %1366 = vmatpush1.bf16.msra.mxu0 %v992
      %1367 = vmatprep.subr.bf16.mxu0 0
      %1368 = vmatpush1.bf16.msra.mxu0 %v993
      %1369 = vmatprep.subr.bf16.mxu0 0
      %1370 = vmatpush1.bf16.msra.mxu0 %v994
      %1371 = vmatprep.subr.bf16.mxu0 0
      %1372 = vmatpush1.bf16.msra.mxu0 %v995
      %1373 = vmatprep.subr.bf16.mxu0 0
      %1374 = vmatpush1.bf16.msra.mxu0 %v996
      %1375 = vmatprep.subr.bf16.mxu0 0
      %1376 = vmatpush1.bf16.msra.mxu0 %v997
      %1377 = vmatprep.subr.bf16.mxu0 0
      %1378 = vmatpush1.bf16.msra.mxu0 %v998
      %1379 = vmatprep.subr.bf16.mxu0 0
      %1380 = vmatpush1.bf16.msra.mxu0 %v999
      %1381 = vmatprep.subr.bf16.mxu0 0
      %1382 = vmatpush1.bf16.msra.mxu0 %v1000
      %1383 = vmatprep.subr.bf16.mxu0 0
      %1384 = vmatpush1.bf16.msra.mxu0 %v1001
      %1385 = vmatprep.mubr.bf16.mxu0 %v1135
      %1386 = vmatmul.mubr.bf16.gmra.mrb[0].mxu0 %v1133
      %v1387 = vpop.f32.mrb[0].mxu0
      %v1388 = vadd.f32 %v1348, %v1387
      %v1389 = vpop.f32.mrb[0].mxu0
      %v1390 = vpop.f32.mrb[0].mxu0
      %v1391 = vpop.f32.mrb[0].mxu0
      %1392 = vdwg.mxu0
      %1393 = vmatprep.subr.bf16.mxu0 0
      %1394 = vmatpush1.bf16.msra.mxu0 %v1002
      %1395 = vmatprep.subr.bf16.mxu0 0
      %1396 = vmatpush1.bf16.msra.mxu0 %v1003
      %1397 = vmatprep.subr.bf16.mxu0 0
      %1398 = vmatpush1.bf16.msra.mxu0 %v1004
      %1399 = vmatprep.subr.bf16.mxu0 0
      %1400 = vmatpush1.bf16.msra.mxu0 %v1005
      %1401 = vmatprep.subr.bf16.mxu0 0
      %1402 = vmatpush1.bf16.msra.mxu0 %v1006
      %1403 = vmatprep.subr.bf16.mxu0 0
      %1404 = vmatpush1.bf16.msra.mxu0 %v1007
      %1405 = vmatprep.subr.bf16.mxu0 0
      %1406 = vmatpush1.bf16.msra.mxu0 %v1008
      %1407 = vmatprep.subr.bf16.mxu0 0
      %1408 = vmatpush1.bf16.msra.mxu0 %v1009
      %1409 = vmatprep.subr.bf16.mxu0 0
      %1410 = vmatpush1.bf16.msra.mxu0 %v1010
      %1411 = vmatprep.subr.bf16.mxu0 0
      %1412 = vmatpush1.bf16.msra.mxu0 %v1011
      %1413 = vmatprep.subr.bf16.mxu0 0
      %1414 = vmatpush1.bf16.msra.mxu0 %v1012
      %1415 = vmatprep.subr.bf16.mxu0 0
      %1416 = vmatpush1.bf16.msra.mxu0 %v1013
      %1417 = vmatprep.subr.bf16.mxu0 0
      %1418 = vmatpush1.bf16.msra.mxu0 %v1014
      %1419 = vmatprep.subr.bf16.mxu0 0
      %1420 = vmatpush1.bf16.msra.mxu0 %v1015
      %1421 = vmatprep.subr.bf16.mxu0 0
      %1422 = vmatpush1.bf16.msra.mxu0 %v1016
      %1423 = vmatprep.subr.bf16.mxu0 0
      %1424 = vmatpush1.bf16.msra.mxu0 %v1017
      %1425 = vmatprep.mubr.bf16.mxu0 %v1132
      %1426 = vmatmul.mubr.bf16.gmra.mrb[0].mxu0 %v1118
      %v1427 = vpop.f32.mrb[0].mxu0
      %v1428 = vadd.f32 %v1388, %v1427
      %v1429 = vpop.f32.mrb[0].mxu0
      %v1430 = vpop.f32.mrb[0].mxu0
      %v1431 = vpop.f32.mrb[0].mxu0
      %1432 = vdwg.mxu0
      %1433 = vmatprep.subr.bf16.mxu0 0
      %1434 = vmatpush1.bf16.msra.mxu0 %v1018
      %1435 = vmatprep.subr.bf16.mxu0 0
      %1436 = vmatpush1.bf16.msra.mxu0 %v1019
      %1437 = vmatprep.subr.bf16.mxu0 0
      %1438 = vmatpush1.bf16.msra.mxu0 %v1020
      %1439 = vmatprep.subr.bf16.mxu0 0
      %1440 = vmatpush1.bf16.msra.mxu0 %v1021
      %1441 = vmatprep.subr.bf16.mxu0 0
      %1442 = vmatpush1.bf16.msra.mxu0 %v1022
      %1443 = vmatprep.subr.bf16.mxu0 0
      %1444 = vmatpush1.bf16.msra.mxu0 %v1023
      %1445 = vmatprep.subr.bf16.mxu0 0
      %1446 = vmatpush1.bf16.msra.mxu0 %v1024
      %1447 = vmatprep.subr.bf16.mxu0 0
      %1448 = vmatpush1.bf16.msra.mxu0 %v1025
      %1449 = vmatprep.subr.bf16.mxu0 0
      %1450 = vmatpush1.bf16.msra.mxu0 %v1026
      %1451 = vmatprep.subr.bf16.mxu0 0
      %1452 = vmatpush1.bf16.msra.mxu0 %v1027
      %1453 = vmatprep.subr.bf16.mxu0 0
      %1454 = vmatpush1.bf16.msra.mxu0 %v1028
      %1455 = vmatprep.subr.bf16.mxu0 0
      %1456 = vmatpush1.bf16.msra.mxu0 %v1029
      %1457 = vmatprep.subr.bf16.mxu0 0
      %1458 = vmatpush1.bf16.msra.mxu0 %v1030
      %1459 = vmatprep.subr.bf16.mxu0 0
      %1460 = vmatpush1.bf16.msra.mxu0 %v1031
      %1461 = vmatprep.subr.bf16.mxu0 0
      %1462 = vmatpush1.bf16.msra.mxu0 %v1032
      %1463 = vmatprep.subr.bf16.mxu0 0
      %1464 = vmatpush1.bf16.msra.mxu0 %v1033
      %1465 = vmatprep.mubr.bf16.mxu0 %v1136
      %1466 = vmatmul.mubr.bf16.gmra.mrb[0].mxu0 %v1134
      %v1467 = vpop.f32.mrb[0].mxu0
      %v1468 = vadd.f32 %v1428, %v1467
      %v1469 = vpop.f32.mrb[0].mxu0
      %v1470 = vpop.f32.mrb[0].mxu0
      %v1471 = vpop.f32.mrb[0].mxu0
      %1472 = vdwg.mxu0
      %v1473 = vadd.f32 %v1034, %v1468
      %1474 = vst [vmem:[#allocation2] sm:$0x3] %v1473
      %v1475 = vld [vmem:[%s195 + $0x400] sm:$0xff]
      %v1476 = vld [vmem:[%s195 + $0x408] sm:$0xff]
      %v1477 = vld [vmem:[%s195 + $0x410] sm:$0xff]
      %v1478 = vld [vmem:[%s195 + $0x418] sm:$0xff]
      %v1479 = vld [vmem:[%s195 + $0x420] sm:$0xff]
      %v1480 = vld [vmem:[%s195 + $0x428] sm:$0xff]
      %v1481 = vld [vmem:[%s195 + $0x430] sm:$0xff]
      %v1482 = vld [vmem:[%s195 + $0x438] sm:$0xff]
      %v1483 = vld [vmem:[%s195 + $0x440] sm:$0xff]
      %v1484 = vld [vmem:[%s195 + $0x448] sm:$0xff]
      %v1485 = vld [vmem:[%s195 + $0x450] sm:$0xff]
      %v1486 = vld [vmem:[%s195 + $0x458] sm:$0xff]
      %v1487 = vld [vmem:[%s195 + $0x460] sm:$0xff]
      %v1488 = vld [vmem:[%s195 + $0x468] sm:$0xff]
      %v1489 = vld [vmem:[%s195 + $0x470] sm:$0xff]
      %v1490 = vld [vmem:[%s195 + $0x478] sm:$0xff]
      %v1491 = vld [vmem:[%s195 + $0x480] sm:$0xff]
      %v1492 = vld [vmem:[%s195 + $0x488] sm:$0xff]
      %v1493 = vld [vmem:[%s195 + $0x490] sm:$0xff]
      %v1494 = vld [vmem:[%s195 + $0x498] sm:$0xff]
      %v1495 = vld [vmem:[%s195 + $0x4a0] sm:$0xff]
      %v1496 = vld [vmem:[%s195 + $0x4a8] sm:$0xff]
      %v1497 = vld [vmem:[%s195 + $0x4b0] sm:$0xff]
      %v1498 = vld [vmem:[%s195 + $0x4b8] sm:$0xff]
      %v1499 = vld [vmem:[%s195 + $0x4c0] sm:$0xff]
      %v1500 = vld [vmem:[%s195 + $0x4c8] sm:$0xff]
      %v1501 = vld [vmem:[%s195 + $0x4d0] sm:$0xff]
      %v1502 = vld [vmem:[%s195 + $0x4d8] sm:$0xff]
      %v1503 = vld [vmem:[%s195 + $0x4e0] sm:$0xff]
      %v1504 = vld [vmem:[%s195 + $0x4e8] sm:$0xff]
      %v1505 = vld [vmem:[%s195 + $0x4f0] sm:$0xff]
      %v1506 = vld [vmem:[%s195 + $0x4f8] sm:$0xff]
      %v1507 = vld [vmem:[%s195 + $0x500] sm:$0xff]
      %v1508 = vld [vmem:[%s195 + $0x508] sm:$0xff]
      %v1509 = vld [vmem:[%s195 + $0x510] sm:$0xff]
      %v1510 = vld [vmem:[%s195 + $0x518] sm:$0xff]
      %v1511 = vld [vmem:[%s195 + $0x520] sm:$0xff]
      %v1512 = vld [vmem:[%s195 + $0x528] sm:$0xff]
      %v1513 = vld [vmem:[%s195 + $0x530] sm:$0xff]
      %v1514 = vld [vmem:[%s195 + $0x538] sm:$0xff]
      %v1515 = vld [vmem:[%s195 + $0x540] sm:$0xff]
      %v1516 = vld [vmem:[%s195 + $0x548] sm:$0xff]
      %v1517 = vld [vmem:[%s195 + $0x550] sm:$0xff]
      %v1518 = vld [vmem:[%s195 + $0x558] sm:$0xff]
      %v1519 = vld [vmem:[%s195 + $0x560] sm:$0xff]
      %v1520 = vld [vmem:[%s195 + $0x568] sm:$0xff]
      %v1521 = vld [vmem:[%s195 + $0x570] sm:$0xff]
      %v1522 = vld [vmem:[%s195 + $0x578] sm:$0xff]
      %v1523 = vld [vmem:[%s195 + $0x580] sm:$0xff]
      %v1524 = vld [vmem:[%s195 + $0x588] sm:$0xff]
      %v1525 = vld [vmem:[%s195 + $0x590] sm:$0xff]
      %v1526 = vld [vmem:[%s195 + $0x598] sm:$0xff]
      %v1527 = vld [vmem:[%s195 + $0x5a0] sm:$0xff]
      %v1528 = vld [vmem:[%s195 + $0x5a8] sm:$0xff]
      %v1529 = vld [vmem:[%s195 + $0x5b0] sm:$0xff]
      %v1530 = vld [vmem:[%s195 + $0x5b8] sm:$0xff]
      %v1531 = vld [vmem:[%s195 + $0x5c0] sm:$0xff]
      %v1532 = vld [vmem:[%s195 + $0x5c8] sm:$0xff]
      %v1533 = vld [vmem:[%s195 + $0x5d0] sm:$0xff]
      %v1534 = vld [vmem:[%s195 + $0x5d8] sm:$0xff]
      %v1535 = vld [vmem:[%s195 + $0x5e0] sm:$0xff]
      %v1536 = vld [vmem:[%s195 + $0x5e8] sm:$0xff]
      %v1537 = vld [vmem:[%s195 + $0x5f0] sm:$0xff]
      %v1538 = vld [vmem:[%s195 + $0x5f8] sm:$0xff]
      %v1539 = vunpack.c.l.s8.bf16 %v1475
      %v1540 = vunpack.c.h.s8.bf16 %v1475
      %v1541 = vunpack.c.l.s8.bf16 %v1476
      %v1542 = vunpack.c.h.s8.bf16 %v1476
      %v1543 = vunpack.c.l.s8.bf16 %v1477
      %v1544 = vunpack.c.h.s8.bf16 %v1477
      %v1545 = vunpack.c.l.s8.bf16 %v1478
      %v1546 = vunpack.c.h.s8.bf16 %v1478
      %v1547 = vunpack.c.l.s8.bf16 %v1479
      %v1548 = vunpack.c.h.s8.bf16 %v1479
      %v1549 = vunpack.c.l.s8.bf16 %v1480
      %v1550 = vunpack.c.h.s8.bf16 %v1480
      %v1551 = vunpack.c.l.s8.bf16 %v1481
      %v1552 = vunpack.c.h.s8.bf16 %v1481
      %v1553 = vunpack.c.l.s8.bf16 %v1482
      %v1554 = vunpack.c.h.s8.bf16 %v1482
      %v1555 = vunpack.c.l.s8.bf16 %v1483
      %v1556 = vunpack.c.h.s8.bf16 %v1483
      %v1557 = vunpack.c.l.s8.bf16 %v1484
      %v1558 = vunpack.c.h.s8.bf16 %v1484
      %v1559 = vunpack.c.l.s8.bf16 %v1485
      %v1560 = vunpack.c.h.s8.bf16 %v1485
      %v1561 = vunpack.c.l.s8.bf16 %v1486
      %v1562 = vunpack.c.h.s8.bf16 %v1486
      %v1563 = vunpack.c.l.s8.bf16 %v1487
      %v1564 = vunpack.c.h.s8.bf16 %v1487
      %v1565 = vunpack.c.l.s8.bf16 %v1488
      %v1566 = vunpack.c.h.s8.bf16 %v1488
      %v1567 = vunpack.c.l.s8.bf16 %v1489
      %v1568 = vunpack.c.h.s8.bf16 %v1489
      %v1569 = vunpack.c.l.s8.bf16 %v1490
      %v1570 = vunpack.c.h.s8.bf16 %v1490
      %v1571 = vunpack.c.l.s8.bf16 %v1491
      %v1572 = vunpack.c.h.s8.bf16 %v1491
      %v1573 = vunpack.c.l.s8.bf16 %v1492
      %v1574 = vunpack.c.h.s8.bf16 %v1492
      %v1575 = vunpack.c.l.s8.bf16 %v1493
      %v1576 = vunpack.c.h.s8.bf16 %v1493
      %v1577 = vunpack.c.l.s8.bf16 %v1494
      %v1578 = vunpack.c.h.s8.bf16 %v1494
      %v1579 = vunpack.c.l.s8.bf16 %v1495
      %v1580 = vunpack.c.h.s8.bf16 %v1495
      %v1581 = vunpack.c.l.s8.bf16 %v1496
      %v1582 = vunpack.c.h.s8.bf16 %v1496
      %v1583 = vunpack.c.l.s8.bf16 %v1497
      %v1584 = vunpack.c.h.s8.bf16 %v1497
      %v1585 = vunpack.c.l.s8.bf16 %v1498
      %v1586 = vunpack.c.h.s8.bf16 %v1498
      %v1587 = vunpack.c.l.s8.bf16 %v1499
      %v1588 = vunpack.c.h.s8.bf16 %v1499
      %v1589 = vunpack.c.l.s8.bf16 %v1500
      %v1590 = vunpack.c.h.s8.bf16 %v1500
      %v1591 = vunpack.c.l.s8.bf16 %v1501
      %v1592 = vunpack.c.h.s8.bf16 %v1501
      %v1593 = vunpack.c.l.s8.bf16 %v1502
      %v1594 = vunpack.c.h.s8.bf16 %v1502
      %v1595 = vunpack.c.l.s8.bf16 %v1503
      %v1596 = vunpack.c.h.s8.bf16 %v1503
      %v1597 = vunpack.c.l.s8.bf16 %v1504
      %v1598 = vunpack.c.h.s8.bf16 %v1504
      %v1599 = vunpack.c.l.s8.bf16 %v1505
      %v1600 = vunpack.c.h.s8.bf16 %v1505
      %v1601 = vunpack.c.l.s8.bf16 %v1506
      %v1602 = vunpack.c.h.s8.bf16 %v1506
      %v1603 = vunpack.c.l.s8.bf16 %v1507
      %v1604 = vunpack.c.h.s8.bf16 %v1507
      %v1605 = vunpack.c.l.s8.bf16 %v1508
      %v1606 = vunpack.c.h.s8.bf16 %v1508
      %v1607 = vunpack.c.l.s8.bf16 %v1509
      %v1608 = vunpack.c.h.s8.bf16 %v1509
      %v1609 = vunpack.c.l.s8.bf16 %v1510
      %v1610 = vunpack.c.h.s8.bf16 %v1510
      %v1611 = vunpack.c.l.s8.bf16 %v1511
      %v1612 = vunpack.c.h.s8.bf16 %v1511
      %v1613 = vunpack.c.l.s8.bf16 %v1512
      %v1614 = vunpack.c.h.s8.bf16 %v1512
      %v1615 = vunpack.c.l.s8.bf16 %v1513
      %v1616 = vunpack.c.h.s8.bf16 %v1513
      %v1617 = vunpack.c.l.s8.bf16 %v1514
      %v1618 = vunpack.c.h.s8.bf16 %v1514
      %v1619 = vunpack.c.l.s8.bf16 %v1515
      %v1620 = vunpack.c.h.s8.bf16 %v1515
      %v1621 = vunpack.c.l.s8.bf16 %v1516
      %v1622 = vunpack.c.h.s8.bf16 %v1516
      %v1623 = vunpack.c.l.s8.bf16 %v1517
      %v1624 = vunpack.c.h.s8.bf16 %v1517
      %v1625 = vunpack.c.l.s8.bf16 %v1518
      %v1626 = vunpack.c.h.s8.bf16 %v1518
      %v1627 = vunpack.c.l.s8.bf16 %v1519
      %v1628 = vunpack.c.h.s8.bf16 %v1519
      %v1629 = vunpack.c.l.s8.bf16 %v1520
      %v1630 = vunpack.c.h.s8.bf16 %v1520
      %v1631 = vunpack.c.l.s8.bf16 %v1521
      %v1632 = vunpack.c.h.s8.bf16 %v1521
      %v1633 = vunpack.c.l.s8.bf16 %v1522
      %v1634 = vunpack.c.h.s8.bf16 %v1522
      %v1635 = vunpack.c.l.s8.bf16 %v1523
      %v1636 = vunpack.c.h.s8.bf16 %v1523
      %v1637 = vunpack.c.l.s8.bf16 %v1524
      %v1638 = vunpack.c.h.s8.bf16 %v1524
      %v1639 = vunpack.c.l.s8.bf16 %v1525
      %v1640 = vunpack.c.h.s8.bf16 %v1525
      %v1641 = vunpack.c.l.s8.bf16 %v1526
      %v1642 = vunpack.c.h.s8.bf16 %v1526
      %v1643 = vunpack.c.l.s8.bf16 %v1527
      %v1644 = vunpack.c.h.s8.bf16 %v1527
      %v1645 = vunpack.c.l.s8.bf16 %v1528
      %v1646 = vunpack.c.h.s8.bf16 %v1528
      %v1647 = vunpack.c.l.s8.bf16 %v1529
      %v1648 = vunpack.c.h.s8.bf16 %v1529
      %v1649 = vunpack.c.l.s8.bf16 %v1530
      %v1650 = vunpack.c.h.s8.bf16 %v1530
      %v1651 = vunpack.c.l.s8.bf16 %v1531
      %v1652 = vunpack.c.h.s8.bf16 %v1531
      %v1653 = vunpack.c.l.s8.bf16 %v1532
      %v1654 = vunpack.c.h.s8.bf16 %v1532
      %v1655 = vunpack.c.l.s8.bf16 %v1533
      %v1656 = vunpack.c.h.s8.bf16 %v1533
      %v1657 = vunpack.c.l.s8.bf16 %v1534
      %v1658 = vunpack.c.h.s8.bf16 %v1534
      %v1659 = vunpack.c.l.s8.bf16 %v1535
      %v1660 = vunpack.c.h.s8.bf16 %v1535
      %v1661 = vunpack.c.l.s8.bf16 %v1536
      %v1662 = vunpack.c.h.s8.bf16 %v1536
      %v1663 = vunpack.c.l.s8.bf16 %v1537
      %v1664 = vunpack.c.h.s8.bf16 %v1537
      %v1665 = vunpack.c.l.s8.bf16 %v1538
      %v1666 = vunpack.c.h.s8.bf16 %v1538
      %v1667 = vld [vmem:[#allocation2] sm:$0x3]
      %v1668 = vld [vmem:[%s185 + $0x20] sm:$0xff]
      %v1669 = vld [vmem:[%s185 + $0x28] sm:$0xff]
      %v1672 = vcombine.high %v1668, %v1668
      %v1674 = vunpack.c.l.s4 1966171168
      %v1675 = vunpack.c.0.s8 %v1674
      %v1676 = vlaneseq
      %v1677 = vshrl.u32 %v1676, 7
      %v1678 = vsub.s32 %v1675, %v1677
      %v1679 = vrot.slane %v1668, %v1678
      %v1681 = vunpack.c.l.s4 1966171168
      %v1682 = vunpack.c.0.s8 %v1681
      %v1683 = vlaneseq
      %v1684 = vshrl.u32 %v1683, 7
      %v1685 = vsub.s32 %v1682, %v1684
      %v1686 = vrot.slane %v1672, %v1685
      %v1687 = vcombine.high %v1679, %v1679
      %v1688 = vcombine.high %v1686, %v1686
      %v1690 = vunpack.c.l.s4 1966171168
      %v1691 = vunpack.c.0.s8 %v1690
      %v1692 = vlaneseq
      %v1693 = vshrl.u32 %v1692, 7
      %v1694 = vsub.s32 %v1691, %v1693
      %v1695 = vrot.slane %v1679, %v1694
      %v1697 = vunpack.c.l.s4 1966171168
      %v1698 = vunpack.c.0.s8 %v1697
      %v1699 = vlaneseq
      %v1700 = vshrl.u32 %v1699, 7
      %v1701 = vsub.s32 %v1698, %v1700
      %v1702 = vrot.slane %v1686, %v1701
      %v1704 = vunpack.c.l.s4 1966171168
      %v1705 = vunpack.c.0.s8 %v1704
      %v1706 = vlaneseq
      %v1707 = vshrl.u32 %v1706, 7
      %v1708 = vsub.s32 %v1705, %v1707
      %v1709 = vrot.slane %v1687, %v1708
      %v1711 = vunpack.c.l.s4 1966171168
      %v1712 = vunpack.c.0.s8 %v1711
      %v1713 = vlaneseq
      %v1714 = vshrl.u32 %v1713, 7
      %v1715 = vsub.s32 %v1712, %v1714
      %v1716 = vrot.slane %v1688, %v1715
      %v1717 = vcombine.high %v1695, %v1695
      %v1718 = vcombine.high %v1702, %v1702
      %v1719 = vcombine.high %v1709, %v1709
      %v1720 = vcombine.high %v1716, %v1716
      %v1721 = vcombine.high %v1669, %v1669
      %v1723 = vunpack.c.l.s4 1966171168
      %v1724 = vunpack.c.0.s8 %v1723
      %v1725 = vlaneseq
      %v1726 = vshrl.u32 %v1725, 7
      %v1727 = vsub.s32 %v1724, %v1726
      %v1728 = vrot.slane %v1669, %v1727
      %v1730 = vunpack.c.l.s4 1966171168
      %v1731 = vunpack.c.0.s8 %v1730
      %v1732 = vlaneseq
      %v1733 = vshrl.u32 %v1732, 7
      %v1734 = vsub.s32 %v1731, %v1733
      %v1735 = vrot.slane %v1721, %v1734
      %v1736 = vcombine.high %v1728, %v1728
      %v1737 = vcombine.high %v1735, %v1735
      %v1739 = vunpack.c.l.s4 1966171168
      %v1740 = vunpack.c.0.s8 %v1739
      %v1741 = vlaneseq
      %v1742 = vshrl.u32 %v1741, 7
      %v1743 = vsub.s32 %v1740, %v1742
      %v1744 = vrot.slane %v1728, %v1743
      %v1746 = vunpack.c.l.s4 1966171168
      %v1747 = vunpack.c.0.s8 %v1746
      %v1748 = vlaneseq
      %v1749 = vshrl.u32 %v1748, 7
      %v1750 = vsub.s32 %v1747, %v1749
      %v1751 = vrot.slane %v1735, %v1750
      %v1753 = vunpack.c.l.s4 1966171168
      %v1754 = vunpack.c.0.s8 %v1753
      %v1755 = vlaneseq
      %v1756 = vshrl.u32 %v1755, 7
      %v1757 = vsub.s32 %v1754, %v1756
      %v1758 = vrot.slane %v1736, %v1757
      %v1760 = vunpack.c.l.s4 1966171168
      %v1761 = vunpack.c.0.s8 %v1760
      %v1762 = vlaneseq
      %v1763 = vshrl.u32 %v1762, 7
      %v1764 = vsub.s32 %v1761, %v1763
      %v1765 = vrot.slane %v1737, %v1764
      %v1766 = vcombine.high %v1744, %v1744
      %v1767 = vcombine.high %v1751, %v1751
      %v1768 = vcombine.high %v1758, %v1758
      %v1769 = vcombine.high %v1765, %v1765
      %1786 = vmatprep.subr.bf16.mxu0 0
      %1787 = vmatpush1.bf16.msra.mxu0 %v1539
      %1788 = vmatprep.subr.bf16.mxu0 0
      %1789 = vmatpush1.bf16.msra.mxu0 %v1540
      %1790 = vmatprep.subr.bf16.mxu0 0
      %1791 = vmatpush1.bf16.msra.mxu0 %v1541
      %1792 = vmatprep.subr.bf16.mxu0 0
      %1793 = vmatpush1.bf16.msra.mxu0 %v1542
      %1794 = vmatprep.subr.bf16.mxu0 0
      %1795 = vmatpush1.bf16.msra.mxu0 %v1543
      %1796 = vmatprep.subr.bf16.mxu0 0
      %1797 = vmatpush1.bf16.msra.mxu0 %v1544
      %1798 = vmatprep.subr.bf16.mxu0 0
      %1799 = vmatpush1.bf16.msra.mxu0 %v1545
      %1800 = vmatprep.subr.bf16.mxu0 0
      %1801 = vmatpush1.bf16.msra.mxu0 %v1546
      %1802 = vmatprep.subr.bf16.mxu0 0
      %1803 = vmatpush1.bf16.msra.mxu0 %v1547
      %1804 = vmatprep.subr.bf16.mxu0 0
      %1805 = vmatpush1.bf16.msra.mxu0 %v1548
      %1806 = vmatprep.subr.bf16.mxu0 0
      %1807 = vmatpush1.bf16.msra.mxu0 %v1549
      %1808 = vmatprep.subr.bf16.mxu0 0
      %1809 = vmatpush1.bf16.msra.mxu0 %v1550
      %1810 = vmatprep.subr.bf16.mxu0 0
      %1811 = vmatpush1.bf16.msra.mxu0 %v1551
      %1812 = vmatprep.subr.bf16.mxu0 0
      %1813 = vmatpush1.bf16.msra.mxu0 %v1552
      %1814 = vmatprep.subr.bf16.mxu0 0
      %1815 = vmatpush1.bf16.msra.mxu0 %v1553
      %1816 = vmatprep.subr.bf16.mxu0 0
      %1817 = vmatpush1.bf16.msra.mxu0 %v1554
      %1818 = vmatprep.mubr.bf16.mxu0 %v1709
      %1819 = vmatmul.mubr.bf16.gmra.mrb[0].mxu0 %v1695
      %v1820 = vpop.f32.mrb[0].mxu0
      %v1821 = vadd.f32 0.0, %v1820
      %v1822 = vpop.f32.mrb[0].mxu0
      %v1823 = vpop.f32.mrb[0].mxu0
      %v1824 = vpop.f32.mrb[0].mxu0
      %1825 = vdwg.mxu0
      %1826 = vmatprep.subr.bf16.mxu0 0
      %1827 = vmatpush1.bf16.msra.mxu0 %v1555
      %1828 = vmatprep.subr.bf16.mxu0 0
      %1829 = vmatpush1.bf16.msra.mxu0 %v1556
      %1830 = vmatprep.subr.bf16.mxu0 0
      %1831 = vmatpush1.bf16.msra.mxu0 %v1557
      %1832 = vmatprep.subr.bf16.mxu0 0
      %1833 = vmatpush1.bf16.msra.mxu0 %v1558
      %1834 = vmatprep.subr.bf16.mxu0 0
      %1835 = vmatpush1.bf16.msra.mxu0 %v1559
      %1836 = vmatprep.subr.bf16.mxu0 0
      %1837 = vmatpush1.bf16.msra.mxu0 %v1560
      %1838 = vmatprep.subr.bf16.mxu0 0
      %1839 = vmatpush1.bf16.msra.mxu0 %v1561
      %1840 = vmatprep.subr.bf16.mxu0 0
      %1841 = vmatpush1.bf16.msra.mxu0 %v1562
      %1842 = vmatprep.subr.bf16.mxu0 0
      %1843 = vmatpush1.bf16.msra.mxu0 %v1563
      %1844 = vmatprep.subr.bf16.mxu0 0
      %1845 = vmatpush1.bf16.msra.mxu0 %v1564
      %1846 = vmatprep.subr.bf16.mxu0 0
      %1847 = vmatpush1.bf16.msra.mxu0 %v1565
      %1848 = vmatprep.subr.bf16.mxu0 0
      %1849 = vmatpush1.bf16.msra.mxu0 %v1566
      %1850 = vmatprep.subr.bf16.mxu0 0
      %1851 = vmatpush1.bf16.msra.mxu0 %v1567
      %1852 = vmatprep.subr.bf16.mxu0 0
      %1853 = vmatpush1.bf16.msra.mxu0 %v1568
      %1854 = vmatprep.subr.bf16.mxu0 0
      %1855 = vmatpush1.bf16.msra.mxu0 %v1569
      %1856 = vmatprep.subr.bf16.mxu0 0
      %1857 = vmatpush1.bf16.msra.mxu0 %v1570
      %1858 = vmatprep.mubr.bf16.mxu0 %v1719
      %1859 = vmatmul.mubr.bf16.gmra.mrb[0].mxu0 %v1717
      %v1860 = vpop.f32.mrb[0].mxu0
      %v1861 = vadd.f32 %v1821, %v1860
      %v1862 = vpop.f32.mrb[0].mxu0
      %v1863 = vpop.f32.mrb[0].mxu0
      %v1864 = vpop.f32.mrb[0].mxu0
      %1865 = vdwg.mxu0
      %1866 = vmatprep.subr.bf16.mxu0 0
      %1867 = vmatpush1.bf16.msra.mxu0 %v1571
      %1868 = vmatprep.subr.bf16.mxu0 0
      %1869 = vmatpush1.bf16.msra.mxu0 %v1572
      %1870 = vmatprep.subr.bf16.mxu0 0
      %1871 = vmatpush1.bf16.msra.mxu0 %v1573
      %1872 = vmatprep.subr.bf16.mxu0 0
      %1873 = vmatpush1.bf16.msra.mxu0 %v1574
      %1874 = vmatprep.subr.bf16.mxu0 0
      %1875 = vmatpush1.bf16.msra.mxu0 %v1575
      %1876 = vmatprep.subr.bf16.mxu0 0
      %1877 = vmatpush1.bf16.msra.mxu0 %v1576
      %1878 = vmatprep.subr.bf16.mxu0 0
      %1879 = vmatpush1.bf16.msra.mxu0 %v1577
      %1880 = vmatprep.subr.bf16.mxu0 0
      %1881 = vmatpush1.bf16.msra.mxu0 %v1578
      %1882 = vmatprep.subr.bf16.mxu0 0
      %1883 = vmatpush1.bf16.msra.mxu0 %v1579
      %1884 = vmatprep.subr.bf16.mxu0 0
      %1885 = vmatpush1.bf16.msra.mxu0 %v1580
      %1886 = vmatprep.subr.bf16.mxu0 0
      %1887 = vmatpush1.bf16.msra.mxu0 %v1581
      %1888 = vmatprep.subr.bf16.mxu0 0
      %1889 = vmatpush1.bf16.msra.mxu0 %v1582
      %1890 = vmatprep.subr.bf16.mxu0 0
      %1891 = vmatpush1.bf16.msra.mxu0 %v1583
      %1892 = vmatprep.subr.bf16.mxu0 0
      %1893 = vmatpush1.bf16.msra.mxu0 %v1584
      %1894 = vmatprep.subr.bf16.mxu0 0
      %1895 = vmatpush1.bf16.msra.mxu0 %v1585
      %1896 = vmatprep.subr.bf16.mxu0 0
      %1897 = vmatpush1.bf16.msra.mxu0 %v1586
      %1898 = vmatprep.mubr.bf16.mxu0 %v1716
      %1899 = vmatmul.mubr.bf16.gmra.mrb[0].mxu0 %v1702
      %v1900 = vpop.f32.mrb[0].mxu0
      %v1901 = vadd.f32 %v1861, %v1900
      %v1902 = vpop.f32.mrb[0].mxu0
      %v1903 = vpop.f32.mrb[0].mxu0
      %v1904 = vpop.f32.mrb[0].mxu0
      %1905 = vdwg.mxu0
      %1906 = vmatprep.subr.bf16.mxu0 0
      %1907 = vmatpush1.bf16.msra.mxu0 %v1587
      %1908 = vmatprep.subr.bf16.mxu0 0
      %1909 = vmatpush1.bf16.msra.mxu0 %v1588
      %1910 = vmatprep.subr.bf16.mxu0 0
      %1911 = vmatpush1.bf16.msra.mxu0 %v1589
      %1912 = vmatprep.subr.bf16.mxu0 0
      %1913 = vmatpush1.bf16.msra.mxu0 %v1590
      %1914 = vmatprep.subr.bf16.mxu0 0
      %1915 = vmatpush1.bf16.msra.mxu0 %v1591
      %1916 = vmatprep.subr.bf16.mxu0 0
      %1917 = vmatpush1.bf16.msra.mxu0 %v1592
      %1918 = vmatprep.subr.bf16.mxu0 0
      %1919 = vmatpush1.bf16.msra.mxu0 %v1593
      %1920 = vmatprep.subr.bf16.mxu0 0
      %1921 = vmatpush1.bf16.msra.mxu0 %v1594
      %1922 = vmatprep.subr.bf16.mxu0 0
      %1923 = vmatpush1.bf16.msra.mxu0 %v1595
      %1924 = vmatprep.subr.bf16.mxu0 0
      %1925 = vmatpush1.bf16.msra.mxu0 %v1596
      %1926 = vmatprep.subr.bf16.mxu0 0
      %1927 = vmatpush1.bf16.msra.mxu0 %v1597
      %1928 = vmatprep.subr.bf16.mxu0 0
      %1929 = vmatpush1.bf16.msra.mxu0 %v1598
      %1930 = vmatprep.subr.bf16.mxu0 0
      %1931 = vmatpush1.bf16.msra.mxu0 %v1599
      %1932 = vmatprep.subr.bf16.mxu0 0
      %1933 = vmatpush1.bf16.msra.mxu0 %v1600
      %1934 = vmatprep.subr.bf16.mxu0 0
      %1935 = vmatpush1.bf16.msra.mxu0 %v1601
      %1936 = vmatprep.subr.bf16.mxu0 0
      %1937 = vmatpush1.bf16.msra.mxu0 %v1602
      %1938 = vmatprep.mubr.bf16.mxu0 %v1720
      %1939 = vmatmul.mubr.bf16.gmra.mrb[0].mxu0 %v1718
      %v1940 = vpop.f32.mrb[0].mxu0
      %v1941 = vadd.f32 %v1901, %v1940
      %v1942 = vpop.f32.mrb[0].mxu0
      %v1943 = vpop.f32.mrb[0].mxu0
      %v1944 = vpop.f32.mrb[0].mxu0
      %1945 = vdwg.mxu0
      %1946 = vmatprep.subr.bf16.mxu0 0
      %1947 = vmatpush1.bf16.msra.mxu0 %v1603
      %1948 = vmatprep.subr.bf16.mxu0 0
      %1949 = vmatpush1.bf16.msra.mxu0 %v1604
      %1950 = vmatprep.subr.bf16.mxu0 0
      %1951 = vmatpush1.bf16.msra.mxu0 %v1605
      %1952 = vmatprep.subr.bf16.mxu0 0
      %1953 = vmatpush1.bf16.msra.mxu0 %v1606
      %1954 = vmatprep.subr.bf16.mxu0 0
      %1955 = vmatpush1.bf16.msra.mxu0 %v1607
      %1956 = vmatprep.subr.bf16.mxu0 0
      %1957 = vmatpush1.bf16.msra.mxu0 %v1608
      %1958 = vmatprep.subr.bf16.mxu0 0
      %1959 = vmatpush1.bf16.msra.mxu0 %v1609
      %1960 = vmatprep.subr.bf16.mxu0 0
      %1961 = vmatpush1.bf16.msra.mxu0 %v1610
      %1962 = vmatprep.subr.bf16.mxu0 0
      %1963 = vmatpush1.bf16.msra.mxu0 %v1611
      %1964 = vmatprep.subr.bf16.mxu0 0
      %1965 = vmatpush1.bf16.msra.mxu0 %v1612
      %1966 = vmatprep.subr.bf16.mxu0 0
      %1967 = vmatpush1.bf16.msra.mxu0 %v1613
      %1968 = vmatprep.subr.bf16.mxu0 0
      %1969 = vmatpush1.bf16.msra.mxu0 %v1614
      %1970 = vmatprep.subr.bf16.mxu0 0
      %1971 = vmatpush1.bf16.msra.mxu0 %v1615
      %1972 = vmatprep.subr.bf16.mxu0 0
      %1973 = vmatpush1.bf16.msra.mxu0 %v1616
      %1974 = vmatprep.subr.bf16.mxu0 0
      %1975 = vmatpush1.bf16.msra.mxu0 %v1617
      %1976 = vmatprep.subr.bf16.mxu0 0
      %1977 = vmatpush1.bf16.msra.mxu0 %v1618
      %1978 = vmatprep.mubr.bf16.mxu0 %v1758
      %1979 = vmatmul.mubr.bf16.gmra.mrb[0].mxu0 %v1744
      %v1980 = vpop.f32.mrb[0].mxu0
      %v1981 = vadd.f32 %v1941, %v1980
      %v1982 = vpop.f32.mrb[0].mxu0
      %v1983 = vpop.f32.mrb[0].mxu0
      %v1984 = vpop.f32.mrb[0].mxu0
      %1985 = vdwg.mxu0
      %1986 = vmatprep.subr.bf16.mxu0 0
      %1987 = vmatpush1.bf16.msra.mxu0 %v1619
      %1988 = vmatprep.subr.bf16.mxu0 0
      %1989 = vmatpush1.bf16.msra.mxu0 %v1620
      %1990 = vmatprep.subr.bf16.mxu0 0
      %1991 = vmatpush1.bf16.msra.mxu0 %v1621
      %1992 = vmatprep.subr.bf16.mxu0 0
      %1993 = vmatpush1.bf16.msra.mxu0 %v1622
      %1994 = vmatprep.subr.bf16.mxu0 0
      %1995 = vmatpush1.bf16.msra.mxu0 %v1623
      %1996 = vmatprep.subr.bf16.mxu0 0
      %1997 = vmatpush1.bf16.msra.mxu0 %v1624
      %1998 = vmatprep.subr.bf16.mxu0 0
      %1999 = vmatpush1.bf16.msra.mxu0 %v1625
      %2000 = vmatprep.subr.bf16.mxu0 0
      %2001 = vmatpush1.bf16.msra.mxu0 %v1626
      %2002 = vmatprep.subr.bf16.mxu0 0
      %2003 = vmatpush1.bf16.msra.mxu0 %v1627
      %2004 = vmatprep.subr.bf16.mxu0 0
      %2005 = vmatpush1.bf16.msra.mxu0 %v1628
      %2006 = vmatprep.subr.bf16.mxu0 0
      %2007 = vmatpush1.bf16.msra.mxu0 %v1629
      %2008 = vmatprep.subr.bf16.mxu0 0
      %2009 = vmatpush1.bf16.msra.mxu0 %v1630
      %2010 = vmatprep.subr.bf16.mxu0 0
      %2011 = vmatpush1.bf16.msra.mxu0 %v1631
      %2012 = vmatprep.subr.bf16.mxu0 0
      %2013 = vmatpush1.bf16.msra.mxu0 %v1632
      %2014 = vmatprep.subr.bf16.mxu0 0
      %2015 = vmatpush1.bf16.msra.mxu0 %v1633
      %2016 = vmatprep.subr.bf16.mxu0 0
      %2017 = vmatpush1.bf16.msra.mxu0 %v1634
      %2018 = vmatprep.mubr.bf16.mxu0 %v1768
      %2019 = vmatmul.mubr.bf16.gmra.mrb[0].mxu0 %v1766
      %v2020 = vpop.f32.mrb[0].mxu0
      %v2021 = vadd.f32 %v1981, %v2020
      %v2022 = vpop.f32.mrb[0].mxu0
      %v2023 = vpop.f32.mrb[0].mxu0
      %v2024 = vpop.f32.mrb[0].mxu0
      %2025 = vdwg.mxu0
      %2026 = vmatprep.subr.bf16.mxu0 0
      %2027 = vmatpush1.bf16.msra.mxu0 %v1635
      %2028 = vmatprep.subr.bf16.mxu0 0
      %2029 = vmatpush1.bf16.msra.mxu0 %v1636
      %2030 = vmatprep.subr.bf16.mxu0 0
      %2031 = vmatpush1.bf16.msra.mxu0 %v1637
      %2032 = vmatprep.subr.bf16.mxu0 0
      %2033 = vmatpush1.bf16.msra.mxu0 %v1638
      %2034 = vmatprep.subr.bf16.mxu0 0
      %2035 = vmatpush1.bf16.msra.mxu0 %v1639
      %2036 = vmatprep.subr.bf16.mxu0 0
      %2037 = vmatpush1.bf16.msra.mxu0 %v1640
      %2038 = vmatprep.subr.bf16.mxu0 0
      %2039 = vmatpush1.bf16.msra.mxu0 %v1641
      %2040 = vmatprep.subr.bf16.mxu0 0
      %2041 = vmatpush1.bf16.msra.mxu0 %v1642
      %2042 = vmatprep.subr.bf16.mxu0 0
      %2043 = vmatpush1.bf16.msra.mxu0 %v1643
      %2044 = vmatprep.subr.bf16.mxu0 0
      %2045 = vmatpush1.bf16.msra.mxu0 %v1644
      %2046 = vmatprep.subr.bf16.mxu0 0
      %2047 = vmatpush1.bf16.msra.mxu0 %v1645
      %2048 = vmatprep.subr.bf16.mxu0 0
      %2049 = vmatpush1.bf16.msra.mxu0 %v1646
      %2050 = vmatprep.subr.bf16.mxu0 0
      %2051 = vmatpush1.bf16.msra.mxu0 %v1647
      %2052 = vmatprep.subr.bf16.mxu0 0
      %2053 = vmatpush1.bf16.msra.mxu0 %v1648
      %2054 = vmatprep.subr.bf16.mxu0 0
      %2055 = vmatpush1.bf16.msra.mxu0 %v1649
      %2056 = vmatprep.subr.bf16.mxu0 0
      %2057 = vmatpush1.bf16.msra.mxu0 %v1650
      %2058 = vmatprep.mubr.bf16.mxu0 %v1765
      %2059 = vmatmul.mubr.bf16.gmra.mrb[0].mxu0 %v1751
      %v2060 = vpop.f32.mrb[0].mxu0
      %v2061 = vadd.f32 %v2021, %v2060
      %v2062 = vpop.f32.mrb[0].mxu0
      %v2063 = vpop.f32.mrb[0].mxu0
      %v2064 = vpop.f32.mrb[0].mxu0
      %2065 = vdwg.mxu0
      %2066 = vmatprep.subr.bf16.mxu0 0
      %2067 = vmatpush1.bf16.msra.mxu0 %v1651
      %2068 = vmatprep.subr.bf16.mxu0 0
      %2069 = vmatpush1.bf16.msra.mxu0 %v1652
      %2070 = vmatprep.subr.bf16.mxu0 0
      %2071 = vmatpush1.bf16.msra.mxu0 %v1653
      %2072 = vmatprep.subr.bf16.mxu0 0
      %2073 = vmatpush1.bf16.msra.mxu0 %v1654
      %2074 = vmatprep.subr.bf16.mxu0 0
      %2075 = vmatpush1.bf16.msra.mxu0 %v1655
      %2076 = vmatprep.subr.bf16.mxu0 0
      %2077 = vmatpush1.bf16.msra.mxu0 %v1656
      %2078 = vmatprep.subr.bf16.mxu0 0
      %2079 = vmatpush1.bf16.msra.mxu0 %v1657
      %2080 = vmatprep.subr.bf16.mxu0 0
      %2081 = vmatpush1.bf16.msra.mxu0 %v1658
      %2082 = vmatprep.subr.bf16.mxu0 0
      %2083 = vmatpush1.bf16.msra.mxu0 %v1659
      %2084 = vmatprep.subr.bf16.mxu0 0
      %2085 = vmatpush1.bf16.msra.mxu0 %v1660
      %2086 = vmatprep.subr.bf16.mxu0 0
      %2087 = vmatpush1.bf16.msra.mxu0 %v1661
      %2088 = vmatprep.subr.bf16.mxu0 0
      %2089 = vmatpush1.bf16.msra.mxu0 %v1662
      %2090 = vmatprep.subr.bf16.mxu0 0
      %2091 = vmatpush1.bf16.msra.mxu0 %v1663
      %2092 = vmatprep.subr.bf16.mxu0 0
      %2093 = vmatpush1.bf16.msra.mxu0 %v1664
      %2094 = vmatprep.subr.bf16.mxu0 0
      %2095 = vmatpush1.bf16.msra.mxu0 %v1665
      %2096 = vmatprep.subr.bf16.mxu0 0
      %2097 = vmatpush1.bf16.msra.mxu0 %v1666
      %2098 = vmatprep.mubr.bf16.mxu0 %v1769
      %2099 = vmatmul.mubr.bf16.gmra.mrb[0].mxu0 %v1767
      %v2100 = vpop.f32.mrb[0].mxu0
      %v2101 = vadd.f32 %v2061, %v2100
      %v2102 = vpop.f32.mrb[0].mxu0
      %v2103 = vpop.f32.mrb[0].mxu0
      %v2104 = vpop.f32.mrb[0].mxu0
      %2105 = vdwg.mxu0
      %v2106 = vadd.f32 %v1667, %v2101
      %2107 = vst [vmem:[#allocation2] sm:$0x3] %v2106
      %v2108 = vld [vmem:[%s195 + $0x600] sm:$0xff]
      %v2109 = vld [vmem:[%s195 + $0x608] sm:$0xff]
      %v2110 = vld [vmem:[%s195 + $0x610] sm:$0xff]
      %v2111 = vld [vmem:[%s195 + $0x618] sm:$0xff]
      %v2112 = vld [vmem:[%s195 + $0x620] sm:$0xff]
      %v2113 = vld [vmem:[%s195 + $0x628] sm:$0xff]
      %v2114 = vld [vmem:[%s195 + $0x630] sm:$0xff]
      %v2115 = vld [vmem:[%s195 + $0x638] sm:$0xff]
      %v2116 = vld [vmem:[%s195 + $0x640] sm:$0xff]
      %v2117 = vld [vmem:[%s195 + $0x648] sm:$0xff]
      %v2118 = vld [vmem:[%s195 + $0x650] sm:$0xff]
      %v2119 = vld [vmem:[%s195 + $0x658] sm:$0xff]
      %v2120 = vld [vmem:[%s195 + $0x660] sm:$0xff]
      %v2121 = vld [vmem:[%s195 + $0x668] sm:$0xff]
      %v2122 = vld [vmem:[%s195 + $0x670] sm:$0xff]
      %v2123 = vld [vmem:[%s195 + $0x678] sm:$0xff]
      %v2124 = vld [vmem:[%s195 + $0x680] sm:$0xff]
      %v2125 = vld [vmem:[%s195 + $0x688] sm:$0xff]
      %v2126 = vld [vmem:[%s195 + $0x690] sm:$0xff]
      %v2127 = vld [vmem:[%s195 + $0x698] sm:$0xff]
      %v2128 = vld [vmem:[%s195 + $0x6a0] sm:$0xff]
      %v2129 = vld [vmem:[%s195 + $0x6a8] sm:$0xff]
      %v2130 = vld [vmem:[%s195 + $0x6b0] sm:$0xff]
      %v2131 = vld [vmem:[%s195 + $0x6b8] sm:$0xff]
      %v2132 = vld [vmem:[%s195 + $0x6c0] sm:$0xff]
      %v2133 = vld [vmem:[%s195 + $0x6c8] sm:$0xff]
      %v2134 = vld [vmem:[%s195 + $0x6d0] sm:$0xff]
      %v2135 = vld [vmem:[%s195 + $0x6d8] sm:$0xff]
      %v2136 = vld [vmem:[%s195 + $0x6e0] sm:$0xff]
      %v2137 = vld [vmem:[%s195 + $0x6e8] sm:$0xff]
      %v2138 = vld [vmem:[%s195 + $0x6f0] sm:$0xff]
      %v2139 = vld [vmem:[%s195 + $0x6f8] sm:$0xff]
      %v2140 = vld [vmem:[%s195 + $0x700] sm:$0xff]
      %v2141 = vld [vmem:[%s195 + $0x708] sm:$0xff]
      %v2142 = vld [vmem:[%s195 + $0x710] sm:$0xff]
      %v2143 = vld [vmem:[%s195 + $0x718] sm:$0xff]
      %v2144 = vld [vmem:[%s195 + $0x720] sm:$0xff]
      %v2145 = vld [vmem:[%s195 + $0x728] sm:$0xff]
      %v2146 = vld [vmem:[%s195 + $0x730] sm:$0xff]
      %v2147 = vld [vmem:[%s195 + $0x738] sm:$0xff]
      %v2148 = vld [vmem:[%s195 + $0x740] sm:$0xff]
      %v2149 = vld [vmem:[%s195 + $0x748] sm:$0xff]
      %v2150 = vld [vmem:[%s195 + $0x750] sm:$0xff]
      %v2151 = vld [vmem:[%s195 + $0x758] sm:$0xff]
      %v2152 = vld [vmem:[%s195 + $0x760] sm:$0xff]
      %v2153 = vld [vmem:[%s195 + $0x768] sm:$0xff]
      %v2154 = vld [vmem:[%s195 + $0x770] sm:$0xff]
      %v2155 = vld [vmem:[%s195 + $0x778] sm:$0xff]
      %v2156 = vld [vmem:[%s195 + $0x780] sm:$0xff]
      %v2157 = vld [vmem:[%s195 + $0x788] sm:$0xff]
      %v2158 = vld [vmem:[%s195 + $0x790] sm:$0xff]
      %v2159 = vld [vmem:[%s195 + $0x798] sm:$0xff]
      %v2160 = vld [vmem:[%s195 + $0x7a0] sm:$0xff]
      %v2161 = vld [vmem:[%s195 + $0x7a8] sm:$0xff]
      %v2162 = vld [vmem:[%s195 + $0x7b0] sm:$0xff]
      %v2163 = vld [vmem:[%s195 + $0x7b8] sm:$0xff]
      %v2164 = vld [vmem:[%s195 + $0x7c0] sm:$0xff]
      %v2165 = vld [vmem:[%s195 + $0x7c8] sm:$0xff]
      %v2166 = vld [vmem:[%s195 + $0x7d0] sm:$0xff]
      %v2167 = vld [vmem:[%s195 + $0x7d8] sm:$0xff]
      %v2168 = vld [vmem:[%s195 + $0x7e0] sm:$0xff]
      %v2169 = vld [vmem:[%s195 + $0x7e8] sm:$0xff]
      %v2170 = vld [vmem:[%s195 + $0x7f0] sm:$0xff]
      %v2171 = vld [vmem:[%s195 + $0x7f8] sm:$0xff]
      %v2172 = vunpack.c.l.s8.bf16 %v2108
      %v2173 = vunpack.c.h.s8.bf16 %v2108
      %v2174 = vunpack.c.l.s8.bf16 %v2109
      %v2175 = vunpack.c.h.s8.bf16 %v2109
      %v2176 = vunpack.c.l.s8.bf16 %v2110
      %v2177 = vunpack.c.h.s8.bf16 %v2110
      %v2178 = vunpack.c.l.s8.bf16 %v2111
      %v2179 = vunpack.c.h.s8.bf16 %v2111
      %v2180 = vunpack.c.l.s8.bf16 %v2112
      %v2181 = vunpack.c.h.s8.bf16 %v2112
      %v2182 = vunpack.c.l.s8.bf16 %v2113
      %v2183 = vunpack.c.h.s8.bf16 %v2113
      %v2184 = vunpack.c.l.s8.bf16 %v2114
      %v2185 = vunpack.c.h.s8.bf16 %v2114
      %v2186 = vunpack.c.l.s8.bf16 %v2115
      %v2187 = vunpack.c.h.s8.bf16 %v2115
      %v2188 = vunpack.c.l.s8.bf16 %v2116
      %v2189 = vunpack.c.h.s8.bf16 %v2116
      %v2190 = vunpack.c.l.s8.bf16 %v2117
      %v2191 = vunpack.c.h.s8.bf16 %v2117
      %v2192 = vunpack.c.l.s8.bf16 %v2118
      %v2193 = vunpack.c.h.s8.bf16 %v2118
      %v2194 = vunpack.c.l.s8.bf16 %v2119
      %v2195 = vunpack.c.h.s8.bf16 %v2119
      %v2196 = vunpack.c.l.s8.bf16 %v2120
      %v2197 = vunpack.c.h.s8.bf16 %v2120
      %v2198 = vunpack.c.l.s8.bf16 %v2121
      %v2199 = vunpack.c.h.s8.bf16 %v2121
      %v2200 = vunpack.c.l.s8.bf16 %v2122
      %v2201 = vunpack.c.h.s8.bf16 %v2122
      %v2202 = vunpack.c.l.s8.bf16 %v2123
      %v2203 = vunpack.c.h.s8.bf16 %v2123
      %v2204 = vunpack.c.l.s8.bf16 %v2124
      %v2205 = vunpack.c.h.s8.bf16 %v2124
      %v2206 = vunpack.c.l.s8.bf16 %v2125
      %v2207 = vunpack.c.h.s8.bf16 %v2125
      %v2208 = vunpack.c.l.s8.bf16 %v2126
      %v2209 = vunpack.c.h.s8.bf16 %v2126
      %v2210 = vunpack.c.l.s8.bf16 %v2127
      %v2211 = vunpack.c.h.s8.bf16 %v2127
      %v2212 = vunpack.c.l.s8.bf16 %v2128
      %v2213 = vunpack.c.h.s8.bf16 %v2128
      %v2214 = vunpack.c.l.s8.bf16 %v2129
      %v2215 = vunpack.c.h.s8.bf16 %v2129
      %v2216 = vunpack.c.l.s8.bf16 %v2130
      %v2217 = vunpack.c.h.s8.bf16 %v2130
      %v2218 = vunpack.c.l.s8.bf16 %v2131
      %v2219 = vunpack.c.h.s8.bf16 %v2131
      %v2220 = vunpack.c.l.s8.bf16 %v2132
      %v2221 = vunpack.c.h.s8.bf16 %v2132
      %v2222 = vunpack.c.l.s8.bf16 %v2133
      %v2223 = vunpack.c.h.s8.bf16 %v2133
      %v2224 = vunpack.c.l.s8.bf16 %v2134
      %v2225 = vunpack.c.h.s8.bf16 %v2134
      %v2226 = vunpack.c.l.s8.bf16 %v2135
      %v2227 = vunpack.c.h.s8.bf16 %v2135
      %v2228 = vunpack.c.l.s8.bf16 %v2136
      %v2229 = vunpack.c.h.s8.bf16 %v2136
      %v2230 = vunpack.c.l.s8.bf16 %v2137
      %v2231 = vunpack.c.h.s8.bf16 %v2137
      %v2232 = vunpack.c.l.s8.bf16 %v2138
      %v2233 = vunpack.c.h.s8.bf16 %v2138
      %v2234 = vunpack.c.l.s8.bf16 %v2139
      %v2235 = vunpack.c.h.s8.bf16 %v2139
      %v2236 = vunpack.c.l.s8.bf16 %v2140
      %v2237 = vunpack.c.h.s8.bf16 %v2140
      %v2238 = vunpack.c.l.s8.bf16 %v2141
      %v2239 = vunpack.c.h.s8.bf16 %v2141
      %v2240 = vunpack.c.l.s8.bf16 %v2142
      %v2241 = vunpack.c.h.s8.bf16 %v2142
      %v2242 = vunpack.c.l.s8.bf16 %v2143
      %v2243 = vunpack.c.h.s8.bf16 %v2143
      %v2244 = vunpack.c.l.s8.bf16 %v2144
      %v2245 = vunpack.c.h.s8.bf16 %v2144
      %v2246 = vunpack.c.l.s8.bf16 %v2145
      %v2247 = vunpack.c.h.s8.bf16 %v2145
      %v2248 = vunpack.c.l.s8.bf16 %v2146
      %v2249 = vunpack.c.h.s8.bf16 %v2146
      %v2250 = vunpack.c.l.s8.bf16 %v2147
      %v2251 = vunpack.c.h.s8.bf16 %v2147
      %v2252 = vunpack.c.l.s8.bf16 %v2148
      %v2253 = vunpack.c.h.s8.bf16 %v2148
      %v2254 = vunpack.c.l.s8.bf16 %v2149
      %v2255 = vunpack.c.h.s8.bf16 %v2149
      %v2256 = vunpack.c.l.s8.bf16 %v2150
      %v2257 = vunpack.c.h.s8.bf16 %v2150
      %v2258 = vunpack.c.l.s8.bf16 %v2151
      %v2259 = vunpack.c.h.s8.bf16 %v2151
      %v2260 = vunpack.c.l.s8.bf16 %v2152
      %v2261 = vunpack.c.h.s8.bf16 %v2152
      %v2262 = vunpack.c.l.s8.bf16 %v2153
      %v2263 = vunpack.c.h.s8.bf16 %v2153
      %v2264 = vunpack.c.l.s8.bf16 %v2154
      %v2265 = vunpack.c.h.s8.bf16 %v2154
      %v2266 = vunpack.c.l.s8.bf16 %v2155
      %v2267 = vunpack.c.h.s8.bf16 %v2155
      %v2268 = vunpack.c.l.s8.bf16 %v2156
      %v2269 = vunpack.c.h.s8.bf16 %v2156
      %v2270 = vunpack.c.l.s8.bf16 %v2157
      %v2271 = vunpack.c.h.s8.bf16 %v2157
      %v2272 = vunpack.c.l.s8.bf16 %v2158
      %v2273 = vunpack.c.h.s8.bf16 %v2158
      %v2274 = vunpack.c.l.s8.bf16 %v2159
      %v2275 = vunpack.c.h.s8.bf16 %v2159
      %v2276 = vunpack.c.l.s8.bf16 %v2160
      %v2277 = vunpack.c.h.s8.bf16 %v2160
      %v2278 = vunpack.c.l.s8.bf16 %v2161
      %v2279 = vunpack.c.h.s8.bf16 %v2161
      %v2280 = vunpack.c.l.s8.bf16 %v2162
      %v2281 = vunpack.c.h.s8.bf16 %v2162
      %v2282 = vunpack.c.l.s8.bf16 %v2163
      %v2283 = vunpack.c.h.s8.bf16 %v2163
      %v2284 = vunpack.c.l.s8.bf16 %v2164
      %v2285 = vunpack.c.h.s8.bf16 %v2164
      %v2286 = vunpack.c.l.s8.bf16 %v2165
      %v2287 = vunpack.c.h.s8.bf16 %v2165
      %v2288 = vunpack.c.l.s8.bf16 %v2166
      %v2289 = vunpack.c.h.s8.bf16 %v2166
      %v2290 = vunpack.c.l.s8.bf16 %v2167
      %v2291 = vunpack.c.h.s8.bf16 %v2167
      %v2292 = vunpack.c.l.s8.bf16 %v2168
      %v2293 = vunpack.c.h.s8.bf16 %v2168
      %v2294 = vunpack.c.l.s8.bf16 %v2169
      %v2295 = vunpack.c.h.s8.bf16 %v2169
      %v2296 = vunpack.c.l.s8.bf16 %v2170
      %v2297 = vunpack.c.h.s8.bf16 %v2170
      %v2298 = vunpack.c.l.s8.bf16 %v2171
      %v2299 = vunpack.c.h.s8.bf16 %v2171
      %v2300 = vld [vmem:[#allocation2] sm:$0x3]
      %v2301 = vld [vmem:[%s185 + $0x30] sm:$0xff]
      %v2302 = vld [vmem:[%s185 + $0x38] sm:$0xff]
      %v2305 = vcombine.high %v2301, %v2301
      %v2307 = vunpack.c.l.s4 1966171168
      %v2308 = vunpack.c.0.s8 %v2307
      %v2309 = vlaneseq
      %v2310 = vshrl.u32 %v2309, 7
      %v2311 = vsub.s32 %v2308, %v2310
      %v2312 = vrot.slane %v2301, %v2311
      %v2314 = vunpack.c.l.s4 1966171168
      %v2315 = vunpack.c.0.s8 %v2314
      %v2316 = vlaneseq
      %v2317 = vshrl.u32 %v2316, 7
      %v2318 = vsub.s32 %v2315, %v2317
      %v2319 = vrot.slane %v2305, %v2318
      %v2320 = vcombine.high %v2312, %v2312
      %v2321 = vcombine.high %v2319, %v2319
      %v2323 = vunpack.c.l.s4 1966171168
      %v2324 = vunpack.c.0.s8 %v2323
      %v2325 = vlaneseq
      %v2326 = vshrl.u32 %v2325, 7
      %v2327 = vsub.s32 %v2324, %v2326
      %v2328 = vrot.slane %v2312, %v2327
      %v2330 = vunpack.c.l.s4 1966171168
      %v2331 = vunpack.c.0.s8 %v2330
      %v2332 = vlaneseq
      %v2333 = vshrl.u32 %v2332, 7
      %v2334 = vsub.s32 %v2331, %v2333
      %v2335 = vrot.slane %v2319, %v2334
      %v2337 = vunpack.c.l.s4 1966171168
      %v2338 = vunpack.c.0.s8 %v2337
      %v2339 = vlaneseq
      %v2340 = vshrl.u32 %v2339, 7
      %v2341 = vsub.s32 %v2338, %v2340
      %v2342 = vrot.slane %v2320, %v2341
      %v2344 = vunpack.c.l.s4 1966171168
      %v2345 = vunpack.c.0.s8 %v2344
      %v2346 = vlaneseq
      %v2347 = vshrl.u32 %v2346, 7
      %v2348 = vsub.s32 %v2345, %v2347
      %v2349 = vrot.slane %v2321, %v2348
      %v2350 = vcombine.high %v2328, %v2328
      %v2351 = vcombine.high %v2335, %v2335
      %v2352 = vcombine.high %v2342, %v2342
      %v2353 = vcombine.high %v2349, %v2349
      %v2354 = vcombine.high %v2302, %v2302
      %v2356 = vunpack.c.l.s4 1966171168
      %v2357 = vunpack.c.0.s8 %v2356
      %v2358 = vlaneseq
      %v2359 = vshrl.u32 %v2358, 7
      %v2360 = vsub.s32 %v2357, %v2359
      %v2361 = vrot.slane %v2302, %v2360
      %v2363 = vunpack.c.l.s4 1966171168
      %v2364 = vunpack.c.0.s8 %v2363
      %v2365 = vlaneseq
      %v2366 = vshrl.u32 %v2365, 7
      %v2367 = vsub.s32 %v2364, %v2366
      %v2368 = vrot.slane %v2354, %v2367
      %v2369 = vcombine.high %v2361, %v2361
      %v2370 = vcombine.high %v2368, %v2368
      %v2372 = vunpack.c.l.s4 1966171168
      %v2373 = vunpack.c.0.s8 %v2372
      %v2374 = vlaneseq
      %v2375 = vshrl.u32 %v2374, 7
      %v2376 = vsub.s32 %v2373, %v2375
      %v2377 = vrot.slane %v2361, %v2376
      %v2379 = vunpack.c.l.s4 1966171168
      %v2380 = vunpack.c.0.s8 %v2379
      %v2381 = vlaneseq
      %v2382 = vshrl.u32 %v2381, 7
      %v2383 = vsub.s32 %v2380, %v2382
      %v2384 = vrot.slane %v2368, %v2383
      %v2386 = vunpack.c.l.s4 1966171168
      %v2387 = vunpack.c.0.s8 %v2386
      %v2388 = vlaneseq
      %v2389 = vshrl.u32 %v2388, 7
      %v2390 = vsub.s32 %v2387, %v2389
      %v2391 = vrot.slane %v2369, %v2390
      %v2393 = vunpack.c.l.s4 1966171168
      %v2394 = vunpack.c.0.s8 %v2393
      %v2395 = vlaneseq
      %v2396 = vshrl.u32 %v2395, 7
      %v2397 = vsub.s32 %v2394, %v2396
      %v2398 = vrot.slane %v2370, %v2397
      %v2399 = vcombine.high %v2377, %v2377
      %v2400 = vcombine.high %v2384, %v2384
      %v2401 = vcombine.high %v2391, %v2391
      %v2402 = vcombine.high %v2398, %v2398
      %2419 = vmatprep.subr.bf16.mxu0 0
      %2420 = vmatpush1.bf16.msra.mxu0 %v2172
      %2421 = vmatprep.subr.bf16.mxu0 0
      %2422 = vmatpush1.bf16.msra.mxu0 %v2173
      %2423 = vmatprep.subr.bf16.mxu0 0
      %2424 = vmatpush1.bf16.msra.mxu0 %v2174
      %2425 = vmatprep.subr.bf16.mxu0 0
      %2426 = vmatpush1.bf16.msra.mxu0 %v2175
      %2427 = vmatprep.subr.bf16.mxu0 0
      %2428 = vmatpush1.bf16.msra.mxu0 %v2176
      %2429 = vmatprep.subr.bf16.mxu0 0
      %2430 = vmatpush1.bf16.msra.mxu0 %v2177
      %2431 = vmatprep.subr.bf16.mxu0 0
      %2432 = vmatpush1.bf16.msra.mxu0 %v2178
      %2433 = vmatprep.subr.bf16.mxu0 0
      %2434 = vmatpush1.bf16.msra.mxu0 %v2179
      %2435 = vmatprep.subr.bf16.mxu0 0
      %2436 = vmatpush1.bf16.msra.mxu0 %v2180
      %2437 = vmatprep.subr.bf16.mxu0 0
      %2438 = vmatpush1.bf16.msra.mxu0 %v2181
      %2439 = vmatprep.subr.bf16.mxu0 0
      %2440 = vmatpush1.bf16.msra.mxu0 %v2182
      %2441 = vmatprep.subr.bf16.mxu0 0
      %2442 = vmatpush1.bf16.msra.mxu0 %v2183
      %2443 = vmatprep.subr.bf16.mxu0 0
      %2444 = vmatpush1.bf16.msra.mxu0 %v2184
      %2445 = vmatprep.subr.bf16.mxu0 0
      %2446 = vmatpush1.bf16.msra.mxu0 %v2185
      %2447 = vmatprep.subr.bf16.mxu0 0
      %2448 = vmatpush1.bf16.msra.mxu0 %v2186
      %2449 = vmatprep.subr.bf16.mxu0 0
      %2450 = vmatpush1.bf16.msra.mxu0 %v2187
      %2451 = vmatprep.mubr.bf16.mxu0 %v2342
      %2452 = vmatmul.mubr.bf16.gmra.mrb[0].mxu0 %v2328
      %v2453 = vpop.f32.mrb[0].mxu0
      %v2454 = vadd.f32 0.0, %v2453
      %v2455 = vpop.f32.mrb[0].mxu0
      %v2456 = vpop.f32.mrb[0].mxu0
      %v2457 = vpop.f32.mrb[0].mxu0
      %2458 = vdwg.mxu0
      %2459 = vmatprep.subr.bf16.mxu0 0
      %2460 = vmatpush1.bf16.msra.mxu0 %v2188
      %2461 = vmatprep.subr.bf16.mxu0 0
      %2462 = vmatpush1.bf16.msra.mxu0 %v2189
      %2463 = vmatprep.subr.bf16.mxu0 0
      %2464 = vmatpush1.bf16.msra.mxu0 %v2190
      %2465 = vmatprep.subr.bf16.mxu0 0
      %2466 = vmatpush1.bf16.msra.mxu0 %v2191
      %2467 = vmatprep.subr.bf16.mxu0 0
      %2468 = vmatpush1.bf16.msra.mxu0 %v2192
      %2469 = vmatprep.subr.bf16.mxu0 0
      %2470 = vmatpush1.bf16.msra.mxu0 %v2193
      %2471 = vmatprep.subr.bf16.mxu0 0
      %2472 = vmatpush1.bf16.msra.mxu0 %v2194
      %2473 = vmatprep.subr.bf16.mxu0 0
      %2474 = vmatpush1.bf16.msra.mxu0 %v2195
      %2475 = vmatprep.subr.bf16.mxu0 0
      %2476 = vmatpush1.bf16.msra.mxu0 %v2196
      %2477 = vmatprep.subr.bf16.mxu0 0
      %2478 = vmatpush1.bf16.msra.mxu0 %v2197
      %2479 = vmatprep.subr.bf16.mxu0 0
      %2480 = vmatpush1.bf16.msra.mxu0 %v2198
      %2481 = vmatprep.subr.bf16.mxu0 0
      %2482 = vmatpush1.bf16.msra.mxu0 %v2199
      %2483 = vmatprep.subr.bf16.mxu0 0
      %2484 = vmatpush1.bf16.msra.mxu0 %v2200
      %2485 = vmatprep.subr.bf16.mxu0 0
      %2486 = vmatpush1.bf16.msra.mxu0 %v2201
      %2487 = vmatprep.subr.bf16.mxu0 0
      %2488 = vmatpush1.bf16.msra.mxu0 %v2202
      %2489 = vmatprep.subr.bf16.mxu0 0
      %2490 = vmatpush1.bf16.msra.mxu0 %v2203
      %2491 = vmatprep.mubr.bf16.mxu0 %v2352
      %2492 = vmatmul.mubr.bf16.gmra.mrb[0].mxu0 %v2350
      %v2493 = vpop.f32.mrb[0].mxu0
      %v2494 = vadd.f32 %v2454, %v2493
      %v2495 = vpop.f32.mrb[0].mxu0
      %v2496 = vpop.f32.mrb[0].mxu0
      %v2497 = vpop.f32.mrb[0].mxu0
      %2498 = vdwg.mxu0
      %2499 = vmatprep.subr.bf16.mxu0 0
      %2500 = vmatpush1.bf16.msra.mxu0 %v2204
      %2501 = vmatprep.subr.bf16.mxu0 0
      %2502 = vmatpush1.bf16.msra.mxu0 %v2205
      %2503 = vmatprep.subr.bf16.mxu0 0
      %2504 = vmatpush1.bf16.msra.mxu0 %v2206
      %2505 = vmatprep.subr.bf16.mxu0 0
      %2506 = vmatpush1.bf16.msra.mxu0 %v2207
      %2507 = vmatprep.subr.bf16.mxu0 0
      %2508 = vmatpush1.bf16.msra.mxu0 %v2208
      %2509 = vmatprep.subr.bf16.mxu0 0
      %2510 = vmatpush1.bf16.msra.mxu0 %v2209
      %2511 = vmatprep.subr.bf16.mxu0 0
      %2512 = vmatpush1.bf16.msra.mxu0 %v2210
      %2513 = vmatprep.subr.bf16.mxu0 0
      %2514 = vmatpush1.bf16.msra.mxu0 %v2211
      %2515 = vmatprep.subr.bf16.mxu0 0
      %2516 = vmatpush1.bf16.msra.mxu0 %v2212
      %2517 = vmatprep.subr.bf16.mxu0 0
      %2518 = vmatpush1.bf16.msra.mxu0 %v2213
      %2519 = vmatprep.subr.bf16.mxu0 0
      %2520 = vmatpush1.bf16.msra.mxu0 %v2214
      %2521 = vmatprep.subr.bf16.mxu0 0
      %2522 = vmatpush1.bf16.msra.mxu0 %v2215
      %2523 = vmatprep.subr.bf16.mxu0 0
      %2524 = vmatpush1.bf16.msra.mxu0 %v2216
      %2525 = vmatprep.subr.bf16.mxu0 0
      %2526 = vmatpush1.bf16.msra.mxu0 %v2217
      %2527 = vmatprep.subr.bf16.mxu0 0
      %2528 = vmatpush1.bf16.msra.mxu0 %v2218
      %2529 = vmatprep.subr.bf16.mxu0 0
      %2530 = vmatpush1.bf16.msra.mxu0 %v2219
      %2531 = vmatprep.mubr.bf16.mxu0 %v2349
      %2532 = vmatmul.mubr.bf16.gmra.mrb[0].mxu0 %v2335
      %v2533 = vpop.f32.mrb[0].mxu0
      %v2534 = vadd.f32 %v2494, %v2533
      %v2535 = vpop.f32.mrb[0].mxu0
      %v2536 = vpop.f32.mrb[0].mxu0
      %v2537 = vpop.f32.mrb[0].mxu0
      %2538 = vdwg.mxu0
      %2539 = vmatprep.subr.bf16.mxu0 0
      %2540 = vmatpush1.bf16.msra.mxu0 %v2220
      %2541 = vmatprep.subr.bf16.mxu0 0
      %2542 = vmatpush1.bf16.msra.mxu0 %v2221
      %2543 = vmatprep.subr.bf16.mxu0 0
      %2544 = vmatpush1.bf16.msra.mxu0 %v2222
      %2545 = vmatprep.subr.bf16.mxu0 0
      %2546 = vmatpush1.bf16.msra.mxu0 %v2223
      %2547 = vmatprep.subr.bf16.mxu0 0
      %2548 = vmatpush1.bf16.msra.mxu0 %v2224
      %2549 = vmatprep.subr.bf16.mxu0 0
      %2550 = vmatpush1.bf16.msra.mxu0 %v2225
      %2551 = vmatprep.subr.bf16.mxu0 0
      %2552 = vmatpush1.bf16.msra.mxu0 %v2226
      %2553 = vmatprep.subr.bf16.mxu0 0
      %2554 = vmatpush1.bf16.msra.mxu0 %v2227
      %2555 = vmatprep.subr.bf16.mxu0 0
      %2556 = vmatpush1.bf16.msra.mxu0 %v2228
      %2557 = vmatprep.subr.bf16.mxu0 0
      %2558 = vmatpush1.bf16.msra.mxu0 %v2229
      %2559 = vmatprep.subr.bf16.mxu0 0
      %2560 = vmatpush1.bf16.msra.mxu0 %v2230
      %2561 = vmatprep.subr.bf16.mxu0 0
      %2562 = vmatpush1.bf16.msra.mxu0 %v2231
      %2563 = vmatprep.subr.bf16.mxu0 0
      %2564 = vmatpush1.bf16.msra.mxu0 %v2232
      %2565 = vmatprep.subr.bf16.mxu0 0
      %2566 = vmatpush1.bf16.msra.mxu0 %v2233
      %2567 = vmatprep.subr.bf16.mxu0 0
      %2568 = vmatpush1.bf16.msra.mxu0 %v2234
      %2569 = vmatprep.subr.bf16.mxu0 0
      %2570 = vmatpush1.bf16.msra.mxu0 %v2235
      %2571 = vmatprep.mubr.bf16.mxu0 %v2353
      %2572 = vmatmul.mubr.bf16.gmra.mrb[0].mxu0 %v2351
      %v2573 = vpop.f32.mrb[0].mxu0
      %v2574 = vadd.f32 %v2534, %v2573
      %v2575 = vpop.f32.mrb[0].mxu0
      %v2576 = vpop.f32.mrb[0].mxu0
      %v2577 = vpop.f32.mrb[0].mxu0
      %2578 = vdwg.mxu0
      %2579 = vmatprep.subr.bf16.mxu0 0
      %2580 = vmatpush1.bf16.msra.mxu0 %v2236
      %2581 = vmatprep.subr.bf16.mxu0 0
      %2582 = vmatpush1.bf16.msra.mxu0 %v2237
      %2583 = vmatprep.subr.bf16.mxu0 0
      %2584 = vmatpush1.bf16.msra.mxu0 %v2238
      %2585 = vmatprep.subr.bf16.mxu0 0
      %2586 = vmatpush1.bf16.msra.mxu0 %v2239
      %2587 = vmatprep.subr.bf16.mxu0 0
      %2588 = vmatpush1.bf16.msra.mxu0 %v2240
      %2589 = vmatprep.subr.bf16.mxu0 0
      %2590 = vmatpush1.bf16.msra.mxu0 %v2241
      %2591 = vmatprep.subr.bf16.mxu0 0
      %2592 = vmatpush1.bf16.msra.mxu0 %v2242
      %2593 = vmatprep.subr.bf16.mxu0 0
      %2594 = vmatpush1.bf16.msra.mxu0 %v2243
      %2595 = vmatprep.subr.bf16.mxu0 0
      %2596 = vmatpush1.bf16.msra.mxu0 %v2244
      %2597 = vmatprep.subr.bf16.mxu0 0
      %2598 = vmatpush1.bf16.msra.mxu0 %v2245
      %2599 = vmatprep.subr.bf16.mxu0 0
      %2600 = vmatpush1.bf16.msra.mxu0 %v2246
      %2601 = vmatprep.subr.bf16.mxu0 0
      %2602 = vmatpush1.bf16.msra.mxu0 %v2247
      %2603 = vmatprep.subr.bf16.mxu0 0
      %2604 = vmatpush1.bf16.msra.mxu0 %v2248
      %2605 = vmatprep.subr.bf16.mxu0 0
      %2606 = vmatpush1.bf16.msra.mxu0 %v2249
      %2607 = vmatprep.subr.bf16.mxu0 0
      %2608 = vmatpush1.bf16.msra.mxu0 %v2250
      %2609 = vmatprep.subr.bf16.mxu0 0
      %2610 = vmatpush1.bf16.msra.mxu0 %v2251
      %2611 = vmatprep.mubr.bf16.mxu0 %v2391
      %2612 = vmatmul.mubr.bf16.gmra.mrb[0].mxu0 %v2377
      %v2613 = vpop.f32.mrb[0].mxu0
      %v2614 = vadd.f32 %v2574, %v2613
      %v2615 = vpop.f32.mrb[0].mxu0
      %v2616 = vpop.f32.mrb[0].mxu0
      %v2617 = vpop.f32.mrb[0].mxu0
      %2618 = vdwg.mxu0
      %2619 = vmatprep.subr.bf16.mxu0 0
      %2620 = vmatpush1.bf16.msra.mxu0 %v2252
      %2621 = vmatprep.subr.bf16.mxu0 0
      %2622 = vmatpush1.bf16.msra.mxu0 %v2253
      %2623 = vmatprep.subr.bf16.mxu0 0
      %2624 = vmatpush1.bf16.msra.mxu0 %v2254
      %2625 = vmatprep.subr.bf16.mxu0 0
      %2626 = vmatpush1.bf16.msra.mxu0 %v2255
      %2627 = vmatprep.subr.bf16.mxu0 0
      %2628 = vmatpush1.bf16.msra.mxu0 %v2256
      %2629 = vmatprep.subr.bf16.mxu0 0
      %2630 = vmatpush1.bf16.msra.mxu0 %v2257
      %2631 = vmatprep.subr.bf16.mxu0 0
      %2632 = vmatpush1.bf16.msra.mxu0 %v2258
      %2633 = vmatprep.subr.bf16.mxu0 0
      %2634 = vmatpush1.bf16.msra.mxu0 %v2259
      %2635 = vmatprep.subr.bf16.mxu0 0
      %2636 = vmatpush1.bf16.msra.mxu0 %v2260
      %2637 = vmatprep.subr.bf16.mxu0 0
      %2638 = vmatpush1.bf16.msra.mxu0 %v2261
      %2639 = vmatprep.subr.bf16.mxu0 0
      %2640 = vmatpush1.bf16.msra.mxu0 %v2262
      %2641 = vmatprep.subr.bf16.mxu0 0
      %2642 = vmatpush1.bf16.msra.mxu0 %v2263
      %2643 = vmatprep.subr.bf16.mxu0 0
      %2644 = vmatpush1.bf16.msra.mxu0 %v2264
      %2645 = vmatprep.subr.bf16.mxu0 0
      %2646 = vmatpush1.bf16.msra.mxu0 %v2265
      %2647 = vmatprep.subr.bf16.mxu0 0
      %2648 = vmatpush1.bf16.msra.mxu0 %v2266
      %2649 = vmatprep.subr.bf16.mxu0 0
      %2650 = vmatpush1.bf16.msra.mxu0 %v2267
      %2651 = vmatprep.mubr.bf16.mxu0 %v2401
      %2652 = vmatmul.mubr.bf16.gmra.mrb[0].mxu0 %v2399
      %v2653 = vpop.f32.mrb[0].mxu0
      %v2654 = vadd.f32 %v2614, %v2653
      %v2655 = vpop.f32.mrb[0].mxu0
      %v2656 = vpop.f32.mrb[0].mxu0
      %v2657 = vpop.f32.mrb[0].mxu0
      %2658 = vdwg.mxu0
      %2659 = vmatprep.subr.bf16.mxu0 0
      %2660 = vmatpush1.bf16.msra.mxu0 %v2268
      %2661 = vmatprep.subr.bf16.mxu0 0
      %2662 = vmatpush1.bf16.msra.mxu0 %v2269
      %2663 = vmatprep.subr.bf16.mxu0 0
      %2664 = vmatpush1.bf16.msra.mxu0 %v2270
      %2665 = vmatprep.subr.bf16.mxu0 0
      %2666 = vmatpush1.bf16.msra.mxu0 %v2271
      %2667 = vmatprep.subr.bf16.mxu0 0
      %2668 = vmatpush1.bf16.msra.mxu0 %v2272
      %2669 = vmatprep.subr.bf16.mxu0 0
      %2670 = vmatpush1.bf16.msra.mxu0 %v2273
      %2671 = vmatprep.subr.bf16.mxu0 0
      %2672 = vmatpush1.bf16.msra.mxu0 %v2274
      %2673 = vmatprep.subr.bf16.mxu0 0
      %2674 = vmatpush1.bf16.msra.mxu0 %v2275
      %2675 = vmatprep.subr.bf16.mxu0 0
      %2676 = vmatpush1.bf16.msra.mxu0 %v2276
      %2677 = vmatprep.subr.bf16.mxu0 0
      %2678 = vmatpush1.bf16.msra.mxu0 %v2277
      %2679 = vmatprep.subr.bf16.mxu0 0
      %2680 = vmatpush1.bf16.msra.mxu0 %v2278
      %2681 = vmatprep.subr.bf16.mxu0 0
      %2682 = vmatpush1.bf16.msra.mxu0 %v2279
      %2683 = vmatprep.subr.bf16.mxu0 0
      %2684 = vmatpush1.bf16.msra.mxu0 %v2280
      %2685 = vmatprep.subr.bf16.mxu0 0
      %2686 = vmatpush1.bf16.msra.mxu0 %v2281
      %2687 = vmatprep.subr.bf16.mxu0 0
      %2688 = vmatpush1.bf16.msra.mxu0 %v2282
      %2689 = vmatprep.subr.bf16.mxu0 0
      %2690 = vmatpush1.bf16.msra.mxu0 %v2283
      %2691 = vmatprep.mubr.bf16.mxu0 %v2398
      %2692 = vmatmul.mubr.bf16.gmra.mrb[0].mxu0 %v2384
      %v2693 = vpop.f32.mrb[0].mxu0
      %v2694 = vadd.f32 %v2654, %v2693
      %v2695 = vpop.f32.mrb[0].mxu0
      %v2696 = vpop.f32.mrb[0].mxu0
      %v2697 = vpop.f32.mrb[0].mxu0
      %2698 = vdwg.mxu0
      %2699 = vmatprep.subr.bf16.mxu0 0
      %2700 = vmatpush1.bf16.msra.mxu0 %v2284
      %2701 = vmatprep.subr.bf16.mxu0 0
      %2702 = vmatpush1.bf16.msra.mxu0 %v2285
      %2703 = vmatprep.subr.bf16.mxu0 0
      %2704 = vmatpush1.bf16.msra.mxu0 %v2286
      %2705 = vmatprep.subr.bf16.mxu0 0
      %2706 = vmatpush1.bf16.msra.mxu0 %v2287
      %2707 = vmatprep.subr.bf16.mxu0 0
      %2708 = vmatpush1.bf16.msra.mxu0 %v2288
      %2709 = vmatprep.subr.bf16.mxu0 0
      %2710 = vmatpush1.bf16.msra.mxu0 %v2289
      %2711 = vmatprep.subr.bf16.mxu0 0
      %2712 = vmatpush1.bf16.msra.mxu0 %v2290
      %2713 = vmatprep.subr.bf16.mxu0 0
      %2714 = vmatpush1.bf16.msra.mxu0 %v2291
      %2715 = vmatprep.subr.bf16.mxu0 0
      %2716 = vmatpush1.bf16.msra.mxu0 %v2292
      %2717 = vmatprep.subr.bf16.mxu0 0
      %2718 = vmatpush1.bf16.msra.mxu0 %v2293
      %2719 = vmatprep.subr.bf16.mxu0 0
      %2720 = vmatpush1.bf16.msra.mxu0 %v2294
      %2721 = vmatprep.subr.bf16.mxu0 0
      %2722 = vmatpush1.bf16.msra.mxu0 %v2295
      %2723 = vmatprep.subr.bf16.mxu0 0
      %2724 = vmatpush1.bf16.msra.mxu0 %v2296
      %2725 = vmatprep.subr.bf16.mxu0 0
      %2726 = vmatpush1.bf16.msra.mxu0 %v2297
      %2727 = vmatprep.subr.bf16.mxu0 0
      %2728 = vmatpush1.bf16.msra.mxu0 %v2298
      %2729 = vmatprep.subr.bf16.mxu0 0
      %2730 = vmatpush1.bf16.msra.mxu0 %v2299
      %2731 = vmatprep.mubr.bf16.mxu0 %v2402
      %2732 = vmatmul.mubr.bf16.gmra.mrb[0].mxu0 %v2400
      %v2733 = vpop.f32.mrb[0].mxu0
      %v2734 = vadd.f32 %v2694, %v2733
      %v2735 = vpop.f32.mrb[0].mxu0
      %v2736 = vpop.f32.mrb[0].mxu0
      %v2737 = vpop.f32.mrb[0].mxu0
      %2738 = vdwg.mxu0
      %v2739 = vadd.f32 %v2300, %v2734
      %2740 = vst [vmem:[#allocation2] sm:$0x3] %v2739
      %p2741 = scmp.eq.s32.totalorder %s18, 1
      // Predicated region
      $region33: #{actor_critic_tag_forward.3} parent=27 // pred_check
        %p2742 = pneg %p2741
      $region34: #{actor_critic_tag_forward.3} parent=27 // pred_check_branch
        %2744 = sbr.rel (%p2742) target = $region36
      $region35: #{actor_critic_tag_forward.3} parent=27 // pred_region
        %v2745 = vld [vmem:[#allocation2] sm:$0x3]
        %2746 = vst [vmem:[%s202] sm:$0x3] %v2745
      $region36: #{actor_critic_tag_forward.3} parent=27 // pred_fallthru
        _
      %p2747 = scmp.lt.s32.totalorder %s17, 1
      %s2748 = scalar_select %p2747, %s17, 1
      %s2749 = smul.addr %s2748, 2
      %s2750 = scalar_lea.vmem %s2, %s2749
      // Predicated region
      $region37: #{actor_critic_tag_forward.3} parent=27 // pred_check
        %p2751 = pneg %p103
      $region38: #{actor_critic_tag_forward.3} parent=27 // pred_check_branch
        %2753 = sbr.rel (%p2751) target = $region40
      $region39: #{actor_critic_tag_forward.3} parent=27 // pred_region
        _
      $region40: #{actor_critic_tag_forward.3} parent=27 // pred_fallthru
        _
    $region28: #{actor_critic_tag_forward.3} parent=5 // pred_fallthru
      _
    %p2754 = scmp.le.s32.totalorder 2, %s8
    // Predicated region
    $region41: #{actor_critic_tag_forward.3} parent=5 // pred_check
      %p2755 = pneg %p2754
    $region42: #{actor_critic_tag_forward.3} parent=5 // pred_check_branch
      %2757 = sbr.rel (%p2755) target = $region44
    $region43: #{actor_critic_tag_forward.3} parent=5 // pred_region
      %s2758 = ssub.s32 %s8, 2
      // Predicated region
      $region45: #{actor_critic_tag_forward.3} parent=43 // pred_check
        %p2759 = pneg %p109
      $region46: #{actor_critic_tag_forward.3} parent=43 // pred_check_branch
        %2761 = sbr.rel (%p2759) target = $region48
      $region47: #{actor_critic_tag_forward.3} parent=43 // pred_region
        %p2762 = scmp.lt.s32.totalorder %s19, 1
        %s2763 = scalar_select %p2762, %s19, 1
        %s2764 = smul.addr %s2763, 2
        %s2765 = scalar_lea.vmem %s2, %s2764
      $region48: #{actor_critic_tag_forward.3} parent=43 // pred_fallthru
        _
    $region44: #{actor_critic_tag_forward.3} parent=5 // pred_fallthru
      _
  $region6: #{actor_critic_tag_forward.3} parent=0 // loop_footer
    %s12 = sadd.s32 1, %s8
  $region7: #{actor_critic_tag_forward.3} parent=0 // loop_footer_branch
    %7 = sbr.rel target = $region3
  $region8: #{actor_critic_tag_forward.3} parent=0 // loop_exit
    _

</llo_original>
